<compile_context>
chip_gen: v6e
topology: v6e:2x2x1
jax: 0.10.0
libtpu: 0.0.40
codegen_flags: <defaults>
</compile_context>

<pallas_src>
import functools

import jax
import jax.numpy as jnp
from jax.experimental import pallas as pl
from jax.experimental.pallas import tpu as pltpu

HEADS = 4
DIM_HEAD = 16
_ROW_TILE = 512                    # M-rows per matmul grid step (fits VMEM on v5e/v6e/v7x)
_COMPUTE_DTYPE = jnp.bfloat16      # activations / weights fed to the MXU


def _pick_div_tile(n, target):
    """Largest tile <= target that evenly divides n and keeps (8,128) tiling legal."""
    if n <= target:
        return n
    d = (target // 8) * 8
    while d >= 8:
        if n % d == 0:
            return d
        d -= 8
    return n


# ----------------------------------------------------------------------------
# Kernel 1: row-tiled fused matmul:
#   y = act((x @ w [+ x2 @ w2]) * scale + shift)
# Covers every 1x1 conv / linear; the optional (x2, w2) pair folds a channel
# concat into two K-slices so the concatenated tensor never hits HBM.
# ----------------------------------------------------------------------------
def _apply_act(y, act, split):
    if act == "relu":
        return jnp.maximum(y, 0.0)
    if act == "sigmoid":
        return jax.nn.sigmoid(y)
    if act == "relu_sigmoid":          # sigmoid(BasicDSConvConv2d(...)) pattern
        return jax.nn.sigmoid(jnp.maximum(y, 0.0))
    if act == "relu_tail":             # ReLU only on columns >= split (fused N-concat)
        col = jax.lax.broadcasted_iota(jnp.int32, y.shape, y.ndim - 1)
        return jnp.where(col >= split, jnp.maximum(y, 0.0), y)
    return y


def _mm_kernel(x_ref, w_ref, scale_ref, shift_ref, o_ref, *, act, split):
    y = jnp.dot(x_ref[...], w_ref[...], preferred_element_type=jnp.float32)
    y = y * scale_ref[...] + shift_ref[...]
    o_ref[...] = _apply_act(y, act, split).astype(o_ref.dtype)


def _mm2_kernel(xa_ref, xb_ref, wa_ref, wb_ref, scale_ref, shift_ref, o_ref,
                *, act, split):
    # cat([xa, xb], -1) @ [wa; wb]  ==  xa @ wa + xb @ wb   (concat folded away)
    y = jnp.dot(xa_ref[...], wa_ref[...], preferred_element_type=jnp.float32)
    y = y + jnp.dot(xb_ref[...], wb_ref[...], preferred_element_type=jnp.float32)
    y = y * scale_ref[...] + shift_ref[...]
    o_ref[...] = _apply_act(y, act, split).astype(o_ref.dtype)


def fused_matmul(x, w, scale=None, shift=None, act="none", *, split=0,
                 x2=None, w2=None, out_dtype=_COMPUTE_DTYPE):
    M, K = x.shape
    N = w.shape[1]
    scale = jnp.ones((N,), jnp.float32) if scale is None else scale
    shift = jnp.zeros((N,), jnp.float32) if shift is None else shift
    scale = scale.reshape(1, N).astype(jnp.float32)
    shift = shift.reshape(1, N).astype(jnp.float32)
    tm = min(M, _ROW_TILE)
    grid = (pl.cdiv(M, tm),)

    def row_spec(shape):
        return pl.BlockSpec(shape, lambda i: (i, 0))

    def full_spec(shape):
        return pl.BlockSpec(shape, lambda i: (0, 0))

    if x2 is None:
        kernel = functools.partial(_mm_kernel, act=act, split=split)
        in_specs = [row_spec((tm, K)), full_spec((K, N)),
                    full_spec((1, N)), full_spec((1, N))]
        args = (x, w, scale, shift)
    else:
        K2 = x2.shape[1]
        kernel = functools.partial(_mm2_kernel, act=act, split=split)
        in_specs = [row_spec((tm, K)), row_spec((tm, K2)),
                    full_spec((K, N)), full_spec((K2, N)),
                    full_spec((1, N)), full_spec((1, N))]
        args = (x, x2, w, w2, scale, shift)

    return pl.pallas_call(
        kernel,
        out_shape=jax.ShapeDtypeStruct((M, N), out_dtype),
        grid=grid,
        in_specs=in_specs,
        out_specs=pl.BlockSpec((tm, N), lambda i: (i, 0)),
        compiler_params=pltpu.CompilerParams(dimension_semantics=("parallel",)),
    )(*args)


# ----------------------------------------------------------------------------
# Kernel 2: the full x1 / x22 / x2 gating subgraph in one pass per image:
#   x1  = sigmoid(bc2(Xup + Yb))
#   g1  = bc4(cat([Yb, Xup]))                      (concat folded -> 2 dots)
#   gp  = sigmoid(bc4(avg_pool3x3(cat([Yb, Xup]))))
#   x2  = gp * g1 * x1
# Inputs are zero-padded by 1 px (for the count_include_pad=True 3x3 avg pool);
# the unpadded views are sliced out in-kernel.
# ----------------------------------------------------------------------------
def _gate_fuse_kernel(ybp_ref, xpp_ref, w2_ref, w4a_ref, w4b_ref,
                      s2_ref, sh2_ref, s4_ref, sh4_ref, o_ref):
    _, Hp, Wp, C = ybp_ref.shape
    H, W = Hp - 2, Wp - 2
    M = H * W
    ybp = ybp_ref[0]                        # (Hp, Wp, C) padded basicconv1(y)
    xpp = xpp_ref[0]                        # (Hp, Wp, C) padded upsample1(basicconv1(x))
    yb = ybp[1:H + 1, 1:W + 1, :]           # interior views
    xu = xpp[1:H + 1, 1:W + 1, :]

    def pool9(t):                           # 3x3 avg pool, count_include_pad=True
        acc = jnp.zeros((H, W, C), jnp.float32)
        for dy in range(3):
            for dx in range(3):
                acc = acc + t[dy:dy + H, dx:dx + W, :].astype(jnp.float32)
        return (acc * (1.0 / 9.0)).astype(t.dtype).reshape(M, C)

    w2, w4a, w4b = w2_ref[...], w4a_ref[...], w4b_ref[...]
    s2, sh2 = s2_ref[...], sh2_ref[...]
    s4, sh4 = s4_ref[...], sh4_ref[...]

    t1 = jnp.dot((yb + xu).reshape(M, C), w2, preferred_element_type=jnp.float32)
    x1 = jax.nn.sigmoid(jnp.maximum(t1 * s2 + sh2, 0.0))

    t2 = (jnp.dot(yb.reshape(M, C), w4a, preferred_element_type=jnp.float32)
          + jnp.dot(xu.reshape(M, C), w4b, preferred_element_type=jnp.float32))
    g1 = jnp.maximum(t2 * s4 + sh4, 0.0)

    t3 = (jnp.dot(pool9(ybp), w4a, preferred_element_type=jnp.float32)
          + jnp.dot(pool9(xpp), w4b, preferred_element_type=jnp.float32))
    gp = jax.nn.sigmoid(jnp.maximum(t3 * s4 + sh4, 0.0))

    x2 = gp * g1 * x1                       # x22 * x1
    o_ref[0] = x2.reshape(H, W, C).astype(o_ref.dtype)


def gate_fuse(yb_pad, xup_pad, w2, w4a, w4b, s2, sh2, s4, sh4):
    B, Hp, Wp, C = yb_pad.shape
    H, W = Hp - 2, Wp - 2
    img = pl.BlockSpec((1, Hp, Wp, C), lambda b: (b, 0, 0, 0))
    mat = pl.BlockSpec((C, C), lambda b: (0, 0))
    vec = pl.BlockSpec((1, C), lambda b: (0, 0))
    return pl.pallas_call(
        _gate_fuse_kernel,
        out_shape=jax.ShapeDtypeStruct((B, H, W, C), yb_pad.dtype),
        grid=(B,),
        in_specs=[img, img, mat, mat, mat, vec, vec, vec, vec],
        out_specs=pl.BlockSpec((1, H, W, C), lambda b: (b, 0, 0, 0)),
        compiler_params=pltpu.CompilerParams(dimension_semantics=("parallel",)),
    )(yb_pad, xup_pad, w2, w4a, w4b,
      s2.reshape(1, C).astype(jnp.float32), sh2.reshape(1, C).astype(jnp.float32),
      s4.reshape(1, C).astype(jnp.float32), sh4.reshape(1, C).astype(jnp.float32))


# ----------------------------------------------------------------------------
# Kernel 3: basicconv3 = depthwise 3x3 + pointwise 1x1 + BN + ReLU, fused
# (the depthwise intermediate never leaves VMEM). Input is pre-padded by 1 px.
# ----------------------------------------------------------------------------
def _dw_pw_kernel(xp_ref, dw_ref, pw_ref, scale_ref, shift_ref, o_ref):
    _, Hp, Wp, C = xp_ref.shape
    H, W = Hp - 2, Wp - 2
    xp = xp_ref[0]
    dw = dw_ref[...].astype(jnp.float32)              # (9, C) depthwise taps
    acc = jnp.zeros((H, W, C), jnp.float32)
    for dy in range(3):
        for dx in range(3):
            acc = acc + xp[dy:dy + H, dx:dx + W, :].astype(jnp.float32) * dw[dy * 3 + dx]
    y = jnp.dot(acc.astype(pw_ref.dtype).reshape(H * W, C), pw_ref[...],
                preferred_element_type=jnp.float32)
    y = jnp.maximum(y * scale_ref[...] + shift_ref[...], 0.0)
    o_ref[0] = y.reshape(H, W, C).astype(o_ref.dtype)


def dw_pw_bn_relu(x_pad, dw9c, pw, scale, shift):
    B, Hp, Wp, C = x_pad.shape
    H, W = Hp - 2, Wp - 2
    N = pw.shape[1]
    return pl.pallas_call(
        _dw_pw_kernel,
        out_shape=jax.ShapeDtypeStruct((B, H, W, N), x_pad.dtype),
        grid=(B,),
        in_specs=[
            pl.BlockSpec((1, Hp, Wp, C), lambda b: (b, 0, 0, 0)),
            pl.BlockSpec((9, C), lambda b: (0, 0)),
            pl.BlockSpec((C, N), lambda b: (0, 0)),
            pl.BlockSpec((1, N), lambda b: (0, 0)),
            pl.BlockSpec((1, N), lambda b: (0, 0)),
        ],
        out_specs=pl.BlockSpec((1, H, W, N), lambda b: (b, 0, 0, 0)),
        compiler_params=pltpu.CompilerParams(dimension_semantics=("parallel",)),
    )(x_pad, dw9c, pw,
      scale.reshape(1, N).astype(jnp.float32), shift.reshape(1, N).astype(jnp.float32))


# ----------------------------------------------------------------------------
# Kernel 4: flash-style softmax attention  softmax(q @ k^T * scale) @ v.
# KV tiled on the innermost ("arbitrary") grid axis with online-softmax state
# (m, l, acc) in VMEM scratch; the (Nq, Nk) score matrix is never materialized.
# Used for both the split multi-head attention and Graph_Attention_Union.
# ----------------------------------------------------------------------------
def _flash_attn_kernel(q_ref, k_ref, v_ref, o_ref, m_sc, l_sc, acc_sc, *, scale):
    ki = pl.program_id(2)

    @pl.when(ki == 0)
    def _():
        m_sc[...] = jnp.full_like(m_sc, -jnp.inf)
        l_sc[...] = jnp.zeros_like(l_sc)
        acc_sc[...] = jnp.zeros_like(acc_sc)

    q, k, v = q_ref[0], k_ref[0], v_ref[0]
    s = jax.lax.dot_general(q, k, (((1,), (1,)), ((), ())),
                            preferred_element_type=jnp.float32) * scale
    m_prev = m_sc[...]
    m_new = jnp.maximum(m_prev, jnp.max(s, axis=-1, keepdims=True))
    alpha = jnp.exp(m_prev - m_new)
    p = jnp.exp(s - m_new)
    l_sc[...] = alpha * l_sc[...] + jnp.sum(p, axis=-1, keepdims=True)
    acc_sc[...] = alpha * acc_sc[...] + jnp.dot(p.astype(v.dtype), v,
                                                preferred_element_type=jnp.float32)
    m_sc[...] = m_new

    @pl.when(ki == pl.num_programs(2) - 1)
    def _():
        o_ref[0] = (acc_sc[...] * pl.reciprocal(l_sc[...], approx=True)
                    ).astype(o_ref.dtype)


def flash_attention(q, k, v, scale, *, q_tile=256, kv_tile=512):
    # q: (G, Nq, Dk), k: (G, Nk, Dk), v: (G, Nk, Dv)
    G, Nq, Dq = q.shape
    Nk, Dv = k.shape[1], v.shape[2]
    tq = _pick_div_tile(Nq, q_tile)
    tkv = _pick_div_tile(Nk, kv_tile)
    grid = (G, Nq // tq, Nk // tkv)
    return pl.pallas_call(
        functools.partial(_flash_attn_kernel, scale=scale),
        out_shape=jax.ShapeDtypeStruct((G, Nq, Dv), q.dtype),
        grid=grid,
        in_specs=[
            pl.BlockSpec((1, tq, Dq), lambda g, qi, ki: (g, qi, 0)),
            pl.BlockSpec((1, tkv, Dq), lambda g, qi, ki: (g, ki, 0)),
            pl.BlockSpec((1, tkv, Dv), lambda g, qi, ki: (g, ki, 0)),
        ],
        out_specs=pl.BlockSpec((1, tq, Dv), lambda g, qi, ki: (g, qi, 0)),
        scratch_shapes=[
            pltpu.VMEM((tq, 1), jnp.float32),
            pltpu.VMEM((tq, 1), jnp.float32),
            pltpu.VMEM((tq, Dv), jnp.float32),
        ],
        compiler_params=pltpu.CompilerParams(
            dimension_semantics=("parallel", "parallel", "arbitrary")),
    )(q, k, v)


# ----------------------------------------------------------------------------
# Parameter init (deterministic, synthetic, f32). BN always folded to scale/shift.
# ----------------------------------------------------------------------------
def init_cfm_params(key, in_c, out_c):
    keys = iter(jax.random.split(key, 64))

    def nrm(shape, s=0.1):
        return s * jax.random.normal(next(keys), shape, dtype=jnp.float32)

    def bn(c):
        gamma = 1.0 + nrm((c,))
        beta = nrm((c,))
        mean = nrm((c,))
        var = jax.random.uniform(next(keys), (c,), jnp.float32, 0.5, 1.5)
        return gamma, beta, mean, var

    def fold(gamma, beta, mean, var, bias=None, eps=1e-5):
        scale = gamma / jnp.sqrt(var + eps)
        shift = beta - mean * scale
        if bias is not None:
            shift = shift + bias * scale
        return scale, shift

    def dsconv1x1(cin, cout):
        dw = 1.0 + nrm((cin,), 0.5)             # depthwise 1x1 = per-channel scale
        pwt = nrm((cin, cout), 0.2)
        return dw[:, None] * pwt                # folded effective weight

    p = {}
    p["bc1_W"] = dsconv1x1(in_c, out_c)
    p["bc1_scale"], p["bc1_shift"] = fold(*bn(out_c))
    p["bc2_W"] = dsconv1x1(out_c, out_c)
    p["bc2_scale"], p["bc2_shift"] = fold(*bn(out_c))
    p["bc4_W"] = dsconv1x1(2 * out_c, out_c)
    p["bc4_scale"], p["bc4_shift"] = fold(*bn(out_c))
    p["bc3_dw"] = nrm((9, out_c), 0.2)
    p["bc3_pw"] = nrm((out_c, out_c), 0.2)
    p["bc3_scale"], p["bc3_shift"] = fold(*bn(out_c))
    p["up_W"] = dsconv1x1(out_c, out_c)
    p["patch_W"] = nrm((out_c, out_c), 0.2)
    p["patch_b"] = nrm((out_c,))
    p["qkv_W"] = nrm((out_c, 3 * HEADS * DIM_HEAD), 0.2)
    p["to_out_W"] = nrm((HEADS * DIM_HEAD, out_c), 0.2)
    p["to_out_b"] = nrm((out_c,))
    p["gam_query_W"] = nrm((out_c, out_c), 0.2)
    p["gam_support_W"] = nrm((out_c, out_c), 0.2)
    p["gam_g_W"] = nrm((out_c, out_c), 0.2)
    g_bias = nrm((out_c,))
    p["gam_g_scale"], p["gam_g_shift"] = fold(*bn(out_c), bias=g_bias)
    p["gam_fi_W"] = nrm((2 * out_c, out_c), 0.2)
    fi_bias = nrm((out_c,))
    p["gam_fi_scale"], p["gam_fi_shift"] = fold(*bn(out_c), bias=fi_bias)
    return p


def prepare_cfm_params(raw, out_c):
    """Fold / fuse raw f32 params into kernel-ready bf16 weights + f32 affines."""
    C = out_c
    inner = HEADS * DIM_HEAD
    w = lambda a: a.astype(_COMPUTE_DTYPE)
    f = lambda a: a.astype(jnp.float32)
    p = {}
    p["bc1_W"], p["bc1_scale"], p["bc1_shift"] = w(raw["bc1_W"]), f(raw["bc1_scale"]), f(raw["bc1_shift"])
    p["up_W"] = w(raw["up_W"])
    p["bc2_W"], p["bc2_scale"], p["bc2_shift"] = w(raw["bc2_W"]), f(raw["bc2_scale"]), f(raw["bc2_shift"])
    p["bc4_Wa"], p["bc4_Wb"] = w(raw["bc4_W"][:C]), w(raw["bc4_W"][C:])
    p["bc4_scale"], p["bc4_shift"] = f(raw["bc4_scale"]), f(raw["bc4_shift"])
    p["bc3_dw"], p["bc3_pw"] = w(raw["bc3_dw"]), w(raw["bc3_pw"])
    p["bc3_scale"], p["bc3_shift"] = f(raw["bc3_scale"]), f(raw["bc3_shift"])
    # PatchEmbeding folded into the qkv linear; only the consumed columns kept.
    Wpq = raw["patch_W"] @ raw["qkv_W"]          # (C, 3*inner)
    bpq = raw["patch_b"] @ raw["qkv_W"]          # (3*inner,)
    p["xqk_W"], p["xqk_b"] = w(Wpq[:, :2 * inner]), f(bpq[:2 * inner])     # X: q|k -> N=128
    p["yv_W"], p["yv_b"] = w(Wpq[:, 2 * inner:]), f(bpq[2 * inner:])       # Y: v   -> N=64
    # GAU xf side: fold to_out into query & g, concatenate the two N=C outputs.
    Wq_x = raw["to_out_W"] @ raw["gam_query_W"]
    bq_x = raw["to_out_b"] @ raw["gam_query_W"]
    Wg_x = raw["to_out_W"] @ raw["gam_g_W"]
    bg_x = raw["to_out_b"] @ raw["gam_g_W"]
    ones, zeros = jnp.ones((C,), jnp.float32), jnp.zeros((C,), jnp.float32)
    p["gau_x_W"] = w(jnp.concatenate([Wq_x, Wg_x], axis=1))
    p["gau_x_scale"] = jnp.concatenate([ones, raw["gam_g_scale"]])
    p["gau_x_shift"] = jnp.concatenate([bq_x, bg_x * raw["gam_g_scale"] + raw["gam_g_shift"]])
    # GAU zf side: support & g share one N=2C matmul.
    p["gau_z_W"] = w(jnp.concatenate([raw["gam_support_W"], raw["gam_g_W"]], axis=1))
    p["gau_z_scale"] = jnp.concatenate([ones, raw["gam_g_scale"]])
    p["gau_z_shift"] = jnp.concatenate([zeros, raw["gam_g_shift"]])
    # fi conv: channel concat folded into two K-slices of the weight.
    p["fi_Wa"], p["fi_Wb"] = w(raw["gam_fi_W"][:C]), w(raw["gam_fi_W"][C:])
    p["fi_scale"], p["fi_shift"] = f(raw["gam_fi_scale"]), f(raw["gam_fi_shift"])
    return p


# ----------------------------------------------------------------------------
# CFM forward
# ----------------------------------------------------------------------------
def cfm_forward(params, x_nchw, y_nchw):
    p = params
    x = jnp.transpose(x_nchw, (0, 2, 3, 1)).astype(_COMPUTE_DTYPE)   # NCHW -> NHWC
    y = jnp.transpose(y_nchw, (0, 2, 3, 1)).astype(_COMPUTE_DTYPE)
    B, Hs, Ws, Cin = x.shape
    _, H2, W2, _ = y.shape
    C = p["bc1_W"].shape[1]
    inner = HEADS * DIM_HEAD

    # basicconv1 on both inputs; upsample1's 1x1 DSConv commutes with the
    # nearest upsample, so it runs at low resolution before the x2 repeat.
    A = fused_matmul(x.reshape(B * Hs * Ws, Cin), p["bc1_W"],
                     p["bc1_scale"], p["bc1_shift"], "relu")
    Aup = fused_matmul(A, p["up_W"], act="relu").reshape(B, Hs, Ws, C)
    Xup = jnp.repeat(jnp.repeat(Aup, 2, axis=1), 2, axis=2)            # nearest x2 (XLA glue)
    Yb = fused_matmul(y.reshape(B * H2 * W2, Cin), p["bc1_W"],
                      p["bc1_scale"], p["bc1_shift"], "relu").reshape(B, H2, W2, C)

    pad1 = lambda t: jnp.pad(t, ((0, 0), (1, 1), (1, 1), (0, 0)))      # halo for 3x3 ops

    # x1 / x22 / x2 gating subgraph -> single fused kernel (no cat1, x1, x22 in HBM)
    x2 = gate_fuse(pad1(Yb), pad1(Xup),
                   p["bc2_W"], p["bc4_Wa"], p["bc4_Wb"],
                   p["bc2_scale"], p["bc2_shift"], p["bc4_scale"], p["bc4_shift"])

    # l = basicconv3(x2)
    l = dw_pw_bn_relu(pad1(x2), p["bc3_dw"], p["bc3_pw"], p["bc3_scale"], p["bc3_shift"])

    # ---- attention branch: patch embedding folded into qkv; only Xq, Xk, Yv computed
    Np = H2 * W2
    Mtok = B * Np
    XQK = fused_matmul(Xup.reshape(Mtok, C), p["xqk_W"], None, p["xqk_b"])   # (Mtok, 128)
    YV = fused_matmul(Yb.reshape(Mtok, C), p["yv_W"], None, p["yv_b"])       # (Mtok, 64)

    def to_heads(t):   # (Mtok, inner) -> (B*heads, Np, dim_head)
        return t.reshape(B, Np, HEADS, DIM_HEAD).transpose(0, 2, 1, 3) \
                .reshape(B * HEADS, Np, DIM_HEAD)

    attn = flash_attention(to_heads(XQK[:, :inner]), to_heads(XQK[:, inner:]),
                           to_heads(YV), scale=DIM_HEAD ** -0.5)
    out_d = attn.reshape(B, HEADS, Np, DIM_HEAD).transpose(0, 2, 1, 3) \
                .reshape(Mtok, inner)                                   # b h n d -> b n (h d)

    # ---- Graph_Attention_Union(zf=l, xf=to_out(out_d)); to_out folded into the
    # query/g projections (xx2 never materialized); query|g and support|g each
    # share one lane-wider N=2C matmul with ReLU applied only to the g half.
    xf_proj = fused_matmul(out_d, p["gau_x_W"], p["gau_x_scale"], p["gau_x_shift"],
                           "relu_tail", split=C)                        # (Mtok, 2C)
    zf_proj = fused_matmul(l.reshape(Mtok, C), p["gau_z_W"], p["gau_z_scale"],
                           p["gau_z_shift"], "relu_tail", split=C)      # (Mtok, 2C)

    xf_trans = xf_proj[:, :C].reshape(B, Np, C)
    xf_g = xf_proj[:, C:]
    zf_trans = zf_proj[:, :C].reshape(B, Np, C)
    zf_g = zf_proj[:, C:].reshape(B, Np, C)

    # similar = softmax(xf_trans @ zf_trans^T, dim=-1); embedding = similar @ zf_g
    embedding = flash_attention(xf_trans, zf_trans, zf_g, scale=1.0)    # (B, Np, C)

    # fi(cat([embedding, xf_g])): concat folded into two K-slices of fi's weight
    out = fused_matmul(embedding.reshape(Mtok, C), p["fi_Wa"],
                       p["fi_scale"], p["fi_shift"], "relu",
                       x2=xf_g, w2=p["fi_Wb"], out_dtype=jnp.float32)
    return jnp.transpose(out.reshape(B, H2, W2, C), (0, 3, 1, 2))       # NHWC -> NCHW


# ----------------------------------------------------------------------------
if __name__ == "__main__":
    key = jax.random.PRNGKey(0)
    kx, ky, kp = jax.random.split(key, 3)

    in_channel, out_channel = 16, 32          # out_channel fixed to 32 by DSConv(32,32,1)
    B, H, W = 2, 4, 4                         # x is half-resolution of y
    x = jax.random.normal(kx, (B, in_channel, H, W), jnp.float32)
    y = jax.random.normal(ky, (B, in_channel, 2 * H, 2 * W), jnp.float32)

    raw = init_cfm_params(kp, in_channel, out_channel)
    params = prepare_cfm_params(raw, out_channel)

    fwd = jax.jit(functools.partial(cfm_forward, params))
    out = jax.block_until_ready(fwd(x, y))

    assert out.shape == (B, out_channel, 2 * H, 2 * W), out.shape
    assert bool(jnp.all(jnp.isfinite(out)))
    print("KERNEL_OK")
</pallas_src>

<mosaic_0001>
module attributes {stable_mosaic.version = 11 : i64} {
  func.func @_mm_kernel(%arg0: i32, %arg1: memref<32x16xbf16, #tpu.memory_space<vmem>>, %arg2: memref<16x32xbf16, #tpu.memory_space<vmem>>, %arg3: memref<1x32xf32, #tpu.memory_space<vmem>>, %arg4: memref<1x32xf32, #tpu.memory_space<vmem>>, %arg5: memref<32x32xbf16, #tpu.memory_space<vmem>>) attributes {dimension_semantics = [#tpu.dimension_semantics<parallel>], iteration_bounds = array<i64: 1>, scalar_prefetch = 0 : i64, scratch_operands = 0 : i64, tpu.core_type = #tpu.core_type<tc>, window_params = [{transform_indices = @transform_0, window_bounds = array<i64: 32, 16>}, {pipeline_mode = #tpu.pipeline_mode<synchronous>, transform_indices = @transform_1, window_bounds = array<i64: 16, 32>}, {pipeline_mode = #tpu.pipeline_mode<synchronous>, transform_indices = @transform_2, window_bounds = array<i64: 1, 32>}, {pipeline_mode = #tpu.pipeline_mode<synchronous>, transform_indices = @transform_3, window_bounds = array<i64: 1, 32>}, {transform_indices = @transform_4, window_bounds = array<i64: 32, 32>}]} {
    %c0 = arith.constant 0 : index
    %c0_0 = arith.constant 0 : index
    %0 = vector.load %arg1[%c0, %c0_0] : memref<32x16xbf16, #tpu.memory_space<vmem>>, vector<32x16xbf16>
    %c0_1 = arith.constant 0 : index
    %c0_2 = arith.constant 0 : index
    %1 = vector.load %arg2[%c0_1, %c0_2] : memref<16x32xbf16, #tpu.memory_space<vmem>>, vector<16x32xbf16>
    %cst = arith.constant dense<0.000000e+00> : vector<32x32xf32>
    %2 = tpu.matmul %0, %1, %cst {dimension_numbers = #tpu.dot_dimension_numbers<[1], [0], [0], [1], [0, 0, 1, 1], [], []>} : vector<32x16xbf16>, vector<16x32xbf16>, vector<32x32xf32> -> vector<32x32xf32>
    %c0_3 = arith.constant 0 : index
    %c0_4 = arith.constant 0 : index
    %3 = vector.load %arg3[%c0_3, %c0_4] : memref<1x32xf32, #tpu.memory_space<vmem>>, vector<1x32xf32>
    %4 = vector.broadcast %3 : vector<1x32xf32> to vector<32x32xf32>
    %5 = arith.mulf %2, %4 : vector<32x32xf32>
    %c0_5 = arith.constant 0 : index
    %c0_6 = arith.constant 0 : index
    %6 = vector.load %arg4[%c0_5, %c0_6] : memref<1x32xf32, #tpu.memory_space<vmem>>, vector<1x32xf32>
    %7 = vector.broadcast %6 : vector<1x32xf32> to vector<32x32xf32>
    %8 = arith.addf %5, %7 : vector<32x32xf32>
    %cst_7 = arith.constant 0.000000e+00 : f32
    %9 = vector.broadcast %cst_7 : f32 to vector<32x32xf32>
    %10 = arith.maximumf %8, %9 : vector<32x32xf32>
    %11 = arith.truncf %10 : vector<32x32xf32> to vector<32x32xbf16>
    %c0_8 = arith.constant 0 : index
    %c0_9 = arith.constant 0 : index
    %12 = vector.load %arg5[%c0_8, %c0_9] : memref<32x32xbf16, #tpu.memory_space<vmem>>, vector<32x32xbf16>
    tpu.vector_store %arg5[%c0_8, %c0_9], %11 {strides = array<i32>} : memref<32x32xbf16, #tpu.memory_space<vmem>>, vector<32x32xbf16>,
    return
  }
  func.func @transform_0(%arg0: i32) -> (i32, i32) {
    %c0_i32 = arith.constant 0 : i32
    %c0_i32_0 = arith.constant 0 : i32
    return %arg0, %c0_i32 : i32, i32
  }
  func.func @transform_1(%arg0: i32) -> (i32, i32) {
    %c0_i32 = arith.constant 0 : i32
    %c0_i32_0 = arith.constant 0 : i32
    %c0_i32_1 = arith.constant 0 : i32
    return %c0_i32, %c0_i32_0 : i32, i32
  }
  func.func @transform_2(%arg0: i32) -> (i32, i32) {
    %c0_i32 = arith.constant 0 : i32
    %c0_i32_0 = arith.constant 0 : i32
    %c0_i32_1 = arith.constant 0 : i32
    return %c0_i32, %c0_i32_0 : i32, i32
  }
  func.func @transform_3(%arg0: i32) -> (i32, i32) {
    %c0_i32 = arith.constant 0 : i32
    %c0_i32_0 = arith.constant 0 : i32
    %c0_i32_1 = arith.constant 0 : i32
    return %c0_i32, %c0_i32_0 : i32, i32
  }
  func.func @transform_4(%arg0: i32) -> (i32, i32) {
    %c0_i32 = arith.constant 0 : i32
    %c0_i32_0 = arith.constant 0 : i32
    return %arg0, %c0_i32 : i32, i32
  }
}

module attributes {stable_mosaic.version = 11 : i64} {
  func.func @_mm_kernel(%arg0: i32, %arg1: memref<32x32xbf16, #tpu.memory_space<vmem>>, %arg2: memref<32x32xbf16, #tpu.memory_space<vmem>>, %arg3: memref<1x32xf32, #tpu.memory_space<vmem>>, %arg4: memref<1x32xf32, #tpu.memory_space<vmem>>, %arg5: memref<32x32xbf16, #tpu.memory_space<vmem>>) attributes {dimension_semantics = [#tpu.dimension_semantics<parallel>], iteration_bounds = array<i64: 1>, scalar_prefetch = 0 : i64, scratch_operands = 0 : i64, tpu.core_type = #tpu.core_type<tc>, window_params = [{transform_indices = @transform_0, window_bounds = array<i64: 32, 32>}, {pipeline_mode = #tpu.pipeline_mode<synchronous>, transform_indices = @transform_1, window_bounds = array<i64: 32, 32>}, {pipeline_mode = #tpu.pipeline_mode<synchronous>, transform_indices = @transform_2, window_bounds = array<i64: 1, 32>}, {pipeline_mode = #tpu.pipeline_mode<synchronous>, transform_indices = @transform_3, window_bounds = array<i64: 1, 32>}, {transform_indices = @transform_4, window_bounds = array<i64: 32, 32>}]} {
    %c0 = arith.constant 0 : index
    %c0_0 = arith.constant 0 : index
    %0 = vector.load %arg1[%c0, %c0_0] : memref<32x32xbf16, #tpu.memory_space<vmem>>, vector<32x32xbf16>
    %c0_1 = arith.constant 0 : index
    %c0_2 = arith.constant 0 : index
    %1 = vector.load %arg2[%c0_1, %c0_2] : memref<32x32xbf16, #tpu.memory_space<vmem>>, vector<32x32xbf16>
    %cst = arith.constant dense<0.000000e+00> : vector<32x32xf32>
    %2 = tpu.matmul %0, %1, %cst {dimension_numbers = #tpu.dot_dimension_numbers<[1], [0], [0], [1], [0, 0, 1, 1], [], []>} : vector<32x32xbf16>, vector<32x32xbf16>, vector<32x32xf32> -> vector<32x32xf32>
    %c0_3 = arith.constant 0 : index
    %c0_4 = arith.constant 0 : index
    %3 = vector.load %arg3[%c0_3, %c0_4] : memref<1x32xf32, #tpu.memory_space<vmem>>, vector<1x32xf32>
    %4 = vector.broadcast %3 : vector<1x32xf32> to vector<32x32xf32>
    %5 = arith.mulf %2, %4 : vector<32x32xf32>
    %c0_5 = arith.constant 0 : index
    %c0_6 = arith.constant 0 : index
    %6 = vector.load %arg4[%c0_5, %c0_6] : memref<1x32xf32, #tpu.memory_space<vmem>>, vector<1x32xf32>
    %7 = vector.broadcast %6 : vector<1x32xf32> to vector<32x32xf32>
    %8 = arith.addf %5, %7 : vector<32x32xf32>
    %cst_7 = arith.constant 0.000000e+00 : f32
    %9 = vector.broadcast %cst_7 : f32 to vector<32x32xf32>
    %10 = arith.maximumf %8, %9 : vector<32x32xf32>
    %11 = arith.truncf %10 : vector<32x32xf32> to vector<32x32xbf16>
    %c0_8 = arith.constant 0 : index
    %c0_9 = arith.constant 0 : index
    %12 = vector.load %arg5[%c0_8, %c0_9] : memref<32x32xbf16, #tpu.memory_space<vmem>>, vector<32x32xbf16>
    tpu.vector_store %arg5[%c0_8, %c0_9], %11 {strides = array<i32>} : memref<32x32xbf16, #tpu.memory_space<vmem>>, vector<32x32xbf16>,
    return
  }
  func.func @transform_0(%arg0: i32) -> (i32, i32) {
    %c0_i32 = arith.constant 0 : i32
    %c0_i32_0 = arith.constant 0 : i32
    return %arg0, %c0_i32 : i32, i32
  }
  func.func @transform_1(%arg0: i32) -> (i32, i32) {
    %c0_i32 = arith.constant 0 : i32
    %c0_i32_0 = arith.constant 0 : i32
    %c0_i32_1 = arith.constant 0 : i32
    return %c0_i32, %c0_i32_0 : i32, i32
  }
  func.func @transform_2(%arg0: i32) -> (i32, i32) {
    %c0_i32 = arith.constant 0 : i32
    %c0_i32_0 = arith.constant 0 : i32
    %c0_i32_1 = arith.constant 0 : i32
    return %c0_i32, %c0_i32_0 : i32, i32
  }
  func.func @transform_3(%arg0: i32) -> (i32, i32) {
    %c0_i32 = arith.constant 0 : i32
    %c0_i32_0 = arith.constant 0 : i32
    %c0_i32_1 = arith.constant 0 : i32
    return %c0_i32, %c0_i32_0 : i32, i32
  }
  func.func @transform_4(%arg0: i32) -> (i32, i32) {
    %c0_i32 = arith.constant 0 : i32
    %c0_i32_0 = arith.constant 0 : i32
    return %arg0, %c0_i32 : i32, i32
  }
}

module attributes {stable_mosaic.version = 11 : i64} {
  func.func @_mm_kernel(%arg0: i32, %arg1: memref<128x32xbf16, #tpu.memory_space<vmem>>, %arg2: memref<32x128xbf16, #tpu.memory_space<vmem>>, %arg3: memref<1x128xf32, #tpu.memory_space<vmem>>, %arg4: memref<1x128xf32, #tpu.memory_space<vmem>>, %arg5: memref<128x128xbf16, #tpu.memory_space<vmem>>) attributes {dimension_semantics = [#tpu.dimension_semantics<parallel>], iteration_bounds = array<i64: 1>, scalar_prefetch = 0 : i64, scratch_operands = 0 : i64, tpu.core_type = #tpu.core_type<tc>, window_params = [{transform_indices = @transform_0, window_bounds = array<i64: 128, 32>}, {pipeline_mode = #tpu.pipeline_mode<synchronous>, transform_indices = @transform_1, window_bounds = array<i64: 32, 128>}, {pipeline_mode = #tpu.pipeline_mode<synchronous>, transform_indices = @transform_2, window_bounds = array<i64: 1, 128>}, {pipeline_mode = #tpu.pipeline_mode<synchronous>, transform_indices = @transform_3, window_bounds = array<i64: 1, 128>}, {transform_indices = @transform_4, window_bounds = array<i64: 128, 128>}]} {
    %c0 = arith.constant 0 : index
    %c0_0 = arith.constant 0 : index
    %0 = vector.load %arg1[%c0, %c0_0] : memref<128x32xbf16, #tpu.memory_space<vmem>>, vector<128x32xbf16>
    %c0_1 = arith.constant 0 : index
    %c0_2 = arith.constant 0 : index
    %1 = vector.load %arg2[%c0_1, %c0_2] : memref<32x128xbf16, #tpu.memory_space<vmem>>, vector<32x128xbf16>
    %cst = arith.constant dense<0.000000e+00> : vector<128x128xf32>
    %2 = tpu.matmul %0, %1, %cst {dimension_numbers = #tpu.dot_dimension_numbers<[1], [0], [0], [1], [0, 0, 1, 1], [], []>} : vector<128x32xbf16>, vector<32x128xbf16>, vector<128x128xf32> -> vector<128x128xf32>
    %c0_3 = arith.constant 0 : index
    %c0_4 = arith.constant 0 : index
    %3 = vector.load %arg3[%c0_3, %c0_4] : memref<1x128xf32, #tpu.memory_space<vmem>>, vector<1x128xf32>
    %4 = vector.broadcast %3 : vector<1x128xf32> to vector<128x128xf32>
    %5 = arith.mulf %2, %4 : vector<128x128xf32>
    %c0_5 = arith.constant 0 : index
    %c0_6 = arith.constant 0 : index
    %6 = vector.load %arg4[%c0_5, %c0_6] : memref<1x128xf32, #tpu.memory_space<vmem>>, vector<1x128xf32>
    %7 = vector.broadcast %6 : vector<1x128xf32> to vector<128x128xf32>
    %8 = arith.addf %5, %7 : vector<128x128xf32>
    %9 = arith.truncf %8 : vector<128x128xf32> to vector<128x128xbf16>
    %c0_7 = arith.constant 0 : index
    %c0_8 = arith.constant 0 : index
    %10 = vector.load %arg5[%c0_7, %c0_8] : memref<128x128xbf16, #tpu.memory_space<vmem>>, vector<128x128xbf16>
    tpu.vector_store %arg5[%c0_7, %c0_8], %9 {strides = array<i32>} : memref<128x128xbf16, #tpu.memory_space<vmem>>, vector<128x128xbf16>,
    return
  }
  func.func @transform_0(%arg0: i32) -> (i32, i32) {
    %c0_i32 = arith.constant 0 : i32
    %c0_i32_0 = arith.constant 0 : i32
    return %arg0, %c0_i32 : i32, i32
  }
  func.func @transform_1(%arg0: i32) -> (i32, i32) {
    %c0_i32 = arith.constant 0 : i32
    %c0_i32_0 = arith.constant 0 : i32
    %c0_i32_1 = arith.constant 0 : i32
    return %c0_i32, %c0_i32_0 : i32, i32
  }
  func.func @transform_2(%arg0: i32) -> (i32, i32) {
    %c0_i32 = arith.constant 0 : i32
    %c0_i32_0 = arith.constant 0 : i32
    %c0_i32_1 = arith.constant 0 : i32
    return %c0_i32, %c0_i32_0 : i32, i32
  }
  func.func @transform_3(%arg0: i32) -> (i32, i32) {
    %c0_i32 = arith.constant 0 : i32
    %c0_i32_0 = arith.constant 0 : i32
    %c0_i32_1 = arith.constant 0 : i32
    return %c0_i32, %c0_i32_0 : i32, i32
  }
  func.func @transform_4(%arg0: i32) -> (i32, i32) {
    %c0_i32 = arith.constant 0 : i32
    %c0_i32_0 = arith.constant 0 : i32
    return %arg0, %c0_i32 : i32, i32
  }
}

module attributes {stable_mosaic.version = 11 : i64} {
  func.func @_mm_kernel(%arg0: i32, %arg1: memref<128x32xbf16, #tpu.memory_space<vmem>>, %arg2: memref<32x64xbf16, #tpu.memory_space<vmem>>, %arg3: memref<1x64xf32, #tpu.memory_space<vmem>>, %arg4: memref<1x64xf32, #tpu.memory_space<vmem>>, %arg5: memref<128x64xbf16, #tpu.memory_space<vmem>>) attributes {dimension_semantics = [#tpu.dimension_semantics<parallel>], iteration_bounds = array<i64: 1>, scalar_prefetch = 0 : i64, scratch_operands = 0 : i64, tpu.core_type = #tpu.core_type<tc>, window_params = [{transform_indices = @transform_0, window_bounds = array<i64: 128, 32>}, {pipeline_mode = #tpu.pipeline_mode<synchronous>, transform_indices = @transform_1, window_bounds = array<i64: 32, 64>}, {pipeline_mode = #tpu.pipeline_mode<synchronous>, transform_indices = @transform_2, window_bounds = array<i64: 1, 64>}, {pipeline_mode = #tpu.pipeline_mode<synchronous>, transform_indices = @transform_3, window_bounds = array<i64: 1, 64>}, {transform_indices = @transform_4, window_bounds = array<i64: 128, 64>}]} {
    %c0 = arith.constant 0 : index
    %c0_0 = arith.constant 0 : index
    %0 = vector.load %arg1[%c0, %c0_0] : memref<128x32xbf16, #tpu.memory_space<vmem>>, vector<128x32xbf16>
    %c0_1 = arith.constant 0 : index
    %c0_2 = arith.constant 0 : index
    %1 = vector.load %arg2[%c0_1, %c0_2] : memref<32x64xbf16, #tpu.memory_space<vmem>>, vector<32x64xbf16>
    %cst = arith.constant dense<0.000000e+00> : vector<128x64xf32>
    %2 = tpu.matmul %0, %1, %cst {dimension_numbers = #tpu.dot_dimension_numbers<[1], [0], [0], [1], [0, 0, 1, 1], [], []>} : vector<128x32xbf16>, vector<32x64xbf16>, vector<128x64xf32> -> vector<128x64xf32>
    %c0_3 = arith.constant 0 : index
    %c0_4 = arith.constant 0 : index
    %3 = vector.load %arg3[%c0_3, %c0_4] : memref<1x64xf32, #tpu.memory_space<vmem>>, vector<1x64xf32>
    %4 = vector.broadcast %3 : vector<1x64xf32> to vector<128x64xf32>
    %5 = arith.mulf %2, %4 : vector<128x64xf32>
    %c0_5 = arith.constant 0 : index
    %c0_6 = arith.constant 0 : index
    %6 = vector.load %arg4[%c0_5, %c0_6] : memref<1x64xf32, #tpu.memory_space<vmem>>, vector<1x64xf32>
    %7 = vector.broadcast %6 : vector<1x64xf32> to vector<128x64xf32>
    %8 = arith.addf %5, %7 : vector<128x64xf32>
    %9 = arith.truncf %8 : vector<128x64xf32> to vector<128x64xbf16>
    %c0_7 = arith.constant 0 : index
    %c0_8 = arith.constant 0 : index
    %10 = vector.load %arg5[%c0_7, %c0_8] : memref<128x64xbf16, #tpu.memory_space<vmem>>, vector<128x64xbf16>
    tpu.vector_store %arg5[%c0_7, %c0_8], %9 {strides = array<i32>} : memref<128x64xbf16, #tpu.memory_space<vmem>>, vector<128x64xbf16>,
    return
  }
  func.func @transform_0(%arg0: i32) -> (i32, i32) {
    %c0_i32 = arith.constant 0 : i32
    %c0_i32_0 = arith.constant 0 : i32
    return %arg0, %c0_i32 : i32, i32
  }
  func.func @transform_1(%arg0: i32) -> (i32, i32) {
    %c0_i32 = arith.constant 0 : i32
    %c0_i32_0 = arith.constant 0 : i32
    %c0_i32_1 = arith.constant 0 : i32
    return %c0_i32, %c0_i32_0 : i32, i32
  }
  func.func @transform_2(%arg0: i32) -> (i32, i32) {
    %c0_i32 = arith.constant 0 : i32
    %c0_i32_0 = arith.constant 0 : i32
    %c0_i32_1 = arith.constant 0 : i32
    return %c0_i32, %c0_i32_0 : i32, i32
  }
  func.func @transform_3(%arg0: i32) -> (i32, i32) {
    %c0_i32 = arith.constant 0 : i32
    %c0_i32_0 = arith.constant 0 : i32
    %c0_i32_1 = arith.constant 0 : i32
    return %c0_i32, %c0_i32_0 : i32, i32
  }
  func.func @transform_4(%arg0: i32) -> (i32, i32) {
    %c0_i32 = arith.constant 0 : i32
    %c0_i32_0 = arith.constant 0 : i32
    return %arg0, %c0_i32 : i32, i32
  }
}

module attributes {stable_mosaic.version = 11 : i64} {
  func.func @_mm_kernel(%arg0: i32, %arg1: memref<128x16xbf16, #tpu.memory_space<vmem>>, %arg2: memref<16x32xbf16, #tpu.memory_space<vmem>>, %arg3: memref<1x32xf32, #tpu.memory_space<vmem>>, %arg4: memref<1x32xf32, #tpu.memory_space<vmem>>, %arg5: memref<128x32xbf16, #tpu.memory_space<vmem>>) attributes {dimension_semantics = [#tpu.dimension_semantics<parallel>], iteration_bounds = array<i64: 1>, scalar_prefetch = 0 : i64, scratch_operands = 0 : i64, tpu.core_type = #tpu.core_type<tc>, window_params = [{transform_indices = @transform_0, window_bounds = array<i64: 128, 16>}, {pipeline_mode = #tpu.pipeline_mode<synchronous>, transform_indices = @transform_1, window_bounds = array<i64: 16, 32>}, {pipeline_mode = #tpu.pipeline_mode<synchronous>, transform_indices = @transform_2, window_bounds = array<i64: 1, 32>}, {pipeline_mode = #tpu.pipeline_mode<synchronous>, transform_indices = @transform_3, window_bounds = array<i64: 1, 32>}, {transform_indices = @transform_4, window_bounds = array<i64: 128, 32>}]} {
    %c0 = arith.constant 0 : index
    %c0_0 = arith.constant 0 : index
    %0 = vector.load %arg1[%c0, %c0_0] : memref<128x16xbf16, #tpu.memory_space<vmem>>, vector<128x16xbf16>
    %c0_1 = arith.constant 0 : index
    %c0_2 = arith.constant 0 : index
    %1 = vector.load %arg2[%c0_1, %c0_2] : memref<16x32xbf16, #tpu.memory_space<vmem>>, vector<16x32xbf16>
    %cst = arith.constant dense<0.000000e+00> : vector<128x32xf32>
    %2 = tpu.matmul %0, %1, %cst {dimension_numbers = #tpu.dot_dimension_numbers<[1], [0], [0], [1], [0, 0, 1, 1], [], []>} : vector<128x16xbf16>, vector<16x32xbf16>, vector<128x32xf32> -> vector<128x32xf32>
    %c0_3 = arith.constant 0 : index
    %c0_4 = arith.constant 0 : index
    %3 = vector.load %arg3[%c0_3, %c0_4] : memref<1x32xf32, #tpu.memory_space<vmem>>, vector<1x32xf32>
    %4 = vector.broadcast %3 : vector<1x32xf32> to vector<128x32xf32>
    %5 = arith.mulf %2, %4 : vector<128x32xf32>
    %c0_5 = arith.constant 0 : index
    %c0_6 = arith.constant 0 : index
    %6 = vector.load %arg4[%c0_5, %c0_6] : memref<1x32xf32, #tpu.memory_space<vmem>>, vector<1x32xf32>
    %7 = vector.broadcast %6 : vector<1x32xf32> to vector<128x32xf32>
    %8 = arith.addf %5, %7 : vector<128x32xf32>
    %cst_7 = arith.constant 0.000000e+00 : f32
    %9 = vector.broadcast %cst_7 : f32 to vector<128x32xf32>
    %10 = arith.maximumf %8, %9 : vector<128x32xf32>
    %11 = arith.truncf %10 : vector<128x32xf32> to vector<128x32xbf16>
    %c0_8 = arith.constant 0 : index
    %c0_9 = arith.constant 0 : index
    %12 = vector.load %arg5[%c0_8, %c0_9] : memref<128x32xbf16, #tpu.memory_space<vmem>>, vector<128x32xbf16>
    tpu.vector_store %arg5[%c0_8, %c0_9], %11 {strides = array<i32>} : memref<128x32xbf16, #tpu.memory_space<vmem>>, vector<128x32xbf16>,
    return
  }
  func.func @transform_0(%arg0: i32) -> (i32, i32) {
    %c0_i32 = arith.constant 0 : i32
    %c0_i32_0 = arith.constant 0 : i32
    return %arg0, %c0_i32 : i32, i32
  }
  func.func @transform_1(%arg0: i32) -> (i32, i32) {
    %c0_i32 = arith.constant 0 : i32
    %c0_i32_0 = arith.constant 0 : i32
    %c0_i32_1 = arith.constant 0 : i32
    return %c0_i32, %c0_i32_0 : i32, i32
  }
  func.func @transform_2(%arg0: i32) -> (i32, i32) {
    %c0_i32 = arith.constant 0 : i32
    %c0_i32_0 = arith.constant 0 : i32
    %c0_i32_1 = arith.constant 0 : i32
    return %c0_i32, %c0_i32_0 : i32, i32
  }
  func.func @transform_3(%arg0: i32) -> (i32, i32) {
    %c0_i32 = arith.constant 0 : i32
    %c0_i32_0 = arith.constant 0 : i32
    %c0_i32_1 = arith.constant 0 : i32
    return %c0_i32, %c0_i32_0 : i32, i32
  }
  func.func @transform_4(%arg0: i32) -> (i32, i32) {
    %c0_i32 = arith.constant 0 : i32
    %c0_i32_0 = arith.constant 0 : i32
    return %arg0, %c0_i32 : i32, i32
  }
}

module attributes {stable_mosaic.version = 11 : i64} {
  func.func @_gate_fuse_kernel(%arg0: i32, %arg1: memref<1x10x10x32xbf16, #tpu.memory_space<vmem>>, %arg2: memref<1x10x10x32xbf16, #tpu.memory_space<vmem>>, %arg3: memref<32x32xbf16, #tpu.memory_space<vmem>>, %arg4: memref<32x32xbf16, #tpu.memory_space<vmem>>, %arg5: memref<32x32xbf16, #tpu.memory_space<vmem>>, %arg6: memref<1x32xf32, #tpu.memory_space<vmem>>, %arg7: memref<1x32xf32, #tpu.memory_space<vmem>>, %arg8: memref<1x32xf32, #tpu.memory_space<vmem>>, %arg9: memref<1x32xf32, #tpu.memory_space<vmem>>, %arg10: memref<1x8x8x32xbf16, #tpu.memory_space<vmem>>) attributes {dimension_semantics = [#tpu.dimension_semantics<parallel>], iteration_bounds = array<i64: 2>, scalar_prefetch = 0 : i64, scratch_operands = 0 : i64, tpu.core_type = #tpu.core_type<tc>, window_params = [{transform_indices = @transform_0, window_bounds = array<i64: 1, 10, 10, 32>}, {transform_indices = @transform_1, window_bounds = array<i64: 1, 10, 10, 32>}, {pipeline_mode = #tpu.pipeline_mode<synchronous>, transform_indices = @transform_2, window_bounds = array<i64: 32, 32>}, {pipeline_mode = #tpu.pipeline_mode<synchronous>, transform_indices = @transform_3, window_bounds = array<i64: 32, 32>}, {pipeline_mode = #tpu.pipeline_mode<synchronous>, transform_indices = @transform_4, window_bounds = array<i64: 32, 32>}, {pipeline_mode = #tpu.pipeline_mode<synchronous>, transform_indices = @transform_5, window_bounds = array<i64: 1, 32>}, {pipeline_mode = #tpu.pipeline_mode<synchronous>, transform_indices = @transform_6, window_bounds = array<i64: 1, 32>}, {pipeline_mode = #tpu.pipeline_mode<synchronous>, transform_indices = @transform_7, window_bounds = array<i64: 1, 32>}, {pipeline_mode = #tpu.pipeline_mode<synchronous>, transform_indices = @transform_8, window_bounds = array<i64: 1, 32>}, {transform_indices = @transform_9, window_bounds = array<i64: 1, 8, 8, 32>}]} {
    %c0 = arith.constant 0 : index
    %c0_0 = arith.constant 0 : index
    %c0_1 = arith.constant 0 : index
    %c0_2 = arith.constant 0 : index
    %0 = vector.load %arg1[%c0, %c0_0, %c0_1, %c0_2] : memref<1x10x10x32xbf16, #tpu.memory_space<vmem>>, vector<1x10x10x32xbf16>
    %1 = vector.shape_cast %0 : vector<1x10x10x32xbf16> to vector<10x10x32xbf16>
    %c0_3 = arith.constant 0 : index
    %c0_4 = arith.constant 0 : index
    %c0_5 = arith.constant 0 : index
    %c0_6 = arith.constant 0 : index
    %2 = vector.load %arg2[%c0_3, %c0_4, %c0_5, %c0_6] : memref<1x10x10x32xbf16, #tpu.memory_space<vmem>>, vector<1x10x10x32xbf16>
    %3 = vector.shape_cast %2 : vector<1x10x10x32xbf16> to vector<10x10x32xbf16>
    %4 = vector.extract_strided_slice %1 {offsets = [1, 1, 0], sizes = [8, 8, 32], strides = [1, 1, 1]} : vector<10x10x32xbf16> to vector<8x8x32xbf16>
    %5 = vector.extract_strided_slice %3 {offsets = [1, 1, 0], sizes = [8, 8, 32], strides = [1, 1, 1]} : vector<10x10x32xbf16> to vector<8x8x32xbf16>
    %c0_7 = arith.constant 0 : index
    %c0_8 = arith.constant 0 : index
    %6 = vector.load %arg3[%c0_7, %c0_8] : memref<32x32xbf16, #tpu.memory_space<vmem>>, vector<32x32xbf16>
    %c0_9 = arith.constant 0 : index
    %c0_10 = arith.constant 0 : index
    %7 = vector.load %arg4[%c0_9, %c0_10] : memref<32x32xbf16, #tpu.memory_space<vmem>>, vector<32x32xbf16>
    %c0_11 = arith.constant 0 : index
    %c0_12 = arith.constant 0 : index
    %8 = vector.load %arg5[%c0_11, %c0_12] : memref<32x32xbf16, #tpu.memory_space<vmem>>, vector<32x32xbf16>
    %c0_13 = arith.constant 0 : index
    %c0_14 = arith.constant 0 : index
    %9 = vector.load %arg6[%c0_13, %c0_14] : memref<1x32xf32, #tpu.memory_space<vmem>>, vector<1x32xf32>
    %c0_15 = arith.constant 0 : index
    %c0_16 = arith.constant 0 : index
    %10 = vector.load %arg7[%c0_15, %c0_16] : memref<1x32xf32, #tpu.memory_space<vmem>>, vector<1x32xf32>
    %c0_17 = arith.constant 0 : index
    %c0_18 = arith.constant 0 : index
    %11 = vector.load %arg8[%c0_17, %c0_18] : memref<1x32xf32, #tpu.memory_space<vmem>>, vector<1x32xf32>
    %c0_19 = arith.constant 0 : index
    %c0_20 = arith.constant 0 : index
    %12 = vector.load %arg9[%c0_19, %c0_20] : memref<1x32xf32, #tpu.memory_space<vmem>>, vector<1x32xf32>
    %13 = arith.addf %4, %5 : vector<8x8x32xbf16>
    %14 = vector.shape_cast %13 : vector<8x8x32xbf16> to vector<64x32xbf16>
    %cst = arith.constant dense<0.000000e+00> : vector<64x32xf32>
    %15 = tpu.matmul %14, %6, %cst {dimension_numbers = #tpu.dot_dimension_numbers<[1], [0], [0], [1], [0, 0, 1, 1], [], []>} : vector<64x32xbf16>, vector<32x32xbf16>, vector<64x32xf32> -> vector<64x32xf32>
    %16 = vector.broadcast %9 : vector<1x32xf32> to vector<64x32xf32>
    %17 = arith.mulf %15, %16 : vector<64x32xf32>
    %18 = vector.broadcast %10 : vector<1x32xf32> to vector<64x32xf32>
    %19 = arith.addf %17, %18 : vector<64x32xf32>
    %cst_21 = arith.constant 0.000000e+00 : f32
    %20 = vector.broadcast %cst_21 : f32 to vector<64x32xf32>
    %21 = arith.maximumf %19, %20 : vector<64x32xf32>
    %22 = arith.negf %21 : vector<64x32xf32>
    %23 = math.exp %22 : vector<64x32xf32>
    %cst_22 = arith.constant 1.000000e+00 : f32
    %24 = vector.broadcast %cst_22 : f32 to vector<64x32xf32>
    %25 = arith.addf %24, %23 : vector<64x32xf32>
    %26 = arith.divf %24, %25 : vector<64x32xf32>
    %27 = vector.shape_cast %4 : vector<8x8x32xbf16> to vector<64x32xbf16>
    %cst_23 = arith.constant dense<0.000000e+00> : vector<64x32xf32>
    %28 = tpu.matmul %27, %7, %cst_23 {dimension_numbers = #tpu.dot_dimension_numbers<[1], [0], [0], [1], [0, 0, 1, 1], [], []>} : vector<64x32xbf16>, vector<32x32xbf16>, vector<64x32xf32> -> vector<64x32xf32>
    %29 = vector.shape_cast %5 : vector<8x8x32xbf16> to vector<64x32xbf16>
    %cst_24 = arith.constant dense<0.000000e+00> : vector<64x32xf32>
    %30 = tpu.matmul %29, %8, %cst_24 {dimension_numbers = #tpu.dot_dimension_numbers<[1], [0], [0], [1], [0, 0, 1, 1], [], []>} : vector<64x32xbf16>, vector<32x32xbf16>, vector<64x32xf32> -> vector<64x32xf32>
    %31 = arith.addf %28, %30 : vector<64x32xf32>
    %32 = vector.broadcast %11 : vector<1x32xf32> to vector<64x32xf32>
    %33 = arith.mulf %31, %32 : vector<64x32xf32>
    %34 = vector.broadcast %12 : vector<1x32xf32> to vector<64x32xf32>
    %35 = arith.addf %33, %34 : vector<64x32xf32>
    %cst_25 = arith.constant 0.000000e+00 : f32
    %36 = vector.broadcast %cst_25 : f32 to vector<64x32xf32>
    %37 = arith.maximumf %35, %36 : vector<64x32xf32>
    %cst_26 = arith.constant 0.000000e+00 : f32
    %38 = vector.broadcast %cst_26 : f32 to vector<8x8x32xf32>
    %39 = vector.extract_strided_slice %1 {offsets = [0, 0, 0], sizes = [8, 8, 32], strides = [1, 1, 1]} : vector<10x10x32xbf16> to vector<8x8x32xbf16>
    %40 = arith.extf %39 : vector<8x8x32xbf16> to vector<8x8x32xf32>
    %41 = arith.addf %38, %40 : vector<8x8x32xf32>
    %42 = vector.extract_strided_slice %1 {offsets = [0, 1, 0], sizes = [8, 8, 32], strides = [1, 1, 1]} : vector<10x10x32xbf16> to vector<8x8x32xbf16>
    %43 = arith.extf %42 : vector<8x8x32xbf16> to vector<8x8x32xf32>
    %44 = arith.addf %41, %43 : vector<8x8x32xf32>
    %45 = vector.extract_strided_slice %1 {offsets = [0, 2, 0], sizes = [8, 8, 32], strides = [1, 1, 1]} : vector<10x10x32xbf16> to vector<8x8x32xbf16>
    %46 = arith.extf %45 : vector<8x8x32xbf16> to vector<8x8x32xf32>
    %47 = arith.addf %44, %46 : vector<8x8x32xf32>
    %48 = vector.extract_strided_slice %1 {offsets = [1, 0, 0], sizes = [8, 8, 32], strides = [1, 1, 1]} : vector<10x10x32xbf16> to vector<8x8x32xbf16>
    %49 = arith.extf %48 : vector<8x8x32xbf16> to vector<8x8x32xf32>
    %50 = arith.addf %47, %49 : vector<8x8x32xf32>
    %51 = vector.extract_strided_slice %1 {offsets = [1, 1, 0], sizes = [8, 8, 32], strides = [1, 1, 1]} : vector<10x10x32xbf16> to vector<8x8x32xbf16>
    %52 = arith.extf %51 : vector<8x8x32xbf16> to vector<8x8x32xf32>
    %53 = arith.addf %50, %52 : vector<8x8x32xf32>
    %54 = vector.extract_strided_slice %1 {offsets = [1, 2, 0], sizes = [8, 8, 32], strides = [1, 1, 1]} : vector<10x10x32xbf16> to vector<8x8x32xbf16>
    %55 = arith.extf %54 : vector<8x8x32xbf16> to vector<8x8x32xf32>
    %56 = arith.addf %53, %55 : vector<8x8x32xf32>
    %57 = vector.extract_strided_slice %1 {offsets = [2, 0, 0], sizes = [8, 8, 32], strides = [1, 1, 1]} : vector<10x10x32xbf16> to vector<8x8x32xbf16>
    %58 = arith.extf %57 : vector<8x8x32xbf16> to vector<8x8x32xf32>
    %59 = arith.addf %56, %58 : vector<8x8x32xf32>
    %60 = vector.extract_strided_slice %1 {offsets = [2, 1, 0], sizes = [8, 8, 32], strides = [1, 1, 1]} : vector<10x10x32xbf16> to vector<8x8x32xbf16>
    %61 = arith.extf %60 : vector<8x8x32xbf16> to vector<8x8x32xf32>
    %62 = arith.addf %59, %61 : vector<8x8x32xf32>
    %63 = vector.extract_strided_slice %1 {offsets = [2, 2, 0], sizes = [8, 8, 32], strides = [1, 1, 1]} : vector<10x10x32xbf16> to vector<8x8x32xbf16>
    %64 = arith.extf %63 : vector<8x8x32xbf16> to vector<8x8x32xf32>
    %65 = arith.addf %62, %64 : vector<8x8x32xf32>
    %cst_27 = arith.constant 0.111111112 : f32
    %66 = vector.broadcast %cst_27 : f32 to vector<8x8x32xf32>
    %67 = arith.mulf %65, %66 : vector<8x8x32xf32>
    %68 = arith.truncf %67 : vector<8x8x32xf32> to vector<8x8x32xbf16>
    %69 = vector.shape_cast %68 : vector<8x8x32xbf16> to vector<64x32xbf16>
    %cst_28 = arith.constant dense<0.000000e+00> : vector<64x32xf32>
    %70 = tpu.matmul %69, %7, %cst_28 {dimension_numbers = #tpu.dot_dimension_numbers<[1], [0], [0], [1], [0, 0, 1, 1], [], []>} : vector<64x32xbf16>, vector<32x32xbf16>, vector<64x32xf32> -> vector<64x32xf32>
    %cst_29 = arith.constant 0.000000e+00 : f32
    %71 = vector.broadcast %cst_29 : f32 to vector<8x8x32xf32>
    %72 = vector.extract_strided_slice %3 {offsets = [0, 0, 0], sizes = [8, 8, 32], strides = [1, 1, 1]} : vector<10x10x32xbf16> to vector<8x8x32xbf16>
    %73 = arith.extf %72 : vector<8x8x32xbf16> to vector<8x8x32xf32>
    %74 = arith.addf %71, %73 : vector<8x8x32xf32>
    %75 = vector.extract_strided_slice %3 {offsets = [0, 1, 0], sizes = [8, 8, 32], strides = [1, 1, 1]} : vector<10x10x32xbf16> to vector<8x8x32xbf16>
    %76 = arith.extf %75 : vector<8x8x32xbf16> to vector<8x8x32xf32>
    %77 = arith.addf %74, %76 : vector<8x8x32xf32>
    %78 = vector.extract_strided_slice %3 {offsets = [0, 2, 0], sizes = [8, 8, 32], strides = [1, 1, 1]} : vector<10x10x32xbf16> to vector<8x8x32xbf16>
    %79 = arith.extf %78 : vector<8x8x32xbf16> to vector<8x8x32xf32>
    %80 = arith.addf %77, %79 : vector<8x8x32xf32>
    %81 = vector.extract_strided_slice %3 {offsets = [1, 0, 0], sizes = [8, 8, 32], strides = [1, 1, 1]} : vector<10x10x32xbf16> to vector<8x8x32xbf16>
    %82 = arith.extf %81 : vector<8x8x32xbf16> to vector<8x8x32xf32>
    %83 = arith.addf %80, %82 : vector<8x8x32xf32>
    %84 = vector.extract_strided_slice %3 {offsets = [1, 1, 0], sizes = [8, 8, 32], strides = [1, 1, 1]} : vector<10x10x32xbf16> to vector<8x8x32xbf16>
    %85 = arith.extf %84 : vector<8x8x32xbf16> to vector<8x8x32xf32>
    %86 = arith.addf %83, %85 : vector<8x8x32xf32>
    %87 = vector.extract_strided_slice %3 {offsets = [1, 2, 0], sizes = [8, 8, 32], strides = [1, 1, 1]} : vector<10x10x32xbf16> to vector<8x8x32xbf16>
    %88 = arith.extf %87 : vector<8x8x32xbf16> to vector<8x8x32xf32>
    %89 = arith.addf %86, %88 : vector<8x8x32xf32>
    %90 = vector.extract_strided_slice %3 {offsets = [2, 0, 0], sizes = [8, 8, 32], strides = [1, 1, 1]} : vector<10x10x32xbf16> to vector<8x8x32xbf16>
    %91 = arith.extf %90 : vector<8x8x32xbf16> to vector<8x8x32xf32>
    %92 = arith.addf %89, %91 : vector<8x8x32xf32>
    %93 = vector.extract_strided_slice %3 {offsets = [2, 1, 0], sizes = [8, 8, 32], strides = [1, 1, 1]} : vector<10x10x32xbf16> to vector<8x8x32xbf16>
    %94 = arith.extf %93 : vector<8x8x32xbf16> to vector<8x8x32xf32>
    %95 = arith.addf %92, %94 : vector<8x8x32xf32>
    %96 = vector.extract_strided_slice %3 {offsets = [2, 2, 0], sizes = [8, 8, 32], strides = [1, 1, 1]} : vector<10x10x32xbf16> to vector<8x8x32xbf16>
    %97 = arith.extf %96 : vector<8x8x32xbf16> to vector<8x8x32xf32>
    %98 = arith.addf %95, %97 : vector<8x8x32xf32>
    %cst_30 = arith.constant 0.111111112 : f32
    %99 = vector.broadcast %cst_30 : f32 to vector<8x8x32xf32>
    %100 = arith.mulf %98, %99 : vector<8x8x32xf32>
    %101 = arith.truncf %100 : vector<8x8x32xf32> to vector<8x8x32xbf16>
    %102 = vector.shape_cast %101 : vector<8x8x32xbf16> to vector<64x32xbf16>
    %cst_31 = arith.constant dense<0.000000e+00> : vector<64x32xf32>
    %103 = tpu.matmul %102, %8, %cst_31 {dimension_numbers = #tpu.dot_dimension_numbers<[1], [0], [0], [1], [0, 0, 1, 1], [], []>} : vector<64x32xbf16>, vector<32x32xbf16>, vector<64x32xf32> -> vector<64x32xf32>
    %104 = arith.addf %70, %103 : vector<64x32xf32>
    %105 = vector.broadcast %11 : vector<1x32xf32> to vector<64x32xf32>
    %106 = arith.mulf %104, %105 : vector<64x32xf32>
    %107 = vector.broadcast %12 : vector<1x32xf32> to vector<64x32xf32>
    %108 = arith.addf %106, %107 : vector<64x32xf32>
    %cst_32 = arith.constant 0.000000e+00 : f32
    %109 = vector.broadcast %cst_32 : f32 to vector<64x32xf32>
    %110 = arith.maximumf %108, %109 : vector<64x32xf32>
    %111 = arith.negf %110 : vector<64x32xf32>
    %112 = math.exp %111 : vector<64x32xf32>
    %cst_33 = arith.constant 1.000000e+00 : f32
    %113 = vector.broadcast %cst_33 : f32 to vector<64x32xf32>
    %114 = arith.addf %113, %112 : vector<64x32xf32>
    %115 = arith.divf %113, %114 : vector<64x32xf32>
    %116 = arith.mulf %115, %37 : vector<64x32xf32>
    %117 = arith.mulf %116, %26 : vector<64x32xf32>
    %118 = vector.shape_cast %117 : vector<64x32xf32> to vector<8x8x32xf32>
    %119 = arith.truncf %118 : vector<8x8x32xf32> to vector<8x8x32xbf16>
    %c0_34 = arith.constant 0 : index
    %c0_35 = arith.constant 0 : index
    %c0_36 = arith.constant 0 : index
    %c0_37 = arith.constant 0 : index
    %120 = vector.load %arg10[%c0_34, %c0_35, %c0_36, %c0_37] : memref<1x8x8x32xbf16, #tpu.memory_space<vmem>>, vector<1x8x8x32xbf16>
    %121 = vector.shape_cast %120 : vector<1x8x8x32xbf16> to vector<8x8x32xbf16>
    %122 = vector.shape_cast %119 : vector<8x8x32xbf16> to vector<1x8x8x32xbf16>
    tpu.vector_store %arg10[%c0_34, %c0_35, %c0_36, %c0_37], %122 {strides = array<i32>} : memref<1x8x8x32xbf16, #tpu.memory_space<vmem>>, vector<1x8x8x32xbf16>,
    return
  }
  func.func @transform_0(%arg0: i32) -> (i32, i32, i32, i32) {
    %c0_i32 = arith.constant 0 : i32
    %c0_i32_0 = arith.constant 0 : i32
    %c0_i32_1 = arith.constant 0 : i32
    %c0_i32_2 = arith.constant 0 : i32
    return %arg0, %c0_i32, %c0_i32_0, %c0_i32_1 : i32, i32, i32, i32
  }
  func.func @transform_1(%arg0: i32) -> (i32, i32, i32, i32) {
    %c0_i32 = arith.constant 0 : i32
    %c0_i32_0 = arith.constant 0 : i32
    %c0_i32_1 = arith.constant 0 : i32
    %c0_i32_2 = arith.constant 0 : i32
    return %arg0, %c0_i32, %c0_i32_0, %c0_i32_1 : i32, i32, i32, i32
  }
  func.func @transform_2(%arg0: i32) -> (i32, i32) {
    %c0_i32 = arith.constant 0 : i32
    %c0_i32_0 = arith.constant 0 : i32
    %c0_i32_1 = arith.constant 0 : i32
    return %c0_i32, %c0_i32_0 : i32, i32
  }
  func.func @transform_3(%arg0: i32) -> (i32, i32) {
    %c0_i32 = arith.constant 0 : i32
    %c0_i32_0 = arith.constant 0 : i32
    %c0_i32_1 = arith.constant 0 : i32
    return %c0_i32, %c0_i32_0 : i32, i32
  }
  func.func @transform_4(%arg0: i32) -> (i32, i32) {
    %c0_i32 = arith.constant 0 : i32
    %c0_i32_0 = arith.constant 0 : i32
    %c0_i32_1 = arith.constant 0 : i32
    return %c0_i32, %c0_i32_0 : i32, i32
  }
  func.func @transform_5(%arg0: i32) -> (i32, i32) {
    %c0_i32 = arith.constant 0 : i32
    %c0_i32_0 = arith.constant 0 : i32
    %c0_i32_1 = arith.constant 0 : i32
    return %c0_i32, %c0_i32_0 : i32, i32
  }
  func.func @transform_6(%arg0: i32) -> (i32, i32) {
    %c0_i32 = arith.constant 0 : i32
    %c0_i32_0 = arith.constant 0 : i32
    %c0_i32_1 = arith.constant 0 : i32
    return %c0_i32, %c0_i32_0 : i32, i32
  }
  func.func @transform_7(%arg0: i32) -> (i32, i32) {
    %c0_i32 = arith.constant 0 : i32
    %c0_i32_0 = arith.constant 0 : i32
    %c0_i32_1 = arith.constant 0 : i32
    return %c0_i32, %c0_i32_0 : i32, i32
  }
  func.func @transform_8(%arg0: i32) -> (i32, i32) {
    %c0_i32 = arith.constant 0 : i32
    %c0_i32_0 = arith.constant 0 : i32
    %c0_i32_1 = arith.constant 0 : i32
    return %c0_i32, %c0_i32_0 : i32, i32
  }
  func.func @transform_9(%arg0: i32) -> (i32, i32, i32, i32) {
    %c0_i32 = arith.constant 0 : i32
    %c0_i32_0 = arith.constant 0 : i32
    %c0_i32_1 = arith.constant 0 : i32
    %c0_i32_2 = arith.constant 0 : i32
    return %arg0, %c0_i32, %c0_i32_0, %c0_i32_1 : i32, i32, i32, i32
  }
}

module attributes {stable_mosaic.version = 11 : i64} {
  func.func @_mm_kernel(%arg0: i32, %arg1: memref<128x32xbf16, #tpu.memory_space<vmem>>, %arg2: memref<32x64xbf16, #tpu.memory_space<vmem>>, %arg3: memref<1x64xf32, #tpu.memory_space<vmem>>, %arg4: memref<1x64xf32, #tpu.memory_space<vmem>>, %arg5: memref<128x64xbf16, #tpu.memory_space<vmem>>) attributes {dimension_semantics = [#tpu.dimension_semantics<parallel>], iteration_bounds = array<i64: 1>, scalar_prefetch = 0 : i64, scratch_operands = 0 : i64, tpu.core_type = #tpu.core_type<tc>, window_params = [{transform_indices = @transform_0, window_bounds = array<i64: 128, 32>}, {pipeline_mode = #tpu.pipeline_mode<synchronous>, transform_indices = @transform_1, window_bounds = array<i64: 32, 64>}, {pipeline_mode = #tpu.pipeline_mode<synchronous>, transform_indices = @transform_2, window_bounds = array<i64: 1, 64>}, {pipeline_mode = #tpu.pipeline_mode<synchronous>, transform_indices = @transform_3, window_bounds = array<i64: 1, 64>}, {transform_indices = @transform_4, window_bounds = array<i64: 128, 64>}]} {
    %c0 = arith.constant 0 : index
    %c0_0 = arith.constant 0 : index
    %0 = vector.load %arg1[%c0, %c0_0] : memref<128x32xbf16, #tpu.memory_space<vmem>>, vector<128x32xbf16>
    %c0_1 = arith.constant 0 : index
    %c0_2 = arith.constant 0 : index
    %1 = vector.load %arg2[%c0_1, %c0_2] : memref<32x64xbf16, #tpu.memory_space<vmem>>, vector<32x64xbf16>
    %cst = arith.constant dense<0.000000e+00> : vector<128x64xf32>
    %2 = tpu.matmul %0, %1, %cst {dimension_numbers = #tpu.dot_dimension_numbers<[1], [0], [0], [1], [0, 0, 1, 1], [], []>} : vector<128x32xbf16>, vector<32x64xbf16>, vector<128x64xf32> -> vector<128x64xf32>
    %c0_3 = arith.constant 0 : index
    %c0_4 = arith.constant 0 : index
    %3 = vector.load %arg3[%c0_3, %c0_4] : memref<1x64xf32, #tpu.memory_space<vmem>>, vector<1x64xf32>
    %4 = vector.broadcast %3 : vector<1x64xf32> to vector<128x64xf32>
    %5 = arith.mulf %2, %4 : vector<128x64xf32>
    %c0_5 = arith.constant 0 : index
    %c0_6 = arith.constant 0 : index
    %6 = vector.load %arg4[%c0_5, %c0_6] : memref<1x64xf32, #tpu.memory_space<vmem>>, vector<1x64xf32>
    %7 = vector.broadcast %6 : vector<1x64xf32> to vector<128x64xf32>
    %8 = arith.addf %5, %7 : vector<128x64xf32>
    %9 = tpu.iota {dimensions = array<i32: 1>} : vector<128x64xi32>
    %c32_i32 = arith.constant 32 : i32
    %10 = vector.broadcast %c32_i32 : i32 to vector<128x64xi32>
    %11 = arith.cmpi sge, %9, %10 : vector<128x64xi32>
    %cst_7 = arith.constant 0.000000e+00 : f32
    %12 = vector.broadcast %cst_7 : f32 to vector<128x64xf32>
    %13 = arith.maximumf %8, %12 : vector<128x64xf32>
    %14 = arith.select %11, %13, %8 : vector<128x64xi1>, vector<128x64xf32>
    %15 = arith.truncf %14 : vector<128x64xf32> to vector<128x64xbf16>
    %c0_8 = arith.constant 0 : index
    %c0_9 = arith.constant 0 : index
    %16 = vector.load %arg5[%c0_8, %c0_9] : memref<128x64xbf16, #tpu.memory_space<vmem>>, vector<128x64xbf16>
    tpu.vector_store %arg5[%c0_8, %c0_9], %15 {strides = array<i32>} : memref<128x64xbf16, #tpu.memory_space<vmem>>, vector<128x64xbf16>,
    return
  }
  func.func @transform_0(%arg0: i32) -> (i32, i32) {
    %c0_i32 = arith.constant 0 : i32
    %c0_i32_0 = arith.constant 0 : i32
    return %arg0, %c0_i32 : i32, i32
  }
  func.func @transform_1(%arg0: i32) -> (i32, i32) {
    %c0_i32 = arith.constant 0 : i32
    %c0_i32_0 = arith.constant 0 : i32
    %c0_i32_1 = arith.constant 0 : i32
    return %c0_i32, %c0_i32_0 : i32, i32
  }
  func.func @transform_2(%arg0: i32) -> (i32, i32) {
    %c0_i32 = arith.constant 0 : i32
    %c0_i32_0 = arith.constant 0 : i32
    %c0_i32_1 = arith.constant 0 : i32
    return %c0_i32, %c0_i32_0 : i32, i32
  }
  func.func @transform_3(%arg0: i32) -> (i32, i32) {
    %c0_i32 = arith.constant 0 : i32
    %c0_i32_0 = arith.constant 0 : i32
    %c0_i32_1 = arith.constant 0 : i32
    return %c0_i32, %c0_i32_0 : i32, i32
  }
  func.func @transform_4(%arg0: i32) -> (i32, i32) {
    %c0_i32 = arith.constant 0 : i32
    %c0_i32_0 = arith.constant 0 : i32
    return %arg0, %c0_i32 : i32, i32
  }
}

module attributes {stable_mosaic.version = 11 : i64} {
  func.func @_dw_pw_kernel(%arg0: i32, %arg1: memref<1x10x10x32xbf16, #tpu.memory_space<vmem>>, %arg2: memref<9x32xbf16, #tpu.memory_space<vmem>>, %arg3: memref<32x32xbf16, #tpu.memory_space<vmem>>, %arg4: memref<1x32xf32, #tpu.memory_space<vmem>>, %arg5: memref<1x32xf32, #tpu.memory_space<vmem>>, %arg6: memref<1x8x8x32xbf16, #tpu.memory_space<vmem>>) attributes {dimension_semantics = [#tpu.dimension_semantics<parallel>], iteration_bounds = array<i64: 2>, scalar_prefetch = 0 : i64, scratch_operands = 0 : i64, tpu.core_type = #tpu.core_type<tc>, window_params = [{transform_indices = @transform_0, window_bounds = array<i64: 1, 10, 10, 32>}, {pipeline_mode = #tpu.pipeline_mode<synchronous>, transform_indices = @transform_1, window_bounds = array<i64: 9, 32>}, {pipeline_mode = #tpu.pipeline_mode<synchronous>, transform_indices = @transform_2, window_bounds = array<i64: 32, 32>}, {pipeline_mode = #tpu.pipeline_mode<synchronous>, transform_indices = @transform_3, window_bounds = array<i64: 1, 32>}, {pipeline_mode = #tpu.pipeline_mode<synchronous>, transform_indices = @transform_4, window_bounds = array<i64: 1, 32>}, {transform_indices = @transform_5, window_bounds = array<i64: 1, 8, 8, 32>}]} {
    %c0 = arith.constant 0 : index
    %c0_0 = arith.constant 0 : index
    %c0_1 = arith.constant 0 : index
    %c0_2 = arith.constant 0 : index
    %0 = vector.load %arg1[%c0, %c0_0, %c0_1, %c0_2] : memref<1x10x10x32xbf16, #tpu.memory_space<vmem>>, vector<1x10x10x32xbf16>
    %1 = vector.shape_cast %0 : vector<1x10x10x32xbf16> to vector<10x10x32xbf16>
    %c0_3 = arith.constant 0 : index
    %c0_4 = arith.constant 0 : index
    %2 = vector.load %arg2[%c0_3, %c0_4] : memref<9x32xbf16, #tpu.memory_space<vmem>>, vector<9x32xbf16>
    %3 = arith.extf %2 : vector<9x32xbf16> to vector<9x32xf32>
    %cst = arith.constant 0.000000e+00 : f32
    %4 = vector.broadcast %cst : f32 to vector<8x8x32xf32>
    %5 = vector.extract_strided_slice %1 {offsets = [0, 0, 0], sizes = [8, 8, 32], strides = [1, 1, 1]} : vector<10x10x32xbf16> to vector<8x8x32xbf16>
    %6 = arith.extf %5 : vector<8x8x32xbf16> to vector<8x8x32xf32>
    %7 = vector.extract_strided_slice %3 {offsets = [0, 0], sizes = [1, 32], strides = [1, 1]} : vector<9x32xf32> to vector<1x32xf32>
    %8 = vector.shape_cast %7 : vector<1x32xf32> to vector<32xf32>
    %9 = vector.shape_cast %8 : vector<32xf32> to vector<1x1x32xf32>
    %10 = vector.broadcast %9 : vector<1x1x32xf32> to vector<8x8x32xf32>
    %11 = arith.mulf %6, %10 : vector<8x8x32xf32>
    %12 = arith.addf %4, %11 : vector<8x8x32xf32>
    %13 = vector.extract_strided_slice %1 {offsets = [0, 1, 0], sizes = [8, 8, 32], strides = [1, 1, 1]} : vector<10x10x32xbf16> to vector<8x8x32xbf16>
    %14 = arith.extf %13 : vector<8x8x32xbf16> to vector<8x8x32xf32>
    %15 = vector.extract_strided_slice %3 {offsets = [1, 0], sizes = [1, 32], strides = [1, 1]} : vector<9x32xf32> to vector<1x32xf32>
    %16 = vector.shape_cast %15 : vector<1x32xf32> to vector<32xf32>
    %17 = vector.shape_cast %16 : vector<32xf32> to vector<1x1x32xf32>
    %18 = vector.broadcast %17 : vector<1x1x32xf32> to vector<8x8x32xf32>
    %19 = arith.mulf %14, %18 : vector<8x8x32xf32>
    %20 = arith.addf %12, %19 : vector<8x8x32xf32>
    %21 = vector.extract_strided_slice %1 {offsets = [0, 2, 0], sizes = [8, 8, 32], strides = [1, 1, 1]} : vector<10x10x32xbf16> to vector<8x8x32xbf16>
    %22 = arith.extf %21 : vector<8x8x32xbf16> to vector<8x8x32xf32>
    %23 = vector.extract_strided_slice %3 {offsets = [2, 0], sizes = [1, 32], strides = [1, 1]} : vector<9x32xf32> to vector<1x32xf32>
    %24 = vector.shape_cast %23 : vector<1x32xf32> to vector<32xf32>
    %25 = vector.shape_cast %24 : vector<32xf32> to vector<1x1x32xf32>
    %26 = vector.broadcast %25 : vector<1x1x32xf32> to vector<8x8x32xf32>
    %27 = arith.mulf %22, %26 : vector<8x8x32xf32>
    %28 = arith.addf %20, %27 : vector<8x8x32xf32>
    %29 = vector.extract_strided_slice %1 {offsets = [1, 0, 0], sizes = [8, 8, 32], strides = [1, 1, 1]} : vector<10x10x32xbf16> to vector<8x8x32xbf16>
    %30 = arith.extf %29 : vector<8x8x32xbf16> to vector<8x8x32xf32>
    %31 = vector.extract_strided_slice %3 {offsets = [3, 0], sizes = [1, 32], strides = [1, 1]} : vector<9x32xf32> to vector<1x32xf32>
    %32 = vector.shape_cast %31 : vector<1x32xf32> to vector<32xf32>
    %33 = vector.shape_cast %32 : vector<32xf32> to vector<1x1x32xf32>
    %34 = vector.broadcast %33 : vector<1x1x32xf32> to vector<8x8x32xf32>
    %35 = arith.mulf %30, %34 : vector<8x8x32xf32>
    %36 = arith.addf %28, %35 : vector<8x8x32xf32>
    %37 = vector.extract_strided_slice %1 {offsets = [1, 1, 0], sizes = [8, 8, 32], strides = [1, 1, 1]} : vector<10x10x32xbf16> to vector<8x8x32xbf16>
    %38 = arith.extf %37 : vector<8x8x32xbf16> to vector<8x8x32xf32>
    %39 = vector.extract_strided_slice %3 {offsets = [4, 0], sizes = [1, 32], strides = [1, 1]} : vector<9x32xf32> to vector<1x32xf32>
    %40 = vector.shape_cast %39 : vector<1x32xf32> to vector<32xf32>
    %41 = vector.shape_cast %40 : vector<32xf32> to vector<1x1x32xf32>
    %42 = vector.broadcast %41 : vector<1x1x32xf32> to vector<8x8x32xf32>
    %43 = arith.mulf %38, %42 : vector<8x8x32xf32>
    %44 = arith.addf %36, %43 : vector<8x8x32xf32>
    %45 = vector.extract_strided_slice %1 {offsets = [1, 2, 0], sizes = [8, 8, 32], strides = [1, 1, 1]} : vector<10x10x32xbf16> to vector<8x8x32xbf16>
    %46 = arith.extf %45 : vector<8x8x32xbf16> to vector<8x8x32xf32>
    %47 = vector.extract_strided_slice %3 {offsets = [5, 0], sizes = [1, 32], strides = [1, 1]} : vector<9x32xf32> to vector<1x32xf32>
    %48 = vector.shape_cast %47 : vector<1x32xf32> to vector<32xf32>
    %49 = vector.shape_cast %48 : vector<32xf32> to vector<1x1x32xf32>
    %50 = vector.broadcast %49 : vector<1x1x32xf32> to vector<8x8x32xf32>
    %51 = arith.mulf %46, %50 : vector<8x8x32xf32>
    %52 = arith.addf %44, %51 : vector<8x8x32xf32>
    %53 = vector.extract_strided_slice %1 {offsets = [2, 0, 0], sizes = [8, 8, 32], strides = [1, 1, 1]} : vector<10x10x32xbf16> to vector<8x8x32xbf16>
    %54 = arith.extf %53 : vector<8x8x32xbf16> to vector<8x8x32xf32>
    %55 = vector.extract_strided_slice %3 {offsets = [6, 0], sizes = [1, 32], strides = [1, 1]} : vector<9x32xf32> to vector<1x32xf32>
    %56 = vector.shape_cast %55 : vector<1x32xf32> to vector<32xf32>
    %57 = vector.shape_cast %56 : vector<32xf32> to vector<1x1x32xf32>
    %58 = vector.broadcast %57 : vector<1x1x32xf32> to vector<8x8x32xf32>
    %59 = arith.mulf %54, %58 : vector<8x8x32xf32>
    %60 = arith.addf %52, %59 : vector<8x8x32xf32>
    %61 = vector.extract_strided_slice %1 {offsets = [2, 1, 0], sizes = [8, 8, 32], strides = [1, 1, 1]} : vector<10x10x32xbf16> to vector<8x8x32xbf16>
    %62 = arith.extf %61 : vector<8x8x32xbf16> to vector<8x8x32xf32>
    %63 = vector.extract_strided_slice %3 {offsets = [7, 0], sizes = [1, 32], strides = [1, 1]} : vector<9x32xf32> to vector<1x32xf32>
    %64 = vector.shape_cast %63 : vector<1x32xf32> to vector<32xf32>
    %65 = vector.shape_cast %64 : vector<32xf32> to vector<1x1x32xf32>
    %66 = vector.broadcast %65 : vector<1x1x32xf32> to vector<8x8x32xf32>
    %67 = arith.mulf %62, %66 : vector<8x8x32xf32>
    %68 = arith.addf %60, %67 : vector<8x8x32xf32>
    %69 = vector.extract_strided_slice %1 {offsets = [2, 2, 0], sizes = [8, 8, 32], strides = [1, 1, 1]} : vector<10x10x32xbf16> to vector<8x8x32xbf16>
    %70 = arith.extf %69 : vector<8x8x32xbf16> to vector<8x8x32xf32>
    %71 = vector.extract_strided_slice %3 {offsets = [8, 0], sizes = [1, 32], strides = [1, 1]} : vector<9x32xf32> to vector<1x32xf32>
    %72 = vector.shape_cast %71 : vector<1x32xf32> to vector<32xf32>
    %73 = vector.shape_cast %72 : vector<32xf32> to vector<1x1x32xf32>
    %74 = vector.broadcast %73 : vector<1x1x32xf32> to vector<8x8x32xf32>
    %75 = arith.mulf %70, %74 : vector<8x8x32xf32>
    %76 = arith.addf %68, %75 : vector<8x8x32xf32>
    %77 = arith.truncf %76 : vector<8x8x32xf32> to vector<8x8x32xbf16>
    %78 = vector.shape_cast %77 : vector<8x8x32xbf16> to vector<64x32xbf16>
    %c0_5 = arith.constant 0 : index
    %c0_6 = arith.constant 0 : index
    %79 = vector.load %arg3[%c0_5, %c0_6] : memref<32x32xbf16, #tpu.memory_space<vmem>>, vector<32x32xbf16>
    %cst_7 = arith.constant dense<0.000000e+00> : vector<64x32xf32>
    %80 = tpu.matmul %78, %79, %cst_7 {dimension_numbers = #tpu.dot_dimension_numbers<[1], [0], [0], [1], [0, 0, 1, 1], [], []>} : vector<64x32xbf16>, vector<32x32xbf16>, vector<64x32xf32> -> vector<64x32xf32>
    %c0_8 = arith.constant 0 : index
    %c0_9 = arith.constant 0 : index
    %81 = vector.load %arg4[%c0_8, %c0_9] : memref<1x32xf32, #tpu.memory_space<vmem>>, vector<1x32xf32>
    %82 = vector.broadcast %81 : vector<1x32xf32> to vector<64x32xf32>
    %83 = arith.mulf %80, %82 : vector<64x32xf32>
    %c0_10 = arith.constant 0 : index
    %c0_11 = arith.constant 0 : index
    %84 = vector.load %arg5[%c0_10, %c0_11] : memref<1x32xf32, #tpu.memory_space<vmem>>, vector<1x32xf32>
    %85 = vector.broadcast %84 : vector<1x32xf32> to vector<64x32xf32>
    %86 = arith.addf %83, %85 : vector<64x32xf32>
    %cst_12 = arith.constant 0.000000e+00 : f32
    %87 = vector.broadcast %cst_12 : f32 to vector<64x32xf32>
    %88 = arith.maximumf %86, %87 : vector<64x32xf32>
    %89 = vector.shape_cast %88 : vector<64x32xf32> to vector<8x8x32xf32>
    %90 = arith.truncf %89 : vector<8x8x32xf32> to vector<8x8x32xbf16>
    %c0_13 = arith.constant 0 : index
    %c0_14 = arith.constant 0 : index
    %c0_15 = arith.constant 0 : index
    %c0_16 = arith.constant 0 : index
    %91 = vector.load %arg6[%c0_13, %c0_14, %c0_15, %c0_16] : memref<1x8x8x32xbf16, #tpu.memory_space<vmem>>, vector<1x8x8x32xbf16>
    %92 = vector.shape_cast %91 : vector<1x8x8x32xbf16> to vector<8x8x32xbf16>
    %93 = vector.shape_cast %90 : vector<8x8x32xbf16> to vector<1x8x8x32xbf16>
    tpu.vector_store %arg6[%c0_13, %c0_14, %c0_15, %c0_16], %93 {strides = array<i32>} : memref<1x8x8x32xbf16, #tpu.memory_space<vmem>>, vector<1x8x8x32xbf16>,
    return
  }
  func.func @transform_0(%arg0: i32) -> (i32, i32, i32, i32) {
    %c0_i32 = arith.constant 0 : i32
    %c0_i32_0 = arith.constant 0 : i32
    %c0_i32_1 = arith.constant 0 : i32
    %c0_i32_2 = arith.constant 0 : i32
    return %arg0, %c0_i32, %c0_i32_0, %c0_i32_1 : i32, i32, i32, i32
  }
  func.func @transform_1(%arg0: i32) -> (i32, i32) {
    %c0_i32 = arith.constant 0 : i32
    %c0_i32_0 = arith.constant 0 : i32
    %c0_i32_1 = arith.constant 0 : i32
    return %c0_i32, %c0_i32_0 : i32, i32
  }
  func.func @transform_2(%arg0: i32) -> (i32, i32) {
    %c0_i32 = arith.constant 0 : i32
    %c0_i32_0 = arith.constant 0 : i32
    %c0_i32_1 = arith.constant 0 : i32
    return %c0_i32, %c0_i32_0 : i32, i32
  }
  func.func @transform_3(%arg0: i32) -> (i32, i32) {
    %c0_i32 = arith.constant 0 : i32
    %c0_i32_0 = arith.constant 0 : i32
    %c0_i32_1 = arith.constant 0 : i32
    return %c0_i32, %c0_i32_0 : i32, i32
  }
  func.func @transform_4(%arg0: i32) -> (i32, i32) {
    %c0_i32 = arith.constant 0 : i32
    %c0_i32_0 = arith.constant 0 : i32
    %c0_i32_1 = arith.constant 0 : i32
    return %c0_i32, %c0_i32_0 : i32, i32
  }
  func.func @transform_5(%arg0: i32) -> (i32, i32, i32, i32) {
    %c0_i32 = arith.constant 0 : i32
    %c0_i32_0 = arith.constant 0 : i32
    %c0_i32_1 = arith.constant 0 : i32
    %c0_i32_2 = arith.constant 0 : i32
    return %arg0, %c0_i32, %c0_i32_0, %c0_i32_1 : i32, i32, i32, i32
  }
}

module attributes {stable_mosaic.version = 11 : i64} {
  func.func @_flash_attn_kernel(%arg0: i32, %arg1: i32, %arg2: i32, %arg3: memref<1x64x16xbf16, #tpu.memory_space<vmem>>, %arg4: memref<1x64x16xbf16, #tpu.memory_space<vmem>>, %arg5: memref<1x64x16xbf16, #tpu.memory_space<vmem>>, %arg6: memref<1x64x16xbf16, #tpu.memory_space<vmem>>, %arg7: memref<64x1xf32, #tpu.memory_space<vmem>>, %arg8: memref<64x1xf32, #tpu.memory_space<vmem>>, %arg9: memref<64x16xf32, #tpu.memory_space<vmem>>) attributes {dimension_semantics = [#tpu.dimension_semantics<parallel>, #tpu.dimension_semantics<parallel>, #tpu.dimension_semantics<arbitrary>], iteration_bounds = array<i64: 8, 1, 1>, scalar_prefetch = 0 : i64, scratch_operands = 3 : i64, tpu.core_type = #tpu.core_type<tc>, window_params = [{transform_indices = @transform_0, window_bounds = array<i64: 1, 64, 16>}, {transform_indices = @transform_1, window_bounds = array<i64: 1, 64, 16>}, {transform_indices = @transform_2, window_bounds = array<i64: 1, 64, 16>}, {transform_indices = @transform_3, window_bounds = array<i64: 1, 64, 16>}]} {
    %c0_i32 = arith.constant 0 : i32
    %0 = arith.cmpi eq, %arg2, %c0_i32 : i32
    %1 = arith.extui %0 : i1 to i32
    %c0_i32_0 = arith.constant 0 : i32
    %2 = arith.cmpi ne, %1, %c0_i32_0 : i32
    scf.if %2 {
      %cst_27 = arith.constant 0xFF800000 : f32
      %38 = vector.broadcast %cst_27 : f32 to vector<64x1xf32>
      %c0_28 = arith.constant 0 : index
      %c0_29 = arith.constant 0 : index
      %39 = vector.load %arg7[%c0_28, %c0_29] : memref<64x1xf32, #tpu.memory_space<vmem>>, vector<64x1xf32>
      tpu.vector_store %arg7[%c0_28, %c0_29], %38 {strides = array<i32>} : memref<64x1xf32, #tpu.memory_space<vmem>>, vector<64x1xf32>,
      %cst_30 = arith.constant 0.000000e+00 : f32
      %40 = vector.broadcast %cst_30 : f32 to vector<64x1xf32>
      %c0_31 = arith.constant 0 : index
      %c0_32 = arith.constant 0 : index
      %41 = vector.load %arg8[%c0_31, %c0_32] : memref<64x1xf32, #tpu.memory_space<vmem>>, vector<64x1xf32>
      tpu.vector_store %arg8[%c0_31, %c0_32], %40 {strides = array<i32>} : memref<64x1xf32, #tpu.memory_space<vmem>>, vector<64x1xf32>,
      %cst_33 = arith.constant 0.000000e+00 : f32
      %42 = vector.broadcast %cst_33 : f32 to vector<64x16xf32>
      %c0_34 = arith.constant 0 : index
      %c0_35 = arith.constant 0 : index
      %43 = vector.load %arg9[%c0_34, %c0_35] : memref<64x16xf32, #tpu.memory_space<vmem>>, vector<64x16xf32>
      tpu.vector_store %arg9[%c0_34, %c0_35], %42 {strides = array<i32>} : memref<64x16xf32, #tpu.memory_space<vmem>>, vector<64x16xf32>,
    } else {
    }
    %c0 = arith.constant 0 : index
    %c0_1 = arith.constant 0 : index
    %c0_2 = arith.constant 0 : index
    %3 = vector.load %arg3[%c0, %c0_1, %c0_2] : memref<1x64x16xbf16, #tpu.memory_space<vmem>>, vector<1x64x16xbf16>
    %4 = vector.shape_cast %3 : vector<1x64x16xbf16> to vector<64x16xbf16>
    %c0_3 = arith.constant 0 : index
    %c0_4 = arith.constant 0 : index
    %c0_5 = arith.constant 0 : index
    %5 = vector.load %arg4[%c0_3, %c0_4, %c0_5] : memref<1x64x16xbf16, #tpu.memory_space<vmem>>, vector<1x64x16xbf16>
    %6 = vector.shape_cast %5 : vector<1x64x16xbf16> to vector<64x16xbf16>
    %c0_6 = arith.constant 0 : index
    %c0_7 = arith.constant 0 : index
    %c0_8 = arith.constant 0 : index
    %7 = vector.load %arg5[%c0_6, %c0_7, %c0_8] : memref<1x64x16xbf16, #tpu.memory_space<vmem>>, vector<1x64x16xbf16>
    %8 = vector.shape_cast %7 : vector<1x64x16xbf16> to vector<64x16xbf16>
    %cst = arith.constant dense<0.000000e+00> : vector<64x64xf32>
    %9 = tpu.matmul %4, %6, %cst {dimension_numbers = #tpu.dot_dimension_numbers<[1], [1], [0], [0], [0, 0, 1, 0], [], []>} : vector<64x16xbf16>, vector<64x16xbf16>, vector<64x64xf32> -> vector<64x64xf32>
    %cst_9 = arith.constant 2.500000e-01 : f32
    %10 = vector.broadcast %cst_9 : f32 to vector<64x64xf32>
    %11 = arith.mulf %9, %10 : vector<64x64xf32>
    %c0_10 = arith.constant 0 : index
    %c0_11 = arith.constant 0 : index
    %12 = vector.load %arg7[%c0_10, %c0_11] : memref<64x1xf32, #tpu.memory_space<vmem>>, vector<64x1xf32>
    %cst_12 = arith.constant dense<0xFF800000> : vector<64xf32>
    %13 = vector.multi_reduction <maximumf>, %11, %cst_12 [1] : vector<64x64xf32> to vector<64xf32>
    %14 = vector.shape_cast %13 : vector<64xf32> to vector<64x1xf32>
    %15 = arith.maximumf %12, %14 : vector<64x1xf32>
    %16 = arith.subf %12, %15 : vector<64x1xf32>
    %17 = math.exp %16 : vector<64x1xf32>
    %18 = vector.broadcast %15 : vector<64x1xf32> to vector<64x64xf32>
    %19 = arith.subf %11, %18 : vector<64x64xf32>
    %20 = math.exp %19 : vector<64x64xf32>
    %c0_13 = arith.constant 0 : index
    %c0_14 = arith.constant 0 : index
    %21 = vector.load %arg8[%c0_13, %c0_14] : memref<64x1xf32, #tpu.memory_space<vmem>>, vector<64x1xf32>
    %22 = arith.mulf %17, %21 : vector<64x1xf32>
    %cst_15 = arith.constant dense<0.000000e+00> : vector<64xf32>
    %23 = vector.multi_reduction <add>, %20, %cst_15 [1] : vector<64x64xf32> to vector<64xf32>
    %24 = vector.shape_cast %23 : vector<64xf32> to vector<64x1xf32>
    %25 = arith.addf %22, %24 : vector<64x1xf32>
    %c0_16 = arith.constant 0 : index
    %c0_17 = arith.constant 0 : index
    %26 = vector.load %arg8[%c0_16, %c0_17] : memref<64x1xf32, #tpu.memory_space<vmem>>, vector<64x1xf32>
    tpu.vector_store %arg8[%c0_16, %c0_17], %25 {strides = array<i32>} : memref<64x1xf32, #tpu.memory_space<vmem>>, vector<64x1xf32>,
    %c0_18 = arith.constant 0 : index
    %c0_19 = arith.constant 0 : index
    %27 = vector.load %arg9[%c0_18, %c0_19] : memref<64x16xf32, #tpu.memory_space<vmem>>, vector<64x16xf32>
    %28 = vector.broadcast %17 : vector<64x1xf32> to vector<64x16xf32>
    %29 = arith.mulf %28, %27 : vector<64x16xf32>
    %30 = arith.truncf %20 : vector<64x64xf32> to vector<64x64xbf16>
    %cst_20 = arith.constant dense<0.000000e+00> : vector<64x16xf32>
    %31 = tpu.matmul %30, %8, %cst_20 {dimension_numbers = #tpu.dot_dimension_numbers<[1], [0], [0], [1], [0, 0, 1, 1], [], []>} : vector<64x64xbf16>, vector<64x16xbf16>, vector<64x16xf32> -> vector<64x16xf32>
    %32 = arith.addf %29, %31 : vector<64x16xf32>
    %c0_21 = arith.constant 0 : index
    %c0_22 = arith.constant 0 : index
    %33 = vector.load %arg9[%c0_21, %c0_22] : memref<64x16xf32, #tpu.memory_space<vmem>>, vector<64x16xf32>
    tpu.vector_store %arg9[%c0_21, %c0_22], %32 {strides = array<i32>} : memref<64x16xf32, #tpu.memory_space<vmem>>, vector<64x16xf32>,
    %c0_23 = arith.constant 0 : index
    %c0_24 = arith.constant 0 : index
    %34 = vector.load %arg7[%c0_23, %c0_24] : memref<64x1xf32, #tpu.memory_space<vmem>>, vector<64x1xf32>
    tpu.vector_store %arg7[%c0_23, %c0_24], %15 {strides = array<i32>} : memref<64x1xf32, #tpu.memory_space<vmem>>, vector<64x1xf32>,
    %c0_i32_25 = arith.constant 0 : i32
    %35 = arith.cmpi eq, %arg2, %c0_i32_25 : i32
    %36 = arith.extui %35 : i1 to i32
    %c0_i32_26 = arith.constant 0 : i32
    %37 = arith.cmpi ne, %36, %c0_i32_26 : i32
    scf.if %37 {
      %c0_27 = arith.constant 0 : index
      %c0_28 = arith.constant 0 : index
      %38 = vector.load %arg9[%c0_27, %c0_28] : memref<64x16xf32, #tpu.memory_space<vmem>>, vector<64x16xf32>
      %c0_29 = arith.constant 0 : index
      %c0_30 = arith.constant 0 : index
      %39 = vector.load %arg8[%c0_29, %c0_30] : memref<64x1xf32, #tpu.memory_space<vmem>>, vector<64x1xf32>
      %40 = tpu.reciprocal %39 {approx = true} : vector<64x1xf32> -> vector<64x1xf32>
      %41 = vector.broadcast %40 : vector<64x1xf32> to vector<64x16xf32>
      %42 = arith.mulf %38, %41 : vector<64x16xf32>
      %43 = arith.truncf %42 : vector<64x16xf32> to vector<64x16xbf16>
      %c0_31 = arith.constant 0 : index
      %c0_32 = arith.constant 0 : index
      %c0_33 = arith.constant 0 : index
      %44 = vector.load %arg6[%c0_31, %c0_32, %c0_33] : memref<1x64x16xbf16, #tpu.memory_space<vmem>>, vector<1x64x16xbf16>
      %45 = vector.shape_cast %44 : vector<1x64x16xbf16> to vector<64x16xbf16>
      %46 = vector.shape_cast %43 : vector<64x16xbf16> to vector<1x64x16xbf16>
      tpu.vector_store %arg6[%c0_31, %c0_32, %c0_33], %46 {strides = array<i32>} : memref<1x64x16xbf16, #tpu.memory_space<vmem>>, vector<1x64x16xbf16>,
    } else {
    }
    return
  }
  func.func @transform_0(%arg0: i32, %arg1: i32, %arg2: i32) -> (i32, i32, i32) {
    %c0_i32 = arith.constant 0 : i32
    %c0_i32_0 = arith.constant 0 : i32
    return %arg0, %arg1, %c0_i32 : i32, i32, i32
  }
  func.func @transform_1(%arg0: i32, %arg1: i32, %arg2: i32) -> (i32, i32, i32) {
    %c0_i32 = arith.constant 0 : i32
    %c0_i32_0 = arith.constant 0 : i32
    return %arg0, %arg2, %c0_i32 : i32, i32, i32
  }
  func.func @transform_2(%arg0: i32, %arg1: i32, %arg2: i32) -> (i32, i32, i32) {
    %c0_i32 = arith.constant 0 : i32
    %c0_i32_0 = arith.constant 0 : i32
    return %arg0, %arg2, %c0_i32 : i32, i32, i32
  }
  func.func @transform_3(%arg0: i32, %arg1: i32, %arg2: i32) -> (i32, i32, i32) {
    %c0_i32 = arith.constant 0 : i32
    %c0_i32_0 = arith.constant 0 : i32
    return %arg0, %arg1, %c0_i32 : i32, i32, i32
  }
}

module attributes {stable_mosaic.version = 11 : i64} {
  func.func @_mm_kernel(%arg0: i32, %arg1: memref<128x64xbf16, #tpu.memory_space<vmem>>, %arg2: memref<64x64xbf16, #tpu.memory_space<vmem>>, %arg3: memref<1x64xf32, #tpu.memory_space<vmem>>, %arg4: memref<1x64xf32, #tpu.memory_space<vmem>>, %arg5: memref<128x64xbf16, #tpu.memory_space<vmem>>) attributes {dimension_semantics = [#tpu.dimension_semantics<parallel>], iteration_bounds = array<i64: 1>, scalar_prefetch = 0 : i64, scratch_operands = 0 : i64, tpu.core_type = #tpu.core_type<tc>, window_params = [{transform_indices = @transform_0, window_bounds = array<i64: 128, 64>}, {pipeline_mode = #tpu.pipeline_mode<synchronous>, transform_indices = @transform_1, window_bounds = array<i64: 64, 64>}, {pipeline_mode = #tpu.pipeline_mode<synchronous>, transform_indices = @transform_2, window_bounds = array<i64: 1, 64>}, {pipeline_mode = #tpu.pipeline_mode<synchronous>, transform_indices = @transform_3, window_bounds = array<i64: 1, 64>}, {transform_indices = @transform_4, window_bounds = array<i64: 128, 64>}]} {
    %c0 = arith.constant 0 : index
    %c0_0 = arith.constant 0 : index
    %0 = vector.load %arg1[%c0, %c0_0] : memref<128x64xbf16, #tpu.memory_space<vmem>>, vector<128x64xbf16>
    %c0_1 = arith.constant 0 : index
    %c0_2 = arith.constant 0 : index
    %1 = vector.load %arg2[%c0_1, %c0_2] : memref<64x64xbf16, #tpu.memory_space<vmem>>, vector<64x64xbf16>
    %cst = arith.constant dense<0.000000e+00> : vector<128x64xf32>
    %2 = tpu.matmul %0, %1, %cst {dimension_numbers = #tpu.dot_dimension_numbers<[1], [0], [0], [1], [0, 0, 1, 1], [], []>} : vector<128x64xbf16>, vector<64x64xbf16>, vector<128x64xf32> -> vector<128x64xf32>
    %c0_3 = arith.constant 0 : index
    %c0_4 = arith.constant 0 : index
    %3 = vector.load %arg3[%c0_3, %c0_4] : memref<1x64xf32, #tpu.memory_space<vmem>>, vector<1x64xf32>
    %4 = vector.broadcast %3 : vector<1x64xf32> to vector<128x64xf32>
    %5 = arith.mulf %2, %4 : vector<128x64xf32>
    %c0_5 = arith.constant 0 : index
    %c0_6 = arith.constant 0 : index
    %6 = vector.load %arg4[%c0_5, %c0_6] : memref<1x64xf32, #tpu.memory_space<vmem>>, vector<1x64xf32>
    %7 = vector.broadcast %6 : vector<1x64xf32> to vector<128x64xf32>
    %8 = arith.addf %5, %7 : vector<128x64xf32>
    %9 = tpu.iota {dimensions = array<i32: 1>} : vector<128x64xi32>
    %c32_i32 = arith.constant 32 : i32
    %10 = vector.broadcast %c32_i32 : i32 to vector<128x64xi32>
    %11 = arith.cmpi sge, %9, %10 : vector<128x64xi32>
    %cst_7 = arith.constant 0.000000e+00 : f32
    %12 = vector.broadcast %cst_7 : f32 to vector<128x64xf32>
    %13 = arith.maximumf %8, %12 : vector<128x64xf32>
    %14 = arith.select %11, %13, %8 : vector<128x64xi1>, vector<128x64xf32>
    %15 = arith.truncf %14 : vector<128x64xf32> to vector<128x64xbf16>
    %c0_8 = arith.constant 0 : index
    %c0_9 = arith.constant 0 : index
    %16 = vector.load %arg5[%c0_8, %c0_9] : memref<128x64xbf16, #tpu.memory_space<vmem>>, vector<128x64xbf16>
    tpu.vector_store %arg5[%c0_8, %c0_9], %15 {strides = array<i32>} : memref<128x64xbf16, #tpu.memory_space<vmem>>, vector<128x64xbf16>,
    return
  }
  func.func @transform_0(%arg0: i32) -> (i32, i32) {
    %c0_i32 = arith.constant 0 : i32
    %c0_i32_0 = arith.constant 0 : i32
    return %arg0, %c0_i32 : i32, i32
  }
  func.func @transform_1(%arg0: i32) -> (i32, i32) {
    %c0_i32 = arith.constant 0 : i32
    %c0_i32_0 = arith.constant 0 : i32
    %c0_i32_1 = arith.constant 0 : i32
    return %c0_i32, %c0_i32_0 : i32, i32
  }
  func.func @transform_2(%arg0: i32) -> (i32, i32) {
    %c0_i32 = arith.constant 0 : i32
    %c0_i32_0 = arith.constant 0 : i32
    %c0_i32_1 = arith.constant 0 : i32
    return %c0_i32, %c0_i32_0 : i32, i32
  }
  func.func @transform_3(%arg0: i32) -> (i32, i32) {
    %c0_i32 = arith.constant 0 : i32
    %c0_i32_0 = arith.constant 0 : i32
    %c0_i32_1 = arith.constant 0 : i32
    return %c0_i32, %c0_i32_0 : i32, i32
  }
  func.func @transform_4(%arg0: i32) -> (i32, i32) {
    %c0_i32 = arith.constant 0 : i32
    %c0_i32_0 = arith.constant 0 : i32
    return %arg0, %c0_i32 : i32, i32
  }
}

module attributes {stable_mosaic.version = 11 : i64} {
  func.func @_mm2_kernel(%arg0: i32, %arg1: memref<128x32xbf16, #tpu.memory_space<vmem>>, %arg2: memref<128x32xbf16, #tpu.memory_space<vmem>>, %arg3: memref<32x32xbf16, #tpu.memory_space<vmem>>, %arg4: memref<32x32xbf16, #tpu.memory_space<vmem>>, %arg5: memref<1x32xf32, #tpu.memory_space<vmem>>, %arg6: memref<1x32xf32, #tpu.memory_space<vmem>>, %arg7: memref<128x32xf32, #tpu.memory_space<vmem>>) attributes {dimension_semantics = [#tpu.dimension_semantics<parallel>], iteration_bounds = array<i64: 1>, scalar_prefetch = 0 : i64, scratch_operands = 0 : i64, tpu.core_type = #tpu.core_type<tc>, window_params = [{transform_indices = @transform_0, window_bounds = array<i64: 128, 32>}, {transform_indices = @transform_1, window_bounds = array<i64: 128, 32>}, {pipeline_mode = #tpu.pipeline_mode<synchronous>, transform_indices = @transform_2, window_bounds = array<i64: 32, 32>}, {pipeline_mode = #tpu.pipeline_mode<synchronous>, transform_indices = @transform_3, window_bounds = array<i64: 32, 32>}, {pipeline_mode = #tpu.pipeline_mode<synchronous>, transform_indices = @transform_4, window_bounds = array<i64: 1, 32>}, {pipeline_mode = #tpu.pipeline_mode<synchronous>, transform_indices = @transform_5, window_bounds = array<i64: 1, 32>}, {transform_indices = @transform_6, window_bounds = array<i64: 128, 32>}]} {
    %c0 = arith.constant 0 : index
    %c0_0 = arith.constant 0 : index
    %0 = vector.load %arg1[%c0, %c0_0] : memref<128x32xbf16, #tpu.memory_space<vmem>>, vector<128x32xbf16>
    %c0_1 = arith.constant 0 : index
    %c0_2 = arith.constant 0 : index
    %1 = vector.load %arg3[%c0_1, %c0_2] : memref<32x32xbf16, #tpu.memory_space<vmem>>, vector<32x32xbf16>
    %cst = arith.constant dense<0.000000e+00> : vector<128x32xf32>
    %2 = tpu.matmul %0, %1, %cst {dimension_numbers = #tpu.dot_dimension_numbers<[1], [0], [0], [1], [0, 0, 1, 1], [], []>} : vector<128x32xbf16>, vector<32x32xbf16>, vector<128x32xf32> -> vector<128x32xf32>
    %c0_3 = arith.constant 0 : index
    %c0_4 = arith.constant 0 : index
    %3 = vector.load %arg2[%c0_3, %c0_4] : memref<128x32xbf16, #tpu.memory_space<vmem>>, vector<128x32xbf16>
    %c0_5 = arith.constant 0 : index
    %c0_6 = arith.constant 0 : index
    %4 = vector.load %arg4[%c0_5, %c0_6] : memref<32x32xbf16, #tpu.memory_space<vmem>>, vector<32x32xbf16>
    %cst_7 = arith.constant dense<0.000000e+00> : vector<128x32xf32>
    %5 = tpu.matmul %3, %4, %cst_7 {dimension_numbers = #tpu.dot_dimension_numbers<[1], [0], [0], [1], [0, 0, 1, 1], [], []>} : vector<128x32xbf16>, vector<32x32xbf16>, vector<128x32xf32> -> vector<128x32xf32>
    %6 = arith.addf %2, %5 : vector<128x32xf32>
    %c0_8 = arith.constant 0 : index
    %c0_9 = arith.constant 0 : index
    %7 = vector.load %arg5[%c0_8, %c0_9] : memref<1x32xf32, #tpu.memory_space<vmem>>, vector<1x32xf32>
    %8 = vector.broadcast %7 : vector<1x32xf32> to vector<128x32xf32>
    %9 = arith.mulf %6, %8 : vector<128x32xf32>
    %c0_10 = arith.constant 0 : index
    %c0_11 = arith.constant 0 : index
    %10 = vector.load %arg6[%c0_10, %c0_11] : memref<1x32xf32, #tpu.memory_space<vmem>>, vector<1x32xf32>
    %11 = vector.broadcast %10 : vector<1x32xf32> to vector<128x32xf32>
    %12 = arith.addf %9, %11 : vector<128x32xf32>
    %cst_12 = arith.constant 0.000000e+00 : f32
    %13 = vector.broadcast %cst_12 : f32 to vector<128x32xf32>
    %14 = arith.maximumf %12, %13 : vector<128x32xf32>
    %c0_13 = arith.constant 0 : index
    %c0_14 = arith.constant 0 : index
    %15 = vector.load %arg7[%c0_13, %c0_14] : memref<128x32xf32, #tpu.memory_space<vmem>>, vector<128x32xf32>
    tpu.vector_store %arg7[%c0_13, %c0_14], %14 {strides = array<i32>} : memref<128x32xf32, #tpu.memory_space<vmem>>, vector<128x32xf32>,
    return
  }
  func.func @transform_0(%arg0: i32) -> (i32, i32) {
    %c0_i32 = arith.constant 0 : i32
    %c0_i32_0 = arith.constant 0 : i32
    return %arg0, %c0_i32 : i32, i32
  }
  func.func @transform_1(%arg0: i32) -> (i32, i32) {
    %c0_i32 = arith.constant 0 : i32
    %c0_i32_0 = arith.constant 0 : i32
    return %arg0, %c0_i32 : i32, i32
  }
  func.func @transform_2(%arg0: i32) -> (i32, i32) {
    %c0_i32 = arith.constant 0 : i32
    %c0_i32_0 = arith.constant 0 : i32
    %c0_i32_1 = arith.constant 0 : i32
    return %c0_i32, %c0_i32_0 : i32, i32
  }
  func.func @transform_3(%arg0: i32) -> (i32, i32) {
    %c0_i32 = arith.constant 0 : i32
    %c0_i32_0 = arith.constant 0 : i32
    %c0_i32_1 = arith.constant 0 : i32
    return %c0_i32, %c0_i32_0 : i32, i32
  }
  func.func @transform_4(%arg0: i32) -> (i32, i32) {
    %c0_i32 = arith.constant 0 : i32
    %c0_i32_0 = arith.constant 0 : i32
    %c0_i32_1 = arith.constant 0 : i32
    return %c0_i32, %c0_i32_0 : i32, i32
  }
  func.func @transform_5(%arg0: i32) -> (i32, i32) {
    %c0_i32 = arith.constant 0 : i32
    %c0_i32_0 = arith.constant 0 : i32
    %c0_i32_1 = arith.constant 0 : i32
    return %c0_i32, %c0_i32_0 : i32, i32
  }
  func.func @transform_6(%arg0: i32) -> (i32, i32) {
    %c0_i32 = arith.constant 0 : i32
    %c0_i32_0 = arith.constant 0 : i32
    return %arg0, %c0_i32 : i32, i32
  }
}

module attributes {stable_mosaic.version = 11 : i64} {
  func.func @_flash_attn_kernel(%arg0: i32, %arg1: i32, %arg2: i32, %arg3: memref<1x64x32xbf16, #tpu.memory_space<vmem>>, %arg4: memref<1x64x32xbf16, #tpu.memory_space<vmem>>, %arg5: memref<1x64x32xbf16, #tpu.memory_space<vmem>>, %arg6: memref<1x64x32xbf16, #tpu.memory_space<vmem>>, %arg7: memref<64x1xf32, #tpu.memory_space<vmem>>, %arg8: memref<64x1xf32, #tpu.memory_space<vmem>>, %arg9: memref<64x32xf32, #tpu.memory_space<vmem>>) attributes {dimension_semantics = [#tpu.dimension_semantics<parallel>, #tpu.dimension_semantics<parallel>, #tpu.dimension_semantics<arbitrary>], iteration_bounds = array<i64: 2, 1, 1>, scalar_prefetch = 0 : i64, scratch_operands = 3 : i64, tpu.core_type = #tpu.core_type<tc>, window_params = [{transform_indices = @transform_0, window_bounds = array<i64: 1, 64, 32>}, {transform_indices = @transform_1, window_bounds = array<i64: 1, 64, 32>}, {transform_indices = @transform_2, window_bounds = array<i64: 1, 64, 32>}, {transform_indices = @transform_3, window_bounds = array<i64: 1, 64, 32>}]} {
    %c0_i32 = arith.constant 0 : i32
    %0 = arith.cmpi eq, %arg2, %c0_i32 : i32
    %1 = arith.extui %0 : i1 to i32
    %c0_i32_0 = arith.constant 0 : i32
    %2 = arith.cmpi ne, %1, %c0_i32_0 : i32
    scf.if %2 {
      %cst_27 = arith.constant 0xFF800000 : f32
      %38 = vector.broadcast %cst_27 : f32 to vector<64x1xf32>
      %c0_28 = arith.constant 0 : index
      %c0_29 = arith.constant 0 : index
      %39 = vector.load %arg7[%c0_28, %c0_29] : memref<64x1xf32, #tpu.memory_space<vmem>>, vector<64x1xf32>
      tpu.vector_store %arg7[%c0_28, %c0_29], %38 {strides = array<i32>} : memref<64x1xf32, #tpu.memory_space<vmem>>, vector<64x1xf32>,
      %cst_30 = arith.constant 0.000000e+00 : f32
      %40 = vector.broadcast %cst_30 : f32 to vector<64x1xf32>
      %c0_31 = arith.constant 0 : index
      %c0_32 = arith.constant 0 : index
      %41 = vector.load %arg8[%c0_31, %c0_32] : memref<64x1xf32, #tpu.memory_space<vmem>>, vector<64x1xf32>
      tpu.vector_store %arg8[%c0_31, %c0_32], %40 {strides = array<i32>} : memref<64x1xf32, #tpu.memory_space<vmem>>, vector<64x1xf32>,
      %cst_33 = arith.constant 0.000000e+00 : f32
      %42 = vector.broadcast %cst_33 : f32 to vector<64x32xf32>
      %c0_34 = arith.constant 0 : index
      %c0_35 = arith.constant 0 : index
      %43 = vector.load %arg9[%c0_34, %c0_35] : memref<64x32xf32, #tpu.memory_space<vmem>>, vector<64x32xf32>
      tpu.vector_store %arg9[%c0_34, %c0_35], %42 {strides = array<i32>} : memref<64x32xf32, #tpu.memory_space<vmem>>, vector<64x32xf32>,
    } else {
    }
    %c0 = arith.constant 0 : index
    %c0_1 = arith.constant 0 : index
    %c0_2 = arith.constant 0 : index
    %3 = vector.load %arg3[%c0, %c0_1, %c0_2] : memref<1x64x32xbf16, #tpu.memory_space<vmem>>, vector<1x64x32xbf16>
    %4 = vector.shape_cast %3 : vector<1x64x32xbf16> to vector<64x32xbf16>
    %c0_3 = arith.constant 0 : index
    %c0_4 = arith.constant 0 : index
    %c0_5 = arith.constant 0 : index
    %5 = vector.load %arg4[%c0_3, %c0_4, %c0_5] : memref<1x64x32xbf16, #tpu.memory_space<vmem>>, vector<1x64x32xbf16>
    %6 = vector.shape_cast %5 : vector<1x64x32xbf16> to vector<64x32xbf16>
    %c0_6 = arith.constant 0 : index
    %c0_7 = arith.constant 0 : index
    %c0_8 = arith.constant 0 : index
    %7 = vector.load %arg5[%c0_6, %c0_7, %c0_8] : memref<1x64x32xbf16, #tpu.memory_space<vmem>>, vector<1x64x32xbf16>
    %8 = vector.shape_cast %7 : vector<1x64x32xbf16> to vector<64x32xbf16>
    %cst = arith.constant dense<0.000000e+00> : vector<64x64xf32>
    %9 = tpu.matmul %4, %6, %cst {dimension_numbers = #tpu.dot_dimension_numbers<[1], [1], [0], [0], [0, 0, 1, 0], [], []>} : vector<64x32xbf16>, vector<64x32xbf16>, vector<64x64xf32> -> vector<64x64xf32>
    %cst_9 = arith.constant 1.000000e+00 : f32
    %10 = vector.broadcast %cst_9 : f32 to vector<64x64xf32>
    %11 = arith.mulf %9, %10 : vector<64x64xf32>
    %c0_10 = arith.constant 0 : index
    %c0_11 = arith.constant 0 : index
    %12 = vector.load %arg7[%c0_10, %c0_11] : memref<64x1xf32, #tpu.memory_space<vmem>>, vector<64x1xf32>
    %cst_12 = arith.constant dense<0xFF800000> : vector<64xf32>
    %13 = vector.multi_reduction <maximumf>, %11, %cst_12 [1] : vector<64x64xf32> to vector<64xf32>
    %14 = vector.shape_cast %13 : vector<64xf32> to vector<64x1xf32>
    %15 = arith.maximumf %12, %14 : vector<64x1xf32>
    %16 = arith.subf %12, %15 : vector<64x1xf32>
    %17 = math.exp %16 : vector<64x1xf32>
    %18 = vector.broadcast %15 : vector<64x1xf32> to vector<64x64xf32>
    %19 = arith.subf %11, %18 : vector<64x64xf32>
    %20 = math.exp %19 : vector<64x64xf32>
    %c0_13 = arith.constant 0 : index
    %c0_14 = arith.constant 0 : index
    %21 = vector.load %arg8[%c0_13, %c0_14] : memref<64x1xf32, #tpu.memory_space<vmem>>, vector<64x1xf32>
    %22 = arith.mulf %17, %21 : vector<64x1xf32>
    %cst_15 = arith.constant dense<0.000000e+00> : vector<64xf32>
    %23 = vector.multi_reduction <add>, %20, %cst_15 [1] : vector<64x64xf32> to vector<64xf32>
    %24 = vector.shape_cast %23 : vector<64xf32> to vector<64x1xf32>
    %25 = arith.addf %22, %24 : vector<64x1xf32>
    %c0_16 = arith.constant 0 : index
    %c0_17 = arith.constant 0 : index
    %26 = vector.load %arg8[%c0_16, %c0_17] : memref<64x1xf32, #tpu.memory_space<vmem>>, vector<64x1xf32>
    tpu.vector_store %arg8[%c0_16, %c0_17], %25 {strides = array<i32>} : memref<64x1xf32, #tpu.memory_space<vmem>>, vector<64x1xf32>,
    %c0_18 = arith.constant 0 : index
    %c0_19 = arith.constant 0 : index
    %27 = vector.load %arg9[%c0_18, %c0_19] : memref<64x32xf32, #tpu.memory_space<vmem>>, vector<64x32xf32>
    %28 = vector.broadcast %17 : vector<64x1xf32> to vector<64x32xf32>
    %29 = arith.mulf %28, %27 : vector<64x32xf32>
    %30 = arith.truncf %20 : vector<64x64xf32> to vector<64x64xbf16>
    %cst_20 = arith.constant dense<0.000000e+00> : vector<64x32xf32>
    %31 = tpu.matmul %30, %8, %cst_20 {dimension_numbers = #tpu.dot_dimension_numbers<[1], [0], [0], [1], [0, 0, 1, 1], [], []>} : vector<64x64xbf16>, vector<64x32xbf16>, vector<64x32xf32> -> vector<64x32xf32>
    %32 = arith.addf %29, %31 : vector<64x32xf32>
    %c0_21 = arith.constant 0 : index
    %c0_22 = arith.constant 0 : index
    %33 = vector.load %arg9[%c0_21, %c0_22] : memref<64x32xf32, #tpu.memory_space<vmem>>, vector<64x32xf32>
    tpu.vector_store %arg9[%c0_21, %c0_22], %32 {strides = array<i32>} : memref<64x32xf32, #tpu.memory_space<vmem>>, vector<64x32xf32>,
    %c0_23 = arith.constant 0 : index
    %c0_24 = arith.constant 0 : index
    %34 = vector.load %arg7[%c0_23, %c0_24] : memref<64x1xf32, #tpu.memory_space<vmem>>, vector<64x1xf32>
    tpu.vector_store %arg7[%c0_23, %c0_24], %15 {strides = array<i32>} : memref<64x1xf32, #tpu.memory_space<vmem>>, vector<64x1xf32>,
    %c0_i32_25 = arith.constant 0 : i32
    %35 = arith.cmpi eq, %arg2, %c0_i32_25 : i32
    %36 = arith.extui %35 : i1 to i32
    %c0_i32_26 = arith.constant 0 : i32
    %37 = arith.cmpi ne, %36, %c0_i32_26 : i32
    scf.if %37 {
      %c0_27 = arith.constant 0 : index
      %c0_28 = arith.constant 0 : index
      %38 = vector.load %arg9[%c0_27, %c0_28] : memref<64x32xf32, #tpu.memory_space<vmem>>, vector<64x32xf32>
      %c0_29 = arith.constant 0 : index
      %c0_30 = arith.constant 0 : index
      %39 = vector.load %arg8[%c0_29, %c0_30] : memref<64x1xf32, #tpu.memory_space<vmem>>, vector<64x1xf32>
      %40 = tpu.reciprocal %39 {approx = true} : vector<64x1xf32> -> vector<64x1xf32>
      %41 = vector.broadcast %40 : vector<64x1xf32> to vector<64x32xf32>
      %42 = arith.mulf %38, %41 : vector<64x32xf32>
      %43 = arith.truncf %42 : vector<64x32xf32> to vector<64x32xbf16>
      %c0_31 = arith.constant 0 : index
      %c0_32 = arith.constant 0 : index
      %c0_33 = arith.constant 0 : index
      %44 = vector.load %arg6[%c0_31, %c0_32, %c0_33] : memref<1x64x32xbf16, #tpu.memory_space<vmem>>, vector<1x64x32xbf16>
      %45 = vector.shape_cast %44 : vector<1x64x32xbf16> to vector<64x32xbf16>
      %46 = vector.shape_cast %43 : vector<64x32xbf16> to vector<1x64x32xbf16>
      tpu.vector_store %arg6[%c0_31, %c0_32, %c0_33], %46 {strides = array<i32>} : memref<1x64x32xbf16, #tpu.memory_space<vmem>>, vector<1x64x32xbf16>,
    } else {
    }
    return
  }
  func.func @transform_0(%arg0: i32, %arg1: i32, %arg2: i32) -> (i32, i32, i32) {
    %c0_i32 = arith.constant 0 : i32
    %c0_i32_0 = arith.constant 0 : i32
    return %arg0, %arg1, %c0_i32 : i32, i32, i32
  }
  func.func @transform_1(%arg0: i32, %arg1: i32, %arg2: i32) -> (i32, i32, i32) {
    %c0_i32 = arith.constant 0 : i32
    %c0_i32_0 = arith.constant 0 : i32
    return %arg0, %arg2, %c0_i32 : i32, i32, i32
  }
  func.func @transform_2(%arg0: i32, %arg1: i32, %arg2: i32) -> (i32, i32, i32) {
    %c0_i32 = arith.constant 0 : i32
    %c0_i32_0 = arith.constant 0 : i32
    return %arg0, %arg2, %c0_i32 : i32, i32, i32
  }
  func.func @transform_3(%arg0: i32, %arg1: i32, %arg2: i32) -> (i32, i32, i32) {
    %c0_i32 = arith.constant 0 : i32
    %c0_i32_0 = arith.constant 0 : i32
    return %arg0, %arg1, %c0_i32 : i32, i32, i32
  }
}

</mosaic_0001>

<llo_original>
// kernel: cfm_forward.13
$region0: #{cfm_forward.13}
  #allocation0 [shape = 'u32[]', space=smem, size = 0x4, offset = 0x4, fixed_abs, tag = 'smem constant byte address 0x4 - core index']
  #allocation1 [shape = 'u32[144,128]{1,0:T(1,128)}', space=vmem, size = 0x12000, scoped, tag = 'internal scratch']
  %s0 = inlined_call_operand.vmem [shape: bf16[32,32], index: 0, kind: input, shape index: {}]
  %s1 = inlined_call_operand.vmem [shape: bf16[32,32], index: 1, kind: input, shape index: {}]
  %s2 = inlined_call_operand.vmem [shape: f32[1,32], index: 2, kind: input, shape index: {}]
  %s3 = inlined_call_operand.vmem [shape: f32[1,32], index: 3, kind: input, shape index: {}]
  %s4 = inlined_call_operand.vmem [shape: bf16[32,32], index: 4, kind: output, shape index: {}]
  %s5 = sld [smem:[#allocation0]]
  $region26: #{cfm_forward.13} parent=0
    _
  %s7 = ssub.s32 1, %s5
  %s8 = scalar_select 0, %s7, %s5
  // Predicated region
  $region2: #{cfm_forward.13} parent=0 // pred_check
    _
  $region3: #{cfm_forward.13} parent=0 // pred_check_branch
    %10 = sbr.rel (0) target = $region5
  $region4: #{cfm_forward.13} parent=0 // pred_region
    _
  $region5: #{cfm_forward.13} parent=0 // pred_fallthru
    _
  // Predicated region
  $region6: #{cfm_forward.13} parent=0 // pred_check
    _
  $region7: #{cfm_forward.13} parent=0 // pred_check_branch
    %12 = sbr.rel (0) target = $region9
  $region8: #{cfm_forward.13} parent=0 // pred_region
    _
  $region9: #{cfm_forward.13} parent=0 // pred_fallthru
    _
  // Predicated region
  $region10: #{cfm_forward.13} parent=0 // pred_check
    _
  $region11: #{cfm_forward.13} parent=0 // pred_check_branch
    %14 = sbr.rel (0) target = $region13
  $region12: #{cfm_forward.13} parent=0 // pred_region
    _
  $region13: #{cfm_forward.13} parent=0 // pred_fallthru
    _
  // Predicated region
  $region14: #{cfm_forward.13} parent=0 // pred_check
    _
  $region15: #{cfm_forward.13} parent=0 // pred_check_branch
    %16 = sbr.rel (0) target = $region17
  $region16: #{cfm_forward.13} parent=0 // pred_region
    _
  $region17: #{cfm_forward.13} parent=0 // pred_fallthru
    _
  %v18 = vld [vmem:[%s0] sm:$0xf]
  %v19 = vld [vmem:[%s0 + $0x4] sm:$0xf]
  %v20 = vld [vmem:[%s0 + $0x8] sm:$0xf]
  %v21 = vld [vmem:[%s0 + $0xc] sm:$0xf]
  %v22 = vld [vmem:[%s1] sm:$0xf]
  %v23 = vld [vmem:[%s1 + $0x4] sm:$0xf]
  %v24 = vld [vmem:[%s1 + $0x8] sm:$0xf]
  %v25 = vld [vmem:[%s1 + $0xc] sm:$0xf]
  %v30 = vunpack.c.l.b16 %v18
  %v31 = vunpack.c.l.b16 %v19
  %v32 = vunpack.c.l.b16 %v20
  %v33 = vunpack.c.l.b16 %v21
  %v34 = vpack.c.b16 %v31, %v30
  %v35 = vpack.c.b16 %v33, %v32
  %v40 = vunpack.c.l.b16 %v22
  %v41 = vunpack.c.l.b16 %v23
  %v42 = vunpack.c.l.b16 %v24
  %v43 = vunpack.c.l.b16 %v25
  %v44 = vpack.c.b16 %v41, %v40
  %v45 = vpack.c.b16 %v43, %v42
  %vm48 = vcmask 261120
  %v50 = vsel %vm48, %v34, 0
  %v53 = vsel %vm48, %v35, 0
  %55 = vmatprep.subr.bf16.mxu0 0
  %56 = vmatpush1.bf16.msra.mxu0 0
  %57 = vmatprep.subr.bf16.mxu0 0
  %58 = vmatpush1.bf16.msra.mxu0 0
  %59 = vmatprep.subr.bf16.mxu0 0
  %60 = vmatpush1.bf16.msra.mxu0 0
  %61 = vmatprep.subr.bf16.mxu0 0
  %62 = vmatpush1.bf16.msra.mxu0 0
  %63 = vmatprep.subr.bf16.mxu0 0
  %64 = vmatpush1.bf16.msra.mxu0 0
  %65 = vmatprep.subr.bf16.mxu0 0
  %66 = vmatpush1.bf16.msra.mxu0 0
  %67 = vmatprep.subr.bf16.mxu0 0
  %68 = vmatpush1.bf16.msra.mxu0 %v45
  %69 = vmatprep.subr.bf16.mxu0 0
  %70 = vmatpush1.bf16.msra.mxu0 %v44
  %71 = vmatprep.subr.bf16.mxu0 0
  %72 = vmatpush2.bf16.msra.mxu0 0
  %73 = vmatprep.subr.bf16.mxu0 0
  %74 = vmatpush2.bf16.msra.mxu0 0
  %75 = vmatprep.subr.bf16.mxu0 0
  %76 = vmatpush2.bf16.msra.mxu0 0
  %77 = vmatprep.subr.bf16.mxu0 0
  %78 = vmatpush2.bf16.msra.mxu0 0
  %79 = vmatprep.subr.bf16.mxu0 0
  %80 = vmatpush2.bf16.msra.mxu0 0
  %81 = vmatprep.subr.bf16.mxu0 0
  %82 = vmatpush2.bf16.msra.mxu0 0
  %83 = vmatprep.subr.bf16.mxu0 0
  %84 = vmatpush2.bf16.msra.mxu0 0
  %85 = vmatprep.subr.bf16.mxu0 0
  %86 = vmatpush2.bf16.msra.mxu0 0
  %87 = vmatprep.mubr.bf16.mxu0 0
  %88 = vmatmul.mubr.bf16.gmra.mxu0 %v50
  %v89 = vpop.f32.mrf.mxu0
  %v90 = vadd.f32 0.0, %v89
  %v91 = vpop.f32.mrf.mxu0
  %v92 = vpop.f32.mrf.mxu0
  %v93 = vadd.f32 0.0, %v92
  %v94 = vpop.f32.mrf.mxu0
  %95 = vmatprep.mubr.bf16.mxu0 0
  %96 = vmatmul.mubr.bf16.gmra.mxu0 %v53
  %v97 = vpop.f32.mrf.mxu0
  %v98 = vadd.f32 0.0, %v97
  %v99 = vpop.f32.mrf.mxu0
  %v100 = vpop.f32.mrf.mxu0
  %v101 = vadd.f32 0.0, %v100
  %v102 = vpop.f32.mrf.mxu0
  %103 = vdwg.mxu0
  %v104 = vld [vmem:[%s2] sm:$0x1]
  %v106 = vlaneseq
  %v107 = vshrl.u32 %v106, 7
  %v108 = vsub.s32 0, %v107
  %v109 = vrot.slane %v104, %v108
  %v111 = vmul.f32 %v90, %v109
  %v112 = vmul.f32 %v93, %v109
  %v113 = vmul.f32 %v98, %v109
  %v114 = vmul.f32 %v101, %v109
  %v115 = vld [vmem:[%s3] sm:$0x1]
  %v117 = vlaneseq
  %v118 = vshrl.u32 %v117, 7
  %v119 = vsub.s32 0, %v118
  %v120 = vrot.slane %v115, %v119
  %v122 = vadd.f32 %v111, %v120
  %v123 = vadd.f32 %v112, %v120
  %v124 = vadd.f32 %v113, %v120
  %v125 = vadd.f32 %v114, %v120
  %v126 = vmax.f32 %v122, 0.0
  %v127 = vmax.f32 %v123, 0.0
  %v128 = vmax.f32 %v124, 0.0
  %v129 = vmax.f32 %v125, 0.0
  %v130 = vpack.c.bf16 %v127, %v126
  %v131 = vpack.c.bf16 %v129, %v128
  %v134 = vunpack.c.l.b16 %v130
  %v135 = vunpack.c.h.b16 %v130
  %v136 = vunpack.c.l.b16 %v131
  %v137 = vunpack.c.h.b16 %v131
  %v138 = vpack.c.b16 %v134, %v134
  %v139 = vpack.c.b16 %v135, %v135
  %v140 = vpack.c.b16 %v136, %v136
  %v141 = vpack.c.b16 %v137, %v137
  %vm146 = vcmask 257024
  %147 = vst.msk [vmem:[%s4] sm:$0xf] %vm146, %v138
  %148 = vst.msk [vmem:[%s4 + $0x4] sm:$0xf] %vm146, %v139
  %149 = vst.msk [vmem:[%s4 + $0x8] sm:$0xf] %vm146, %v140
  %150 = vst.msk [vmem:[%s4 + $0xc] sm:$0xf] %vm146, %v141
  // Predicated region
  $region18: #{cfm_forward.13} parent=0 // pred_check
    _
  $region19: #{cfm_forward.13} parent=0 // pred_check_branch
    %152 = sbr.rel (0) target = $region21
  $region20: #{cfm_forward.13} parent=0 // pred_region
    _
  $region21: #{cfm_forward.13} parent=0 // pred_fallthru
    _
  // Predicated region
  $region22: #{cfm_forward.13} parent=0 // pred_check
    _
  $region23: #{cfm_forward.13} parent=0 // pred_check_branch
    %154 = sbr.rel (0) target = $region25
  $region24: #{cfm_forward.13} parent=0 // pred_region
    _
  $region25: #{cfm_forward.13} parent=0 // pred_fallthru
    _

// kernel: cfm_forward.12
$region0: #{cfm_forward.12}
  #allocation0 [shape = 'u32[]', space=smem, size = 0x4, offset = 0x4, fixed_abs, tag = 'smem constant byte address 0x4 - core index']
  #allocation1 [shape = 'u32[144,128]{1,0:T(1,128)}', space=vmem, size = 0x12000, scoped, tag = 'internal scratch']
  %s0 = inlined_call_operand.vmem [shape: bf16[32,16], index: 0, kind: input, shape index: {}]
  %s1 = inlined_call_operand.vmem [shape: bf16[16,32], index: 1, kind: input, shape index: {}]
  %s2 = inlined_call_operand.vmem [shape: f32[1,32], index: 2, kind: input, shape index: {}]
  %s3 = inlined_call_operand.vmem [shape: f32[1,32], index: 3, kind: input, shape index: {}]
  %s4 = inlined_call_operand.vmem [shape: bf16[32,32], index: 4, kind: output, shape index: {}]
  %s5 = sld [smem:[#allocation0]]
  $region26: #{cfm_forward.12} parent=0
    _
  %s7 = ssub.s32 1, %s5
  %s8 = scalar_select 0, %s7, %s5
  // Predicated region
  $region2: #{cfm_forward.12} parent=0 // pred_check
    _
  $region3: #{cfm_forward.12} parent=0 // pred_check_branch
    %10 = sbr.rel (0) target = $region5
  $region4: #{cfm_forward.12} parent=0 // pred_region
    _
  $region5: #{cfm_forward.12} parent=0 // pred_fallthru
    _
  // Predicated region
  $region6: #{cfm_forward.12} parent=0 // pred_check
    _
  $region7: #{cfm_forward.12} parent=0 // pred_check_branch
    %12 = sbr.rel (0) target = $region9
  $region8: #{cfm_forward.12} parent=0 // pred_region
    _
  $region9: #{cfm_forward.12} parent=0 // pred_fallthru
    _
  // Predicated region
  $region10: #{cfm_forward.12} parent=0 // pred_check
    _
  $region11: #{cfm_forward.12} parent=0 // pred_check_branch
    %14 = sbr.rel (0) target = $region13
  $region12: #{cfm_forward.12} parent=0 // pred_region
    _
  $region13: #{cfm_forward.12} parent=0 // pred_fallthru
    _
  // Predicated region
  $region14: #{cfm_forward.12} parent=0 // pred_check
    _
  $region15: #{cfm_forward.12} parent=0 // pred_check_branch
    %16 = sbr.rel (0) target = $region17
  $region16: #{cfm_forward.12} parent=0 // pred_region
    _
  $region17: #{cfm_forward.12} parent=0 // pred_fallthru
    _
  %v18 = vld [vmem:[%s0] sm:$0xf]
  %v19 = vld [vmem:[%s0 + $0x4] sm:$0xf]
  %v20 = vld [vmem:[%s0 + $0x8] sm:$0xf]
  %v21 = vld [vmem:[%s0 + $0xc] sm:$0xf]
  %v22 = vld [vmem:[%s1] sm:$0xf]
  %v23 = vld [vmem:[%s1 + $0x4] sm:$0xf]
  %v28 = vunpack.c.l.b16 %v18
  %v29 = vunpack.c.l.b16 %v19
  %v30 = vunpack.c.l.b16 %v20
  %v31 = vunpack.c.l.b16 %v21
  %v32 = vpack.c.b16 %v29, %v28
  %v33 = vpack.c.b16 %v31, %v30
  %v36 = vunpack.c.l.b16 %v22
  %v37 = vunpack.c.l.b16 %v23
  %v38 = vpack.c.b16 %v37, %v36
  %vm40 = vcmask 130048
  %v42 = vsel %vm40, %v32, 0
  %v45 = vsel %vm40, %v33, 0
  %47 = vmatprep.subr.bf16.mxu0 0
  %48 = vmatpush1.bf16.msra.mxu0 0
  %49 = vmatprep.subr.bf16.mxu0 0
  %50 = vmatpush1.bf16.msra.mxu0 0
  %51 = vmatprep.subr.bf16.mxu0 0
  %52 = vmatpush1.bf16.msra.mxu0 0
  %53 = vmatprep.subr.bf16.mxu0 0
  %54 = vmatpush1.bf16.msra.mxu0 0
  %55 = vmatprep.subr.bf16.mxu0 0
  %56 = vmatpush1.bf16.msra.mxu0 0
  %57 = vmatprep.subr.bf16.mxu0 0
  %58 = vmatpush1.bf16.msra.mxu0 0
  %59 = vmatprep.subr.bf16.mxu0 0
  %60 = vmatpush1.bf16.msra.mxu0 0
  %61 = vmatprep.subr.bf16.mxu0 0
  %62 = vmatpush1.bf16.msra.mxu0 %v38
  %63 = vmatprep.subr.bf16.mxu0 0
  %64 = vmatpush2.bf16.msra.mxu0 0
  %65 = vmatprep.subr.bf16.mxu0 0
  %66 = vmatpush2.bf16.msra.mxu0 0
  %67 = vmatprep.subr.bf16.mxu0 0
  %68 = vmatpush2.bf16.msra.mxu0 0
  %69 = vmatprep.subr.bf16.mxu0 0
  %70 = vmatpush2.bf16.msra.mxu0 0
  %71 = vmatprep.subr.bf16.mxu0 0
  %72 = vmatpush2.bf16.msra.mxu0 0
  %73 = vmatprep.subr.bf16.mxu0 0
  %74 = vmatpush2.bf16.msra.mxu0 0
  %75 = vmatprep.subr.bf16.mxu0 0
  %76 = vmatpush2.bf16.msra.mxu0 0
  %77 = vmatprep.subr.bf16.mxu0 0
  %78 = vmatpush2.bf16.msra.mxu0 0
  %79 = vmatprep.mubr.bf16.mxu0 0
  %80 = vmatmul.mubr.bf16.gmra.mxu0 %v42
  %v81 = vpop.f32.mrf.mxu0
  %v82 = vadd.f32 0.0, %v81
  %v83 = vpop.f32.mrf.mxu0
  %v84 = vpop.f32.mrf.mxu0
  %v85 = vadd.f32 0.0, %v84
  %v86 = vpop.f32.mrf.mxu0
  %87 = vmatprep.mubr.bf16.mxu0 0
  %88 = vmatmul.mubr.bf16.gmra.mxu0 %v45
  %v89 = vpop.f32.mrf.mxu0
  %v90 = vadd.f32 0.0, %v89
  %v91 = vpop.f32.mrf.mxu0
  %v92 = vpop.f32.mrf.mxu0
  %v93 = vadd.f32 0.0, %v92
  %v94 = vpop.f32.mrf.mxu0
  %95 = vdwg.mxu0
  %v96 = vld [vmem:[%s2] sm:$0x1]
  %v98 = vlaneseq
  %v99 = vshrl.u32 %v98, 7
  %v100 = vsub.s32 0, %v99
  %v101 = vrot.slane %v96, %v100
  %v103 = vmul.f32 %v82, %v101
  %v104 = vmul.f32 %v85, %v101
  %v105 = vmul.f32 %v90, %v101
  %v106 = vmul.f32 %v93, %v101
  %v107 = vld [vmem:[%s3] sm:$0x1]
  %v109 = vlaneseq
  %v110 = vshrl.u32 %v109, 7
  %v111 = vsub.s32 0, %v110
  %v112 = vrot.slane %v107, %v111
  %v114 = vadd.f32 %v103, %v112
  %v115 = vadd.f32 %v104, %v112
  %v116 = vadd.f32 %v105, %v112
  %v117 = vadd.f32 %v106, %v112
  %v118 = vmax.f32 %v114, 0.0
  %v119 = vmax.f32 %v115, 0.0
  %v120 = vmax.f32 %v116, 0.0
  %v121 = vmax.f32 %v117, 0.0
  %v122 = vpack.c.bf16 %v119, %v118
  %v123 = vpack.c.bf16 %v121, %v120
  %v126 = vunpack.c.l.b16 %v122
  %v127 = vunpack.c.h.b16 %v122
  %v128 = vunpack.c.l.b16 %v123
  %v129 = vunpack.c.h.b16 %v123
  %v130 = vpack.c.b16 %v126, %v126
  %v131 = vpack.c.b16 %v127, %v127
  %v132 = vpack.c.b16 %v128, %v128
  %v133 = vpack.c.b16 %v129, %v129
  %vm138 = vcmask 257024
  %139 = vst.msk [vmem:[%s4] sm:$0xf] %vm138, %v130
  %140 = vst.msk [vmem:[%s4 + $0x4] sm:$0xf] %vm138, %v131
  %141 = vst.msk [vmem:[%s4 + $0x8] sm:$0xf] %vm138, %v132
  %142 = vst.msk [vmem:[%s4 + $0xc] sm:$0xf] %vm138, %v133
  // Predicated region
  $region18: #{cfm_forward.12} parent=0 // pred_check
    _
  $region19: #{cfm_forward.12} parent=0 // pred_check_branch
    %144 = sbr.rel (0) target = $region21
  $region20: #{cfm_forward.12} parent=0 // pred_region
    _
  $region21: #{cfm_forward.12} parent=0 // pred_fallthru
    _
  // Predicated region
  $region22: #{cfm_forward.12} parent=0 // pred_check
    _
  $region23: #{cfm_forward.12} parent=0 // pred_check_branch
    %146 = sbr.rel (0) target = $region25
  $region24: #{cfm_forward.12} parent=0 // pred_region
    _
  $region25: #{cfm_forward.12} parent=0 // pred_fallthru
    _

// kernel: cfm_forward.17
$region0: #{cfm_forward.17}
  #allocation0 [shape = 'u32[]', space=smem, size = 0x4, offset = 0x4, fixed_abs, tag = 'smem constant byte address 0x4 - core index']
  #allocation1 [shape = 'u32[144,128]{1,0:T(1,128)}', space=vmem, size = 0x12000, scoped, tag = 'internal scratch']
  %s0 = inlined_call_operand.vmem [shape: bf16[128,32], index: 0, kind: input, shape index: {}]
  %s1 = inlined_call_operand.vmem [shape: bf16[32,128], index: 1, kind: input, shape index: {}]
  %s2 = inlined_call_operand.vmem [shape: f32[1,128], index: 2, kind: input, shape index: {}]
  %s3 = inlined_call_operand.vmem [shape: f32[1,128], index: 3, kind: input, shape index: {}]
  %s4 = inlined_call_operand.vmem [shape: bf16[128,128], index: 4, kind: output, shape index: {}]
  %s5 = sld [smem:[#allocation0]]
  $region26: #{cfm_forward.17} parent=0
    _
  %s7 = ssub.s32 1, %s5
  %s8 = scalar_select 0, %s7, %s5
  // Predicated region
  $region2: #{cfm_forward.17} parent=0 // pred_check
    _
  $region3: #{cfm_forward.17} parent=0 // pred_check_branch
    %10 = sbr.rel (0) target = $region5
  $region4: #{cfm_forward.17} parent=0 // pred_region
    _
  $region5: #{cfm_forward.17} parent=0 // pred_fallthru
    _
  // Predicated region
  $region6: #{cfm_forward.17} parent=0 // pred_check
    _
  $region7: #{cfm_forward.17} parent=0 // pred_check_branch
    %12 = sbr.rel (0) target = $region9
  $region8: #{cfm_forward.17} parent=0 // pred_region
    _
  $region9: #{cfm_forward.17} parent=0 // pred_fallthru
    _
  // Predicated region
  $region10: #{cfm_forward.17} parent=0 // pred_check
    _
  $region11: #{cfm_forward.17} parent=0 // pred_check_branch
    %14 = sbr.rel (0) target = $region13
  $region12: #{cfm_forward.17} parent=0 // pred_region
    _
  $region13: #{cfm_forward.17} parent=0 // pred_fallthru
    _
  // Predicated region
  $region14: #{cfm_forward.17} parent=0 // pred_check
    _
  $region15: #{cfm_forward.17} parent=0 // pred_check_branch
    %16 = sbr.rel (0) target = $region17
  $region16: #{cfm_forward.17} parent=0 // pred_region
    _
  $region17: #{cfm_forward.17} parent=0 // pred_fallthru
    _
  %v18 = vld [vmem:[%s0] sm:$0xf]
  %v19 = vld [vmem:[%s0 + $0x4] sm:$0xf]
  %v20 = vld [vmem:[%s0 + $0x8] sm:$0xf]
  %v21 = vld [vmem:[%s0 + $0xc] sm:$0xf]
  %v22 = vld [vmem:[%s0 + $0x10] sm:$0xf]
  %v23 = vld [vmem:[%s0 + $0x14] sm:$0xf]
  %v24 = vld [vmem:[%s0 + $0x18] sm:$0xf]
  %v25 = vld [vmem:[%s0 + $0x1c] sm:$0xf]
  %v26 = vld [vmem:[%s0 + $0x20] sm:$0xf]
  %v27 = vld [vmem:[%s0 + $0x24] sm:$0xf]
  %v28 = vld [vmem:[%s0 + $0x28] sm:$0xf]
  %v29 = vld [vmem:[%s0 + $0x2c] sm:$0xf]
  %v30 = vld [vmem:[%s0 + $0x30] sm:$0xf]
  %v31 = vld [vmem:[%s0 + $0x34] sm:$0xf]
  %v32 = vld [vmem:[%s0 + $0x38] sm:$0xf]
  %v33 = vld [vmem:[%s0 + $0x3c] sm:$0xf]
  %v34 = vld [vmem:[%s1] sm:$0xf]
  %v35 = vld [vmem:[%s1 + $0x4] sm:$0xf]
  %v36 = vld [vmem:[%s1 + $0x8] sm:$0xf]
  %v37 = vld [vmem:[%s1 + $0xc] sm:$0xf]
  %v54 = vunpack.c.l.b16 %v18
  %v55 = vunpack.c.l.b16 %v19
  %v56 = vunpack.c.l.b16 %v20
  %v57 = vunpack.c.l.b16 %v21
  %v58 = vunpack.c.l.b16 %v22
  %v59 = vunpack.c.l.b16 %v23
  %v60 = vunpack.c.l.b16 %v24
  %v61 = vunpack.c.l.b16 %v25
  %v62 = vunpack.c.l.b16 %v26
  %v63 = vunpack.c.l.b16 %v27
  %v64 = vunpack.c.l.b16 %v28
  %v65 = vunpack.c.l.b16 %v29
  %v66 = vunpack.c.l.b16 %v30
  %v67 = vunpack.c.l.b16 %v31
  %v68 = vunpack.c.l.b16 %v32
  %v69 = vunpack.c.l.b16 %v33
  %v70 = vpack.c.b16 %v55, %v54
  %v71 = vpack.c.b16 %v57, %v56
  %v72 = vpack.c.b16 %v59, %v58
  %v73 = vpack.c.b16 %v61, %v60
  %v74 = vpack.c.b16 %v63, %v62
  %v75 = vpack.c.b16 %v65, %v64
  %v76 = vpack.c.b16 %v67, %v66
  %v77 = vpack.c.b16 %v69, %v68
  %v82 = vunpack.c.l.b16 %v34
  %v83 = vunpack.c.l.b16 %v35
  %v84 = vunpack.c.l.b16 %v36
  %v85 = vunpack.c.l.b16 %v37
  %v86 = vpack.c.b16 %v83, %v82
  %v87 = vpack.c.b16 %v85, %v84
  %vm90 = vcmask 261120
  %v92 = vsel %vm90, %v70, 0
  %v95 = vsel %vm90, %v71, 0
  %v98 = vsel %vm90, %v72, 0
  %v101 = vsel %vm90, %v73, 0
  %v104 = vsel %vm90, %v74, 0
  %v107 = vsel %vm90, %v75, 0
  %v110 = vsel %vm90, %v76, 0
  %v113 = vsel %vm90, %v77, 0
  %115 = vmatprep.subr.bf16.mxu0 0
  %116 = vmatpush1.bf16.msra.mxu0 0
  %117 = vmatprep.subr.bf16.mxu0 0
  %118 = vmatpush1.bf16.msra.mxu0 0
  %119 = vmatprep.subr.bf16.mxu0 0
  %120 = vmatpush1.bf16.msra.mxu0 0
  %121 = vmatprep.subr.bf16.mxu0 0
  %122 = vmatpush1.bf16.msra.mxu0 0
  %123 = vmatprep.subr.bf16.mxu0 0
  %124 = vmatpush1.bf16.msra.mxu0 0
  %125 = vmatprep.subr.bf16.mxu0 0
  %126 = vmatpush1.bf16.msra.mxu0 0
  %127 = vmatprep.subr.bf16.mxu0 0
  %128 = vmatpush1.bf16.msra.mxu0 %v87
  %129 = vmatprep.subr.bf16.mxu0 0
  %130 = vmatpush1.bf16.msra.mxu0 %v86
  %131 = vmatprep.subr.bf16.mxu0 0
  %132 = vmatpush2.bf16.msra.mxu0 0
  %133 = vmatprep.subr.bf16.mxu0 0
  %134 = vmatpush2.bf16.msra.mxu0 0
  %135 = vmatprep.subr.bf16.mxu0 0
  %136 = vmatpush2.bf16.msra.mxu0 0
  %137 = vmatprep.subr.bf16.mxu0 0
  %138 = vmatpush2.bf16.msra.mxu0 0
  %139 = vmatprep.subr.bf16.mxu0 0
  %140 = vmatpush2.bf16.msra.mxu0 0
  %141 = vmatprep.subr.bf16.mxu0 0
  %142 = vmatpush2.bf16.msra.mxu0 0
  %143 = vmatprep.subr.bf16.mxu0 0
  %144 = vmatpush2.bf16.msra.mxu0 0
  %145 = vmatprep.subr.bf16.mxu0 0
  %146 = vmatpush2.bf16.msra.mxu0 0
  %147 = vmatprep.mubr.bf16.mxu0 0
  %148 = vmatmul.mubr.bf16.gmra.mxu0 %v92
  %v149 = vpop.f32.mrf.mxu0
  %v150 = vadd.f32 0.0, %v149
  %v151 = vpop.f32.mrf.mxu0
  %v152 = vpop.f32.mrf.mxu0
  %v153 = vadd.f32 0.0, %v152
  %v154 = vpop.f32.mrf.mxu0
  %155 = vmatprep.mubr.bf16.mxu0 0
  %156 = vmatmul.mubr.bf16.gmra.mxu0 %v95
  %v157 = vpop.f32.mrf.mxu0
  %v158 = vadd.f32 0.0, %v157
  %v159 = vpop.f32.mrf.mxu0
  %v160 = vpop.f32.mrf.mxu0
  %v161 = vadd.f32 0.0, %v160
  %v162 = vpop.f32.mrf.mxu0
  %163 = vmatprep.mubr.bf16.mxu0 0
  %164 = vmatmul.mubr.bf16.gmra.mxu0 %v98
  %v165 = vpop.f32.mrf.mxu0
  %v166 = vadd.f32 0.0, %v165
  %v167 = vpop.f32.mrf.mxu0
  %v168 = vpop.f32.mrf.mxu0
  %v169 = vadd.f32 0.0, %v168
  %v170 = vpop.f32.mrf.mxu0
  %171 = vmatprep.mubr.bf16.mxu0 0
  %172 = vmatmul.mubr.bf16.gmra.mxu0 %v101
  %v173 = vpop.f32.mrf.mxu0
  %v174 = vadd.f32 0.0, %v173
  %v175 = vpop.f32.mrf.mxu0
  %v176 = vpop.f32.mrf.mxu0
  %v177 = vadd.f32 0.0, %v176
  %v178 = vpop.f32.mrf.mxu0
  %179 = vmatprep.mubr.bf16.mxu0 0
  %180 = vmatmul.mubr.bf16.gmra.mxu0 %v104
  %v181 = vpop.f32.mrf.mxu0
  %v182 = vadd.f32 0.0, %v181
  %v183 = vpop.f32.mrf.mxu0
  %v184 = vpop.f32.mrf.mxu0
  %v185 = vadd.f32 0.0, %v184
  %v186 = vpop.f32.mrf.mxu0
  %187 = vmatprep.mubr.bf16.mxu0 0
  %188 = vmatmul.mubr.bf16.gmra.mxu0 %v107
  %v189 = vpop.f32.mrf.mxu0
  %v190 = vadd.f32 0.0, %v189
  %v191 = vpop.f32.mrf.mxu0
  %v192 = vpop.f32.mrf.mxu0
  %v193 = vadd.f32 0.0, %v192
  %v194 = vpop.f32.mrf.mxu0
  %195 = vmatprep.mubr.bf16.mxu0 0
  %196 = vmatmul.mubr.bf16.gmra.mxu0 %v110
  %v197 = vpop.f32.mrf.mxu0
  %v198 = vadd.f32 0.0, %v197
  %v199 = vpop.f32.mrf.mxu0
  %v200 = vpop.f32.mrf.mxu0
  %v201 = vadd.f32 0.0, %v200
  %v202 = vpop.f32.mrf.mxu0
  %203 = vmatprep.mubr.bf16.mxu0 0
  %204 = vmatmul.mubr.bf16.gmra.mxu0 %v113
  %v205 = vpop.f32.mrf.mxu0
  %v206 = vadd.f32 0.0, %v205
  %v207 = vpop.f32.mrf.mxu0
  %v208 = vpop.f32.mrf.mxu0
  %v209 = vadd.f32 0.0, %v208
  %v210 = vpop.f32.mrf.mxu0
  %211 = vdwg.mxu0
  %v212 = vld [vmem:[%s2] sm:$0x1]
  %v214 = vlaneseq
  %v215 = vshrl.u32 %v214, 7
  %v216 = vsub.s32 0, %v215
  %v217 = vrot.slane %v212, %v216
  %v219 = vmul.f32 %v150, %v217
  %v220 = vmul.f32 %v153, %v217
  %v221 = vmul.f32 %v158, %v217
  %v222 = vmul.f32 %v161, %v217
  %v223 = vmul.f32 %v166, %v217
  %v224 = vmul.f32 %v169, %v217
  %v225 = vmul.f32 %v174, %v217
  %v226 = vmul.f32 %v177, %v217
  %v227 = vmul.f32 %v182, %v217
  %v228 = vmul.f32 %v185, %v217
  %v229 = vmul.f32 %v190, %v217
  %v230 = vmul.f32 %v193, %v217
  %v231 = vmul.f32 %v198, %v217
  %v232 = vmul.f32 %v201, %v217
  %v233 = vmul.f32 %v206, %v217
  %v234 = vmul.f32 %v209, %v217
  %v235 = vld [vmem:[%s3] sm:$0x1]
  %v237 = vlaneseq
  %v238 = vshrl.u32 %v237, 7
  %v239 = vsub.s32 0, %v238
  %v240 = vrot.slane %v235, %v239
  %v242 = vadd.f32 %v219, %v240
  %v243 = vadd.f32 %v220, %v240
  %v244 = vadd.f32 %v221, %v240
  %v245 = vadd.f32 %v222, %v240
  %v246 = vadd.f32 %v223, %v240
  %v247 = vadd.f32 %v224, %v240
  %v248 = vadd.f32 %v225, %v240
  %v249 = vadd.f32 %v226, %v240
  %v250 = vadd.f32 %v227, %v240
  %v251 = vadd.f32 %v228, %v240
  %v252 = vadd.f32 %v229, %v240
  %v253 = vadd.f32 %v230, %v240
  %v254 = vadd.f32 %v231, %v240
  %v255 = vadd.f32 %v232, %v240
  %v256 = vadd.f32 %v233, %v240
  %v257 = vadd.f32 %v234, %v240
  %v258 = vpack.c.bf16 %v243, %v242
  %v259 = vpack.c.bf16 %v245, %v244
  %v260 = vpack.c.bf16 %v247, %v246
  %v261 = vpack.c.bf16 %v249, %v248
  %v262 = vpack.c.bf16 %v251, %v250
  %v263 = vpack.c.bf16 %v253, %v252
  %v264 = vpack.c.bf16 %v255, %v254
  %v265 = vpack.c.bf16 %v257, %v256
  %v274 = vunpack.c.l.b16 %v258
  %v275 = vunpack.c.h.b16 %v258
  %v276 = vunpack.c.l.b16 %v259
  %v277 = vunpack.c.h.b16 %v259
  %v278 = vunpack.c.l.b16 %v260
  %v279 = vunpack.c.h.b16 %v260
  %v280 = vunpack.c.l.b16 %v261
  %v281 = vunpack.c.h.b16 %v261
  %v282 = vunpack.c.l.b16 %v262
  %v283 = vunpack.c.h.b16 %v262
  %v284 = vunpack.c.l.b16 %v263
  %v285 = vunpack.c.h.b16 %v263
  %v286 = vunpack.c.l.b16 %v264
  %v287 = vunpack.c.h.b16 %v264
  %v288 = vunpack.c.l.b16 %v265
  %v289 = vunpack.c.h.b16 %v265
  %v290 = vpack.c.b16 %v274, %v274
  %v291 = vpack.c.b16 %v275, %v275
  %v292 = vpack.c.b16 %v276, %v276
  %v293 = vpack.c.b16 %v277, %v277
  %v294 = vpack.c.b16 %v278, %v278
  %v295 = vpack.c.b16 %v279, %v279
  %v296 = vpack.c.b16 %v280, %v280
  %v297 = vpack.c.b16 %v281, %v281
  %v298 = vpack.c.b16 %v282, %v282
  %v299 = vpack.c.b16 %v283, %v283
  %v300 = vpack.c.b16 %v284, %v284
  %v301 = vpack.c.b16 %v285, %v285
  %v302 = vpack.c.b16 %v286, %v286
  %v303 = vpack.c.b16 %v287, %v287
  %v304 = vpack.c.b16 %v288, %v288
  %v305 = vpack.c.b16 %v289, %v289
  %322 = vst [vmem:[%s4] sm:$0xf] %v290
  %323 = vst [vmem:[%s4 + $0x4] sm:$0xf] %v291
  %324 = vst [vmem:[%s4 + $0x8] sm:$0xf] %v292
  %325 = vst [vmem:[%s4 + $0xc] sm:$0xf] %v293
  %326 = vst [vmem:[%s4 + $0x10] sm:$0xf] %v294
  %327 = vst [vmem:[%s4 + $0x14] sm:$0xf] %v295
  %328 = vst [vmem:[%s4 + $0x18] sm:$0xf] %v296
  %329 = vst [vmem:[%s4 + $0x1c] sm:$0xf] %v297
  %330 = vst [vmem:[%s4 + $0x20] sm:$0xf] %v298
  %331 = vst [vmem:[%s4 + $0x24] sm:$0xf] %v299
  %332 = vst [vmem:[%s4 + $0x28] sm:$0xf] %v300
  %333 = vst [vmem:[%s4 + $0x2c] sm:$0xf] %v301
  %334 = vst [vmem:[%s4 + $0x30] sm:$0xf] %v302
  %335 = vst [vmem:[%s4 + $0x34] sm:$0xf] %v303
  %336 = vst [vmem:[%s4 + $0x38] sm:$0xf] %v304
  %337 = vst [vmem:[%s4 + $0x3c] sm:$0xf] %v305
  // Predicated region
  $region18: #{cfm_forward.17} parent=0 // pred_check
    _
  $region19: #{cfm_forward.17} parent=0 // pred_check_branch
    %339 = sbr.rel (0) target = $region21
  $region20: #{cfm_forward.17} parent=0 // pred_region
    _
  $region21: #{cfm_forward.17} parent=0 // pred_fallthru
    _
  // Predicated region
  $region22: #{cfm_forward.17} parent=0 // pred_check
    _
  $region23: #{cfm_forward.17} parent=0 // pred_check_branch
    %341 = sbr.rel (0) target = $region25
  $region24: #{cfm_forward.17} parent=0 // pred_region
    _
  $region25: #{cfm_forward.17} parent=0 // pred_fallthru
    _

// kernel: cfm_forward.18
$region0: #{cfm_forward.18}
  #allocation0 [shape = 'u32[]', space=smem, size = 0x4, offset = 0x4, fixed_abs, tag = 'smem constant byte address 0x4 - core index']
  #allocation1 [shape = 'u32[144,128]{1,0:T(1,128)}', space=vmem, size = 0x12000, scoped, tag = 'internal scratch']
  %s0 = inlined_call_operand.vmem [shape: bf16[128,32], index: 0, kind: input, shape index: {}]
  %s1 = inlined_call_operand.vmem [shape: bf16[32,64], index: 1, kind: input, shape index: {}]
  %s2 = inlined_call_operand.vmem [shape: f32[1,64], index: 2, kind: input, shape index: {}]
  %s3 = inlined_call_operand.vmem [shape: f32[1,64], index: 3, kind: input, shape index: {}]
  %s4 = inlined_call_operand.vmem [shape: bf16[128,64], index: 4, kind: output, shape index: {}]
  %s5 = sld [smem:[#allocation0]]
  $region26: #{cfm_forward.18} parent=0
    _
  %s7 = ssub.s32 1, %s5
  %s8 = scalar_select 0, %s7, %s5
  // Predicated region
  $region2: #{cfm_forward.18} parent=0 // pred_check
    _
  $region3: #{cfm_forward.18} parent=0 // pred_check_branch
    %10 = sbr.rel (0) target = $region5
  $region4: #{cfm_forward.18} parent=0 // pred_region
    _
  $region5: #{cfm_forward.18} parent=0 // pred_fallthru
    _
  // Predicated region
  $region6: #{cfm_forward.18} parent=0 // pred_check
    _
  $region7: #{cfm_forward.18} parent=0 // pred_check_branch
    %12 = sbr.rel (0) target = $region9
  $region8: #{cfm_forward.18} parent=0 // pred_region
    _
  $region9: #{cfm_forward.18} parent=0 // pred_fallthru
    _
  // Predicated region
  $region10: #{cfm_forward.18} parent=0 // pred_check
    _
  $region11: #{cfm_forward.18} parent=0 // pred_check_branch
    %14 = sbr.rel (0) target = $region13
  $region12: #{cfm_forward.18} parent=0 // pred_region
    _
  $region13: #{cfm_forward.18} parent=0 // pred_fallthru
    _
  // Predicated region
  $region14: #{cfm_forward.18} parent=0 // pred_check
    _
  $region15: #{cfm_forward.18} parent=0 // pred_check_branch
    %16 = sbr.rel (0) target = $region17
  $region16: #{cfm_forward.18} parent=0 // pred_region
    _
  $region17: #{cfm_forward.18} parent=0 // pred_fallthru
    _
  %v18 = vld [vmem:[%s0] sm:$0xf]
  %v19 = vld [vmem:[%s0 + $0x4] sm:$0xf]
  %v20 = vld [vmem:[%s0 + $0x8] sm:$0xf]
  %v21 = vld [vmem:[%s0 + $0xc] sm:$0xf]
  %v22 = vld [vmem:[%s0 + $0x10] sm:$0xf]
  %v23 = vld [vmem:[%s0 + $0x14] sm:$0xf]
  %v24 = vld [vmem:[%s0 + $0x18] sm:$0xf]
  %v25 = vld [vmem:[%s0 + $0x1c] sm:$0xf]
  %v26 = vld [vmem:[%s0 + $0x20] sm:$0xf]
  %v27 = vld [vmem:[%s0 + $0x24] sm:$0xf]
  %v28 = vld [vmem:[%s0 + $0x28] sm:$0xf]
  %v29 = vld [vmem:[%s0 + $0x2c] sm:$0xf]
  %v30 = vld [vmem:[%s0 + $0x30] sm:$0xf]
  %v31 = vld [vmem:[%s0 + $0x34] sm:$0xf]
  %v32 = vld [vmem:[%s0 + $0x38] sm:$0xf]
  %v33 = vld [vmem:[%s0 + $0x3c] sm:$0xf]
  %v34 = vld [vmem:[%s1] sm:$0xf]
  %v35 = vld [vmem:[%s1 + $0x4] sm:$0xf]
  %v36 = vld [vmem:[%s1 + $0x8] sm:$0xf]
  %v37 = vld [vmem:[%s1 + $0xc] sm:$0xf]
  %v54 = vunpack.c.l.b16 %v18
  %v55 = vunpack.c.l.b16 %v19
  %v56 = vunpack.c.l.b16 %v20
  %v57 = vunpack.c.l.b16 %v21
  %v58 = vunpack.c.l.b16 %v22
  %v59 = vunpack.c.l.b16 %v23
  %v60 = vunpack.c.l.b16 %v24
  %v61 = vunpack.c.l.b16 %v25
  %v62 = vunpack.c.l.b16 %v26
  %v63 = vunpack.c.l.b16 %v27
  %v64 = vunpack.c.l.b16 %v28
  %v65 = vunpack.c.l.b16 %v29
  %v66 = vunpack.c.l.b16 %v30
  %v67 = vunpack.c.l.b16 %v31
  %v68 = vunpack.c.l.b16 %v32
  %v69 = vunpack.c.l.b16 %v33
  %v70 = vpack.c.b16 %v55, %v54
  %v71 = vpack.c.b16 %v57, %v56
  %v72 = vpack.c.b16 %v59, %v58
  %v73 = vpack.c.b16 %v61, %v60
  %v74 = vpack.c.b16 %v63, %v62
  %v75 = vpack.c.b16 %v65, %v64
  %v76 = vpack.c.b16 %v67, %v66
  %v77 = vpack.c.b16 %v69, %v68
  %v82 = vunpack.c.l.b16 %v34
  %v83 = vunpack.c.l.b16 %v35
  %v84 = vunpack.c.l.b16 %v36
  %v85 = vunpack.c.l.b16 %v37
  %v86 = vpack.c.b16 %v83, %v82
  %v87 = vpack.c.b16 %v85, %v84
  %vm90 = vcmask 261120
  %v92 = vsel %vm90, %v70, 0
  %v95 = vsel %vm90, %v71, 0
  %v98 = vsel %vm90, %v72, 0
  %v101 = vsel %vm90, %v73, 0
  %v104 = vsel %vm90, %v74, 0
  %v107 = vsel %vm90, %v75, 0
  %v110 = vsel %vm90, %v76, 0
  %v113 = vsel %vm90, %v77, 0
  %115 = vmatprep.subr.bf16.mxu0 0
  %116 = vmatpush1.bf16.msra.mxu0 0
  %117 = vmatprep.subr.bf16.mxu0 0
  %118 = vmatpush1.bf16.msra.mxu0 0
  %119 = vmatprep.subr.bf16.mxu0 0
  %120 = vmatpush1.bf16.msra.mxu0 0
  %121 = vmatprep.subr.bf16.mxu0 0
  %122 = vmatpush1.bf16.msra.mxu0 0
  %123 = vmatprep.subr.bf16.mxu0 0
  %124 = vmatpush1.bf16.msra.mxu0 0
  %125 = vmatprep.subr.bf16.mxu0 0
  %126 = vmatpush1.bf16.msra.mxu0 0
  %127 = vmatprep.subr.bf16.mxu0 0
  %128 = vmatpush1.bf16.msra.mxu0 %v87
  %129 = vmatprep.subr.bf16.mxu0 0
  %130 = vmatpush1.bf16.msra.mxu0 %v86
  %131 = vmatprep.subr.bf16.mxu0 0
  %132 = vmatpush2.bf16.msra.mxu0 0
  %133 = vmatprep.subr.bf16.mxu0 0
  %134 = vmatpush2.bf16.msra.mxu0 0
  %135 = vmatprep.subr.bf16.mxu0 0
  %136 = vmatpush2.bf16.msra.mxu0 0
  %137 = vmatprep.subr.bf16.mxu0 0
  %138 = vmatpush2.bf16.msra.mxu0 0
  %139 = vmatprep.subr.bf16.mxu0 0
  %140 = vmatpush2.bf16.msra.mxu0 0
  %141 = vmatprep.subr.bf16.mxu0 0
  %142 = vmatpush2.bf16.msra.mxu0 0
  %143 = vmatprep.subr.bf16.mxu0 0
  %144 = vmatpush2.bf16.msra.mxu0 0
  %145 = vmatprep.subr.bf16.mxu0 0
  %146 = vmatpush2.bf16.msra.mxu0 0
  %147 = vmatprep.mubr.bf16.mxu0 0
  %148 = vmatmul.mubr.bf16.gmra.mxu0 %v92
  %v149 = vpop.f32.mrf.mxu0
  %v150 = vadd.f32 0.0, %v149
  %v151 = vpop.f32.mrf.mxu0
  %v152 = vpop.f32.mrf.mxu0
  %v153 = vadd.f32 0.0, %v152
  %v154 = vpop.f32.mrf.mxu0
  %155 = vmatprep.mubr.bf16.mxu0 0
  %156 = vmatmul.mubr.bf16.gmra.mxu0 %v95
  %v157 = vpop.f32.mrf.mxu0
  %v158 = vadd.f32 0.0, %v157
  %v159 = vpop.f32.mrf.mxu0
  %v160 = vpop.f32.mrf.mxu0
  %v161 = vadd.f32 0.0, %v160
  %v162 = vpop.f32.mrf.mxu0
  %163 = vmatprep.mubr.bf16.mxu0 0
  %164 = vmatmul.mubr.bf16.gmra.mxu0 %v98
  %v165 = vpop.f32.mrf.mxu0
  %v166 = vadd.f32 0.0, %v165
  %v167 = vpop.f32.mrf.mxu0
  %v168 = vpop.f32.mrf.mxu0
  %v169 = vadd.f32 0.0, %v168
  %v170 = vpop.f32.mrf.mxu0
  %171 = vmatprep.mubr.bf16.mxu0 0
  %172 = vmatmul.mubr.bf16.gmra.mxu0 %v101
  %v173 = vpop.f32.mrf.mxu0
  %v174 = vadd.f32 0.0, %v173
  %v175 = vpop.f32.mrf.mxu0
  %v176 = vpop.f32.mrf.mxu0
  %v177 = vadd.f32 0.0, %v176
  %v178 = vpop.f32.mrf.mxu0
  %179 = vmatprep.mubr.bf16.mxu0 0
  %180 = vmatmul.mubr.bf16.gmra.mxu0 %v104
  %v181 = vpop.f32.mrf.mxu0
  %v182 = vadd.f32 0.0, %v181
  %v183 = vpop.f32.mrf.mxu0
  %v184 = vpop.f32.mrf.mxu0
  %v185 = vadd.f32 0.0, %v184
  %v186 = vpop.f32.mrf.mxu0
  %187 = vmatprep.mubr.bf16.mxu0 0
  %188 = vmatmul.mubr.bf16.gmra.mxu0 %v107
  %v189 = vpop.f32.mrf.mxu0
  %v190 = vadd.f32 0.0, %v189
  %v191 = vpop.f32.mrf.mxu0
  %v192 = vpop.f32.mrf.mxu0
  %v193 = vadd.f32 0.0, %v192
  %v194 = vpop.f32.mrf.mxu0
  %195 = vmatprep.mubr.bf16.mxu0 0
  %196 = vmatmul.mubr.bf16.gmra.mxu0 %v110
  %v197 = vpop.f32.mrf.mxu0
  %v198 = vadd.f32 0.0, %v197
  %v199 = vpop.f32.mrf.mxu0
  %v200 = vpop.f32.mrf.mxu0
  %v201 = vadd.f32 0.0, %v200
  %v202 = vpop.f32.mrf.mxu0
  %203 = vmatprep.mubr.bf16.mxu0 0
  %204 = vmatmul.mubr.bf16.gmra.mxu0 %v113
  %v205 = vpop.f32.mrf.mxu0
  %v206 = vadd.f32 0.0, %v205
  %v207 = vpop.f32.mrf.mxu0
  %v208 = vpop.f32.mrf.mxu0
  %v209 = vadd.f32 0.0, %v208
  %v210 = vpop.f32.mrf.mxu0
  %211 = vdwg.mxu0
  %v212 = vld [vmem:[%s2] sm:$0x1]
  %v214 = vlaneseq
  %v215 = vshrl.u32 %v214, 7
  %v216 = vsub.s32 0, %v215
  %v217 = vrot.slane %v212, %v216
  %v219 = vmul.f32 %v150, %v217
  %v220 = vmul.f32 %v153, %v217
  %v221 = vmul.f32 %v158, %v217
  %v222 = vmul.f32 %v161, %v217
  %v223 = vmul.f32 %v166, %v217
  %v224 = vmul.f32 %v169, %v217
  %v225 = vmul.f32 %v174, %v217
  %v226 = vmul.f32 %v177, %v217
  %v227 = vmul.f32 %v182, %v217
  %v228 = vmul.f32 %v185, %v217
  %v229 = vmul.f32 %v190, %v217
  %v230 = vmul.f32 %v193, %v217
  %v231 = vmul.f32 %v198, %v217
  %v232 = vmul.f32 %v201, %v217
  %v233 = vmul.f32 %v206, %v217
  %v234 = vmul.f32 %v209, %v217
  %v235 = vld [vmem:[%s3] sm:$0x1]
  %v237 = vlaneseq
  %v238 = vshrl.u32 %v237, 7
  %v239 = vsub.s32 0, %v238
  %v240 = vrot.slane %v235, %v239
  %v242 = vadd.f32 %v219, %v240
  %v243 = vadd.f32 %v220, %v240
  %v244 = vadd.f32 %v221, %v240
  %v245 = vadd.f32 %v222, %v240
  %v246 = vadd.f32 %v223, %v240
  %v247 = vadd.f32 %v224, %v240
  %v248 = vadd.f32 %v225, %v240
  %v249 = vadd.f32 %v226, %v240
  %v250 = vadd.f32 %v227, %v240
  %v251 = vadd.f32 %v228, %v240
  %v252 = vadd.f32 %v229, %v240
  %v253 = vadd.f32 %v230, %v240
  %v254 = vadd.f32 %v231, %v240
  %v255 = vadd.f32 %v232, %v240
  %v256 = vadd.f32 %v233, %v240
  %v257 = vadd.f32 %v234, %v240
  %v258 = vpack.c.bf16 %v243, %v242
  %v259 = vpack.c.bf16 %v245, %v244
  %v260 = vpack.c.bf16 %v247, %v246
  %v261 = vpack.c.bf16 %v249, %v248
  %v262 = vpack.c.bf16 %v251, %v250
  %v263 = vpack.c.bf16 %v253, %v252
  %v264 = vpack.c.bf16 %v255, %v254
  %v265 = vpack.c.bf16 %v257, %v256
  %v274 = vunpack.c.l.b16 %v258
  %v275 = vunpack.c.h.b16 %v258
  %v276 = vunpack.c.l.b16 %v259
  %v277 = vunpack.c.h.b16 %v259
  %v278 = vunpack.c.l.b16 %v260
  %v279 = vunpack.c.h.b16 %v260
  %v280 = vunpack.c.l.b16 %v261
  %v281 = vunpack.c.h.b16 %v261
  %v282 = vunpack.c.l.b16 %v262
  %v283 = vunpack.c.h.b16 %v262
  %v284 = vunpack.c.l.b16 %v263
  %v285 = vunpack.c.h.b16 %v263
  %v286 = vunpack.c.l.b16 %v264
  %v287 = vunpack.c.h.b16 %v264
  %v288 = vunpack.c.l.b16 %v265
  %v289 = vunpack.c.h.b16 %v265
  %v290 = vpack.c.b16 %v274, %v274
  %v291 = vpack.c.b16 %v275, %v275
  %v292 = vpack.c.b16 %v276, %v276
  %v293 = vpack.c.b16 %v277, %v277
  %v294 = vpack.c.b16 %v278, %v278
  %v295 = vpack.c.b16 %v279, %v279
  %v296 = vpack.c.b16 %v280, %v280
  %v297 = vpack.c.b16 %v281, %v281
  %v298 = vpack.c.b16 %v282, %v282
  %v299 = vpack.c.b16 %v283, %v283
  %v300 = vpack.c.b16 %v284, %v284
  %v301 = vpack.c.b16 %v285, %v285
  %v302 = vpack.c.b16 %v286, %v286
  %v303 = vpack.c.b16 %v287, %v287
  %v304 = vpack.c.b16 %v288, %v288
  %v305 = vpack.c.b16 %v289, %v289
  %vm322 = vcmask 519168
  %323 = vst.msk [vmem:[%s4] sm:$0xf] %vm322, %v290
  %324 = vst.msk [vmem:[%s4 + $0x4] sm:$0xf] %vm322, %v291
  %325 = vst.msk [vmem:[%s4 + $0x8] sm:$0xf] %vm322, %v292
  %326 = vst.msk [vmem:[%s4 + $0xc] sm:$0xf] %vm322, %v293
  %327 = vst.msk [vmem:[%s4 + $0x10] sm:$0xf] %vm322, %v294
  %328 = vst.msk [vmem:[%s4 + $0x14] sm:$0xf] %vm322, %v295
  %329 = vst.msk [vmem:[%s4 + $0x18] sm:$0xf] %vm322, %v296
  %330 = vst.msk [vmem:[%s4 + $0x1c] sm:$0xf] %vm322, %v297
  %331 = vst.msk [vmem:[%s4 + $0x20] sm:$0xf] %vm322, %v298
  %332 = vst.msk [vmem:[%s4 + $0x24] sm:$0xf] %vm322, %v299
  %333 = vst.msk [vmem:[%s4 + $0x28] sm:$0xf] %vm322, %v300
  %334 = vst.msk [vmem:[%s4 + $0x2c] sm:$0xf] %vm322, %v301
  %335 = vst.msk [vmem:[%s4 + $0x30] sm:$0xf] %vm322, %v302
  %336 = vst.msk [vmem:[%s4 + $0x34] sm:$0xf] %vm322, %v303
  %337 = vst.msk [vmem:[%s4 + $0x38] sm:$0xf] %vm322, %v304
  %338 = vst.msk [vmem:[%s4 + $0x3c] sm:$0xf] %vm322, %v305
  // Predicated region
  $region18: #{cfm_forward.18} parent=0 // pred_check
    _
  $region19: #{cfm_forward.18} parent=0 // pred_check_branch
    %340 = sbr.rel (0) target = $region21
  $region20: #{cfm_forward.18} parent=0 // pred_region
    _
  $region21: #{cfm_forward.18} parent=0 // pred_fallthru
    _
  // Predicated region
  $region22: #{cfm_forward.18} parent=0 // pred_check
    _
  $region23: #{cfm_forward.18} parent=0 // pred_check_branch
    %342 = sbr.rel (0) target = $region25
  $region24: #{cfm_forward.18} parent=0 // pred_region
    _
  $region25: #{cfm_forward.18} parent=0 // pred_fallthru
    _

// kernel: cfm_forward.14
$region0: #{cfm_forward.14}
  #allocation0 [shape = 'u32[]', space=smem, size = 0x4, offset = 0x4, fixed_abs, tag = 'smem constant byte address 0x4 - core index']
  #allocation1 [shape = 'u32[144,128]{1,0:T(1,128)}', space=vmem, size = 0x12000, scoped, tag = 'internal scratch']
  %s0 = inlined_call_operand.vmem [shape: bf16[128,16], index: 0, kind: input, shape index: {}]
  %s1 = inlined_call_operand.vmem [shape: bf16[16,32], index: 1, kind: input, shape index: {}]
  %s2 = inlined_call_operand.vmem [shape: f32[1,32], index: 2, kind: input, shape index: {}]
  %s3 = inlined_call_operand.vmem [shape: f32[1,32], index: 3, kind: input, shape index: {}]
  %s4 = inlined_call_operand.vmem [shape: bf16[128,32], index: 4, kind: output, shape index: {}]
  %s5 = sld [smem:[#allocation0]]
  $region26: #{cfm_forward.14} parent=0
    _
  %s7 = ssub.s32 1, %s5
  %s8 = scalar_select 0, %s7, %s5
  // Predicated region
  $region2: #{cfm_forward.14} parent=0 // pred_check
    _
  $region3: #{cfm_forward.14} parent=0 // pred_check_branch
    %10 = sbr.rel (0) target = $region5
  $region4: #{cfm_forward.14} parent=0 // pred_region
    _
  $region5: #{cfm_forward.14} parent=0 // pred_fallthru
    _
  // Predicated region
  $region6: #{cfm_forward.14} parent=0 // pred_check
    _
  $region7: #{cfm_forward.14} parent=0 // pred_check_branch
    %12 = sbr.rel (0) target = $region9
  $region8: #{cfm_forward.14} parent=0 // pred_region
    _
  $region9: #{cfm_forward.14} parent=0 // pred_fallthru
    _
  // Predicated region
  $region10: #{cfm_forward.14} parent=0 // pred_check
    _
  $region11: #{cfm_forward.14} parent=0 // pred_check_branch
    %14 = sbr.rel (0) target = $region13
  $region12: #{cfm_forward.14} parent=0 // pred_region
    _
  $region13: #{cfm_forward.14} parent=0 // pred_fallthru
    _
  // Predicated region
  $region14: #{cfm_forward.14} parent=0 // pred_check
    _
  $region15: #{cfm_forward.14} parent=0 // pred_check_branch
    %16 = sbr.rel (0) target = $region17
  $region16: #{cfm_forward.14} parent=0 // pred_region
    _
  $region17: #{cfm_forward.14} parent=0 // pred_fallthru
    _
  %v18 = vld [vmem:[%s0] sm:$0xf]
  %v19 = vld [vmem:[%s0 + $0x4] sm:$0xf]
  %v20 = vld [vmem:[%s0 + $0x8] sm:$0xf]
  %v21 = vld [vmem:[%s0 + $0xc] sm:$0xf]
  %v22 = vld [vmem:[%s0 + $0x10] sm:$0xf]
  %v23 = vld [vmem:[%s0 + $0x14] sm:$0xf]
  %v24 = vld [vmem:[%s0 + $0x18] sm:$0xf]
  %v25 = vld [vmem:[%s0 + $0x1c] sm:$0xf]
  %v26 = vld [vmem:[%s0 + $0x20] sm:$0xf]
  %v27 = vld [vmem:[%s0 + $0x24] sm:$0xf]
  %v28 = vld [vmem:[%s0 + $0x28] sm:$0xf]
  %v29 = vld [vmem:[%s0 + $0x2c] sm:$0xf]
  %v30 = vld [vmem:[%s0 + $0x30] sm:$0xf]
  %v31 = vld [vmem:[%s0 + $0x34] sm:$0xf]
  %v32 = vld [vmem:[%s0 + $0x38] sm:$0xf]
  %v33 = vld [vmem:[%s0 + $0x3c] sm:$0xf]
  %v34 = vld [vmem:[%s1] sm:$0xf]
  %v35 = vld [vmem:[%s1 + $0x4] sm:$0xf]
  %v52 = vunpack.c.l.b16 %v18
  %v53 = vunpack.c.l.b16 %v19
  %v54 = vunpack.c.l.b16 %v20
  %v55 = vunpack.c.l.b16 %v21
  %v56 = vunpack.c.l.b16 %v22
  %v57 = vunpack.c.l.b16 %v23
  %v58 = vunpack.c.l.b16 %v24
  %v59 = vunpack.c.l.b16 %v25
  %v60 = vunpack.c.l.b16 %v26
  %v61 = vunpack.c.l.b16 %v27
  %v62 = vunpack.c.l.b16 %v28
  %v63 = vunpack.c.l.b16 %v29
  %v64 = vunpack.c.l.b16 %v30
  %v65 = vunpack.c.l.b16 %v31
  %v66 = vunpack.c.l.b16 %v32
  %v67 = vunpack.c.l.b16 %v33
  %v68 = vpack.c.b16 %v53, %v52
  %v69 = vpack.c.b16 %v55, %v54
  %v70 = vpack.c.b16 %v57, %v56
  %v71 = vpack.c.b16 %v59, %v58
  %v72 = vpack.c.b16 %v61, %v60
  %v73 = vpack.c.b16 %v63, %v62
  %v74 = vpack.c.b16 %v65, %v64
  %v75 = vpack.c.b16 %v67, %v66
  %v78 = vunpack.c.l.b16 %v34
  %v79 = vunpack.c.l.b16 %v35
  %v80 = vpack.c.b16 %v79, %v78
  %vm82 = vcmask 130048
  %v84 = vsel %vm82, %v68, 0
  %v87 = vsel %vm82, %v69, 0
  %v90 = vsel %vm82, %v70, 0
  %v93 = vsel %vm82, %v71, 0
  %v96 = vsel %vm82, %v72, 0
  %v99 = vsel %vm82, %v73, 0
  %v102 = vsel %vm82, %v74, 0
  %v105 = vsel %vm82, %v75, 0
  %107 = vmatprep.subr.bf16.mxu0 0
  %108 = vmatpush1.bf16.msra.mxu0 0
  %109 = vmatprep.subr.bf16.mxu0 0
  %110 = vmatpush1.bf16.msra.mxu0 0
  %111 = vmatprep.subr.bf16.mxu0 0
  %112 = vmatpush1.bf16.msra.mxu0 0
  %113 = vmatprep.subr.bf16.mxu0 0
  %114 = vmatpush1.bf16.msra.mxu0 0
  %115 = vmatprep.subr.bf16.mxu0 0
  %116 = vmatpush1.bf16.msra.mxu0 0
  %117 = vmatprep.subr.bf16.mxu0 0
  %118 = vmatpush1.bf16.msra.mxu0 0
  %119 = vmatprep.subr.bf16.mxu0 0
  %120 = vmatpush1.bf16.msra.mxu0 0
  %121 = vmatprep.subr.bf16.mxu0 0
  %122 = vmatpush1.bf16.msra.mxu0 %v80
  %123 = vmatprep.subr.bf16.mxu0 0
  %124 = vmatpush2.bf16.msra.mxu0 0
  %125 = vmatprep.subr.bf16.mxu0 0
  %126 = vmatpush2.bf16.msra.mxu0 0
  %127 = vmatprep.subr.bf16.mxu0 0
  %128 = vmatpush2.bf16.msra.mxu0 0
  %129 = vmatprep.subr.bf16.mxu0 0
  %130 = vmatpush2.bf16.msra.mxu0 0
  %131 = vmatprep.subr.bf16.mxu0 0
  %132 = vmatpush2.bf16.msra.mxu0 0
  %133 = vmatprep.subr.bf16.mxu0 0
  %134 = vmatpush2.bf16.msra.mxu0 0
  %135 = vmatprep.subr.bf16.mxu0 0
  %136 = vmatpush2.bf16.msra.mxu0 0
  %137 = vmatprep.subr.bf16.mxu0 0
  %138 = vmatpush2.bf16.msra.mxu0 0
  %139 = vmatprep.mubr.bf16.mxu0 0
  %140 = vmatmul.mubr.bf16.gmra.mxu0 %v84
  %v141 = vpop.f32.mrf.mxu0
  %v142 = vadd.f32 0.0, %v141
  %v143 = vpop.f32.mrf.mxu0
  %v144 = vpop.f32.mrf.mxu0
  %v145 = vadd.f32 0.0, %v144
  %v146 = vpop.f32.mrf.mxu0
  %147 = vmatprep.mubr.bf16.mxu0 0
  %148 = vmatmul.mubr.bf16.gmra.mxu0 %v87
  %v149 = vpop.f32.mrf.mxu0
  %v150 = vadd.f32 0.0, %v149
  %v151 = vpop.f32.mrf.mxu0
  %v152 = vpop.f32.mrf.mxu0
  %v153 = vadd.f32 0.0, %v152
  %v154 = vpop.f32.mrf.mxu0
  %155 = vmatprep.mubr.bf16.mxu0 0
  %156 = vmatmul.mubr.bf16.gmra.mxu0 %v90
  %v157 = vpop.f32.mrf.mxu0
  %v158 = vadd.f32 0.0, %v157
  %v159 = vpop.f32.mrf.mxu0
  %v160 = vpop.f32.mrf.mxu0
  %v161 = vadd.f32 0.0, %v160
  %v162 = vpop.f32.mrf.mxu0
  %163 = vmatprep.mubr.bf16.mxu0 0
  %164 = vmatmul.mubr.bf16.gmra.mxu0 %v93
  %v165 = vpop.f32.mrf.mxu0
  %v166 = vadd.f32 0.0, %v165
  %v167 = vpop.f32.mrf.mxu0
  %v168 = vpop.f32.mrf.mxu0
  %v169 = vadd.f32 0.0, %v168
  %v170 = vpop.f32.mrf.mxu0
  %171 = vmatprep.mubr.bf16.mxu0 0
  %172 = vmatmul.mubr.bf16.gmra.mxu0 %v96
  %v173 = vpop.f32.mrf.mxu0
  %v174 = vadd.f32 0.0, %v173
  %v175 = vpop.f32.mrf.mxu0
  %v176 = vpop.f32.mrf.mxu0
  %v177 = vadd.f32 0.0, %v176
  %v178 = vpop.f32.mrf.mxu0
  %179 = vmatprep.mubr.bf16.mxu0 0
  %180 = vmatmul.mubr.bf16.gmra.mxu0 %v99
  %v181 = vpop.f32.mrf.mxu0
  %v182 = vadd.f32 0.0, %v181
  %v183 = vpop.f32.mrf.mxu0
  %v184 = vpop.f32.mrf.mxu0
  %v185 = vadd.f32 0.0, %v184
  %v186 = vpop.f32.mrf.mxu0
  %187 = vmatprep.mubr.bf16.mxu0 0
  %188 = vmatmul.mubr.bf16.gmra.mxu0 %v102
  %v189 = vpop.f32.mrf.mxu0
  %v190 = vadd.f32 0.0, %v189
  %v191 = vpop.f32.mrf.mxu0
  %v192 = vpop.f32.mrf.mxu0
  %v193 = vadd.f32 0.0, %v192
  %v194 = vpop.f32.mrf.mxu0
  %195 = vmatprep.mubr.bf16.mxu0 0
  %196 = vmatmul.mubr.bf16.gmra.mxu0 %v105
  %v197 = vpop.f32.mrf.mxu0
  %v198 = vadd.f32 0.0, %v197
  %v199 = vpop.f32.mrf.mxu0
  %v200 = vpop.f32.mrf.mxu0
  %v201 = vadd.f32 0.0, %v200
  %v202 = vpop.f32.mrf.mxu0
  %203 = vdwg.mxu0
  %v204 = vld [vmem:[%s2] sm:$0x1]
  %v206 = vlaneseq
  %v207 = vshrl.u32 %v206, 7
  %v208 = vsub.s32 0, %v207
  %v209 = vrot.slane %v204, %v208
  %v211 = vmul.f32 %v142, %v209
  %v212 = vmul.f32 %v145, %v209
  %v213 = vmul.f32 %v150, %v209
  %v214 = vmul.f32 %v153, %v209
  %v215 = vmul.f32 %v158, %v209
  %v216 = vmul.f32 %v161, %v209
  %v217 = vmul.f32 %v166, %v209
  %v218 = vmul.f32 %v169, %v209
  %v219 = vmul.f32 %v174, %v209
  %v220 = vmul.f32 %v177, %v209
  %v221 = vmul.f32 %v182, %v209
  %v222 = vmul.f32 %v185, %v209
  %v223 = vmul.f32 %v190, %v209
  %v224 = vmul.f32 %v193, %v209
  %v225 = vmul.f32 %v198, %v209
  %v226 = vmul.f32 %v201, %v209
  %v227 = vld [vmem:[%s3] sm:$0x1]
  %v229 = vlaneseq
  %v230 = vshrl.u32 %v229, 7
  %v231 = vsub.s32 0, %v230
  %v232 = vrot.slane %v227, %v231
  %v234 = vadd.f32 %v211, %v232
  %v235 = vadd.f32 %v212, %v232
  %v236 = vadd.f32 %v213, %v232
  %v237 = vadd.f32 %v214, %v232
  %v238 = vadd.f32 %v215, %v232
  %v239 = vadd.f32 %v216, %v232
  %v240 = vadd.f32 %v217, %v232
  %v241 = vadd.f32 %v218, %v232
  %v242 = vadd.f32 %v219, %v232
  %v243 = vadd.f32 %v220, %v232
  %v244 = vadd.f32 %v221, %v232
  %v245 = vadd.f32 %v222, %v232
  %v246 = vadd.f32 %v223, %v232
  %v247 = vadd.f32 %v224, %v232
  %v248 = vadd.f32 %v225, %v232
  %v249 = vadd.f32 %v226, %v232
  %v250 = vmax.f32 %v234, 0.0
  %v251 = vmax.f32 %v235, 0.0
  %v252 = vmax.f32 %v236, 0.0
  %v253 = vmax.f32 %v237, 0.0
  %v254 = vmax.f32 %v238, 0.0
  %v255 = vmax.f32 %v239, 0.0
  %v256 = vmax.f32 %v240, 0.0
  %v257 = vmax.f32 %v241, 0.0
  %v258 = vmax.f32 %v242, 0.0
  %v259 = vmax.f32 %v243, 0.0
  %v260 = vmax.f32 %v244, 0.0
  %v261 = vmax.f32 %v245, 0.0
  %v262 = vmax.f32 %v246, 0.0
  %v263 = vmax.f32 %v247, 0.0
  %v264 = vmax.f32 %v248, 0.0
  %v265 = vmax.f32 %v249, 0.0
  %v266 = vpack.c.bf16 %v251, %v250
  %v267 = vpack.c.bf16 %v253, %v252
  %v268 = vpack.c.bf16 %v255, %v254
  %v269 = vpack.c.bf16 %v257, %v256
  %v270 = vpack.c.bf16 %v259, %v258
  %v271 = vpack.c.bf16 %v261, %v260
  %v272 = vpack.c.bf16 %v263, %v262
  %v273 = vpack.c.bf16 %v265, %v264
  %v282 = vunpack.c.l.b16 %v266
  %v283 = vunpack.c.h.b16 %v266
  %v284 = vunpack.c.l.b16 %v267
  %v285 = vunpack.c.h.b16 %v267
  %v286 = vunpack.c.l.b16 %v268
  %v287 = vunpack.c.h.b16 %v268
  %v288 = vunpack.c.l.b16 %v269
  %v289 = vunpack.c.h.b16 %v269
  %v290 = vunpack.c.l.b16 %v270
  %v291 = vunpack.c.h.b16 %v270
  %v292 = vunpack.c.l.b16 %v271
  %v293 = vunpack.c.h.b16 %v271
  %v294 = vunpack.c.l.b16 %v272
  %v295 = vunpack.c.h.b16 %v272
  %v296 = vunpack.c.l.b16 %v273
  %v297 = vunpack.c.h.b16 %v273
  %v298 = vpack.c.b16 %v282, %v282
  %v299 = vpack.c.b16 %v283, %v283
  %v300 = vpack.c.b16 %v284, %v284
  %v301 = vpack.c.b16 %v285, %v285
  %v302 = vpack.c.b16 %v286, %v286
  %v303 = vpack.c.b16 %v287, %v287
  %v304 = vpack.c.b16 %v288, %v288
  %v305 = vpack.c.b16 %v289, %v289
  %v306 = vpack.c.b16 %v290, %v290
  %v307 = vpack.c.b16 %v291, %v291
  %v308 = vpack.c.b16 %v292, %v292
  %v309 = vpack.c.b16 %v293, %v293
  %v310 = vpack.c.b16 %v294, %v294
  %v311 = vpack.c.b16 %v295, %v295
  %v312 = vpack.c.b16 %v296, %v296
  %v313 = vpack.c.b16 %v297, %v297
  %vm330 = vcmask 257024
  %331 = vst.msk [vmem:[%s4] sm:$0xf] %vm330, %v298
  %332 = vst.msk [vmem:[%s4 + $0x4] sm:$0xf] %vm330, %v299
  %333 = vst.msk [vmem:[%s4 + $0x8] sm:$0xf] %vm330, %v300
  %334 = vst.msk [vmem:[%s4 + $0xc] sm:$0xf] %vm330, %v301
  %335 = vst.msk [vmem:[%s4 + $0x10] sm:$0xf] %vm330, %v302
  %336 = vst.msk [vmem:[%s4 + $0x14] sm:$0xf] %vm330, %v303
  %337 = vst.msk [vmem:[%s4 + $0x18] sm:$0xf] %vm330, %v304
  %338 = vst.msk [vmem:[%s4 + $0x1c] sm:$0xf] %vm330, %v305
  %339 = vst.msk [vmem:[%s4 + $0x20] sm:$0xf] %vm330, %v306
  %340 = vst.msk [vmem:[%s4 + $0x24] sm:$0xf] %vm330, %v307
  %341 = vst.msk [vmem:[%s4 + $0x28] sm:$0xf] %vm330, %v308
  %342 = vst.msk [vmem:[%s4 + $0x2c] sm:$0xf] %vm330, %v309
  %343 = vst.msk [vmem:[%s4 + $0x30] sm:$0xf] %vm330, %v310
  %344 = vst.msk [vmem:[%s4 + $0x34] sm:$0xf] %vm330, %v311
  %345 = vst.msk [vmem:[%s4 + $0x38] sm:$0xf] %vm330, %v312
  %346 = vst.msk [vmem:[%s4 + $0x3c] sm:$0xf] %vm330, %v313
  // Predicated region
  $region18: #{cfm_forward.14} parent=0 // pred_check
    _
  $region19: #{cfm_forward.14} parent=0 // pred_check_branch
    %348 = sbr.rel (0) target = $region21
  $region20: #{cfm_forward.14} parent=0 // pred_region
    _
  $region21: #{cfm_forward.14} parent=0 // pred_fallthru
    _
  // Predicated region
  $region22: #{cfm_forward.14} parent=0 // pred_check
    _
  $region23: #{cfm_forward.14} parent=0 // pred_check_branch
    %350 = sbr.rel (0) target = $region25
  $region24: #{cfm_forward.14} parent=0 // pred_region
    _
  $region25: #{cfm_forward.14} parent=0 // pred_fallthru
    _

// kernel: cfm_forward.21
$region0: #{cfm_forward.21}
  #allocation0 [shape = 'u32[]', space=smem, size = 0x4, offset = 0x4, fixed_abs, tag = 'smem constant byte address 0x4 - core index']
  #allocation1 [shape = 'u32[144,128]{1,0:T(1,128)}', space=vmem, size = 0x12000, scoped, tag = 'internal scratch']
  %s0 = inlined_call_operand.vmem [shape: bf16[128,32], index: 0, kind: input, shape index: {}]
  %s1 = inlined_call_operand.vmem [shape: bf16[32,64], index: 1, kind: input, shape index: {}]
  %s2 = inlined_call_operand.vmem [shape: f32[1,64], index: 2, kind: input, shape index: {}]
  %s3 = inlined_call_operand.vmem [shape: f32[1,64], index: 3, kind: input, shape index: {}]
  %s4 = inlined_call_operand.vmem [shape: bf16[128,64], index: 4, kind: output, shape index: {}]
  %s5 = sld [smem:[#allocation0]]
  $region26: #{cfm_forward.21} parent=0
    _
  %s7 = ssub.s32 1, %s5
  %s8 = scalar_select 0, %s7, %s5
  // Predicated region
  $region2: #{cfm_forward.21} parent=0 // pred_check
    _
  $region3: #{cfm_forward.21} parent=0 // pred_check_branch
    %10 = sbr.rel (0) target = $region5
  $region4: #{cfm_forward.21} parent=0 // pred_region
    _
  $region5: #{cfm_forward.21} parent=0 // pred_fallthru
    _
  // Predicated region
  $region6: #{cfm_forward.21} parent=0 // pred_check
    _
  $region7: #{cfm_forward.21} parent=0 // pred_check_branch
    %12 = sbr.rel (0) target = $region9
  $region8: #{cfm_forward.21} parent=0 // pred_region
    _
  $region9: #{cfm_forward.21} parent=0 // pred_fallthru
    _
  // Predicated region
  $region10: #{cfm_forward.21} parent=0 // pred_check
    _
  $region11: #{cfm_forward.21} parent=0 // pred_check_branch
    %14 = sbr.rel (0) target = $region13
  $region12: #{cfm_forward.21} parent=0 // pred_region
    _
  $region13: #{cfm_forward.21} parent=0 // pred_fallthru
    _
  // Predicated region
  $region14: #{cfm_forward.21} parent=0 // pred_check
    _
  $region15: #{cfm_forward.21} parent=0 // pred_check_branch
    %16 = sbr.rel (0) target = $region17
  $region16: #{cfm_forward.21} parent=0 // pred_region
    _
  $region17: #{cfm_forward.21} parent=0 // pred_fallthru
    _
  %v18 = vld [vmem:[%s0] sm:$0xf]
  %v19 = vld [vmem:[%s0 + $0x4] sm:$0xf]
  %v20 = vld [vmem:[%s0 + $0x8] sm:$0xf]
  %v21 = vld [vmem:[%s0 + $0xc] sm:$0xf]
  %v22 = vld [vmem:[%s0 + $0x10] sm:$0xf]
  %v23 = vld [vmem:[%s0 + $0x14] sm:$0xf]
  %v24 = vld [vmem:[%s0 + $0x18] sm:$0xf]
  %v25 = vld [vmem:[%s0 + $0x1c] sm:$0xf]
  %v26 = vld [vmem:[%s0 + $0x20] sm:$0xf]
  %v27 = vld [vmem:[%s0 + $0x24] sm:$0xf]
  %v28 = vld [vmem:[%s0 + $0x28] sm:$0xf]
  %v29 = vld [vmem:[%s0 + $0x2c] sm:$0xf]
  %v30 = vld [vmem:[%s0 + $0x30] sm:$0xf]
  %v31 = vld [vmem:[%s0 + $0x34] sm:$0xf]
  %v32 = vld [vmem:[%s0 + $0x38] sm:$0xf]
  %v33 = vld [vmem:[%s0 + $0x3c] sm:$0xf]
  %v34 = vld [vmem:[%s1] sm:$0xf]
  %v35 = vld [vmem:[%s1 + $0x4] sm:$0xf]
  %v36 = vld [vmem:[%s1 + $0x8] sm:$0xf]
  %v37 = vld [vmem:[%s1 + $0xc] sm:$0xf]
  %v54 = vunpack.c.l.b16 %v18
  %v55 = vunpack.c.l.b16 %v19
  %v56 = vunpack.c.l.b16 %v20
  %v57 = vunpack.c.l.b16 %v21
  %v58 = vunpack.c.l.b16 %v22
  %v59 = vunpack.c.l.b16 %v23
  %v60 = vunpack.c.l.b16 %v24
  %v61 = vunpack.c.l.b16 %v25
  %v62 = vunpack.c.l.b16 %v26
  %v63 = vunpack.c.l.b16 %v27
  %v64 = vunpack.c.l.b16 %v28
  %v65 = vunpack.c.l.b16 %v29
  %v66 = vunpack.c.l.b16 %v30
  %v67 = vunpack.c.l.b16 %v31
  %v68 = vunpack.c.l.b16 %v32
  %v69 = vunpack.c.l.b16 %v33
  %v70 = vpack.c.b16 %v55, %v54
  %v71 = vpack.c.b16 %v57, %v56
  %v72 = vpack.c.b16 %v59, %v58
  %v73 = vpack.c.b16 %v61, %v60
  %v74 = vpack.c.b16 %v63, %v62
  %v75 = vpack.c.b16 %v65, %v64
  %v76 = vpack.c.b16 %v67, %v66
  %v77 = vpack.c.b16 %v69, %v68
  %v82 = vunpack.c.l.b16 %v34
  %v83 = vunpack.c.l.b16 %v35
  %v84 = vunpack.c.l.b16 %v36
  %v85 = vunpack.c.l.b16 %v37
  %v86 = vpack.c.b16 %v83, %v82
  %v87 = vpack.c.b16 %v85, %v84
  %vm90 = vcmask 261120
  %v92 = vsel %vm90, %v70, 0
  %v95 = vsel %vm90, %v71, 0
  %v98 = vsel %vm90, %v72, 0
  %v101 = vsel %vm90, %v73, 0
  %v104 = vsel %vm90, %v74, 0
  %v107 = vsel %vm90, %v75, 0
  %v110 = vsel %vm90, %v76, 0
  %v113 = vsel %vm90, %v77, 0
  %115 = vmatprep.subr.bf16.mxu0 0
  %116 = vmatpush1.bf16.msra.mxu0 0
  %117 = vmatprep.subr.bf16.mxu0 0
  %118 = vmatpush1.bf16.msra.mxu0 0
  %119 = vmatprep.subr.bf16.mxu0 0
  %120 = vmatpush1.bf16.msra.mxu0 0
  %121 = vmatprep.subr.bf16.mxu0 0
  %122 = vmatpush1.bf16.msra.mxu0 0
  %123 = vmatprep.subr.bf16.mxu0 0
  %124 = vmatpush1.bf16.msra.mxu0 0
  %125 = vmatprep.subr.bf16.mxu0 0
  %126 = vmatpush1.bf16.msra.mxu0 0
  %127 = vmatprep.subr.bf16.mxu0 0
  %128 = vmatpush1.bf16.msra.mxu0 %v87
  %129 = vmatprep.subr.bf16.mxu0 0
  %130 = vmatpush1.bf16.msra.mxu0 %v86
  %131 = vmatprep.subr.bf16.mxu0 0
  %132 = vmatpush2.bf16.msra.mxu0 0
  %133 = vmatprep.subr.bf16.mxu0 0
  %134 = vmatpush2.bf16.msra.mxu0 0
  %135 = vmatprep.subr.bf16.mxu0 0
  %136 = vmatpush2.bf16.msra.mxu0 0
  %137 = vmatprep.subr.bf16.mxu0 0
  %138 = vmatpush2.bf16.msra.mxu0 0
  %139 = vmatprep.subr.bf16.mxu0 0
  %140 = vmatpush2.bf16.msra.mxu0 0
  %141 = vmatprep.subr.bf16.mxu0 0
  %142 = vmatpush2.bf16.msra.mxu0 0
  %143 = vmatprep.subr.bf16.mxu0 0
  %144 = vmatpush2.bf16.msra.mxu0 0
  %145 = vmatprep.subr.bf16.mxu0 0
  %146 = vmatpush2.bf16.msra.mxu0 0
  %147 = vmatprep.mubr.bf16.mxu0 0
  %148 = vmatmul.mubr.bf16.gmra.mxu0 %v92
  %v149 = vpop.f32.mrf.mxu0
  %v150 = vadd.f32 0.0, %v149
  %v151 = vpop.f32.mrf.mxu0
  %v152 = vpop.f32.mrf.mxu0
  %v153 = vadd.f32 0.0, %v152
  %v154 = vpop.f32.mrf.mxu0
  %155 = vmatprep.mubr.bf16.mxu0 0
  %156 = vmatmul.mubr.bf16.gmra.mxu0 %v95
  %v157 = vpop.f32.mrf.mxu0
  %v158 = vadd.f32 0.0, %v157
  %v159 = vpop.f32.mrf.mxu0
  %v160 = vpop.f32.mrf.mxu0
  %v161 = vadd.f32 0.0, %v160
  %v162 = vpop.f32.mrf.mxu0
  %163 = vmatprep.mubr.bf16.mxu0 0
  %164 = vmatmul.mubr.bf16.gmra.mxu0 %v98
  %v165 = vpop.f32.mrf.mxu0
  %v166 = vadd.f32 0.0, %v165
  %v167 = vpop.f32.mrf.mxu0
  %v168 = vpop.f32.mrf.mxu0
  %v169 = vadd.f32 0.0, %v168
  %v170 = vpop.f32.mrf.mxu0
  %171 = vmatprep.mubr.bf16.mxu0 0
  %172 = vmatmul.mubr.bf16.gmra.mxu0 %v101
  %v173 = vpop.f32.mrf.mxu0
  %v174 = vadd.f32 0.0, %v173
  %v175 = vpop.f32.mrf.mxu0
  %v176 = vpop.f32.mrf.mxu0
  %v177 = vadd.f32 0.0, %v176
  %v178 = vpop.f32.mrf.mxu0
  %179 = vmatprep.mubr.bf16.mxu0 0
  %180 = vmatmul.mubr.bf16.gmra.mxu0 %v104
  %v181 = vpop.f32.mrf.mxu0
  %v182 = vadd.f32 0.0, %v181
  %v183 = vpop.f32.mrf.mxu0
  %v184 = vpop.f32.mrf.mxu0
  %v185 = vadd.f32 0.0, %v184
  %v186 = vpop.f32.mrf.mxu0
  %187 = vmatprep.mubr.bf16.mxu0 0
  %188 = vmatmul.mubr.bf16.gmra.mxu0 %v107
  %v189 = vpop.f32.mrf.mxu0
  %v190 = vadd.f32 0.0, %v189
  %v191 = vpop.f32.mrf.mxu0
  %v192 = vpop.f32.mrf.mxu0
  %v193 = vadd.f32 0.0, %v192
  %v194 = vpop.f32.mrf.mxu0
  %195 = vmatprep.mubr.bf16.mxu0 0
  %196 = vmatmul.mubr.bf16.gmra.mxu0 %v110
  %v197 = vpop.f32.mrf.mxu0
  %v198 = vadd.f32 0.0, %v197
  %v199 = vpop.f32.mrf.mxu0
  %v200 = vpop.f32.mrf.mxu0
  %v201 = vadd.f32 0.0, %v200
  %v202 = vpop.f32.mrf.mxu0
  %203 = vmatprep.mubr.bf16.mxu0 0
  %204 = vmatmul.mubr.bf16.gmra.mxu0 %v113
  %v205 = vpop.f32.mrf.mxu0
  %v206 = vadd.f32 0.0, %v205
  %v207 = vpop.f32.mrf.mxu0
  %v208 = vpop.f32.mrf.mxu0
  %v209 = vadd.f32 0.0, %v208
  %v210 = vpop.f32.mrf.mxu0
  %211 = vdwg.mxu0
  %v212 = vld [vmem:[%s2] sm:$0x1]
  %v214 = vlaneseq
  %v215 = vshrl.u32 %v214, 7
  %v216 = vsub.s32 0, %v215
  %v217 = vrot.slane %v212, %v216
  %v219 = vmul.f32 %v150, %v217
  %v220 = vmul.f32 %v153, %v217
  %v221 = vmul.f32 %v158, %v217
  %v222 = vmul.f32 %v161, %v217
  %v223 = vmul.f32 %v166, %v217
  %v224 = vmul.f32 %v169, %v217
  %v225 = vmul.f32 %v174, %v217
  %v226 = vmul.f32 %v177, %v217
  %v227 = vmul.f32 %v182, %v217
  %v228 = vmul.f32 %v185, %v217
  %v229 = vmul.f32 %v190, %v217
  %v230 = vmul.f32 %v193, %v217
  %v231 = vmul.f32 %v198, %v217
  %v232 = vmul.f32 %v201, %v217
  %v233 = vmul.f32 %v206, %v217
  %v234 = vmul.f32 %v209, %v217
  %v235 = vld [vmem:[%s3] sm:$0x1]
  %v237 = vlaneseq
  %v238 = vshrl.u32 %v237, 7
  %v239 = vsub.s32 0, %v238
  %v240 = vrot.slane %v235, %v239
  %v242 = vadd.f32 %v219, %v240
  %v243 = vadd.f32 %v220, %v240
  %v244 = vadd.f32 %v221, %v240
  %v245 = vadd.f32 %v222, %v240
  %v246 = vadd.f32 %v223, %v240
  %v247 = vadd.f32 %v224, %v240
  %v248 = vadd.f32 %v225, %v240
  %v249 = vadd.f32 %v226, %v240
  %v250 = vadd.f32 %v227, %v240
  %v251 = vadd.f32 %v228, %v240
  %v252 = vadd.f32 %v229, %v240
  %v253 = vadd.f32 %v230, %v240
  %v254 = vadd.f32 %v231, %v240
  %v255 = vadd.f32 %v232, %v240
  %v256 = vadd.f32 %v233, %v240
  %v257 = vadd.f32 %v234, %v240
  %v258 = vlaneseq
  %v259 = vand.u32 %v258, 127
  %vm260 = vcmp.ge.s32.totalorder %v259, 32
  %v261 = vmax.f32 %v242, 0.0
  %v262 = vmax.f32 %v243, 0.0
  %v263 = vmax.f32 %v244, 0.0
  %v264 = vmax.f32 %v245, 0.0
  %v265 = vmax.f32 %v246, 0.0
  %v266 = vmax.f32 %v247, 0.0
  %v267 = vmax.f32 %v248, 0.0
  %v268 = vmax.f32 %v249, 0.0
  %v269 = vmax.f32 %v250, 0.0
  %v270 = vmax.f32 %v251, 0.0
  %v271 = vmax.f32 %v252, 0.0
  %v272 = vmax.f32 %v253, 0.0
  %v273 = vmax.f32 %v254, 0.0
  %v274 = vmax.f32 %v255, 0.0
  %v275 = vmax.f32 %v256, 0.0
  %v276 = vmax.f32 %v257, 0.0
  %v277 = vsel %vm260, %v261, %v242
  %v278 = vsel %vm260, %v262, %v243
  %v279 = vsel %vm260, %v263, %v244
  %v280 = vsel %vm260, %v264, %v245
  %v281 = vsel %vm260, %v265, %v246
  %v282 = vsel %vm260, %v266, %v247
  %v283 = vsel %vm260, %v267, %v248
  %v284 = vsel %vm260, %v268, %v249
  %v285 = vsel %vm260, %v269, %v250
  %v286 = vsel %vm260, %v270, %v251
  %v287 = vsel %vm260, %v271, %v252
  %v288 = vsel %vm260, %v272, %v253
  %v289 = vsel %vm260, %v273, %v254
  %v290 = vsel %vm260, %v274, %v255
  %v291 = vsel %vm260, %v275, %v256
  %v292 = vsel %vm260, %v276, %v257
  %v293 = vpack.c.bf16 %v278, %v277
  %v294 = vpack.c.bf16 %v280, %v279
  %v295 = vpack.c.bf16 %v282, %v281
  %v296 = vpack.c.bf16 %v284, %v283
  %v297 = vpack.c.bf16 %v286, %v285
  %v298 = vpack.c.bf16 %v288, %v287
  %v299 = vpack.c.bf16 %v290, %v289
  %v300 = vpack.c.bf16 %v292, %v291
  %v309 = vunpack.c.l.b16 %v293
  %v310 = vunpack.c.h.b16 %v293
  %v311 = vunpack.c.l.b16 %v294
  %v312 = vunpack.c.h.b16 %v294
  %v313 = vunpack.c.l.b16 %v295
  %v314 = vunpack.c.h.b16 %v295
  %v315 = vunpack.c.l.b16 %v296
  %v316 = vunpack.c.h.b16 %v296
  %v317 = vunpack.c.l.b16 %v297
  %v318 = vunpack.c.h.b16 %v297
  %v319 = vunpack.c.l.b16 %v298
  %v320 = vunpack.c.h.b16 %v298
  %v321 = vunpack.c.l.b16 %v299
  %v322 = vunpack.c.h.b16 %v299
  %v323 = vunpack.c.l.b16 %v300
  %v324 = vunpack.c.h.b16 %v300
  %v325 = vpack.c.b16 %v309, %v309
  %v326 = vpack.c.b16 %v310, %v310
  %v327 = vpack.c.b16 %v311, %v311
  %v328 = vpack.c.b16 %v312, %v312
  %v329 = vpack.c.b16 %v313, %v313
  %v330 = vpack.c.b16 %v314, %v314
  %v331 = vpack.c.b16 %v315, %v315
  %v332 = vpack.c.b16 %v316, %v316
  %v333 = vpack.c.b16 %v317, %v317
  %v334 = vpack.c.b16 %v318, %v318
  %v335 = vpack.c.b16 %v319, %v319
  %v336 = vpack.c.b16 %v320, %v320
  %v337 = vpack.c.b16 %v321, %v321
  %v338 = vpack.c.b16 %v322, %v322
  %v339 = vpack.c.b16 %v323, %v323
  %v340 = vpack.c.b16 %v324, %v324
  %vm357 = vcmask 519168
  %358 = vst.msk [vmem:[%s4] sm:$0xf] %vm357, %v325
  %359 = vst.msk [vmem:[%s4 + $0x4] sm:$0xf] %vm357, %v326
  %360 = vst.msk [vmem:[%s4 + $0x8] sm:$0xf] %vm357, %v327
  %361 = vst.msk [vmem:[%s4 + $0xc] sm:$0xf] %vm357, %v328
  %362 = vst.msk [vmem:[%s4 + $0x10] sm:$0xf] %vm357, %v329
  %363 = vst.msk [vmem:[%s4 + $0x14] sm:$0xf] %vm357, %v330
  %364 = vst.msk [vmem:[%s4 + $0x18] sm:$0xf] %vm357, %v331
  %365 = vst.msk [vmem:[%s4 + $0x1c] sm:$0xf] %vm357, %v332
  %366 = vst.msk [vmem:[%s4 + $0x20] sm:$0xf] %vm357, %v333
  %367 = vst.msk [vmem:[%s4 + $0x24] sm:$0xf] %vm357, %v334
  %368 = vst.msk [vmem:[%s4 + $0x28] sm:$0xf] %vm357, %v335
  %369 = vst.msk [vmem:[%s4 + $0x2c] sm:$0xf] %vm357, %v336
  %370 = vst.msk [vmem:[%s4 + $0x30] sm:$0xf] %vm357, %v337
  %371 = vst.msk [vmem:[%s4 + $0x34] sm:$0xf] %vm357, %v338
  %372 = vst.msk [vmem:[%s4 + $0x38] sm:$0xf] %vm357, %v339
  %373 = vst.msk [vmem:[%s4 + $0x3c] sm:$0xf] %vm357, %v340
  // Predicated region
  $region18: #{cfm_forward.21} parent=0 // pred_check
    _
  $region19: #{cfm_forward.21} parent=0 // pred_check_branch
    %375 = sbr.rel (0) target = $region21
  $region20: #{cfm_forward.21} parent=0 // pred_region
    _
  $region21: #{cfm_forward.21} parent=0 // pred_fallthru
    _
  // Predicated region
  $region22: #{cfm_forward.21} parent=0 // pred_check
    _
  $region23: #{cfm_forward.21} parent=0 // pred_check_branch
    %377 = sbr.rel (0) target = $region25
  $region24: #{cfm_forward.21} parent=0 // pred_region
    _
  $region25: #{cfm_forward.21} parent=0 // pred_fallthru
    _

// kernel: cfm_forward.16
$region0: #{cfm_forward.16}
  #allocation0 [shape = 'u32[]', space=smem, size = 0x4, offset = 0x4, fixed_abs, tag = 'smem constant byte address 0x4 - core index']
  #allocation1 [shape = 'u32[144,128]{1,0:T(1,128)}', space=vmem, size = 0x12000, scoped, tag = 'internal scratch']
  %s0 = inlined_call_operand.vmem [shape: bf16[2,10,10,32], index: 0, kind: input, shape index: {}]
  %s1 = inlined_call_operand.vmem [shape: bf16[9,32], index: 1, kind: input, shape index: {}]
  %s2 = inlined_call_operand.vmem [shape: bf16[32,32], index: 2, kind: input, shape index: {}]
  %s3 = inlined_call_operand.vmem [shape: f32[1,32], index: 3, kind: input, shape index: {}]
  %s4 = inlined_call_operand.vmem [shape: f32[1,32], index: 4, kind: input, shape index: {}]
  %s5 = inlined_call_operand.vmem [shape: bf16[2,8,8,32], index: 5, kind: output, shape index: {}]
  %s6 = sld [smem:[#allocation0]]
  $region53: #{cfm_forward.16} parent=0
    _
  %s8 = ssub.s32 1, %s6
  %s9 = scalar_select 0, %s8, %s6
  loop: start=0, step=1, limit=4
  $region2: #{cfm_forward.16} parent=0 // loop_pre_header
    _
  $region3: #{cfm_forward.16} parent=0 // loop_header
    %s11 = sphi 0, %s15
    %p12 = scmp.ge.s32.totalorder %s11, 4
    %s21 = sphi 0, %s23
    %s24 = sphi 0, %s21
    %s25 = sphi 0, %s24
    %s41 = sphi 0, %s25
    %s45 = sphi 0, %s45
    %s47 = sphi 0, %s45
    %s48 = sphi 0, %s47
    %s62 = sphi 0, %s48
    %s66 = sphi 0, %s66
    %s68 = sphi 0, %s66
    %s69 = sphi 0, %s68
    %s83 = sphi 0, %s69
    %s87 = sphi 0, %s87
    %s89 = sphi 0, %s87
    %s90 = sphi 0, %s89
    %s104 = sphi 0, %s90
    %s108 = sphi 0, %s108
    %s110 = sphi 0, %s108
    %s111 = sphi 0, %s110
    %s125 = sphi 0, %s111
    %s131 = sphi 0, %s133
    %s134 = sphi 0, %s131
    %s135 = sphi 0, %s134
    %s151 = sphi 0, %s135
  $region4: #{cfm_forward.16} parent=0 // loop_header_branch
    %14 = sbr.rel (%p12) target = $region8
  $region5: #{cfm_forward.16} parent=0 // loop_body
    %s16 = ssub.s32 %s11, 1
    %s17 = ssub.s32 %s11, 2
    %s18 = sadd.s32 %s11, 1
    %s19 = ssub.s32 %s11, %s18
    %p20 = scmp.eq.s32.totalorder %s19, 0
    %s22 = sadd.s32 %s21, 1
    %s23 = scalar_select %p20, %s21, %s22
    %p26 = pneg %p20
    %p27 = scmp.eq.s32.totalorder %s11, 1
    %p28 = por %p26, %p27
    %p29 = scmp.ne.s32.totalorder %s21, %s24
    %p30 = scmp.eq.s32.totalorder %s11, 0
    %p31 = por %p29, %p30
    %p32 = scmp.ne.s32.totalorder %s21, %s24
    %p33 = scmp.eq.s32.totalorder %s16, 1
    %p34 = por %p32, %p33
    %p35 = scmp.ne.s32.totalorder %s24, %s25
    %p36 = scmp.eq.s32.totalorder %s16, 0
    %p37 = por %p35, %p36
    %p38 = scmp.ne.s32.totalorder %s24, %s25
    %p39 = scmp.eq.s32.totalorder %s17, 1
    %p40 = por %p38, %p39
    %p42 = scmp.ne.s32.totalorder %s25, %s41
    %p43 = scmp.eq.s32.totalorder %s17, 0
    %p44 = por %p42, %p43
    %s46 = sadd.s32 %s45, 1
    %p49 = scmp.eq.s32.totalorder %s11, 1
    %p50 = scmp.ne.s32.totalorder %s45, %s47
    %p51 = scmp.eq.s32.totalorder %s11, 0
    %p52 = por %p50, %p51
    %p53 = scmp.ne.s32.totalorder %s45, %s47
    %p54 = scmp.eq.s32.totalorder %s16, 1
    %p55 = por %p53, %p54
    %p56 = scmp.ne.s32.totalorder %s47, %s48
    %p57 = scmp.eq.s32.totalorder %s16, 0
    %p58 = por %p56, %p57
    %p59 = scmp.ne.s32.totalorder %s47, %s48
    %p60 = scmp.eq.s32.totalorder %s17, 1
    %p61 = por %p59, %p60
    %p63 = scmp.ne.s32.totalorder %s48, %s62
    %p64 = scmp.eq.s32.totalorder %s17, 0
    %p65 = por %p63, %p64
    %s67 = sadd.s32 %s66, 1
    %p70 = scmp.eq.s32.totalorder %s11, 1
    %p71 = scmp.ne.s32.totalorder %s66, %s68
    %p72 = scmp.eq.s32.totalorder %s11, 0
    %p73 = por %p71, %p72
    %p74 = scmp.ne.s32.totalorder %s66, %s68
    %p75 = scmp.eq.s32.totalorder %s16, 1
    %p76 = por %p74, %p75
    %p77 = scmp.ne.s32.totalorder %s68, %s69
    %p78 = scmp.eq.s32.totalorder %s16, 0
    %p79 = por %p77, %p78
    %p80 = scmp.ne.s32.totalorder %s68, %s69
    %p81 = scmp.eq.s32.totalorder %s17, 1
    %p82 = por %p80, %p81
    %p84 = scmp.ne.s32.totalorder %s69, %s83
    %p85 = scmp.eq.s32.totalorder %s17, 0
    %p86 = por %p84, %p85
    %s88 = sadd.s32 %s87, 1
    %p91 = scmp.eq.s32.totalorder %s11, 1
    %p92 = scmp.ne.s32.totalorder %s87, %s89
    %p93 = scmp.eq.s32.totalorder %s11, 0
    %p94 = por %p92, %p93
    %p95 = scmp.ne.s32.totalorder %s87, %s89
    %p96 = scmp.eq.s32.totalorder %s16, 1
    %p97 = por %p95, %p96
    %p98 = scmp.ne.s32.totalorder %s89, %s90
    %p99 = scmp.eq.s32.totalorder %s16, 0
    %p100 = por %p98, %p99
    %p101 = scmp.ne.s32.totalorder %s89, %s90
    %p102 = scmp.eq.s32.totalorder %s17, 1
    %p103 = por %p101, %p102
    %p105 = scmp.ne.s32.totalorder %s90, %s104
    %p106 = scmp.eq.s32.totalorder %s17, 0
    %p107 = por %p105, %p106
    %s109 = sadd.s32 %s108, 1
    %p112 = scmp.eq.s32.totalorder %s11, 1
    %p113 = scmp.ne.s32.totalorder %s108, %s110
    %p114 = scmp.eq.s32.totalorder %s11, 0
    %p115 = por %p113, %p114
    %p116 = scmp.ne.s32.totalorder %s108, %s110
    %p117 = scmp.eq.s32.totalorder %s16, 1
    %p118 = por %p116, %p117
    %p119 = scmp.ne.s32.totalorder %s110, %s111
    %p120 = scmp.eq.s32.totalorder %s16, 0
    %p121 = por %p119, %p120
    %p122 = scmp.ne.s32.totalorder %s110, %s111
    %p123 = scmp.eq.s32.totalorder %s17, 1
    %p124 = por %p122, %p123
    %p126 = scmp.ne.s32.totalorder %s111, %s125
    %p127 = scmp.eq.s32.totalorder %s17, 0
    %p128 = por %p126, %p127
    %s129 = ssub.s32 %s11, %s18
    %p130 = scmp.eq.s32.totalorder %s129, 0
    %s132 = sadd.s32 %s131, 1
    %s133 = scalar_select %p130, %s131, %s132
    %p136 = pneg %p130
    %p137 = scmp.eq.s32.totalorder %s11, 1
    %p138 = por %p136, %p137
    %p139 = scmp.ne.s32.totalorder %s131, %s134
    %p140 = scmp.eq.s32.totalorder %s11, 0
    %p141 = por %p139, %p140
    %p142 = scmp.ne.s32.totalorder %s131, %s134
    %p143 = scmp.eq.s32.totalorder %s16, 1
    %p144 = por %p142, %p143
    %p145 = scmp.ne.s32.totalorder %s134, %s135
    %p146 = scmp.eq.s32.totalorder %s16, 0
    %p147 = por %p145, %p146
    %p148 = scmp.ne.s32.totalorder %s134, %s135
    %p149 = scmp.eq.s32.totalorder %s17, 1
    %p150 = por %p148, %p149
    %p152 = scmp.ne.s32.totalorder %s135, %s151
    %p153 = scmp.eq.s32.totalorder %s17, 0
    %p154 = por %p152, %p153
    %p155 = scmp.le.s32.totalorder 1, %s11
    %p156 = scmp.lt.s32.totalorder %s11, 3
    %p157 = pnand %p155, %p156
    %p158 = pneg %p157
    // Predicated region
    $region9: #{cfm_forward.16} parent=5 // pred_check
      _
    $region10: #{cfm_forward.16} parent=5 // pred_check_branch
      %160 = sbr.rel (%p157) target = $region12
    $region11: #{cfm_forward.16} parent=5 // pred_region
      %s161 = ssub.s32 %s11, 1
      // Predicated region
      $region13: #{cfm_forward.16} parent=11 // pred_check
        %p162 = pneg %p58
      $region14: #{cfm_forward.16} parent=11 // pred_check_branch
        %164 = sbr.rel (%p162) target = $region16
      $region15: #{cfm_forward.16} parent=11 // pred_region
        _
      $region16: #{cfm_forward.16} parent=11 // pred_fallthru
        _
      // Predicated region
      $region17: #{cfm_forward.16} parent=11 // pred_check
        %p165 = pneg %p79
      $region18: #{cfm_forward.16} parent=11 // pred_check_branch
        %167 = sbr.rel (%p165) target = $region20
      $region19: #{cfm_forward.16} parent=11 // pred_region
        _
      $region20: #{cfm_forward.16} parent=11 // pred_fallthru
        _
      // Predicated region
      $region21: #{cfm_forward.16} parent=11 // pred_check
        %p168 = pneg %p100
      $region22: #{cfm_forward.16} parent=11 // pred_check_branch
        %170 = sbr.rel (%p168) target = $region24
      $region23: #{cfm_forward.16} parent=11 // pred_region
        _
      $region24: #{cfm_forward.16} parent=11 // pred_fallthru
        _
      // Predicated region
      $region25: #{cfm_forward.16} parent=11 // pred_check
        %p171 = pneg %p121
      $region26: #{cfm_forward.16} parent=11 // pred_check_branch
        %173 = sbr.rel (%p171) target = $region28
      $region27: #{cfm_forward.16} parent=11 // pred_region
        _
      $region28: #{cfm_forward.16} parent=11 // pred_fallthru
        _
    $region12: #{cfm_forward.16} parent=5 // pred_fallthru
      _
    %p174 = scmp.lt.s32.totalorder %s11, 2
    // Predicated region
    $region29: #{cfm_forward.16} parent=5 // pred_check
      %p175 = pneg %p174
    $region30: #{cfm_forward.16} parent=5 // pred_check_branch
      %177 = sbr.rel (%p175) target = $region32
    $region31: #{cfm_forward.16} parent=5 // pred_region
      // Predicated region
      $region33: #{cfm_forward.16} parent=31 // pred_check
        %p178 = pneg %p31
      $region34: #{cfm_forward.16} parent=31 // pred_check_branch
        %180 = sbr.rel (%p178) target = $region36
      $region35: #{cfm_forward.16} parent=31 // pred_region
        %p181 = scmp.lt.s32.totalorder %s11, 1
        %s182 = scalar_select %p181, %s11, 1
        %s183 = smul.addr %s182, 20
        %s184 = smul.addr %s183, 4
        %s185 = scalar_lea.vmem %s0, %s184
      $region36: #{cfm_forward.16} parent=31 // pred_fallthru
        _
    $region32: #{cfm_forward.16} parent=5 // pred_fallthru
      _
    %p186 = scmp.le.s32.totalorder 1, %s11
    %p187 = scmp.lt.s32.totalorder %s11, 3
    %p188 = pnand %p186, %p187
    %p189 = pneg %p188
    // Predicated region
    $region37: #{cfm_forward.16} parent=5 // pred_check
      _
    $region38: #{cfm_forward.16} parent=5 // pred_check_branch
      %191 = sbr.rel (%p188) target = $region40
    $region39: #{cfm_forward.16} parent=5 // pred_region
      %s192 = ssub.s32 %s11, 1
      %p193 = scmp.lt.s32.totalorder %s16, 1
      %s194 = scalar_select %p193, %s16, 1
      %s195 = smul.addr %s194, 20
      %s196 = smul.addr %s195, 4
      %s197 = scalar_lea.vmem %s0, %s196
      %p198 = pneg %p37
      %p199 = pneg %p34
      %p200 = pneg %p58
      %p201 = pneg %p55
      %p202 = pneg %p79
      %p203 = pneg %p76
      %p204 = pneg %p100
      %p205 = pneg %p97
      %p206 = pneg %p121
      %p207 = pneg %p118
      %p208 = pneg %p147
      %p209 = pneg %p144
      %p210 = scmp.lt.s32.totalorder %s16, 1
      %s211 = scalar_select %p210, %s16, 1
      %s212 = smul.addr %s211, 8
      %s213 = smul.addr %s212, 4
      %s214 = scalar_lea.vmem %s5, %s213
      %p215 = scmp.lt.s32.totalorder %s16, 1
      %s216 = scalar_select %p215, %s16, 1
      %s217 = smul.addr %s216, 20
      %s218 = smul.addr %s217, 4
      %s219 = scalar_lea.vmem %s0, %s218
      %p220 = scmp.lt.s32.totalorder %s16, 1
      %s221 = scalar_select %p220, %s16, 1
      %s222 = smul.addr %s221, 8
      %s223 = smul.addr %s222, 4
      %s224 = scalar_lea.vmem %s5, %s223
      %v226 = vld [vmem:[%s219] sm:$0xf]
      %v227 = vld [vmem:[%s219 + $0x4] sm:$0x1]
      %v228 = vld [vmem:[%s219 + $0x8] sm:$0xf]
      %v229 = vld [vmem:[%s219 + $0xc] sm:$0x1]
      %v230 = vld [vmem:[%s219 + $0x10] sm:$0xf]
      %v231 = vld [vmem:[%s219 + $0x14] sm:$0x1]
      %v232 = vld [vmem:[%s219 + $0x18] sm:$0xf]
      %v233 = vld [vmem:[%s219 + $0x1c] sm:$0x1]
      %v234 = vld [vmem:[%s219 + $0x20] sm:$0xf]
      %v235 = vld [vmem:[%s219 + $0x24] sm:$0x1]
      %v236 = vld [vmem:[%s219 + $0x28] sm:$0xf]
      %v237 = vld [vmem:[%s219 + $0x2c] sm:$0x1]
      %v238 = vld [vmem:[%s219 + $0x30] sm:$0xf]
      %v239 = vld [vmem:[%s219 + $0x34] sm:$0x1]
      %v240 = vld [vmem:[%s219 + $0x38] sm:$0xf]
      %v241 = vld [vmem:[%s219 + $0x3c] sm:$0x1]
      %v242 = vld [vmem:[%s219 + $0x40] sm:$0xf]
      %v243 = vld [vmem:[%s219 + $0x44] sm:$0x1]
      %v244 = vld [vmem:[%s219 + $0x48] sm:$0xf]
      %v245 = vld [vmem:[%s219 + $0x4c] sm:$0x1]
      %v246 = vld [vmem:[%s1] sm:$0xf]
      %v247 = vld [vmem:[%s1 + $0x4] sm:$0x1]
      %v248 = vunpack.c.l.bf16 %v246
      %v249 = vunpack.c.l.bf16 %v247
      %v250 = vunpack.c.l.bf16 %v226
      %v251 = vunpack.c.l.bf16 %v228
      %v252 = vunpack.c.l.bf16 %v230
      %v253 = vunpack.c.l.bf16 %v232
      %v254 = vunpack.c.l.bf16 %v234
      %v255 = vunpack.c.l.bf16 %v236
      %v256 = vunpack.c.l.bf16 %v238
      %v257 = vunpack.c.l.bf16 %v240
      %v258 = vlaneseq
      %v259 = vshrl.u32 %v258, 7
      %v260 = vsub.s32 0, %v259
      %v261 = vrot.slane %v248, %v260
      %v262 = vmul.f32 %v250, %v261
      %v263 = vmul.f32 %v251, %v261
      %v264 = vmul.f32 %v252, %v261
      %v265 = vmul.f32 %v253, %v261
      %v266 = vmul.f32 %v254, %v261
      %v267 = vmul.f32 %v255, %v261
      %v268 = vmul.f32 %v256, %v261
      %v269 = vmul.f32 %v257, %v261
      %v270 = vadd.f32 %v262, 0.0
      %v271 = vadd.f32 %v263, 0.0
      %v272 = vadd.f32 %v264, 0.0
      %v273 = vadd.f32 %v265, 0.0
      %v274 = vadd.f32 %v266, 0.0
      %v275 = vadd.f32 %v267, 0.0
      %v276 = vadd.f32 %v268, 0.0
      %v277 = vadd.f32 %v269, 0.0
      %v278 = vunpack.c.l.bf16 %v227
      %v279 = vunpack.c.l.bf16 %v229
      %v280 = vunpack.c.l.bf16 %v231
      %v281 = vunpack.c.l.bf16 %v233
      %v282 = vunpack.c.l.bf16 %v235
      %v283 = vunpack.c.l.bf16 %v237
      %v284 = vunpack.c.l.bf16 %v239
      %v285 = vunpack.c.l.bf16 %v241
      %v286 = vlaneseq
      %v287 = vshrl.u32 %v286, 7
      %v288 = vsub.s32 1, %v287
      %v289 = vrot.slane %v248, %v288
      %v290 = vmul.f32 %v250, %v289
      %v291 = vmul.f32 %v278, %v289
      %v292 = vmul.f32 %v251, %v289
      %v293 = vmul.f32 %v279, %v289
      %v294 = vmul.f32 %v252, %v289
      %v295 = vmul.f32 %v280, %v289
      %v296 = vmul.f32 %v253, %v289
      %v297 = vmul.f32 %v281, %v289
      %v298 = vmul.f32 %v254, %v289
      %v299 = vmul.f32 %v282, %v289
      %v300 = vmul.f32 %v255, %v289
      %v301 = vmul.f32 %v283, %v289
      %v302 = vmul.f32 %v256, %v289
      %v303 = vmul.f32 %v284, %v289
      %v304 = vmul.f32 %v257, %v289
      %v305 = vmul.f32 %v285, %v289
      %vm322 = vcmask 1046528
      %v323 = vrot.slane %v290, 1
      %v324 = vrot.slane %v291, 1
      %v325 = vsel %vm322, %v323, %v324
      %v326 = vrot.slane %v292, 1
      %v327 = vrot.slane %v293, 1
      %v328 = vsel %vm322, %v326, %v327
      %v329 = vrot.slane %v294, 1
      %v330 = vrot.slane %v295, 1
      %v331 = vsel %vm322, %v329, %v330
      %v332 = vrot.slane %v296, 1
      %v333 = vrot.slane %v297, 1
      %v334 = vsel %vm322, %v332, %v333
      %v335 = vrot.slane %v298, 1
      %v336 = vrot.slane %v299, 1
      %v337 = vsel %vm322, %v335, %v336
      %v338 = vrot.slane %v300, 1
      %v339 = vrot.slane %v301, 1
      %v340 = vsel %vm322, %v338, %v339
      %v341 = vrot.slane %v302, 1
      %v342 = vrot.slane %v303, 1
      %v343 = vsel %vm322, %v341, %v342
      %v344 = vrot.slane %v304, 1
      %v345 = vrot.slane %v305, 1
      %v346 = vsel %vm322, %v344, %v345
      %v355 = vadd.f32 %v270, %v325
      %v356 = vadd.f32 %v271, %v328
      %v357 = vadd.f32 %v272, %v331
      %v358 = vadd.f32 %v273, %v334
      %v359 = vadd.f32 %v274, %v337
      %v360 = vadd.f32 %v275, %v340
      %v361 = vadd.f32 %v276, %v343
      %v362 = vadd.f32 %v277, %v346
      %v363 = vlaneseq
      %v364 = vshrl.u32 %v363, 7
      %v365 = vsub.s32 2, %v364
      %v366 = vrot.slane %v248, %v365
      %v367 = vmul.f32 %v250, %v366
      %v368 = vmul.f32 %v278, %v366
      %v369 = vmul.f32 %v251, %v366
      %v370 = vmul.f32 %v279, %v366
      %v371 = vmul.f32 %v252, %v366
      %v372 = vmul.f32 %v280, %v366
      %v373 = vmul.f32 %v253, %v366
      %v374 = vmul.f32 %v281, %v366
      %v375 = vmul.f32 %v254, %v366
      %v376 = vmul.f32 %v282, %v366
      %v377 = vmul.f32 %v255, %v366
      %v378 = vmul.f32 %v283, %v366
      %v379 = vmul.f32 %v256, %v366
      %v380 = vmul.f32 %v284, %v366
      %v381 = vmul.f32 %v257, %v366
      %v382 = vmul.f32 %v285, %v366
      %vm399 = vcmask 1045504
      %v400 = vrot.slane %v367, 2
      %v401 = vrot.slane %v368, 2
      %v402 = vsel %vm399, %v400, %v401
      %v403 = vrot.slane %v369, 2
      %v404 = vrot.slane %v370, 2
      %v405 = vsel %vm399, %v403, %v404
      %v406 = vrot.slane %v371, 2
      %v407 = vrot.slane %v372, 2
      %v408 = vsel %vm399, %v406, %v407
      %v409 = vrot.slane %v373, 2
      %v410 = vrot.slane %v374, 2
      %v411 = vsel %vm399, %v409, %v410
      %v412 = vrot.slane %v375, 2
      %v413 = vrot.slane %v376, 2
      %v414 = vsel %vm399, %v412, %v413
      %v415 = vrot.slane %v377, 2
      %v416 = vrot.slane %v378, 2
      %v417 = vsel %vm399, %v415, %v416
      %v418 = vrot.slane %v379, 2
      %v419 = vrot.slane %v380, 2
      %v420 = vsel %vm399, %v418, %v419
      %v421 = vrot.slane %v381, 2
      %v422 = vrot.slane %v382, 2
      %v423 = vsel %vm399, %v421, %v422
      %v432 = vadd.f32 %v355, %v402
      %v433 = vadd.f32 %v356, %v405
      %v434 = vadd.f32 %v357, %v408
      %v435 = vadd.f32 %v358, %v411
      %v436 = vadd.f32 %v359, %v414
      %v437 = vadd.f32 %v360, %v417
      %v438 = vadd.f32 %v361, %v420
      %v439 = vadd.f32 %v362, %v423
      %v440 = vunpack.c.l.bf16 %v242
      %v441 = vlaneseq
      %v442 = vshrl.u32 %v441, 7
      %v443 = vsub.s32 3, %v442
      %v444 = vrot.slane %v248, %v443
      %v445 = vmul.f32 %v251, %v444
      %v446 = vmul.f32 %v252, %v444
      %v447 = vmul.f32 %v253, %v444
      %v448 = vmul.f32 %v254, %v444
      %v449 = vmul.f32 %v255, %v444
      %v450 = vmul.f32 %v256, %v444
      %v451 = vmul.f32 %v257, %v444
      %v452 = vmul.f32 %v440, %v444
      %v453 = vadd.f32 %v432, %v445
      %v454 = vadd.f32 %v433, %v446
      %v455 = vadd.f32 %v434, %v447
      %v456 = vadd.f32 %v435, %v448
      %v457 = vadd.f32 %v436, %v449
      %v458 = vadd.f32 %v437, %v450
      %v459 = vadd.f32 %v438, %v451
      %v460 = vadd.f32 %v439, %v452
      %v461 = vunpack.c.l.bf16 %v243
      %v462 = vlaneseq
      %v463 = vshrl.u32 %v462, 7
      %v464 = vsub.s32 4, %v463
      %v465 = vrot.slane %v248, %v464
      %v466 = vmul.f32 %v251, %v465
      %v467 = vmul.f32 %v279, %v465
      %v468 = vmul.f32 %v252, %v465
      %v469 = vmul.f32 %v280, %v465
      %v470 = vmul.f32 %v253, %v465
      %v471 = vmul.f32 %v281, %v465
      %v472 = vmul.f32 %v254, %v465
      %v473 = vmul.f32 %v282, %v465
      %v474 = vmul.f32 %v255, %v465
      %v475 = vmul.f32 %v283, %v465
      %v476 = vmul.f32 %v256, %v465
      %v477 = vmul.f32 %v284, %v465
      %v478 = vmul.f32 %v257, %v465
      %v479 = vmul.f32 %v285, %v465
      %v480 = vmul.f32 %v440, %v465
      %v481 = vmul.f32 %v461, %v465
      %v498 = vrot.slane %v466, 1
      %v499 = vrot.slane %v467, 1
      %v500 = vsel %vm322, %v498, %v499
      %v501 = vrot.slane %v468, 1
      %v502 = vrot.slane %v469, 1
      %v503 = vsel %vm322, %v501, %v502
      %v504 = vrot.slane %v470, 1
      %v505 = vrot.slane %v471, 1
      %v506 = vsel %vm322, %v504, %v505
      %v507 = vrot.slane %v472, 1
      %v508 = vrot.slane %v473, 1
      %v509 = vsel %vm322, %v507, %v508
      %v510 = vrot.slane %v474, 1
      %v511 = vrot.slane %v475, 1
      %v512 = vsel %vm322, %v510, %v511
      %v513 = vrot.slane %v476, 1
      %v514 = vrot.slane %v477, 1
      %v515 = vsel %vm322, %v513, %v514
      %v516 = vrot.slane %v478, 1
      %v517 = vrot.slane %v479, 1
      %v518 = vsel %vm322, %v516, %v517
      %v519 = vrot.slane %v480, 1
      %v520 = vrot.slane %v481, 1
      %v521 = vsel %vm322, %v519, %v520
      %v530 = vadd.f32 %v453, %v500
      %v531 = vadd.f32 %v454, %v503
      %v532 = vadd.f32 %v455, %v506
      %v533 = vadd.f32 %v456, %v509
      %v534 = vadd.f32 %v457, %v512
      %v535 = vadd.f32 %v458, %v515
      %v536 = vadd.f32 %v459, %v518
      %v537 = vadd.f32 %v460, %v521
      %v538 = vlaneseq
      %v539 = vshrl.u32 %v538, 7
      %v540 = vsub.s32 5, %v539
      %v541 = vrot.slane %v248, %v540
      %v542 = vmul.f32 %v251, %v541
      %v543 = vmul.f32 %v279, %v541
      %v544 = vmul.f32 %v252, %v541
      %v545 = vmul.f32 %v280, %v541
      %v546 = vmul.f32 %v253, %v541
      %v547 = vmul.f32 %v281, %v541
      %v548 = vmul.f32 %v254, %v541
      %v549 = vmul.f32 %v282, %v541
      %v550 = vmul.f32 %v255, %v541
      %v551 = vmul.f32 %v283, %v541
      %v552 = vmul.f32 %v256, %v541
      %v553 = vmul.f32 %v284, %v541
      %v554 = vmul.f32 %v257, %v541
      %v555 = vmul.f32 %v285, %v541
      %v556 = vmul.f32 %v440, %v541
      %v557 = vmul.f32 %v461, %v541
      %v574 = vrot.slane %v542, 2
      %v575 = vrot.slane %v543, 2
      %v576 = vsel %vm399, %v574, %v575
      %v577 = vrot.slane %v544, 2
      %v578 = vrot.slane %v545, 2
      %v579 = vsel %vm399, %v577, %v578
      %v580 = vrot.slane %v546, 2
      %v581 = vrot.slane %v547, 2
      %v582 = vsel %vm399, %v580, %v581
      %v583 = vrot.slane %v548, 2
      %v584 = vrot.slane %v549, 2
      %v585 = vsel %vm399, %v583, %v584
      %v586 = vrot.slane %v550, 2
      %v587 = vrot.slane %v551, 2
      %v588 = vsel %vm399, %v586, %v587
      %v589 = vrot.slane %v552, 2
      %v590 = vrot.slane %v553, 2
      %v591 = vsel %vm399, %v589, %v590
      %v592 = vrot.slane %v554, 2
      %v593 = vrot.slane %v555, 2
      %v594 = vsel %vm399, %v592, %v593
      %v595 = vrot.slane %v556, 2
      %v596 = vrot.slane %v557, 2
      %v597 = vsel %vm399, %v595, %v596
      %v606 = vadd.f32 %v530, %v576
      %v607 = vadd.f32 %v531, %v579
      %v608 = vadd.f32 %v532, %v582
      %v609 = vadd.f32 %v533, %v585
      %v610 = vadd.f32 %v534, %v588
      %v611 = vadd.f32 %v535, %v591
      %v612 = vadd.f32 %v536, %v594
      %v613 = vadd.f32 %v537, %v597
      %v614 = vunpack.c.l.bf16 %v244
      %v615 = vlaneseq
      %v616 = vshrl.u32 %v615, 7
      %v617 = vsub.s32 6, %v616
      %v618 = vrot.slane %v248, %v617
      %v619 = vmul.f32 %v252, %v618
      %v620 = vmul.f32 %v253, %v618
      %v621 = vmul.f32 %v254, %v618
      %v622 = vmul.f32 %v255, %v618
      %v623 = vmul.f32 %v256, %v618
      %v624 = vmul.f32 %v257, %v618
      %v625 = vmul.f32 %v440, %v618
      %v626 = vmul.f32 %v614, %v618
      %v627 = vadd.f32 %v606, %v619
      %v628 = vadd.f32 %v607, %v620
      %v629 = vadd.f32 %v608, %v621
      %v630 = vadd.f32 %v609, %v622
      %v631 = vadd.f32 %v610, %v623
      %v632 = vadd.f32 %v611, %v624
      %v633 = vadd.f32 %v612, %v625
      %v634 = vadd.f32 %v613, %v626
      %v635 = vunpack.c.l.bf16 %v245
      %v636 = vlaneseq
      %v637 = vshrl.u32 %v636, 7
      %v638 = vsub.s32 7, %v637
      %v639 = vrot.slane %v248, %v638
      %v640 = vmul.f32 %v252, %v639
      %v641 = vmul.f32 %v280, %v639
      %v642 = vmul.f32 %v253, %v639
      %v643 = vmul.f32 %v281, %v639
      %v644 = vmul.f32 %v254, %v639
      %v645 = vmul.f32 %v282, %v639
      %v646 = vmul.f32 %v255, %v639
      %v647 = vmul.f32 %v283, %v639
      %v648 = vmul.f32 %v256, %v639
      %v649 = vmul.f32 %v284, %v639
      %v650 = vmul.f32 %v257, %v639
      %v651 = vmul.f32 %v285, %v639
      %v652 = vmul.f32 %v440, %v639
      %v653 = vmul.f32 %v461, %v639
      %v654 = vmul.f32 %v614, %v639
      %v655 = vmul.f32 %v635, %v639
      %v672 = vrot.slane %v640, 1
      %v673 = vrot.slane %v641, 1
      %v674 = vsel %vm322, %v672, %v673
      %v675 = vrot.slane %v642, 1
      %v676 = vrot.slane %v643, 1
      %v677 = vsel %vm322, %v675, %v676
      %v678 = vrot.slane %v644, 1
      %v679 = vrot.slane %v645, 1
      %v680 = vsel %vm322, %v678, %v679
      %v681 = vrot.slane %v646, 1
      %v682 = vrot.slane %v647, 1
      %v683 = vsel %vm322, %v681, %v682
      %v684 = vrot.slane %v648, 1
      %v685 = vrot.slane %v649, 1
      %v686 = vsel %vm322, %v684, %v685
      %v687 = vrot.slane %v650, 1
      %v688 = vrot.slane %v651, 1
      %v689 = vsel %vm322, %v687, %v688
      %v690 = vrot.slane %v652, 1
      %v691 = vrot.slane %v653, 1
      %v692 = vsel %vm322, %v690, %v691
      %v693 = vrot.slane %v654, 1
      %v694 = vrot.slane %v655, 1
      %v695 = vsel %vm322, %v693, %v694
      %v704 = vadd.f32 %v627, %v674
      %v705 = vadd.f32 %v628, %v677
      %v706 = vadd.f32 %v629, %v680
      %v707 = vadd.f32 %v630, %v683
      %v708 = vadd.f32 %v631, %v686
      %v709 = vadd.f32 %v632, %v689
      %v710 = vadd.f32 %v633, %v692
      %v711 = vadd.f32 %v634, %v695
      %v712 = vlaneseq
      %v713 = vshrl.u32 %v712, 7
      %v714 = vsub.s32 0, %v713
      %v715 = vrot.slane %v249, %v714
      %v716 = vmul.f32 %v252, %v715
      %v717 = vmul.f32 %v280, %v715
      %v718 = vmul.f32 %v253, %v715
      %v719 = vmul.f32 %v281, %v715
      %v720 = vmul.f32 %v254, %v715
      %v721 = vmul.f32 %v282, %v715
      %v722 = vmul.f32 %v255, %v715
      %v723 = vmul.f32 %v283, %v715
      %v724 = vmul.f32 %v256, %v715
      %v725 = vmul.f32 %v284, %v715
      %v726 = vmul.f32 %v257, %v715
      %v727 = vmul.f32 %v285, %v715
      %v728 = vmul.f32 %v440, %v715
      %v729 = vmul.f32 %v461, %v715
      %v730 = vmul.f32 %v614, %v715
      %v731 = vmul.f32 %v635, %v715
      %v748 = vrot.slane %v716, 2
      %v749 = vrot.slane %v717, 2
      %v750 = vsel %vm399, %v748, %v749
      %v751 = vrot.slane %v718, 2
      %v752 = vrot.slane %v719, 2
      %v753 = vsel %vm399, %v751, %v752
      %v754 = vrot.slane %v720, 2
      %v755 = vrot.slane %v721, 2
      %v756 = vsel %vm399, %v754, %v755
      %v757 = vrot.slane %v722, 2
      %v758 = vrot.slane %v723, 2
      %v759 = vsel %vm399, %v757, %v758
      %v760 = vrot.slane %v724, 2
      %v761 = vrot.slane %v725, 2
      %v762 = vsel %vm399, %v760, %v761
      %v763 = vrot.slane %v726, 2
      %v764 = vrot.slane %v727, 2
      %v765 = vsel %vm399, %v763, %v764
      %v766 = vrot.slane %v728, 2
      %v767 = vrot.slane %v729, 2
      %v768 = vsel %vm399, %v766, %v767
      %v769 = vrot.slane %v730, 2
      %v770 = vrot.slane %v731, 2
      %v771 = vsel %vm399, %v769, %v770
      %v780 = vadd.f32 %v704, %v750
      %v781 = vadd.f32 %v705, %v753
      %v782 = vadd.f32 %v706, %v756
      %v783 = vadd.f32 %v707, %v759
      %v784 = vadd.f32 %v708, %v762
      %v785 = vadd.f32 %v709, %v765
      %v786 = vadd.f32 %v710, %v768
      %v787 = vadd.f32 %v711, %v771
      %v788 = vpack.c.bf16 %v780, %v780
      %v789 = vpack.c.bf16 %v781, %v781
      %v790 = vpack.c.bf16 %v782, %v782
      %v791 = vpack.c.bf16 %v783, %v783
      %v792 = vpack.c.bf16 %v784, %v784
      %v793 = vpack.c.bf16 %v785, %v785
      %v794 = vpack.c.bf16 %v786, %v786
      %v795 = vpack.c.bf16 %v787, %v787
      %v796 = vld [vmem:[%s2] sm:$0xf]
      %v797 = vld [vmem:[%s2 + $0x4] sm:$0xf]
      %v798 = vld [vmem:[%s2 + $0x8] sm:$0xf]
      %v799 = vld [vmem:[%s2 + $0xc] sm:$0xf]
      %v808 = vunpack.c.l.b16 %v788
      %v809 = vunpack.c.l.b16 %v789
      %v810 = vunpack.c.l.b16 %v790
      %v811 = vunpack.c.l.b16 %v791
      %v812 = vunpack.c.l.b16 %v792
      %v813 = vunpack.c.l.b16 %v793
      %v814 = vunpack.c.l.b16 %v794
      %v815 = vunpack.c.l.b16 %v795
      %v816 = vpack.c.b16 %v809, %v808
      %v817 = vpack.c.b16 %v811, %v810
      %v818 = vpack.c.b16 %v813, %v812
      %v819 = vpack.c.b16 %v815, %v814
      %v824 = vunpack.c.l.b16 %v796
      %v825 = vunpack.c.l.b16 %v797
      %v826 = vunpack.c.l.b16 %v798
      %v827 = vunpack.c.l.b16 %v799
      %v828 = vpack.c.b16 %v825, %v824
      %v829 = vpack.c.b16 %v827, %v826
      %vm832 = vcmask 261120
      %v834 = vsel %vm832, %v816, 0
      %v837 = vsel %vm832, %v817, 0
      %v840 = vsel %vm832, %v818, 0
      %v843 = vsel %vm832, %v819, 0
      %845 = vmatprep.subr.bf16.mxu0 0
      %846 = vmatpush1.bf16.msra.mxu0 0
      %847 = vmatprep.subr.bf16.mxu0 0
      %848 = vmatpush1.bf16.msra.mxu0 0
      %849 = vmatprep.subr.bf16.mxu0 0
      %850 = vmatpush1.bf16.msra.mxu0 0
      %851 = vmatprep.subr.bf16.mxu0 0
      %852 = vmatpush1.bf16.msra.mxu0 0
      %853 = vmatprep.subr.bf16.mxu0 0
      %854 = vmatpush1.bf16.msra.mxu0 0
      %855 = vmatprep.subr.bf16.mxu0 0
      %856 = vmatpush1.bf16.msra.mxu0 0
      %857 = vmatprep.subr.bf16.mxu0 0
      %858 = vmatpush1.bf16.msra.mxu0 %v829
      %859 = vmatprep.subr.bf16.mxu0 0
      %860 = vmatpush1.bf16.msra.mxu0 %v828
      %861 = vmatprep.subr.bf16.mxu0 0
      %862 = vmatpush2.bf16.msra.mxu0 0
      %863 = vmatprep.subr.bf16.mxu0 0
      %864 = vmatpush2.bf16.msra.mxu0 0
      %865 = vmatprep.subr.bf16.mxu0 0
      %866 = vmatpush2.bf16.msra.mxu0 0
      %867 = vmatprep.subr.bf16.mxu0 0
      %868 = vmatpush2.bf16.msra.mxu0 0
      %869 = vmatprep.subr.bf16.mxu0 0
      %870 = vmatpush2.bf16.msra.mxu0 0
      %871 = vmatprep.subr.bf16.mxu0 0
      %872 = vmatpush2.bf16.msra.mxu0 0
      %873 = vmatprep.subr.bf16.mxu0 0
      %874 = vmatpush2.bf16.msra.mxu0 0
      %875 = vmatprep.subr.bf16.mxu0 0
      %876 = vmatpush2.bf16.msra.mxu0 0
      %877 = vmatprep.mubr.bf16.mxu0 0
      %878 = vmatmul.mubr.bf16.gmra.mxu0 %v834
      %v879 = vpop.f32.mrf.mxu0
      %v880 = vadd.f32 0.0, %v879
      %v881 = vpop.f32.mrf.mxu0
      %v882 = vpop.f32.mrf.mxu0
      %v883 = vadd.f32 0.0, %v882
      %v884 = vpop.f32.mrf.mxu0
      %885 = vmatprep.mubr.bf16.mxu0 0
      %886 = vmatmul.mubr.bf16.gmra.mxu0 %v837
      %v887 = vpop.f32.mrf.mxu0
      %v888 = vadd.f32 0.0, %v887
      %v889 = vpop.f32.mrf.mxu0
      %v890 = vpop.f32.mrf.mxu0
      %v891 = vadd.f32 0.0, %v890
      %v892 = vpop.f32.mrf.mxu0
      %893 = vmatprep.mubr.bf16.mxu0 0
      %894 = vmatmul.mubr.bf16.gmra.mxu0 %v840
      %v895 = vpop.f32.mrf.mxu0
      %v896 = vadd.f32 0.0, %v895
      %v897 = vpop.f32.mrf.mxu0
      %v898 = vpop.f32.mrf.mxu0
      %v899 = vadd.f32 0.0, %v898
      %v900 = vpop.f32.mrf.mxu0
      %901 = vmatprep.mubr.bf16.mxu0 0
      %902 = vmatmul.mubr.bf16.gmra.mxu0 %v843
      %v903 = vpop.f32.mrf.mxu0
      %v904 = vadd.f32 0.0, %v903
      %v905 = vpop.f32.mrf.mxu0
      %v906 = vpop.f32.mrf.mxu0
      %v907 = vadd.f32 0.0, %v906
      %v908 = vpop.f32.mrf.mxu0
      %909 = vdwg.mxu0
      %v910 = vld [vmem:[%s3] sm:$0x1]
      %v912 = vlaneseq
      %v913 = vshrl.u32 %v912, 7
      %v914 = vsub.s32 0, %v913
      %v915 = vrot.slane %v910, %v914
      %v917 = vmul.f32 %v880, %v915
      %v918 = vmul.f32 %v883, %v915
      %v919 = vmul.f32 %v888, %v915
      %v920 = vmul.f32 %v891, %v915
      %v921 = vmul.f32 %v896, %v915
      %v922 = vmul.f32 %v899, %v915
      %v923 = vmul.f32 %v904, %v915
      %v924 = vmul.f32 %v907, %v915
      %v925 = vld [vmem:[%s4] sm:$0x1]
      %v927 = vlaneseq
      %v928 = vshrl.u32 %v927, 7
      %v929 = vsub.s32 0, %v928
      %v930 = vrot.slane %v925, %v929
      %v932 = vadd.f32 %v917, %v930
      %v933 = vadd.f32 %v918, %v930
      %v934 = vadd.f32 %v919, %v930
      %v935 = vadd.f32 %v920, %v930
      %v936 = vadd.f32 %v921, %v930
      %v937 = vadd.f32 %v922, %v930
      %v938 = vadd.f32 %v923, %v930
      %v939 = vadd.f32 %v924, %v930
      %v940 = vmax.f32 %v932, 0.0
      %v941 = vmax.f32 %v933, 0.0
      %v942 = vmax.f32 %v934, 0.0
      %v943 = vmax.f32 %v935, 0.0
      %v944 = vmax.f32 %v936, 0.0
      %v945 = vmax.f32 %v937, 0.0
      %v946 = vmax.f32 %v938, 0.0
      %v947 = vmax.f32 %v939, 0.0
      %v948 = vpack.c.bf16 %v940, %v940
      %v949 = vpack.c.bf16 %v941, %v941
      %v950 = vpack.c.bf16 %v942, %v942
      %v951 = vpack.c.bf16 %v943, %v943
      %v952 = vpack.c.bf16 %v944, %v944
      %v953 = vpack.c.bf16 %v945, %v945
      %v954 = vpack.c.bf16 %v946, %v946
      %v955 = vpack.c.bf16 %v947, %v947
      %vm956 = vcmask 257024
      %957 = vst.msk [vmem:[%s224] sm:$0xf] %vm956, %v948
      %958 = vst.msk [vmem:[%s224 + $0x4] sm:$0xf] %vm956, %v949
      %959 = vst.msk [vmem:[%s224 + $0x8] sm:$0xf] %vm956, %v950
      %960 = vst.msk [vmem:[%s224 + $0xc] sm:$0xf] %vm956, %v951
      %961 = vst.msk [vmem:[%s224 + $0x10] sm:$0xf] %vm956, %v952
      %962 = vst.msk [vmem:[%s224 + $0x14] sm:$0xf] %vm956, %v953
      %963 = vst.msk [vmem:[%s224 + $0x18] sm:$0xf] %vm956, %v954
      %964 = vst.msk [vmem:[%s224 + $0x1c] sm:$0xf] %vm956, %v955
      %p965 = scmp.lt.s32.totalorder %s16, 1
      %s966 = scalar_select %p965, %s16, 1
      %s967 = smul.addr %s966, 8
      %s968 = smul.addr %s967, 4
      %s969 = scalar_lea.vmem %s5, %s968
      // Predicated region
      $region41: #{cfm_forward.16} parent=39 // pred_check
        %p970 = pneg %p144
      $region42: #{cfm_forward.16} parent=39 // pred_check_branch
        %972 = sbr.rel (%p970) target = $region44
      $region43: #{cfm_forward.16} parent=39 // pred_region
        _
      $region44: #{cfm_forward.16} parent=39 // pred_fallthru
        _
    $region40: #{cfm_forward.16} parent=5 // pred_fallthru
      _
    %p973 = scmp.le.s32.totalorder 2, %s11
    // Predicated region
    $region45: #{cfm_forward.16} parent=5 // pred_check
      %p974 = pneg %p973
    $region46: #{cfm_forward.16} parent=5 // pred_check_branch
      %976 = sbr.rel (%p974) target = $region48
    $region47: #{cfm_forward.16} parent=5 // pred_region
      %s977 = ssub.s32 %s11, 2
      // Predicated region
      $region49: #{cfm_forward.16} parent=47 // pred_check
        %p978 = pneg %p150
      $region50: #{cfm_forward.16} parent=47 // pred_check_branch
        %980 = sbr.rel (%p978) target = $region52
      $region51: #{cfm_forward.16} parent=47 // pred_region
        %p981 = scmp.lt.s32.totalorder %s17, 1
        %s982 = scalar_select %p981, %s17, 1
        %s983 = smul.addr %s982, 8
        %s984 = smul.addr %s983, 4
        %s985 = scalar_lea.vmem %s5, %s984
      $region52: #{cfm_forward.16} parent=47 // pred_fallthru
        _
    $region48: #{cfm_forward.16} parent=5 // pred_fallthru
      _
  $region6: #{cfm_forward.16} parent=0 // loop_footer
    %s15 = sadd.s32 1, %s11
  $region7: #{cfm_forward.16} parent=0 // loop_footer_branch
    %10 = sbr.rel target = $region3
  $region8: #{cfm_forward.16} parent=0 // loop_exit
    _

// kernel: cfm_forward.15
$region0: #{cfm_forward.15}
  #allocation0 [shape = 'u32[]', space=smem, size = 0x4, offset = 0x4, fixed_abs, tag = 'smem constant byte address 0x4 - core index']
  #allocation1 [shape = 'u32[144,128]{1,0:T(1,128)}', space=vmem, size = 0x12000, scoped, tag = 'internal scratch']
  %s0 = inlined_call_operand.vmem [shape: bf16[2,10,10,32], index: 0, kind: input, shape index: {}]
  %s1 = inlined_call_operand.vmem [shape: bf16[2,10,10,32], index: 1, kind: input, shape index: {}]
  %s2 = inlined_call_operand.vmem [shape: bf16[32,32], index: 2, kind: input, shape index: {}]
  %s3 = inlined_call_operand.vmem [shape: bf16[32,32], index: 3, kind: input, shape index: {}]
  %s4 = inlined_call_operand.vmem [shape: bf16[32,32], index: 4, kind: input, shape index: {}]
  %s5 = inlined_call_operand.vmem [shape: f32[1,32], index: 5, kind: input, shape index: {}]
  %s6 = inlined_call_operand.vmem [shape: f32[1,32], index: 6, kind: input, shape index: {}]
  %s7 = inlined_call_operand.vmem [shape: f32[1,32], index: 7, kind: input, shape index: {}]
  %s8 = inlined_call_operand.vmem [shape: f32[1,32], index: 8, kind: input, shape index: {}]
  %s9 = inlined_call_operand.vmem [shape: bf16[2,8,8,32], index: 9, kind: output, shape index: {}]
  %s10 = sld [smem:[#allocation0]]
  $region69: #{cfm_forward.15} parent=0
    _
  %s12 = ssub.s32 1, %s10
  %s13 = scalar_select 0, %s12, %s10
  loop: start=0, step=1, limit=4
  $region2: #{cfm_forward.15} parent=0 // loop_pre_header
    _
  $region3: #{cfm_forward.15} parent=0 // loop_header
    %s15 = sphi 0, %s19
    %p16 = scmp.ge.s32.totalorder %s15, 4
    %s25 = sphi 0, %s27
    %s28 = sphi 0, %s25
    %s29 = sphi 0, %s28
    %s45 = sphi 0, %s29
    %s51 = sphi 0, %s53
    %s54 = sphi 0, %s51
    %s55 = sphi 0, %s54
    %s71 = sphi 0, %s55
    %s75 = sphi 0, %s75
    %s77 = sphi 0, %s75
    %s78 = sphi 0, %s77
    %s92 = sphi 0, %s78
    %s96 = sphi 0, %s96
    %s98 = sphi 0, %s96
    %s99 = sphi 0, %s98
    %s113 = sphi 0, %s99
    %s117 = sphi 0, %s117
    %s119 = sphi 0, %s117
    %s120 = sphi 0, %s119
    %s134 = sphi 0, %s120
    %s138 = sphi 0, %s138
    %s140 = sphi 0, %s138
    %s141 = sphi 0, %s140
    %s155 = sphi 0, %s141
    %s159 = sphi 0, %s159
    %s161 = sphi 0, %s159
    %s162 = sphi 0, %s161
    %s176 = sphi 0, %s162
    %s180 = sphi 0, %s180
    %s182 = sphi 0, %s180
    %s183 = sphi 0, %s182
    %s197 = sphi 0, %s183
    %s201 = sphi 0, %s201
    %s203 = sphi 0, %s201
    %s204 = sphi 0, %s203
    %s218 = sphi 0, %s204
    %s224 = sphi 0, %s226
    %s227 = sphi 0, %s224
    %s228 = sphi 0, %s227
    %s244 = sphi 0, %s228
  $region4: #{cfm_forward.15} parent=0 // loop_header_branch
    %18 = sbr.rel (%p16) target = $region8
  $region5: #{cfm_forward.15} parent=0 // loop_body
    %s20 = ssub.s32 %s15, 1
    %s21 = ssub.s32 %s15, 2
    %s22 = sadd.s32 %s15, 1
    %s23 = ssub.s32 %s15, %s22
    %p24 = scmp.eq.s32.totalorder %s23, 0
    %s26 = sadd.s32 %s25, 1
    %s27 = scalar_select %p24, %s25, %s26
    %p30 = pneg %p24
    %p31 = scmp.eq.s32.totalorder %s15, 1
    %p32 = por %p30, %p31
    %p33 = scmp.ne.s32.totalorder %s25, %s28
    %p34 = scmp.eq.s32.totalorder %s15, 0
    %p35 = por %p33, %p34
    %p36 = scmp.ne.s32.totalorder %s25, %s28
    %p37 = scmp.eq.s32.totalorder %s20, 1
    %p38 = por %p36, %p37
    %p39 = scmp.ne.s32.totalorder %s28, %s29
    %p40 = scmp.eq.s32.totalorder %s20, 0
    %p41 = por %p39, %p40
    %p42 = scmp.ne.s32.totalorder %s28, %s29
    %p43 = scmp.eq.s32.totalorder %s21, 1
    %p44 = por %p42, %p43
    %p46 = scmp.ne.s32.totalorder %s29, %s45
    %p47 = scmp.eq.s32.totalorder %s21, 0
    %p48 = por %p46, %p47
    %s49 = ssub.s32 %s15, %s22
    %p50 = scmp.eq.s32.totalorder %s49, 0
    %s52 = sadd.s32 %s51, 1
    %s53 = scalar_select %p50, %s51, %s52
    %p56 = pneg %p50
    %p57 = scmp.eq.s32.totalorder %s15, 1
    %p58 = por %p56, %p57
    %p59 = scmp.ne.s32.totalorder %s51, %s54
    %p60 = scmp.eq.s32.totalorder %s15, 0
    %p61 = por %p59, %p60
    %p62 = scmp.ne.s32.totalorder %s51, %s54
    %p63 = scmp.eq.s32.totalorder %s20, 1
    %p64 = por %p62, %p63
    %p65 = scmp.ne.s32.totalorder %s54, %s55
    %p66 = scmp.eq.s32.totalorder %s20, 0
    %p67 = por %p65, %p66
    %p68 = scmp.ne.s32.totalorder %s54, %s55
    %p69 = scmp.eq.s32.totalorder %s21, 1
    %p70 = por %p68, %p69
    %p72 = scmp.ne.s32.totalorder %s55, %s71
    %p73 = scmp.eq.s32.totalorder %s21, 0
    %p74 = por %p72, %p73
    %s76 = sadd.s32 %s75, 1
    %p79 = scmp.eq.s32.totalorder %s15, 1
    %p80 = scmp.ne.s32.totalorder %s75, %s77
    %p81 = scmp.eq.s32.totalorder %s15, 0
    %p82 = por %p80, %p81
    %p83 = scmp.ne.s32.totalorder %s75, %s77
    %p84 = scmp.eq.s32.totalorder %s20, 1
    %p85 = por %p83, %p84
    %p86 = scmp.ne.s32.totalorder %s77, %s78
    %p87 = scmp.eq.s32.totalorder %s20, 0
    %p88 = por %p86, %p87
    %p89 = scmp.ne.s32.totalorder %s77, %s78
    %p90 = scmp.eq.s32.totalorder %s21, 1
    %p91 = por %p89, %p90
    %p93 = scmp.ne.s32.totalorder %s78, %s92
    %p94 = scmp.eq.s32.totalorder %s21, 0
    %p95 = por %p93, %p94
    %s97 = sadd.s32 %s96, 1
    %p100 = scmp.eq.s32.totalorder %s15, 1
    %p101 = scmp.ne.s32.totalorder %s96, %s98
    %p102 = scmp.eq.s32.totalorder %s15, 0
    %p103 = por %p101, %p102
    %p104 = scmp.ne.s32.totalorder %s96, %s98
    %p105 = scmp.eq.s32.totalorder %s20, 1
    %p106 = por %p104, %p105
    %p107 = scmp.ne.s32.totalorder %s98, %s99
    %p108 = scmp.eq.s32.totalorder %s20, 0
    %p109 = por %p107, %p108
    %p110 = scmp.ne.s32.totalorder %s98, %s99
    %p111 = scmp.eq.s32.totalorder %s21, 1
    %p112 = por %p110, %p111
    %p114 = scmp.ne.s32.totalorder %s99, %s113
    %p115 = scmp.eq.s32.totalorder %s21, 0
    %p116 = por %p114, %p115
    %s118 = sadd.s32 %s117, 1
    %p121 = scmp.eq.s32.totalorder %s15, 1
    %p122 = scmp.ne.s32.totalorder %s117, %s119
    %p123 = scmp.eq.s32.totalorder %s15, 0
    %p124 = por %p122, %p123
    %p125 = scmp.ne.s32.totalorder %s117, %s119
    %p126 = scmp.eq.s32.totalorder %s20, 1
    %p127 = por %p125, %p126
    %p128 = scmp.ne.s32.totalorder %s119, %s120
    %p129 = scmp.eq.s32.totalorder %s20, 0
    %p130 = por %p128, %p129
    %p131 = scmp.ne.s32.totalorder %s119, %s120
    %p132 = scmp.eq.s32.totalorder %s21, 1
    %p133 = por %p131, %p132
    %p135 = scmp.ne.s32.totalorder %s120, %s134
    %p136 = scmp.eq.s32.totalorder %s21, 0
    %p137 = por %p135, %p136
    %s139 = sadd.s32 %s138, 1
    %p142 = scmp.eq.s32.totalorder %s15, 1
    %p143 = scmp.ne.s32.totalorder %s138, %s140
    %p144 = scmp.eq.s32.totalorder %s15, 0
    %p145 = por %p143, %p144
    %p146 = scmp.ne.s32.totalorder %s138, %s140
    %p147 = scmp.eq.s32.totalorder %s20, 1
    %p148 = por %p146, %p147
    %p149 = scmp.ne.s32.totalorder %s140, %s141
    %p150 = scmp.eq.s32.totalorder %s20, 0
    %p151 = por %p149, %p150
    %p152 = scmp.ne.s32.totalorder %s140, %s141
    %p153 = scmp.eq.s32.totalorder %s21, 1
    %p154 = por %p152, %p153
    %p156 = scmp.ne.s32.totalorder %s141, %s155
    %p157 = scmp.eq.s32.totalorder %s21, 0
    %p158 = por %p156, %p157
    %s160 = sadd.s32 %s159, 1
    %p163 = scmp.eq.s32.totalorder %s15, 1
    %p164 = scmp.ne.s32.totalorder %s159, %s161
    %p165 = scmp.eq.s32.totalorder %s15, 0
    %p166 = por %p164, %p165
    %p167 = scmp.ne.s32.totalorder %s159, %s161
    %p168 = scmp.eq.s32.totalorder %s20, 1
    %p169 = por %p167, %p168
    %p170 = scmp.ne.s32.totalorder %s161, %s162
    %p171 = scmp.eq.s32.totalorder %s20, 0
    %p172 = por %p170, %p171
    %p173 = scmp.ne.s32.totalorder %s161, %s162
    %p174 = scmp.eq.s32.totalorder %s21, 1
    %p175 = por %p173, %p174
    %p177 = scmp.ne.s32.totalorder %s162, %s176
    %p178 = scmp.eq.s32.totalorder %s21, 0
    %p179 = por %p177, %p178
    %s181 = sadd.s32 %s180, 1
    %p184 = scmp.eq.s32.totalorder %s15, 1
    %p185 = scmp.ne.s32.totalorder %s180, %s182
    %p186 = scmp.eq.s32.totalorder %s15, 0
    %p187 = por %p185, %p186
    %p188 = scmp.ne.s32.totalorder %s180, %s182
    %p189 = scmp.eq.s32.totalorder %s20, 1
    %p190 = por %p188, %p189
    %p191 = scmp.ne.s32.totalorder %s182, %s183
    %p192 = scmp.eq.s32.totalorder %s20, 0
    %p193 = por %p191, %p192
    %p194 = scmp.ne.s32.totalorder %s182, %s183
    %p195 = scmp.eq.s32.totalorder %s21, 1
    %p196 = por %p194, %p195
    %p198 = scmp.ne.s32.totalorder %s183, %s197
    %p199 = scmp.eq.s32.totalorder %s21, 0
    %p200 = por %p198, %p199
    %s202 = sadd.s32 %s201, 1
    %p205 = scmp.eq.s32.totalorder %s15, 1
    %p206 = scmp.ne.s32.totalorder %s201, %s203
    %p207 = scmp.eq.s32.totalorder %s15, 0
    %p208 = por %p206, %p207
    %p209 = scmp.ne.s32.totalorder %s201, %s203
    %p210 = scmp.eq.s32.totalorder %s20, 1
    %p211 = por %p209, %p210
    %p212 = scmp.ne.s32.totalorder %s203, %s204
    %p213 = scmp.eq.s32.totalorder %s20, 0
    %p214 = por %p212, %p213
    %p215 = scmp.ne.s32.totalorder %s203, %s204
    %p216 = scmp.eq.s32.totalorder %s21, 1
    %p217 = por %p215, %p216
    %p219 = scmp.ne.s32.totalorder %s204, %s218
    %p220 = scmp.eq.s32.totalorder %s21, 0
    %p221 = por %p219, %p220
    %s222 = ssub.s32 %s15, %s22
    %p223 = scmp.eq.s32.totalorder %s222, 0
    %s225 = sadd.s32 %s224, 1
    %s226 = scalar_select %p223, %s224, %s225
    %p229 = pneg %p223
    %p230 = scmp.eq.s32.totalorder %s15, 1
    %p231 = por %p229, %p230
    %p232 = scmp.ne.s32.totalorder %s224, %s227
    %p233 = scmp.eq.s32.totalorder %s15, 0
    %p234 = por %p232, %p233
    %p235 = scmp.ne.s32.totalorder %s224, %s227
    %p236 = scmp.eq.s32.totalorder %s20, 1
    %p237 = por %p235, %p236
    %p238 = scmp.ne.s32.totalorder %s227, %s228
    %p239 = scmp.eq.s32.totalorder %s20, 0
    %p240 = por %p238, %p239
    %p241 = scmp.ne.s32.totalorder %s227, %s228
    %p242 = scmp.eq.s32.totalorder %s21, 1
    %p243 = por %p241, %p242
    %p245 = scmp.ne.s32.totalorder %s228, %s244
    %p246 = scmp.eq.s32.totalorder %s21, 0
    %p247 = por %p245, %p246
    %p248 = scmp.le.s32.totalorder 1, %s15
    %p249 = scmp.lt.s32.totalorder %s15, 3
    %p250 = pnand %p248, %p249
    %p251 = pneg %p250
    // Predicated region
    $region9: #{cfm_forward.15} parent=5 // pred_check
      _
    $region10: #{cfm_forward.15} parent=5 // pred_check_branch
      %253 = sbr.rel (%p250) target = $region12
    $region11: #{cfm_forward.15} parent=5 // pred_region
      %s254 = ssub.s32 %s15, 1
      // Predicated region
      $region13: #{cfm_forward.15} parent=11 // pred_check
        %p255 = pneg %p88
      $region14: #{cfm_forward.15} parent=11 // pred_check_branch
        %257 = sbr.rel (%p255) target = $region16
      $region15: #{cfm_forward.15} parent=11 // pred_region
        _
      $region16: #{cfm_forward.15} parent=11 // pred_fallthru
        _
      // Predicated region
      $region17: #{cfm_forward.15} parent=11 // pred_check
        %p258 = pneg %p109
      $region18: #{cfm_forward.15} parent=11 // pred_check_branch
        %260 = sbr.rel (%p258) target = $region20
      $region19: #{cfm_forward.15} parent=11 // pred_region
        _
      $region20: #{cfm_forward.15} parent=11 // pred_fallthru
        _
      // Predicated region
      $region21: #{cfm_forward.15} parent=11 // pred_check
        %p261 = pneg %p130
      $region22: #{cfm_forward.15} parent=11 // pred_check_branch
        %263 = sbr.rel (%p261) target = $region24
      $region23: #{cfm_forward.15} parent=11 // pred_region
        _
      $region24: #{cfm_forward.15} parent=11 // pred_fallthru
        _
      // Predicated region
      $region25: #{cfm_forward.15} parent=11 // pred_check
        %p264 = pneg %p151
      $region26: #{cfm_forward.15} parent=11 // pred_check_branch
        %266 = sbr.rel (%p264) target = $region28
      $region27: #{cfm_forward.15} parent=11 // pred_region
        _
      $region28: #{cfm_forward.15} parent=11 // pred_fallthru
        _
      // Predicated region
      $region29: #{cfm_forward.15} parent=11 // pred_check
        %p267 = pneg %p172
      $region30: #{cfm_forward.15} parent=11 // pred_check_branch
        %269 = sbr.rel (%p267) target = $region32
      $region31: #{cfm_forward.15} parent=11 // pred_region
        _
      $region32: #{cfm_forward.15} parent=11 // pred_fallthru
        _
      // Predicated region
      $region33: #{cfm_forward.15} parent=11 // pred_check
        %p270 = pneg %p193
      $region34: #{cfm_forward.15} parent=11 // pred_check_branch
        %272 = sbr.rel (%p270) target = $region36
      $region35: #{cfm_forward.15} parent=11 // pred_region
        _
      $region36: #{cfm_forward.15} parent=11 // pred_fallthru
        _
      // Predicated region
      $region37: #{cfm_forward.15} parent=11 // pred_check
        %p273 = pneg %p214
      $region38: #{cfm_forward.15} parent=11 // pred_check_branch
        %275 = sbr.rel (%p273) target = $region40
      $region39: #{cfm_forward.15} parent=11 // pred_region
        _
      $region40: #{cfm_forward.15} parent=11 // pred_fallthru
        _
    $region12: #{cfm_forward.15} parent=5 // pred_fallthru
      _
    %p276 = scmp.lt.s32.totalorder %s15, 2
    // Predicated region
    $region41: #{cfm_forward.15} parent=5 // pred_check
      %p277 = pneg %p276
    $region42: #{cfm_forward.15} parent=5 // pred_check_branch
      %279 = sbr.rel (%p277) target = $region44
    $region43: #{cfm_forward.15} parent=5 // pred_region
      // Predicated region
      $region45: #{cfm_forward.15} parent=43 // pred_check
        %p280 = pneg %p35
      $region46: #{cfm_forward.15} parent=43 // pred_check_branch
        %282 = sbr.rel (%p280) target = $region48
      $region47: #{cfm_forward.15} parent=43 // pred_region
        %p283 = scmp.lt.s32.totalorder %s15, 1
        %s284 = scalar_select %p283, %s15, 1
        %s285 = smul.addr %s284, 20
        %s286 = smul.addr %s285, 4
        %s287 = scalar_lea.vmem %s0, %s286
      $region48: #{cfm_forward.15} parent=43 // pred_fallthru
        _
      // Predicated region
      $region49: #{cfm_forward.15} parent=43 // pred_check
        %p288 = pneg %p61
      $region50: #{cfm_forward.15} parent=43 // pred_check_branch
        %290 = sbr.rel (%p288) target = $region52
      $region51: #{cfm_forward.15} parent=43 // pred_region
        %p291 = scmp.lt.s32.totalorder %s15, 1
        %s292 = scalar_select %p291, %s15, 1
        %s293 = smul.addr %s292, 20
        %s294 = smul.addr %s293, 4
        %s295 = scalar_lea.vmem %s1, %s294
      $region52: #{cfm_forward.15} parent=43 // pred_fallthru
        _
    $region44: #{cfm_forward.15} parent=5 // pred_fallthru
      _
    %p296 = scmp.le.s32.totalorder 1, %s15
    %p297 = scmp.lt.s32.totalorder %s15, 3
    %p298 = pnand %p296, %p297
    %p299 = pneg %p298
    // Predicated region
    $region53: #{cfm_forward.15} parent=5 // pred_check
      _
    $region54: #{cfm_forward.15} parent=5 // pred_check_branch
      %301 = sbr.rel (%p298) target = $region56
    $region55: #{cfm_forward.15} parent=5 // pred_region
      %s302 = ssub.s32 %s15, 1
      %p303 = scmp.lt.s32.totalorder %s20, 1
      %s304 = scalar_select %p303, %s20, 1
      %s305 = smul.addr %s304, 20
      %s306 = smul.addr %s305, 4
      %s307 = scalar_lea.vmem %s0, %s306
      %p308 = pneg %p41
      %p309 = pneg %p38
      %p310 = scmp.lt.s32.totalorder %s20, 1
      %s311 = scalar_select %p310, %s20, 1
      %s312 = smul.addr %s311, 20
      %s313 = smul.addr %s312, 4
      %s314 = scalar_lea.vmem %s1, %s313
      %p315 = pneg %p67
      %p316 = pneg %p64
      %p317 = pneg %p88
      %p318 = pneg %p85
      %p319 = pneg %p109
      %p320 = pneg %p106
      %p321 = pneg %p130
      %p322 = pneg %p127
      %p323 = pneg %p151
      %p324 = pneg %p148
      %p325 = pneg %p172
      %p326 = pneg %p169
      %p327 = pneg %p193
      %p328 = pneg %p190
      %p329 = pneg %p214
      %p330 = pneg %p211
      %p331 = pneg %p240
      %p332 = pneg %p237
      %p333 = scmp.lt.s32.totalorder %s20, 1
      %s334 = scalar_select %p333, %s20, 1
      %s335 = smul.addr %s334, 8
      %s336 = smul.addr %s335, 4
      %s337 = scalar_lea.vmem %s9, %s336
      %p338 = scmp.lt.s32.totalorder %s20, 1
      %s339 = scalar_select %p338, %s20, 1
      %s340 = smul.addr %s339, 20
      %s341 = smul.addr %s340, 4
      %s342 = scalar_lea.vmem %s0, %s341
      %p343 = scmp.lt.s32.totalorder %s20, 1
      %s344 = scalar_select %p343, %s20, 1
      %s345 = smul.addr %s344, 20
      %s346 = smul.addr %s345, 4
      %s347 = scalar_lea.vmem %s1, %s346
      %p348 = scmp.lt.s32.totalorder %s20, 1
      %s349 = scalar_select %p348, %s20, 1
      %s350 = smul.addr %s349, 8
      %s351 = smul.addr %s350, 4
      %s352 = scalar_lea.vmem %s9, %s351
      %v354 = vld [vmem:[%s342] sm:$0xf]
      %v355 = vld [vmem:[%s342 + $0x4] sm:$0x1]
      %v356 = vld [vmem:[%s342 + $0x8] sm:$0xf]
      %v357 = vld [vmem:[%s342 + $0xc] sm:$0x1]
      %v358 = vld [vmem:[%s342 + $0x10] sm:$0xf]
      %v359 = vld [vmem:[%s342 + $0x14] sm:$0x1]
      %v360 = vld [vmem:[%s342 + $0x18] sm:$0xf]
      %v361 = vld [vmem:[%s342 + $0x1c] sm:$0x1]
      %v362 = vld [vmem:[%s342 + $0x20] sm:$0xf]
      %v363 = vld [vmem:[%s342 + $0x24] sm:$0x1]
      %v364 = vld [vmem:[%s342 + $0x28] sm:$0xf]
      %v365 = vld [vmem:[%s342 + $0x2c] sm:$0x1]
      %v366 = vld [vmem:[%s342 + $0x30] sm:$0xf]
      %v367 = vld [vmem:[%s342 + $0x34] sm:$0x1]
      %v368 = vld [vmem:[%s342 + $0x38] sm:$0xf]
      %v369 = vld [vmem:[%s342 + $0x3c] sm:$0x1]
      %v370 = vld [vmem:[%s342 + $0x40] sm:$0xf]
      %v371 = vld [vmem:[%s342 + $0x44] sm:$0x1]
      %v372 = vld [vmem:[%s342 + $0x48] sm:$0xf]
      %v373 = vld [vmem:[%s342 + $0x4c] sm:$0x1]
      %v374 = vld [vmem:[%s347] sm:$0xf]
      %v375 = vld [vmem:[%s347 + $0x4] sm:$0x1]
      %v376 = vld [vmem:[%s347 + $0x8] sm:$0xf]
      %v377 = vld [vmem:[%s347 + $0xc] sm:$0x1]
      %v378 = vld [vmem:[%s347 + $0x10] sm:$0xf]
      %v379 = vld [vmem:[%s347 + $0x14] sm:$0x1]
      %v380 = vld [vmem:[%s347 + $0x18] sm:$0xf]
      %v381 = vld [vmem:[%s347 + $0x1c] sm:$0x1]
      %v382 = vld [vmem:[%s347 + $0x20] sm:$0xf]
      %v383 = vld [vmem:[%s347 + $0x24] sm:$0x1]
      %v384 = vld [vmem:[%s347 + $0x28] sm:$0xf]
      %v385 = vld [vmem:[%s347 + $0x2c] sm:$0x1]
      %v386 = vld [vmem:[%s347 + $0x30] sm:$0xf]
      %v387 = vld [vmem:[%s347 + $0x34] sm:$0x1]
      %v388 = vld [vmem:[%s347 + $0x38] sm:$0xf]
      %v389 = vld [vmem:[%s347 + $0x3c] sm:$0x1]
      %v390 = vld [vmem:[%s347 + $0x40] sm:$0xf]
      %v391 = vld [vmem:[%s347 + $0x44] sm:$0x1]
      %v392 = vld [vmem:[%s347 + $0x48] sm:$0xf]
      %v393 = vld [vmem:[%s347 + $0x4c] sm:$0x1]
      %v394 = vld [vmem:[%s2] sm:$0xf]
      %v395 = vld [vmem:[%s2 + $0x4] sm:$0xf]
      %v396 = vld [vmem:[%s2 + $0x8] sm:$0xf]
      %v397 = vld [vmem:[%s2 + $0xc] sm:$0xf]
      %v398 = vld [vmem:[%s3] sm:$0xf]
      %v399 = vld [vmem:[%s3 + $0x4] sm:$0xf]
      %v400 = vld [vmem:[%s3 + $0x8] sm:$0xf]
      %v401 = vld [vmem:[%s3 + $0xc] sm:$0xf]
      %v402 = vld [vmem:[%s4] sm:$0xf]
      %v403 = vld [vmem:[%s4 + $0x4] sm:$0xf]
      %v404 = vld [vmem:[%s4 + $0x8] sm:$0xf]
      %v405 = vld [vmem:[%s4 + $0xc] sm:$0xf]
      %v406 = vld [vmem:[%s5] sm:$0x1]
      %v407 = vld [vmem:[%s6] sm:$0x1]
      %v408 = vld [vmem:[%s7] sm:$0x1]
      %v409 = vld [vmem:[%s8] sm:$0x1]
      %v410 = vadd.bf16 %v356, %v376
      %v411 = vadd.bf16 %v357, %v377
      %v412 = vadd.bf16 %v358, %v378
      %v413 = vadd.bf16 %v359, %v379
      %v414 = vadd.bf16 %v360, %v380
      %v415 = vadd.bf16 %v361, %v381
      %v416 = vadd.bf16 %v362, %v382
      %v417 = vadd.bf16 %v363, %v383
      %v418 = vadd.bf16 %v364, %v384
      %v419 = vadd.bf16 %v365, %v385
      %v420 = vadd.bf16 %v366, %v386
      %v421 = vadd.bf16 %v367, %v387
      %v422 = vadd.bf16 %v368, %v388
      %v423 = vadd.bf16 %v369, %v389
      %v424 = vadd.bf16 %v370, %v390
      %v425 = vadd.bf16 %v371, %v391
      %vm426 = vsmask.f32 3328
      %vm427 = vsmask.f32 7440
      %vm428 = vmor %vm426, %vm427
      %v430 = vshrl.u32 %v410, 16
      %v432 = vrot.slane %v430, 4
      %v433 = vshll.u32 %v410, 16
      %v435 = vrot.slane %v433, 5
      %v436 = vor.u32 %v432, %v435
      %v437 = vrot.slane %v436, 4
      %v439 = vshll.u32 %v411, 16
      %v441 = vrot.slane %v439, 5
      %v442 = vsel %vm428, %v437, %v441
      %v444 = vshrl.u32 %v412, 16
      %v446 = vrot.slane %v444, 4
      %v447 = vshll.u32 %v412, 16
      %v449 = vrot.slane %v447, 5
      %v450 = vor.u32 %v446, %v449
      %v451 = vrot.slane %v450, 4
      %v453 = vshll.u32 %v413, 16
      %v455 = vrot.slane %v453, 5
      %v456 = vsel %vm428, %v451, %v455
      %v458 = vshrl.u32 %v414, 16
      %v460 = vrot.slane %v458, 4
      %v461 = vshll.u32 %v414, 16
      %v463 = vrot.slane %v461, 5
      %v464 = vor.u32 %v460, %v463
      %v465 = vrot.slane %v464, 4
      %v467 = vshll.u32 %v415, 16
      %v469 = vrot.slane %v467, 5
      %v470 = vsel %vm428, %v465, %v469
      %v472 = vshrl.u32 %v416, 16
      %v474 = vrot.slane %v472, 4
      %v475 = vshll.u32 %v416, 16
      %v477 = vrot.slane %v475, 5
      %v478 = vor.u32 %v474, %v477
      %v479 = vrot.slane %v478, 4
      %v481 = vshll.u32 %v417, 16
      %v483 = vrot.slane %v481, 5
      %v484 = vsel %vm428, %v479, %v483
      %v486 = vshrl.u32 %v418, 16
      %v488 = vrot.slane %v486, 4
      %v489 = vshll.u32 %v418, 16
      %v491 = vrot.slane %v489, 5
      %v492 = vor.u32 %v488, %v491
      %v493 = vrot.slane %v492, 4
      %v495 = vshll.u32 %v419, 16
      %v497 = vrot.slane %v495, 5
      %v498 = vsel %vm428, %v493, %v497
      %v500 = vshrl.u32 %v420, 16
      %v502 = vrot.slane %v500, 4
      %v503 = vshll.u32 %v420, 16
      %v505 = vrot.slane %v503, 5
      %v506 = vor.u32 %v502, %v505
      %v507 = vrot.slane %v506, 4
      %v509 = vshll.u32 %v421, 16
      %v511 = vrot.slane %v509, 5
      %v512 = vsel %vm428, %v507, %v511
      %v514 = vshrl.u32 %v422, 16
      %v516 = vrot.slane %v514, 4
      %v517 = vshll.u32 %v422, 16
      %v519 = vrot.slane %v517, 5
      %v520 = vor.u32 %v516, %v519
      %v521 = vrot.slane %v520, 4
      %v523 = vshll.u32 %v423, 16
      %v525 = vrot.slane %v523, 5
      %v526 = vsel %vm428, %v521, %v525
      %v528 = vshrl.u32 %v424, 16
      %v530 = vrot.slane %v528, 4
      %v531 = vshll.u32 %v424, 16
      %v533 = vrot.slane %v531, 5
      %v534 = vor.u32 %v530, %v533
      %v535 = vrot.slane %v534, 4
      %v537 = vshll.u32 %v425, 16
      %v539 = vrot.slane %v537, 5
      %v540 = vsel %vm428, %v535, %v539
      %v541 = vunpack.c.l.b16 %v442
      %v542 = vunpack.c.l.b16 %v456
      %v543 = vunpack.c.l.b16 %v470
      %v544 = vunpack.c.l.b16 %v484
      %v545 = vunpack.c.l.b16 %v498
      %v546 = vunpack.c.l.b16 %v512
      %v547 = vunpack.c.l.b16 %v526
      %v548 = vunpack.c.l.b16 %v540
      %v549 = vpack.c.b16 %v542, %v541
      %v550 = vpack.c.b16 %v544, %v543
      %v551 = vpack.c.b16 %v546, %v545
      %v552 = vpack.c.b16 %v548, %v547
      %v557 = vunpack.c.l.b16 %v394
      %v558 = vunpack.c.l.b16 %v395
      %v559 = vunpack.c.l.b16 %v396
      %v560 = vunpack.c.l.b16 %v397
      %v561 = vpack.c.b16 %v558, %v557
      %v562 = vpack.c.b16 %v560, %v559
      %vm565 = vcmask 261120
      %v567 = vsel %vm565, %v549, 0
      %v570 = vsel %vm565, %v550, 0
      %v573 = vsel %vm565, %v551, 0
      %v576 = vsel %vm565, %v552, 0
      %578 = vmatprep.subr.bf16.mxu0 0
      %579 = vmatpush1.bf16.msra.mxu0 0
      %580 = vmatprep.subr.bf16.mxu0 0
      %581 = vmatpush1.bf16.msra.mxu0 0
      %582 = vmatprep.subr.bf16.mxu0 0
      %583 = vmatpush1.bf16.msra.mxu0 0
      %584 = vmatprep.subr.bf16.mxu0 0
      %585 = vmatpush1.bf16.msra.mxu0 0
      %586 = vmatprep.subr.bf16.mxu0 0
      %587 = vmatpush1.bf16.msra.mxu0 0
      %588 = vmatprep.subr.bf16.mxu0 0
      %589 = vmatpush1.bf16.msra.mxu0 0
      %590 = vmatprep.subr.bf16.mxu0 0
      %591 = vmatpush1.bf16.msra.mxu0 %v562
      %592 = vmatprep.subr.bf16.mxu0 0
      %593 = vmatpush1.bf16.msra.mxu0 %v561
      %594 = vmatprep.subr.bf16.mxu0 0
      %595 = vmatpush2.bf16.msra.mxu0 0
      %596 = vmatprep.subr.bf16.mxu0 0
      %597 = vmatpush2.bf16.msra.mxu0 0
      %598 = vmatprep.subr.bf16.mxu0 0
      %599 = vmatpush2.bf16.msra.mxu0 0
      %600 = vmatprep.subr.bf16.mxu0 0
      %601 = vmatpush2.bf16.msra.mxu0 0
      %602 = vmatprep.subr.bf16.mxu0 0
      %603 = vmatpush2.bf16.msra.mxu0 0
      %604 = vmatprep.subr.bf16.mxu0 0
      %605 = vmatpush2.bf16.msra.mxu0 0
      %606 = vmatprep.subr.bf16.mxu0 0
      %607 = vmatpush2.bf16.msra.mxu0 0
      %608 = vmatprep.subr.bf16.mxu0 0
      %609 = vmatpush2.bf16.msra.mxu0 0
      %610 = vmatprep.mubr.bf16.mxu0 0
      %611 = vmatmul.mubr.bf16.gmra.mxu0 %v567
      %v612 = vpop.f32.mrf.mxu0
      %v613 = vadd.f32 0.0, %v612
      %v614 = vpop.f32.mrf.mxu0
      %v615 = vpop.f32.mrf.mxu0
      %v616 = vadd.f32 0.0, %v615
      %v617 = vpop.f32.mrf.mxu0
      %618 = vmatprep.mubr.bf16.mxu0 0
      %619 = vmatmul.mubr.bf16.gmra.mxu0 %v570
      %v620 = vpop.f32.mrf.mxu0
      %v621 = vadd.f32 0.0, %v620
      %v622 = vpop.f32.mrf.mxu0
      %v623 = vpop.f32.mrf.mxu0
      %v624 = vadd.f32 0.0, %v623
      %v625 = vpop.f32.mrf.mxu0
      %626 = vmatprep.mubr.bf16.mxu0 0
      %627 = vmatmul.mubr.bf16.gmra.mxu0 %v573
      %v628 = vpop.f32.mrf.mxu0
      %v629 = vadd.f32 0.0, %v628
      %v630 = vpop.f32.mrf.mxu0
      %v631 = vpop.f32.mrf.mxu0
      %v632 = vadd.f32 0.0, %v631
      %v633 = vpop.f32.mrf.mxu0
      %634 = vmatprep.mubr.bf16.mxu0 0
      %635 = vmatmul.mubr.bf16.gmra.mxu0 %v576
      %v636 = vpop.f32.mrf.mxu0
      %v637 = vadd.f32 0.0, %v636
      %v638 = vpop.f32.mrf.mxu0
      %v639 = vpop.f32.mrf.mxu0
      %v640 = vadd.f32 0.0, %v639
      %v641 = vpop.f32.mrf.mxu0
      %642 = vdwg.mxu0
      %v644 = vlaneseq
      %v645 = vshrl.u32 %v644, 7
      %v646 = vsub.s32 0, %v645
      %v647 = vrot.slane %v406, %v646
      %v649 = vmul.f32 %v613, %v647
      %v650 = vmul.f32 %v616, %v647
      %v651 = vmul.f32 %v621, %v647
      %v652 = vmul.f32 %v624, %v647
      %v653 = vmul.f32 %v629, %v647
      %v654 = vmul.f32 %v632, %v647
      %v655 = vmul.f32 %v637, %v647
      %v656 = vmul.f32 %v640, %v647
      %v658 = vlaneseq
      %v659 = vshrl.u32 %v658, 7
      %v660 = vsub.s32 0, %v659
      %v661 = vrot.slane %v407, %v660
      %v663 = vadd.f32 %v649, %v661
      %v664 = vadd.f32 %v650, %v661
      %v665 = vadd.f32 %v651, %v661
      %v666 = vadd.f32 %v652, %v661
      %v667 = vadd.f32 %v653, %v661
      %v668 = vadd.f32 %v654, %v661
      %v669 = vadd.f32 %v655, %v661
      %v670 = vadd.f32 %v656, %v661
      %v671 = vmax.f32 %v663, 0.0
      %v672 = vmax.f32 %v664, 0.0
      %v673 = vmax.f32 %v665, 0.0
      %v674 = vmax.f32 %v666, 0.0
      %v675 = vmax.f32 %v667, 0.0
      %v676 = vmax.f32 %v668, 0.0
      %v677 = vmax.f32 %v669, 0.0
      %v678 = vmax.f32 %v670, 0.0
      %v679 = vxor.u32 %v671, 2147483648
      %v680 = vxor.u32 %v672, 2147483648
      %v681 = vxor.u32 %v673, 2147483648
      %v682 = vxor.u32 %v674, 2147483648
      %v683 = vxor.u32 %v675, 2147483648
      %v684 = vxor.u32 %v676, 2147483648
      %v685 = vxor.u32 %v677, 2147483648
      %v686 = vxor.u32 %v678, 2147483648
      %v687 = vmul.f32 %v679, 1.442695
      %v688 = vpow.pop %v687
      %v689 = vmul.f32 %v680, 1.442695
      %v690 = vpow.pop %v689
      %v691 = vmul.f32 %v681, 1.442695
      %v692 = vpow.pop %v691
      %v693 = vmul.f32 %v682, 1.442695
      %v694 = vpow.pop %v693
      %v695 = vmul.f32 %v683, 1.442695
      %v696 = vpow.pop %v695
      %v697 = vmul.f32 %v684, 1.442695
      %v698 = vpow.pop %v697
      %v699 = vmul.f32 %v685, 1.442695
      %v700 = vpow.pop %v699
      %v701 = vmul.f32 %v686, 1.442695
      %v702 = vpow.pop %v701
      %v703 = vadd.f32 %v688, 1.0
      %v704 = vadd.f32 %v690, 1.0
      %v705 = vadd.f32 %v692, 1.0
      %v706 = vadd.f32 %v694, 1.0
      %v707 = vadd.f32 %v696, 1.0
      %v708 = vadd.f32 %v698, 1.0
      %v709 = vadd.f32 %v700, 1.0
      %v710 = vadd.f32 %v702, 1.0
      %v711 = vrcp.pop %v703
      %v712 = vmul.f32 1.0, %v711
      %v713 = vrcp.pop %v704
      %v714 = vmul.f32 1.0, %v713
      %v715 = vrcp.pop %v705
      %v716 = vmul.f32 1.0, %v715
      %v717 = vrcp.pop %v706
      %v718 = vmul.f32 1.0, %v717
      %v719 = vrcp.pop %v707
      %v720 = vmul.f32 1.0, %v719
      %v721 = vrcp.pop %v708
      %v722 = vmul.f32 1.0, %v721
      %v723 = vrcp.pop %v709
      %v724 = vmul.f32 1.0, %v723
      %v725 = vrcp.pop %v710
      %v726 = vmul.f32 1.0, %v725
      %v728 = vshrl.u32 %v356, 16
      %v730 = vrot.slane %v728, 4
      %v731 = vshll.u32 %v356, 16
      %v733 = vrot.slane %v731, 5
      %v734 = vor.u32 %v730, %v733
      %v735 = vrot.slane %v734, 4
      %v737 = vshll.u32 %v357, 16
      %v739 = vrot.slane %v737, 5
      %v740 = vsel %vm428, %v735, %v739
      %v742 = vshrl.u32 %v358, 16
      %v744 = vrot.slane %v742, 4
      %v745 = vshll.u32 %v358, 16
      %v747 = vrot.slane %v745, 5
      %v748 = vor.u32 %v744, %v747
      %v749 = vrot.slane %v748, 4
      %v751 = vshll.u32 %v359, 16
      %v753 = vrot.slane %v751, 5
      %v754 = vsel %vm428, %v749, %v753
      %v756 = vshrl.u32 %v360, 16
      %v758 = vrot.slane %v756, 4
      %v759 = vshll.u32 %v360, 16
      %v761 = vrot.slane %v759, 5
      %v762 = vor.u32 %v758, %v761
      %v763 = vrot.slane %v762, 4
      %v765 = vshll.u32 %v361, 16
      %v767 = vrot.slane %v765, 5
      %v768 = vsel %vm428, %v763, %v767
      %v770 = vshrl.u32 %v362, 16
      %v772 = vrot.slane %v770, 4
      %v773 = vshll.u32 %v362, 16
      %v775 = vrot.slane %v773, 5
      %v776 = vor.u32 %v772, %v775
      %v777 = vrot.slane %v776, 4
      %v779 = vshll.u32 %v363, 16
      %v781 = vrot.slane %v779, 5
      %v782 = vsel %vm428, %v777, %v781
      %v784 = vshrl.u32 %v364, 16
      %v786 = vrot.slane %v784, 4
      %v787 = vshll.u32 %v364, 16
      %v789 = vrot.slane %v787, 5
      %v790 = vor.u32 %v786, %v789
      %v791 = vrot.slane %v790, 4
      %v793 = vshll.u32 %v365, 16
      %v795 = vrot.slane %v793, 5
      %v796 = vsel %vm428, %v791, %v795
      %v798 = vshrl.u32 %v366, 16
      %v800 = vrot.slane %v798, 4
      %v801 = vshll.u32 %v366, 16
      %v803 = vrot.slane %v801, 5
      %v804 = vor.u32 %v800, %v803
      %v805 = vrot.slane %v804, 4
      %v807 = vshll.u32 %v367, 16
      %v809 = vrot.slane %v807, 5
      %v810 = vsel %vm428, %v805, %v809
      %v812 = vshrl.u32 %v368, 16
      %v814 = vrot.slane %v812, 4
      %v815 = vshll.u32 %v368, 16
      %v817 = vrot.slane %v815, 5
      %v818 = vor.u32 %v814, %v817
      %v819 = vrot.slane %v818, 4
      %v821 = vshll.u32 %v369, 16
      %v823 = vrot.slane %v821, 5
      %v824 = vsel %vm428, %v819, %v823
      %v826 = vshrl.u32 %v370, 16
      %v828 = vrot.slane %v826, 4
      %v829 = vshll.u32 %v370, 16
      %v831 = vrot.slane %v829, 5
      %v832 = vor.u32 %v828, %v831
      %v833 = vrot.slane %v832, 4
      %v835 = vshll.u32 %v371, 16
      %v837 = vrot.slane %v835, 5
      %v838 = vsel %vm428, %v833, %v837
      %v840 = vshrl.u32 %v376, 16
      %v842 = vrot.slane %v840, 4
      %v843 = vshll.u32 %v376, 16
      %v845 = vrot.slane %v843, 5
      %v846 = vor.u32 %v842, %v845
      %v847 = vrot.slane %v846, 4
      %v849 = vshll.u32 %v377, 16
      %v851 = vrot.slane %v849, 5
      %v852 = vsel %vm428, %v847, %v851
      %v854 = vshrl.u32 %v378, 16
      %v856 = vrot.slane %v854, 4
      %v857 = vshll.u32 %v378, 16
      %v859 = vrot.slane %v857, 5
      %v860 = vor.u32 %v856, %v859
      %v861 = vrot.slane %v860, 4
      %v863 = vshll.u32 %v379, 16
      %v865 = vrot.slane %v863, 5
      %v866 = vsel %vm428, %v861, %v865
      %v868 = vshrl.u32 %v380, 16
      %v870 = vrot.slane %v868, 4
      %v871 = vshll.u32 %v380, 16
      %v873 = vrot.slane %v871, 5
      %v874 = vor.u32 %v870, %v873
      %v875 = vrot.slane %v874, 4
      %v877 = vshll.u32 %v381, 16
      %v879 = vrot.slane %v877, 5
      %v880 = vsel %vm428, %v875, %v879
      %v882 = vshrl.u32 %v382, 16
      %v884 = vrot.slane %v882, 4
      %v885 = vshll.u32 %v382, 16
      %v887 = vrot.slane %v885, 5
      %v888 = vor.u32 %v884, %v887
      %v889 = vrot.slane %v888, 4
      %v891 = vshll.u32 %v383, 16
      %v893 = vrot.slane %v891, 5
      %v894 = vsel %vm428, %v889, %v893
      %v896 = vshrl.u32 %v384, 16
      %v898 = vrot.slane %v896, 4
      %v899 = vshll.u32 %v384, 16
      %v901 = vrot.slane %v899, 5
      %v902 = vor.u32 %v898, %v901
      %v903 = vrot.slane %v902, 4
      %v905 = vshll.u32 %v385, 16
      %v907 = vrot.slane %v905, 5
      %v908 = vsel %vm428, %v903, %v907
      %v910 = vshrl.u32 %v386, 16
      %v912 = vrot.slane %v910, 4
      %v913 = vshll.u32 %v386, 16
      %v915 = vrot.slane %v913, 5
      %v916 = vor.u32 %v912, %v915
      %v917 = vrot.slane %v916, 4
      %v919 = vshll.u32 %v387, 16
      %v921 = vrot.slane %v919, 5
      %v922 = vsel %vm428, %v917, %v921
      %v924 = vshrl.u32 %v388, 16
      %v926 = vrot.slane %v924, 4
      %v927 = vshll.u32 %v388, 16
      %v929 = vrot.slane %v927, 5
      %v930 = vor.u32 %v926, %v929
      %v931 = vrot.slane %v930, 4
      %v933 = vshll.u32 %v389, 16
      %v935 = vrot.slane %v933, 5
      %v936 = vsel %vm428, %v931, %v935
      %v938 = vshrl.u32 %v390, 16
      %v940 = vrot.slane %v938, 4
      %v941 = vshll.u32 %v390, 16
      %v943 = vrot.slane %v941, 5
      %v944 = vor.u32 %v940, %v943
      %v945 = vrot.slane %v944, 4
      %v947 = vshll.u32 %v391, 16
      %v949 = vrot.slane %v947, 5
      %v950 = vsel %vm428, %v945, %v949
      %v951 = vunpack.c.l.b16 %v852
      %v952 = vunpack.c.l.b16 %v866
      %v953 = vunpack.c.l.b16 %v880
      %v954 = vunpack.c.l.b16 %v894
      %v955 = vunpack.c.l.b16 %v908
      %v956 = vunpack.c.l.b16 %v922
      %v957 = vunpack.c.l.b16 %v936
      %v958 = vunpack.c.l.b16 %v950
      %v959 = vpack.c.b16 %v952, %v951
      %v960 = vpack.c.b16 %v954, %v953
      %v961 = vpack.c.b16 %v956, %v955
      %v962 = vpack.c.b16 %v958, %v957
      %v967 = vunpack.c.l.b16 %v402
      %v968 = vunpack.c.l.b16 %v403
      %v969 = vunpack.c.l.b16 %v404
      %v970 = vunpack.c.l.b16 %v405
      %v971 = vpack.c.b16 %v968, %v967
      %v972 = vpack.c.b16 %v970, %v969
      %v976 = vsel %vm565, %v959, 0
      %v979 = vsel %vm565, %v960, 0
      %v982 = vsel %vm565, %v961, 0
      %v985 = vsel %vm565, %v962, 0
      %987 = vmatprep.subr.bf16.mxu0 0
      %988 = vmatpush1.bf16.msra.mxu0 0
      %989 = vmatprep.subr.bf16.mxu0 0
      %990 = vmatpush1.bf16.msra.mxu0 0
      %991 = vmatprep.subr.bf16.mxu0 0
      %992 = vmatpush1.bf16.msra.mxu0 0
      %993 = vmatprep.subr.bf16.mxu0 0
      %994 = vmatpush1.bf16.msra.mxu0 0
      %995 = vmatprep.subr.bf16.mxu0 0
      %996 = vmatpush1.bf16.msra.mxu0 0
      %997 = vmatprep.subr.bf16.mxu0 0
      %998 = vmatpush1.bf16.msra.mxu0 0
      %999 = vmatprep.subr.bf16.mxu0 0
      %1000 = vmatpush1.bf16.msra.mxu0 %v972
      %1001 = vmatprep.subr.bf16.mxu0 0
      %1002 = vmatpush1.bf16.msra.mxu0 %v971
      %1003 = vmatprep.subr.bf16.mxu0 0
      %1004 = vmatpush2.bf16.msra.mxu0 0
      %1005 = vmatprep.subr.bf16.mxu0 0
      %1006 = vmatpush2.bf16.msra.mxu0 0
      %1007 = vmatprep.subr.bf16.mxu0 0
      %1008 = vmatpush2.bf16.msra.mxu0 0
      %1009 = vmatprep.subr.bf16.mxu0 0
      %1010 = vmatpush2.bf16.msra.mxu0 0
      %1011 = vmatprep.subr.bf16.mxu0 0
      %1012 = vmatpush2.bf16.msra.mxu0 0
      %1013 = vmatprep.subr.bf16.mxu0 0
      %1014 = vmatpush2.bf16.msra.mxu0 0
      %1015 = vmatprep.subr.bf16.mxu0 0
      %1016 = vmatpush2.bf16.msra.mxu0 0
      %1017 = vmatprep.subr.bf16.mxu0 0
      %1018 = vmatpush2.bf16.msra.mxu0 0
      %1019 = vmatprep.mubr.bf16.mxu0 0
      %1020 = vmatmul.mubr.bf16.gmra.mxu0 %v976
      %v1021 = vpop.f32.mrf.mxu0
      %v1022 = vadd.f32 0.0, %v1021
      %v1023 = vpop.f32.mrf.mxu0
      %v1024 = vpop.f32.mrf.mxu0
      %v1025 = vadd.f32 0.0, %v1024
      %v1026 = vpop.f32.mrf.mxu0
      %1027 = vmatprep.mubr.bf16.mxu0 0
      %1028 = vmatmul.mubr.bf16.gmra.mxu0 %v979
      %v1029 = vpop.f32.mrf.mxu0
      %v1030 = vadd.f32 0.0, %v1029
      %v1031 = vpop.f32.mrf.mxu0
      %v1032 = vpop.f32.mrf.mxu0
      %v1033 = vadd.f32 0.0, %v1032
      %v1034 = vpop.f32.mrf.mxu0
      %1035 = vmatprep.mubr.bf16.mxu0 0
      %1036 = vmatmul.mubr.bf16.gmra.mxu0 %v982
      %v1037 = vpop.f32.mrf.mxu0
      %v1038 = vadd.f32 0.0, %v1037
      %v1039 = vpop.f32.mrf.mxu0
      %v1040 = vpop.f32.mrf.mxu0
      %v1041 = vadd.f32 0.0, %v1040
      %v1042 = vpop.f32.mrf.mxu0
      %1043 = vmatprep.mubr.bf16.mxu0 0
      %1044 = vmatmul.mubr.bf16.gmra.mxu0 %v985
      %v1045 = vpop.f32.mrf.mxu0
      %v1046 = vadd.f32 0.0, %v1045
      %v1047 = vpop.f32.mrf.mxu0
      %v1048 = vpop.f32.mrf.mxu0
      %v1049 = vadd.f32 0.0, %v1048
      %v1050 = vpop.f32.mrf.mxu0
      %1051 = vdwg.mxu0
      %v1052 = vunpack.c.l.b16 %v740
      %v1053 = vunpack.c.l.b16 %v754
      %v1054 = vunpack.c.l.b16 %v768
      %v1055 = vunpack.c.l.b16 %v782
      %v1056 = vunpack.c.l.b16 %v796
      %v1057 = vunpack.c.l.b16 %v810
      %v1058 = vunpack.c.l.b16 %v824
      %v1059 = vunpack.c.l.b16 %v838
      %v1060 = vpack.c.b16 %v1053, %v1052
      %v1061 = vpack.c.b16 %v1055, %v1054
      %v1062 = vpack.c.b16 %v1057, %v1056
      %v1063 = vpack.c.b16 %v1059, %v1058
      %v1068 = vunpack.c.l.b16 %v398
      %v1069 = vunpack.c.l.b16 %v399
      %v1070 = vunpack.c.l.b16 %v400
      %v1071 = vunpack.c.l.b16 %v401
      %v1072 = vpack.c.b16 %v1069, %v1068
      %v1073 = vpack.c.b16 %v1071, %v1070
      %v1077 = vsel %vm565, %v1060, 0
      %v1080 = vsel %vm565, %v1061, 0
      %v1083 = vsel %vm565, %v1062, 0
      %v1086 = vsel %vm565, %v1063, 0
      %1088 = vmatprep.subr.bf16.mxu0 0
      %1089 = vmatpush1.bf16.msra.mxu0 0
      %1090 = vmatprep.subr.bf16.mxu0 0
      %1091 = vmatpush1.bf16.msra.mxu0 0
      %1092 = vmatprep.subr.bf16.mxu0 0
      %1093 = vmatpush1.bf16.msra.mxu0 0
      %1094 = vmatprep.subr.bf16.mxu0 0
      %1095 = vmatpush1.bf16.msra.mxu0 0
      %1096 = vmatprep.subr.bf16.mxu0 0
      %1097 = vmatpush1.bf16.msra.mxu0 0
      %1098 = vmatprep.subr.bf16.mxu0 0
      %1099 = vmatpush1.bf16.msra.mxu0 0
      %1100 = vmatprep.subr.bf16.mxu0 0
      %1101 = vmatpush1.bf16.msra.mxu0 %v1073
      %1102 = vmatprep.subr.bf16.mxu0 0
      %1103 = vmatpush1.bf16.msra.mxu0 %v1072
      %1104 = vmatprep.subr.bf16.mxu0 0
      %1105 = vmatpush2.bf16.msra.mxu0 0
      %1106 = vmatprep.subr.bf16.mxu0 0
      %1107 = vmatpush2.bf16.msra.mxu0 0
      %1108 = vmatprep.subr.bf16.mxu0 0
      %1109 = vmatpush2.bf16.msra.mxu0 0
      %1110 = vmatprep.subr.bf16.mxu0 0
      %1111 = vmatpush2.bf16.msra.mxu0 0
      %1112 = vmatprep.subr.bf16.mxu0 0
      %1113 = vmatpush2.bf16.msra.mxu0 0
      %1114 = vmatprep.subr.bf16.mxu0 0
      %1115 = vmatpush2.bf16.msra.mxu0 0
      %1116 = vmatprep.subr.bf16.mxu0 0
      %1117 = vmatpush2.bf16.msra.mxu0 0
      %1118 = vmatprep.subr.bf16.mxu0 0
      %1119 = vmatpush2.bf16.msra.mxu0 0
      %1120 = vmatprep.mubr.bf16.mxu0 0
      %1121 = vmatmul.mubr.bf16.gmra.mxu0 %v1077
      %v1122 = vpop.f32.mrf.mxu0
      %v1123 = vadd.f32 %v1022, %v1122
      %v1124 = vpop.f32.mrf.mxu0
      %v1125 = vpop.f32.mrf.mxu0
      %v1126 = vadd.f32 %v1025, %v1125
      %v1127 = vpop.f32.mrf.mxu0
      %1128 = vmatprep.mubr.bf16.mxu0 0
      %1129 = vmatmul.mubr.bf16.gmra.mxu0 %v1080
      %v1130 = vpop.f32.mrf.mxu0
      %v1131 = vadd.f32 %v1030, %v1130
      %v1132 = vpop.f32.mrf.mxu0
      %v1133 = vpop.f32.mrf.mxu0
      %v1134 = vadd.f32 %v1033, %v1133
      %v1135 = vpop.f32.mrf.mxu0
      %1136 = vmatprep.mubr.bf16.mxu0 0
      %1137 = vmatmul.mubr.bf16.gmra.mxu0 %v1083
      %v1138 = vpop.f32.mrf.mxu0
      %v1139 = vadd.f32 %v1038, %v1138
      %v1140 = vpop.f32.mrf.mxu0
      %v1141 = vpop.f32.mrf.mxu0
      %v1142 = vadd.f32 %v1041, %v1141
      %v1143 = vpop.f32.mrf.mxu0
      %1144 = vmatprep.mubr.bf16.mxu0 0
      %1145 = vmatmul.mubr.bf16.gmra.mxu0 %v1086
      %v1146 = vpop.f32.mrf.mxu0
      %v1147 = vadd.f32 %v1046, %v1146
      %v1148 = vpop.f32.mrf.mxu0
      %v1149 = vpop.f32.mrf.mxu0
      %v1150 = vadd.f32 %v1049, %v1149
      %v1151 = vpop.f32.mrf.mxu0
      %1152 = vdwg.mxu0
      %v1154 = vlaneseq
      %v1155 = vshrl.u32 %v1154, 7
      %v1156 = vsub.s32 0, %v1155
      %v1157 = vrot.slane %v408, %v1156
      %v1159 = vmul.f32 %v1123, %v1157
      %v1160 = vmul.f32 %v1126, %v1157
      %v1161 = vmul.f32 %v1131, %v1157
      %v1162 = vmul.f32 %v1134, %v1157
      %v1163 = vmul.f32 %v1139, %v1157
      %v1164 = vmul.f32 %v1142, %v1157
      %v1165 = vmul.f32 %v1147, %v1157
      %v1166 = vmul.f32 %v1150, %v1157
      %v1168 = vlaneseq
      %v1169 = vshrl.u32 %v1168, 7
      %v1170 = vsub.s32 0, %v1169
      %v1171 = vrot.slane %v409, %v1170
      %v1173 = vadd.f32 %v1159, %v1171
      %v1174 = vadd.f32 %v1160, %v1171
      %v1175 = vadd.f32 %v1161, %v1171
      %v1176 = vadd.f32 %v1162, %v1171
      %v1177 = vadd.f32 %v1163, %v1171
      %v1178 = vadd.f32 %v1164, %v1171
      %v1179 = vadd.f32 %v1165, %v1171
      %v1180 = vadd.f32 %v1166, %v1171
      %v1181 = vmax.f32 %v1173, 0.0
      %v1182 = vmax.f32 %v1174, 0.0
      %v1183 = vmax.f32 %v1175, 0.0
      %v1184 = vmax.f32 %v1176, 0.0
      %v1185 = vmax.f32 %v1177, 0.0
      %v1186 = vmax.f32 %v1178, 0.0
      %v1187 = vmax.f32 %v1179, 0.0
      %v1188 = vmax.f32 %v1180, 0.0
      %v1189 = vunpack.c.l.bf16 %v354
      %v1190 = vunpack.c.l.bf16 %v356
      %v1191 = vunpack.c.l.bf16 %v358
      %v1192 = vunpack.c.l.bf16 %v360
      %v1193 = vunpack.c.l.bf16 %v362
      %v1194 = vunpack.c.l.bf16 %v364
      %v1195 = vunpack.c.l.bf16 %v366
      %v1196 = vunpack.c.l.bf16 %v368
      %v1197 = vadd.f32 %v1189, 0.0
      %v1198 = vadd.f32 %v1190, 0.0
      %v1199 = vadd.f32 %v1191, 0.0
      %v1200 = vadd.f32 %v1192, 0.0
      %v1201 = vadd.f32 %v1193, 0.0
      %v1202 = vadd.f32 %v1194, 0.0
      %v1203 = vadd.f32 %v1195, 0.0
      %v1204 = vadd.f32 %v1196, 0.0
      %v1205 = vunpack.c.l.bf16 %v355
      %v1206 = vunpack.c.l.bf16 %v357
      %v1207 = vunpack.c.l.bf16 %v359
      %v1208 = vunpack.c.l.bf16 %v361
      %v1209 = vunpack.c.l.bf16 %v363
      %v1210 = vunpack.c.l.bf16 %v365
      %v1211 = vunpack.c.l.bf16 %v367
      %v1212 = vunpack.c.l.bf16 %v369
      %vm1229 = vcmask 1046528
      %v1230 = vrot.slane %v1189, 1
      %v1231 = vrot.slane %v1205, 1
      %v1232 = vsel %vm1229, %v1230, %v1231
      %v1233 = vrot.slane %v1190, 1
      %v1234 = vrot.slane %v1206, 1
      %v1235 = vsel %vm1229, %v1233, %v1234
      %v1236 = vrot.slane %v1191, 1
      %v1237 = vrot.slane %v1207, 1
      %v1238 = vsel %vm1229, %v1236, %v1237
      %v1239 = vrot.slane %v1192, 1
      %v1240 = vrot.slane %v1208, 1
      %v1241 = vsel %vm1229, %v1239, %v1240
      %v1242 = vrot.slane %v1193, 1
      %v1243 = vrot.slane %v1209, 1
      %v1244 = vsel %vm1229, %v1242, %v1243
      %v1245 = vrot.slane %v1194, 1
      %v1246 = vrot.slane %v1210, 1
      %v1247 = vsel %vm1229, %v1245, %v1246
      %v1248 = vrot.slane %v1195, 1
      %v1249 = vrot.slane %v1211, 1
      %v1250 = vsel %vm1229, %v1248, %v1249
      %v1251 = vrot.slane %v1196, 1
      %v1252 = vrot.slane %v1212, 1
      %v1253 = vsel %vm1229, %v1251, %v1252
      %v1262 = vadd.f32 %v1197, %v1232
      %v1263 = vadd.f32 %v1198, %v1235
      %v1264 = vadd.f32 %v1199, %v1238
      %v1265 = vadd.f32 %v1200, %v1241
      %v1266 = vadd.f32 %v1201, %v1244
      %v1267 = vadd.f32 %v1202, %v1247
      %v1268 = vadd.f32 %v1203, %v1250
      %v1269 = vadd.f32 %v1204, %v1253
      %vm1270 = vcmask 1045504
      %v1271 = vrot.slane %v1189, 2
      %v1272 = vrot.slane %v1205, 2
      %v1273 = vsel %vm1270, %v1271, %v1272
      %v1274 = vrot.slane %v1190, 2
      %v1275 = vrot.slane %v1206, 2
      %v1276 = vsel %vm1270, %v1274, %v1275
      %v1277 = vrot.slane %v1191, 2
      %v1278 = vrot.slane %v1207, 2
      %v1279 = vsel %vm1270, %v1277, %v1278
      %v1280 = vrot.slane %v1192, 2
      %v1281 = vrot.slane %v1208, 2
      %v1282 = vsel %vm1270, %v1280, %v1281
      %v1283 = vrot.slane %v1193, 2
      %v1284 = vrot.slane %v1209, 2
      %v1285 = vsel %vm1270, %v1283, %v1284
      %v1286 = vrot.slane %v1194, 2
      %v1287 = vrot.slane %v1210, 2
      %v1288 = vsel %vm1270, %v1286, %v1287
      %v1289 = vrot.slane %v1195, 2
      %v1290 = vrot.slane %v1211, 2
      %v1291 = vsel %vm1270, %v1289, %v1290
      %v1292 = vrot.slane %v1196, 2
      %v1293 = vrot.slane %v1212, 2
      %v1294 = vsel %vm1270, %v1292, %v1293
      %v1303 = vadd.f32 %v1262, %v1273
      %v1304 = vadd.f32 %v1263, %v1276
      %v1305 = vadd.f32 %v1264, %v1279
      %v1306 = vadd.f32 %v1265, %v1282
      %v1307 = vadd.f32 %v1266, %v1285
      %v1308 = vadd.f32 %v1267, %v1288
      %v1309 = vadd.f32 %v1268, %v1291
      %v1310 = vadd.f32 %v1269, %v1294
      %v1311 = vunpack.c.l.bf16 %v370
      %v1312 = vadd.f32 %v1303, %v1190
      %v1313 = vadd.f32 %v1304, %v1191
      %v1314 = vadd.f32 %v1305, %v1192
      %v1315 = vadd.f32 %v1306, %v1193
      %v1316 = vadd.f32 %v1307, %v1194
      %v1317 = vadd.f32 %v1308, %v1195
      %v1318 = vadd.f32 %v1309, %v1196
      %v1319 = vadd.f32 %v1310, %v1311
      %v1320 = vunpack.c.l.bf16 %v371
      %v1323 = vrot.slane %v1311, 1
      %v1324 = vrot.slane %v1320, 1
      %v1325 = vsel %vm1229, %v1323, %v1324
      %v1327 = vadd.f32 %v1312, %v1235
      %v1328 = vadd.f32 %v1313, %v1238
      %v1329 = vadd.f32 %v1314, %v1241
      %v1330 = vadd.f32 %v1315, %v1244
      %v1331 = vadd.f32 %v1316, %v1247
      %v1332 = vadd.f32 %v1317, %v1250
      %v1333 = vadd.f32 %v1318, %v1253
      %v1334 = vadd.f32 %v1319, %v1325
      %v1335 = vrot.slane %v1311, 2
      %v1336 = vrot.slane %v1320, 2
      %v1337 = vsel %vm1270, %v1335, %v1336
      %v1339 = vadd.f32 %v1327, %v1276
      %v1340 = vadd.f32 %v1328, %v1279
      %v1341 = vadd.f32 %v1329, %v1282
      %v1342 = vadd.f32 %v1330, %v1285
      %v1343 = vadd.f32 %v1331, %v1288
      %v1344 = vadd.f32 %v1332, %v1291
      %v1345 = vadd.f32 %v1333, %v1294
      %v1346 = vadd.f32 %v1334, %v1337
      %v1347 = vunpack.c.l.bf16 %v372
      %v1348 = vadd.f32 %v1339, %v1191
      %v1349 = vadd.f32 %v1340, %v1192
      %v1350 = vadd.f32 %v1341, %v1193
      %v1351 = vadd.f32 %v1342, %v1194
      %v1352 = vadd.f32 %v1343, %v1195
      %v1353 = vadd.f32 %v1344, %v1196
      %v1354 = vadd.f32 %v1345, %v1311
      %v1355 = vadd.f32 %v1346, %v1347
      %v1356 = vunpack.c.l.bf16 %v373
      %v1359 = vrot.slane %v1347, 1
      %v1360 = vrot.slane %v1356, 1
      %v1361 = vsel %vm1229, %v1359, %v1360
      %v1363 = vadd.f32 %v1348, %v1238
      %v1364 = vadd.f32 %v1349, %v1241
      %v1365 = vadd.f32 %v1350, %v1244
      %v1366 = vadd.f32 %v1351, %v1247
      %v1367 = vadd.f32 %v1352, %v1250
      %v1368 = vadd.f32 %v1353, %v1253
      %v1369 = vadd.f32 %v1354, %v1325
      %v1370 = vadd.f32 %v1355, %v1361
      %v1371 = vrot.slane %v1347, 2
      %v1372 = vrot.slane %v1356, 2
      %v1373 = vsel %vm1270, %v1371, %v1372
      %v1375 = vadd.f32 %v1363, %v1279
      %v1376 = vadd.f32 %v1364, %v1282
      %v1377 = vadd.f32 %v1365, %v1285
      %v1378 = vadd.f32 %v1366, %v1288
      %v1379 = vadd.f32 %v1367, %v1291
      %v1380 = vadd.f32 %v1368, %v1294
      %v1381 = vadd.f32 %v1369, %v1337
      %v1382 = vadd.f32 %v1370, %v1373
      %v1383 = vmul.f32 %v1375, 0.11111111
      %v1384 = vmul.f32 %v1376, 0.11111111
      %v1385 = vmul.f32 %v1377, 0.11111111
      %v1386 = vmul.f32 %v1378, 0.11111111
      %v1387 = vmul.f32 %v1379, 0.11111111
      %v1388 = vmul.f32 %v1380, 0.11111111
      %v1389 = vmul.f32 %v1381, 0.11111111
      %v1390 = vmul.f32 %v1382, 0.11111111
      %v1391 = vpack.c.bf16 %v1383, %v1383
      %v1392 = vpack.c.bf16 %v1384, %v1384
      %v1393 = vpack.c.bf16 %v1385, %v1385
      %v1394 = vpack.c.bf16 %v1386, %v1386
      %v1395 = vpack.c.bf16 %v1387, %v1387
      %v1396 = vpack.c.bf16 %v1388, %v1388
      %v1397 = vpack.c.bf16 %v1389, %v1389
      %v1398 = vpack.c.bf16 %v1390, %v1390
      %v1399 = vunpack.c.l.bf16 %v374
      %v1400 = vunpack.c.l.bf16 %v376
      %v1401 = vunpack.c.l.bf16 %v378
      %v1402 = vunpack.c.l.bf16 %v380
      %v1403 = vunpack.c.l.bf16 %v382
      %v1404 = vunpack.c.l.bf16 %v384
      %v1405 = vunpack.c.l.bf16 %v386
      %v1406 = vunpack.c.l.bf16 %v388
      %v1407 = vadd.f32 %v1399, 0.0
      %v1408 = vadd.f32 %v1400, 0.0
      %v1409 = vadd.f32 %v1401, 0.0
      %v1410 = vadd.f32 %v1402, 0.0
      %v1411 = vadd.f32 %v1403, 0.0
      %v1412 = vadd.f32 %v1404, 0.0
      %v1413 = vadd.f32 %v1405, 0.0
      %v1414 = vadd.f32 %v1406, 0.0
      %v1415 = vunpack.c.l.bf16 %v375
      %v1416 = vunpack.c.l.bf16 %v377
      %v1417 = vunpack.c.l.bf16 %v379
      %v1418 = vunpack.c.l.bf16 %v381
      %v1419 = vunpack.c.l.bf16 %v383
      %v1420 = vunpack.c.l.bf16 %v385
      %v1421 = vunpack.c.l.bf16 %v387
      %v1422 = vunpack.c.l.bf16 %v389
      %v1439 = vrot.slane %v1399, 1
      %v1440 = vrot.slane %v1415, 1
      %v1441 = vsel %vm1229, %v1439, %v1440
      %v1442 = vrot.slane %v1400, 1
      %v1443 = vrot.slane %v1416, 1
      %v1444 = vsel %vm1229, %v1442, %v1443
      %v1445 = vrot.slane %v1401, 1
      %v1446 = vrot.slane %v1417, 1
      %v1447 = vsel %vm1229, %v1445, %v1446
      %v1448 = vrot.slane %v1402, 1
      %v1449 = vrot.slane %v1418, 1
      %v1450 = vsel %vm1229, %v1448, %v1449
      %v1451 = vrot.slane %v1403, 1
      %v1452 = vrot.slane %v1419, 1
      %v1453 = vsel %vm1229, %v1451, %v1452
      %v1454 = vrot.slane %v1404, 1
      %v1455 = vrot.slane %v1420, 1
      %v1456 = vsel %vm1229, %v1454, %v1455
      %v1457 = vrot.slane %v1405, 1
      %v1458 = vrot.slane %v1421, 1
      %v1459 = vsel %vm1229, %v1457, %v1458
      %v1460 = vrot.slane %v1406, 1
      %v1461 = vrot.slane %v1422, 1
      %v1462 = vsel %vm1229, %v1460, %v1461
      %v1471 = vadd.f32 %v1407, %v1441
      %v1472 = vadd.f32 %v1408, %v1444
      %v1473 = vadd.f32 %v1409, %v1447
      %v1474 = vadd.f32 %v1410, %v1450
      %v1475 = vadd.f32 %v1411, %v1453
      %v1476 = vadd.f32 %v1412, %v1456
      %v1477 = vadd.f32 %v1413, %v1459
      %v1478 = vadd.f32 %v1414, %v1462
      %v1479 = vrot.slane %v1399, 2
      %v1480 = vrot.slane %v1415, 2
      %v1481 = vsel %vm1270, %v1479, %v1480
      %v1482 = vrot.slane %v1400, 2
      %v1483 = vrot.slane %v1416, 2
      %v1484 = vsel %vm1270, %v1482, %v1483
      %v1485 = vrot.slane %v1401, 2
      %v1486 = vrot.slane %v1417, 2
      %v1487 = vsel %vm1270, %v1485, %v1486
      %v1488 = vrot.slane %v1402, 2
      %v1489 = vrot.slane %v1418, 2
      %v1490 = vsel %vm1270, %v1488, %v1489
      %v1491 = vrot.slane %v1403, 2
      %v1492 = vrot.slane %v1419, 2
      %v1493 = vsel %vm1270, %v1491, %v1492
      %v1494 = vrot.slane %v1404, 2
      %v1495 = vrot.slane %v1420, 2
      %v1496 = vsel %vm1270, %v1494, %v1495
      %v1497 = vrot.slane %v1405, 2
      %v1498 = vrot.slane %v1421, 2
      %v1499 = vsel %vm1270, %v1497, %v1498
      %v1500 = vrot.slane %v1406, 2
      %v1501 = vrot.slane %v1422, 2
      %v1502 = vsel %vm1270, %v1500, %v1501
      %v1511 = vadd.f32 %v1471, %v1481
      %v1512 = vadd.f32 %v1472, %v1484
      %v1513 = vadd.f32 %v1473, %v1487
      %v1514 = vadd.f32 %v1474, %v1490
      %v1515 = vadd.f32 %v1475, %v1493
      %v1516 = vadd.f32 %v1476, %v1496
      %v1517 = vadd.f32 %v1477, %v1499
      %v1518 = vadd.f32 %v1478, %v1502
      %v1519 = vunpack.c.l.bf16 %v390
      %v1520 = vadd.f32 %v1511, %v1400
      %v1521 = vadd.f32 %v1512, %v1401
      %v1522 = vadd.f32 %v1513, %v1402
      %v1523 = vadd.f32 %v1514, %v1403
      %v1524 = vadd.f32 %v1515, %v1404
      %v1525 = vadd.f32 %v1516, %v1405
      %v1526 = vadd.f32 %v1517, %v1406
      %v1527 = vadd.f32 %v1518, %v1519
      %v1528 = vunpack.c.l.bf16 %v391
      %v1531 = vrot.slane %v1519, 1
      %v1532 = vrot.slane %v1528, 1
      %v1533 = vsel %vm1229, %v1531, %v1532
      %v1535 = vadd.f32 %v1520, %v1444
      %v1536 = vadd.f32 %v1521, %v1447
      %v1537 = vadd.f32 %v1522, %v1450
      %v1538 = vadd.f32 %v1523, %v1453
      %v1539 = vadd.f32 %v1524, %v1456
      %v1540 = vadd.f32 %v1525, %v1459
      %v1541 = vadd.f32 %v1526, %v1462
      %v1542 = vadd.f32 %v1527, %v1533
      %v1543 = vrot.slane %v1519, 2
      %v1544 = vrot.slane %v1528, 2
      %v1545 = vsel %vm1270, %v1543, %v1544
      %v1547 = vadd.f32 %v1535, %v1484
      %v1548 = vadd.f32 %v1536, %v1487
      %v1549 = vadd.f32 %v1537, %v1490
      %v1550 = vadd.f32 %v1538, %v1493
      %v1551 = vadd.f32 %v1539, %v1496
      %v1552 = vadd.f32 %v1540, %v1499
      %v1553 = vadd.f32 %v1541, %v1502
      %v1554 = vadd.f32 %v1542, %v1545
      %v1555 = vunpack.c.l.bf16 %v392
      %v1556 = vadd.f32 %v1547, %v1401
      %v1557 = vadd.f32 %v1548, %v1402
      %v1558 = vadd.f32 %v1549, %v1403
      %v1559 = vadd.f32 %v1550, %v1404
      %v1560 = vadd.f32 %v1551, %v1405
      %v1561 = vadd.f32 %v1552, %v1406
      %v1562 = vadd.f32 %v1553, %v1519
      %v1563 = vadd.f32 %v1554, %v1555
      %v1564 = vunpack.c.l.bf16 %v393
      %v1567 = vrot.slane %v1555, 1
      %v1568 = vrot.slane %v1564, 1
      %v1569 = vsel %vm1229, %v1567, %v1568
      %v1571 = vadd.f32 %v1556, %v1447
      %v1572 = vadd.f32 %v1557, %v1450
      %v1573 = vadd.f32 %v1558, %v1453
      %v1574 = vadd.f32 %v1559, %v1456
      %v1575 = vadd.f32 %v1560, %v1459
      %v1576 = vadd.f32 %v1561, %v1462
      %v1577 = vadd.f32 %v1562, %v1533
      %v1578 = vadd.f32 %v1563, %v1569
      %v1579 = vrot.slane %v1555, 2
      %v1580 = vrot.slane %v1564, 2
      %v1581 = vsel %vm1270, %v1579, %v1580
      %v1583 = vadd.f32 %v1571, %v1487
      %v1584 = vadd.f32 %v1572, %v1490
      %v1585 = vadd.f32 %v1573, %v1493
      %v1586 = vadd.f32 %v1574, %v1496
      %v1587 = vadd.f32 %v1575, %v1499
      %v1588 = vadd.f32 %v1576, %v1502
      %v1589 = vadd.f32 %v1577, %v1545
      %v1590 = vadd.f32 %v1578, %v1581
      %v1591 = vmul.f32 %v1583, 0.11111111
      %v1592 = vmul.f32 %v1584, 0.11111111
      %v1593 = vmul.f32 %v1585, 0.11111111
      %v1594 = vmul.f32 %v1586, 0.11111111
      %v1595 = vmul.f32 %v1587, 0.11111111
      %v1596 = vmul.f32 %v1588, 0.11111111
      %v1597 = vmul.f32 %v1589, 0.11111111
      %v1598 = vmul.f32 %v1590, 0.11111111
      %v1599 = vpack.c.bf16 %v1591, %v1591
      %v1600 = vpack.c.bf16 %v1592, %v1592
      %v1601 = vpack.c.bf16 %v1593, %v1593
      %v1602 = vpack.c.bf16 %v1594, %v1594
      %v1603 = vpack.c.bf16 %v1595, %v1595
      %v1604 = vpack.c.bf16 %v1596, %v1596
      %v1605 = vpack.c.bf16 %v1597, %v1597
      %v1606 = vpack.c.bf16 %v1598, %v1598
      %v1615 = vunpack.c.l.b16 %v1599
      %v1616 = vunpack.c.l.b16 %v1600
      %v1617 = vunpack.c.l.b16 %v1601
      %v1618 = vunpack.c.l.b16 %v1602
      %v1619 = vunpack.c.l.b16 %v1603
      %v1620 = vunpack.c.l.b16 %v1604
      %v1621 = vunpack.c.l.b16 %v1605
      %v1622 = vunpack.c.l.b16 %v1606
      %v1623 = vpack.c.b16 %v1616, %v1615
      %v1624 = vpack.c.b16 %v1618, %v1617
      %v1625 = vpack.c.b16 %v1620, %v1619
      %v1626 = vpack.c.b16 %v1622, %v1621
      %v1628 = vsel %vm565, %v1623, 0
      %v1631 = vsel %vm565, %v1624, 0
      %v1634 = vsel %vm565, %v1625, 0
      %v1637 = vsel %vm565, %v1626, 0
      %1639 = vmatprep.subr.bf16.mxu0 0
      %1640 = vmatpush1.bf16.msra.mxu0 0
      %1641 = vmatprep.subr.bf16.mxu0 0
      %1642 = vmatpush1.bf16.msra.mxu0 0
      %1643 = vmatprep.subr.bf16.mxu0 0
      %1644 = vmatpush1.bf16.msra.mxu0 0
      %1645 = vmatprep.subr.bf16.mxu0 0
      %1646 = vmatpush1.bf16.msra.mxu0 0
      %1647 = vmatprep.subr.bf16.mxu0 0
      %1648 = vmatpush1.bf16.msra.mxu0 0
      %1649 = vmatprep.subr.bf16.mxu0 0
      %1650 = vmatpush1.bf16.msra.mxu0 0
      %1651 = vmatprep.subr.bf16.mxu0 0
      %1652 = vmatpush1.bf16.msra.mxu0 %v972
      %1653 = vmatprep.subr.bf16.mxu0 0
      %1654 = vmatpush1.bf16.msra.mxu0 %v971
      %1655 = vmatprep.subr.bf16.mxu0 0
      %1656 = vmatpush2.bf16.msra.mxu0 0
      %1657 = vmatprep.subr.bf16.mxu0 0
      %1658 = vmatpush2.bf16.msra.mxu0 0
      %1659 = vmatprep.subr.bf16.mxu0 0
      %1660 = vmatpush2.bf16.msra.mxu0 0
      %1661 = vmatprep.subr.bf16.mxu0 0
      %1662 = vmatpush2.bf16.msra.mxu0 0
      %1663 = vmatprep.subr.bf16.mxu0 0
      %1664 = vmatpush2.bf16.msra.mxu0 0
      %1665 = vmatprep.subr.bf16.mxu0 0
      %1666 = vmatpush2.bf16.msra.mxu0 0
      %1667 = vmatprep.subr.bf16.mxu0 0
      %1668 = vmatpush2.bf16.msra.mxu0 0
      %1669 = vmatprep.subr.bf16.mxu0 0
      %1670 = vmatpush2.bf16.msra.mxu0 0
      %1671 = vmatprep.mubr.bf16.mxu0 0
      %1672 = vmatmul.mubr.bf16.gmra.mxu0 %v1628
      %v1673 = vpop.f32.mrf.mxu0
      %v1674 = vadd.f32 0.0, %v1673
      %v1675 = vpop.f32.mrf.mxu0
      %v1676 = vpop.f32.mrf.mxu0
      %v1677 = vadd.f32 0.0, %v1676
      %v1678 = vpop.f32.mrf.mxu0
      %1679 = vmatprep.mubr.bf16.mxu0 0
      %1680 = vmatmul.mubr.bf16.gmra.mxu0 %v1631
      %v1681 = vpop.f32.mrf.mxu0
      %v1682 = vadd.f32 0.0, %v1681
      %v1683 = vpop.f32.mrf.mxu0
      %v1684 = vpop.f32.mrf.mxu0
      %v1685 = vadd.f32 0.0, %v1684
      %v1686 = vpop.f32.mrf.mxu0
      %1687 = vmatprep.mubr.bf16.mxu0 0
      %1688 = vmatmul.mubr.bf16.gmra.mxu0 %v1634
      %v1689 = vpop.f32.mrf.mxu0
      %v1690 = vadd.f32 0.0, %v1689
      %v1691 = vpop.f32.mrf.mxu0
      %v1692 = vpop.f32.mrf.mxu0
      %v1693 = vadd.f32 0.0, %v1692
      %v1694 = vpop.f32.mrf.mxu0
      %1695 = vmatprep.mubr.bf16.mxu0 0
      %1696 = vmatmul.mubr.bf16.gmra.mxu0 %v1637
      %v1697 = vpop.f32.mrf.mxu0
      %v1698 = vadd.f32 0.0, %v1697
      %v1699 = vpop.f32.mrf.mxu0
      %v1700 = vpop.f32.mrf.mxu0
      %v1701 = vadd.f32 0.0, %v1700
      %v1702 = vpop.f32.mrf.mxu0
      %1703 = vdwg.mxu0
      %v1712 = vunpack.c.l.b16 %v1391
      %v1713 = vunpack.c.l.b16 %v1392
      %v1714 = vunpack.c.l.b16 %v1393
      %v1715 = vunpack.c.l.b16 %v1394
      %v1716 = vunpack.c.l.b16 %v1395
      %v1717 = vunpack.c.l.b16 %v1396
      %v1718 = vunpack.c.l.b16 %v1397
      %v1719 = vunpack.c.l.b16 %v1398
      %v1720 = vpack.c.b16 %v1713, %v1712
      %v1721 = vpack.c.b16 %v1715, %v1714
      %v1722 = vpack.c.b16 %v1717, %v1716
      %v1723 = vpack.c.b16 %v1719, %v1718
      %v1725 = vsel %vm565, %v1720, 0
      %v1728 = vsel %vm565, %v1721, 0
      %v1731 = vsel %vm565, %v1722, 0
      %v1734 = vsel %vm565, %v1723, 0
      %1736 = vmatprep.subr.bf16.mxu0 0
      %1737 = vmatpush1.bf16.msra.mxu0 0
      %1738 = vmatprep.subr.bf16.mxu0 0
      %1739 = vmatpush1.bf16.msra.mxu0 0
      %1740 = vmatprep.subr.bf16.mxu0 0
      %1741 = vmatpush1.bf16.msra.mxu0 0
      %1742 = vmatprep.subr.bf16.mxu0 0
      %1743 = vmatpush1.bf16.msra.mxu0 0
      %1744 = vmatprep.subr.bf16.mxu0 0
      %1745 = vmatpush1.bf16.msra.mxu0 0
      %1746 = vmatprep.subr.bf16.mxu0 0
      %1747 = vmatpush1.bf16.msra.mxu0 0
      %1748 = vmatprep.subr.bf16.mxu0 0
      %1749 = vmatpush1.bf16.msra.mxu0 %v1073
      %1750 = vmatprep.subr.bf16.mxu0 0
      %1751 = vmatpush1.bf16.msra.mxu0 %v1072
      %1752 = vmatprep.subr.bf16.mxu0 0
      %1753 = vmatpush2.bf16.msra.mxu0 0
      %1754 = vmatprep.subr.bf16.mxu0 0
      %1755 = vmatpush2.bf16.msra.mxu0 0
      %1756 = vmatprep.subr.bf16.mxu0 0
      %1757 = vmatpush2.bf16.msra.mxu0 0
      %1758 = vmatprep.subr.bf16.mxu0 0
      %1759 = vmatpush2.bf16.msra.mxu0 0
      %1760 = vmatprep.subr.bf16.mxu0 0
      %1761 = vmatpush2.bf16.msra.mxu0 0
      %1762 = vmatprep.subr.bf16.mxu0 0
      %1763 = vmatpush2.bf16.msra.mxu0 0
      %1764 = vmatprep.subr.bf16.mxu0 0
      %1765 = vmatpush2.bf16.msra.mxu0 0
      %1766 = vmatprep.subr.bf16.mxu0 0
      %1767 = vmatpush2.bf16.msra.mxu0 0
      %1768 = vmatprep.mubr.bf16.mxu0 0
      %1769 = vmatmul.mubr.bf16.gmra.mxu0 %v1725
      %v1770 = vpop.f32.mrf.mxu0
      %v1771 = vadd.f32 %v1674, %v1770
      %v1772 = vpop.f32.mrf.mxu0
      %v1773 = vpop.f32.mrf.mxu0
      %v1774 = vadd.f32 %v1677, %v1773
      %v1775 = vpop.f32.mrf.mxu0
      %1776 = vmatprep.mubr.bf16.mxu0 0
      %1777 = vmatmul.mubr.bf16.gmra.mxu0 %v1728
      %v1778 = vpop.f32.mrf.mxu0
      %v1779 = vadd.f32 %v1682, %v1778
      %v1780 = vpop.f32.mrf.mxu0
      %v1781 = vpop.f32.mrf.mxu0
      %v1782 = vadd.f32 %v1685, %v1781
      %v1783 = vpop.f32.mrf.mxu0
      %1784 = vmatprep.mubr.bf16.mxu0 0
      %1785 = vmatmul.mubr.bf16.gmra.mxu0 %v1731
      %v1786 = vpop.f32.mrf.mxu0
      %v1787 = vadd.f32 %v1690, %v1786
      %v1788 = vpop.f32.mrf.mxu0
      %v1789 = vpop.f32.mrf.mxu0
      %v1790 = vadd.f32 %v1693, %v1789
      %v1791 = vpop.f32.mrf.mxu0
      %1792 = vmatprep.mubr.bf16.mxu0 0
      %1793 = vmatmul.mubr.bf16.gmra.mxu0 %v1734
      %v1794 = vpop.f32.mrf.mxu0
      %v1795 = vadd.f32 %v1698, %v1794
      %v1796 = vpop.f32.mrf.mxu0
      %v1797 = vpop.f32.mrf.mxu0
      %v1798 = vadd.f32 %v1701, %v1797
      %v1799 = vpop.f32.mrf.mxu0
      %1800 = vdwg.mxu0
      %v1801 = vmul.f32 %v1771, %v1157
      %v1802 = vmul.f32 %v1774, %v1157
      %v1803 = vmul.f32 %v1779, %v1157
      %v1804 = vmul.f32 %v1782, %v1157
      %v1805 = vmul.f32 %v1787, %v1157
      %v1806 = vmul.f32 %v1790, %v1157
      %v1807 = vmul.f32 %v1795, %v1157
      %v1808 = vmul.f32 %v1798, %v1157
      %v1809 = vadd.f32 %v1801, %v1171
      %v1810 = vadd.f32 %v1802, %v1171
      %v1811 = vadd.f32 %v1803, %v1171
      %v1812 = vadd.f32 %v1804, %v1171
      %v1813 = vadd.f32 %v1805, %v1171
      %v1814 = vadd.f32 %v1806, %v1171
      %v1815 = vadd.f32 %v1807, %v1171
      %v1816 = vadd.f32 %v1808, %v1171
      %v1817 = vmax.f32 %v1809, 0.0
      %v1818 = vmax.f32 %v1810, 0.0
      %v1819 = vmax.f32 %v1811, 0.0
      %v1820 = vmax.f32 %v1812, 0.0
      %v1821 = vmax.f32 %v1813, 0.0
      %v1822 = vmax.f32 %v1814, 0.0
      %v1823 = vmax.f32 %v1815, 0.0
      %v1824 = vmax.f32 %v1816, 0.0
      %v1825 = vxor.u32 %v1817, 2147483648
      %v1826 = vxor.u32 %v1818, 2147483648
      %v1827 = vxor.u32 %v1819, 2147483648
      %v1828 = vxor.u32 %v1820, 2147483648
      %v1829 = vxor.u32 %v1821, 2147483648
      %v1830 = vxor.u32 %v1822, 2147483648
      %v1831 = vxor.u32 %v1823, 2147483648
      %v1832 = vxor.u32 %v1824, 2147483648
      %v1833 = vmul.f32 %v1825, 1.442695
      %v1834 = vpow.pop %v1833
      %v1835 = vmul.f32 %v1826, 1.442695
      %v1836 = vpow.pop %v1835
      %v1837 = vmul.f32 %v1827, 1.442695
      %v1838 = vpow.pop %v1837
      %v1839 = vmul.f32 %v1828, 1.442695
      %v1840 = vpow.pop %v1839
      %v1841 = vmul.f32 %v1829, 1.442695
      %v1842 = vpow.pop %v1841
      %v1843 = vmul.f32 %v1830, 1.442695
      %v1844 = vpow.pop %v1843
      %v1845 = vmul.f32 %v1831, 1.442695
      %v1846 = vpow.pop %v1845
      %v1847 = vmul.f32 %v1832, 1.442695
      %v1848 = vpow.pop %v1847
      %v1849 = vadd.f32 %v1834, 1.0
      %v1850 = vadd.f32 %v1836, 1.0
      %v1851 = vadd.f32 %v1838, 1.0
      %v1852 = vadd.f32 %v1840, 1.0
      %v1853 = vadd.f32 %v1842, 1.0
      %v1854 = vadd.f32 %v1844, 1.0
      %v1855 = vadd.f32 %v1846, 1.0
      %v1856 = vadd.f32 %v1848, 1.0
      %v1857 = vrcp.pop %v1849
      %v1858 = vmul.f32 1.0, %v1857
      %v1859 = vrcp.pop %v1850
      %v1860 = vmul.f32 1.0, %v1859
      %v1861 = vrcp.pop %v1851
      %v1862 = vmul.f32 1.0, %v1861
      %v1863 = vrcp.pop %v1852
      %v1864 = vmul.f32 1.0, %v1863
      %v1865 = vrcp.pop %v1853
      %v1866 = vmul.f32 1.0, %v1865
      %v1867 = vrcp.pop %v1854
      %v1868 = vmul.f32 1.0, %v1867
      %v1869 = vrcp.pop %v1855
      %v1870 = vmul.f32 1.0, %v1869
      %v1871 = vrcp.pop %v1856
      %v1872 = vmul.f32 1.0, %v1871
      %v1873 = vmul.f32 %v1858, %v1181
      %v1874 = vmul.f32 %v1860, %v1182
      %v1875 = vmul.f32 %v1862, %v1183
      %v1876 = vmul.f32 %v1864, %v1184
      %v1877 = vmul.f32 %v1866, %v1185
      %v1878 = vmul.f32 %v1868, %v1186
      %v1879 = vmul.f32 %v1870, %v1187
      %v1880 = vmul.f32 %v1872, %v1188
      %v1881 = vmul.f32 %v1873, %v712
      %v1882 = vmul.f32 %v1874, %v714
      %v1883 = vmul.f32 %v1875, %v716
      %v1884 = vmul.f32 %v1876, %v718
      %v1885 = vmul.f32 %v1877, %v720
      %v1886 = vmul.f32 %v1878, %v722
      %v1887 = vmul.f32 %v1879, %v724
      %v1888 = vmul.f32 %v1880, %v726
      %v1889 = vpack.c.bf16 %v1881, %v1881
      %v1890 = vpack.c.bf16 %v1882, %v1882
      %v1891 = vpack.c.bf16 %v1883, %v1883
      %v1892 = vpack.c.bf16 %v1884, %v1884
      %v1893 = vpack.c.bf16 %v1885, %v1885
      %v1894 = vpack.c.bf16 %v1886, %v1886
      %v1895 = vpack.c.bf16 %v1887, %v1887
      %v1896 = vpack.c.bf16 %v1888, %v1888
      %vm1897 = vcmask 257024
      %1898 = vst.msk [vmem:[%s352] sm:$0xf] %vm1897, %v1889
      %1899 = vst.msk [vmem:[%s352 + $0x4] sm:$0xf] %vm1897, %v1890
      %1900 = vst.msk [vmem:[%s352 + $0x8] sm:$0xf] %vm1897, %v1891
      %1901 = vst.msk [vmem:[%s352 + $0xc] sm:$0xf] %vm1897, %v1892
      %1902 = vst.msk [vmem:[%s352 + $0x10] sm:$0xf] %vm1897, %v1893
      %1903 = vst.msk [vmem:[%s352 + $0x14] sm:$0xf] %vm1897, %v1894
      %1904 = vst.msk [vmem:[%s352 + $0x18] sm:$0xf] %vm1897, %v1895
      %1905 = vst.msk [vmem:[%s352 + $0x1c] sm:$0xf] %vm1897, %v1896
      %p1906 = scmp.lt.s32.totalorder %s20, 1
      %s1907 = scalar_select %p1906, %s20, 1
      %s1908 = smul.addr %s1907, 8
      %s1909 = smul.addr %s1908, 4
      %s1910 = scalar_lea.vmem %s9, %s1909
      // Predicated region
      $region57: #{cfm_forward.15} parent=55 // pred_check
        %p1911 = pneg %p237
      $region58: #{cfm_forward.15} parent=55 // pred_check_branch
        %1913 = sbr.rel (%p1911) target = $region60
      $region59: #{cfm_forward.15} parent=55 // pred_region
        _
      $region60: #{cfm_forward.15} parent=55 // pred_fallthru
        _
    $region56: #{cfm_forward.15} parent=5 // pred_fallthru
      _
    %p1914 = scmp.le.s32.totalorder 2, %s15
    // Predicated region
    $region61: #{cfm_forward.15} parent=5 // pred_check
      %p1915 = pneg %p1914
    $region62: #{cfm_forward.15} parent=5 // pred_check_branch
      %1917 = sbr.rel (%p1915) target = $region64
    $region63: #{cfm_forward.15} parent=5 // pred_region
      %s1918 = ssub.s32 %s15, 2
      // Predicated region
      $region65: #{cfm_forward.15} parent=63 // pred_check
        %p1919 = pneg %p243
      $region66: #{cfm_forward.15} parent=63 // pred_check_branch
        %1921 = sbr.rel (%p1919) target = $region68
      $region67: #{cfm_forward.15} parent=63 // pred_region
        %p1922 = scmp.lt.s32.totalorder %s21, 1
        %s1923 = scalar_select %p1922, %s21, 1
        %s1924 = smul.addr %s1923, 8
        %s1925 = smul.addr %s1924, 4
        %s1926 = scalar_lea.vmem %s9, %s1925
      $region68: #{cfm_forward.15} parent=63 // pred_fallthru
        _
    $region64: #{cfm_forward.15} parent=5 // pred_fallthru
      _
  $region6: #{cfm_forward.15} parent=0 // loop_footer
    %s19 = sadd.s32 1, %s15
  $region7: #{cfm_forward.15} parent=0 // loop_footer_branch
    %14 = sbr.rel target = $region3
  $region8: #{cfm_forward.15} parent=0 // loop_exit
    _

// kernel: cfm_forward.19
$region0: #{cfm_forward.19}
  #allocation0 [shape = 'u32[]', space=smem, size = 0x4, offset = 0x4, fixed_abs, tag = 'smem constant byte address 0x4 - core index']
  #allocation1 [shape = 'u32[144,128]{1,0:T(1,128)}', space=vmem, size = 0x12000, scoped, tag = 'internal scratch']
  #allocation2 [shape = 'f32[64,1]{1,0:T(8,128)}', space=vmem, size = 0x8000, scoped, tag = 'scratch operand']
  #allocation3 [shape = 'f32[64,1]{1,0:T(8,128)}', space=vmem, size = 0x8000, scoped, tag = 'scratch operand']
  #allocation4 [shape = 'f32[64,16]{1,0:T(8,128)}', space=vmem, size = 0x8000, scoped, tag = 'scratch operand']
  %s0 = inlined_call_operand.vmem [shape: bf16[8,64,16], index: 0, kind: input, shape index: {}]
  %s1 = inlined_call_operand.vmem [shape: bf16[8,64,16], index: 1, kind: input, shape index: {}]
  %s2 = inlined_call_operand.vmem [shape: bf16[8,64,16], index: 2, kind: input, shape index: {}]
  %s3 = inlined_call_operand.vmem [shape: bf16[8,64,16], index: 3, kind: output, shape index: {}]
  %s4 = sld [smem:[#allocation0]]
  $region53: #{cfm_forward.19} parent=0
    _
  %s6 = ssub.s32 1, %s4
  %s7 = scalar_select 0, %s6, %s4
  loop: start=0, step=1, limit=10
  $region2: #{cfm_forward.19} parent=0 // loop_pre_header
    _
  $region3: #{cfm_forward.19} parent=0 // loop_header
    %s9 = sphi 0, %s13
    %p10 = scmp.ge.s32.totalorder %s9, 10
    %s16 = sphi 0, %s35
    %s17 = sphi 0, %s31
    %s18 = sphi 0, %s27
    %s19 = sphi 0, %s16
    %s20 = sphi 0, %s17
    %s21 = sphi 0, %s18
    %s22 = sphi 0, %s19
    %s23 = sphi 0, %s20
    %s24 = sphi 0, %s21
    %s40 = sphi 0, %s42
    %s43 = sphi 0, %s40
    %s44 = sphi 0, %s43
    %s60 = sphi 0, %s44
    %s68 = sphi 0, %s70
    %s71 = sphi 0, %s68
    %s72 = sphi 0, %s71
    %s88 = sphi 0, %s72
    %s96 = sphi 0, %s98
    %s99 = sphi 0, %s96
    %s100 = sphi 0, %s99
    %s116 = sphi 0, %s100
    %s124 = sphi 0, %s126
    %s127 = sphi 0, %s124
    %s128 = sphi 0, %s127
    %s144 = sphi 0, %s128
  $region4: #{cfm_forward.19} parent=0 // loop_header_branch
    %12 = sbr.rel (%p10) target = $region8
  $region5: #{cfm_forward.19} parent=0 // loop_body
    %s14 = ssub.s32 %s9, 1
    %s15 = ssub.s32 %s9, 2
    %s25 = sadd.s32 1, %s18
    %p26 = scmp.ge.s32.totalorder %s25, 1
    %s27 = scalar_select %p26, 0, %s25
    %s28 = sadd.s32 1, %s17
    %s29 = scalar_select %p26, %s28, %s17
    %p30 = scmp.ge.s32.totalorder %s29, 1
    %s31 = scalar_select %p30, 0, %s29
    %s32 = sadd.s32 1, %s16
    %s33 = scalar_select %p30, %s32, %s16
    %p34 = scmp.ge.s32.totalorder %s33, 8
    %s35 = scalar_select %p34, 0, %s33
    %s36 = ssub.s32 %s16, %s35
    %s37 = ssub.s32 %s17, %s31
    %s38 = sor.u32 %s36, %s37
    %p39 = scmp.eq.s32.totalorder %s38, 0
    %s41 = sadd.s32 %s40, 1
    %s42 = scalar_select %p39, %s40, %s41
    %p45 = pneg %p39
    %p46 = scmp.eq.s32.totalorder %s9, 7
    %p47 = por %p45, %p46
    %p48 = scmp.ne.s32.totalorder %s40, %s43
    %p49 = scmp.eq.s32.totalorder %s9, 0
    %p50 = por %p48, %p49
    %p51 = scmp.ne.s32.totalorder %s40, %s43
    %p52 = scmp.eq.s32.totalorder %s14, 7
    %p53 = por %p51, %p52
    %p54 = scmp.ne.s32.totalorder %s43, %s44
    %p55 = scmp.eq.s32.totalorder %s14, 0
    %p56 = por %p54, %p55
    %p57 = scmp.ne.s32.totalorder %s43, %s44
    %p58 = scmp.eq.s32.totalorder %s15, 7
    %p59 = por %p57, %p58
    %p61 = scmp.ne.s32.totalorder %s44, %s60
    %p62 = scmp.eq.s32.totalorder %s15, 0
    %p63 = por %p61, %p62
    %s64 = ssub.s32 %s16, %s35
    %s65 = ssub.s32 %s18, %s27
    %s66 = sor.u32 %s64, %s65
    %p67 = scmp.eq.s32.totalorder %s66, 0
    %s69 = sadd.s32 %s68, 1
    %s70 = scalar_select %p67, %s68, %s69
    %p73 = pneg %p67
    %p74 = scmp.eq.s32.totalorder %s9, 7
    %p75 = por %p73, %p74
    %p76 = scmp.ne.s32.totalorder %s68, %s71
    %p77 = scmp.eq.s32.totalorder %s9, 0
    %p78 = por %p76, %p77
    %p79 = scmp.ne.s32.totalorder %s68, %s71
    %p80 = scmp.eq.s32.totalorder %s14, 7
    %p81 = por %p79, %p80
    %p82 = scmp.ne.s32.totalorder %s71, %s72
    %p83 = scmp.eq.s32.totalorder %s14, 0
    %p84 = por %p82, %p83
    %p85 = scmp.ne.s32.totalorder %s71, %s72
    %p86 = scmp.eq.s32.totalorder %s15, 7
    %p87 = por %p85, %p86
    %p89 = scmp.ne.s32.totalorder %s72, %s88
    %p90 = scmp.eq.s32.totalorder %s15, 0
    %p91 = por %p89, %p90
    %s92 = ssub.s32 %s16, %s35
    %s93 = ssub.s32 %s18, %s27
    %s94 = sor.u32 %s92, %s93
    %p95 = scmp.eq.s32.totalorder %s94, 0
    %s97 = sadd.s32 %s96, 1
    %s98 = scalar_select %p95, %s96, %s97
    %p101 = pneg %p95
    %p102 = scmp.eq.s32.totalorder %s9, 7
    %p103 = por %p101, %p102
    %p104 = scmp.ne.s32.totalorder %s96, %s99
    %p105 = scmp.eq.s32.totalorder %s9, 0
    %p106 = por %p104, %p105
    %p107 = scmp.ne.s32.totalorder %s96, %s99
    %p108 = scmp.eq.s32.totalorder %s14, 7
    %p109 = por %p107, %p108
    %p110 = scmp.ne.s32.totalorder %s99, %s100
    %p111 = scmp.eq.s32.totalorder %s14, 0
    %p112 = por %p110, %p111
    %p113 = scmp.ne.s32.totalorder %s99, %s100
    %p114 = scmp.eq.s32.totalorder %s15, 7
    %p115 = por %p113, %p114
    %p117 = scmp.ne.s32.totalorder %s100, %s116
    %p118 = scmp.eq.s32.totalorder %s15, 0
    %p119 = por %p117, %p118
    %s120 = ssub.s32 %s16, %s35
    %s121 = ssub.s32 %s17, %s31
    %s122 = sor.u32 %s120, %s121
    %p123 = scmp.eq.s32.totalorder %s122, 0
    %s125 = sadd.s32 %s124, 1
    %s126 = scalar_select %p123, %s124, %s125
    %p129 = pneg %p123
    %p130 = scmp.eq.s32.totalorder %s9, 7
    %p131 = por %p129, %p130
    %p132 = scmp.ne.s32.totalorder %s124, %s127
    %p133 = scmp.eq.s32.totalorder %s9, 0
    %p134 = por %p132, %p133
    %p135 = scmp.ne.s32.totalorder %s124, %s127
    %p136 = scmp.eq.s32.totalorder %s14, 7
    %p137 = por %p135, %p136
    %p138 = scmp.ne.s32.totalorder %s127, %s128
    %p139 = scmp.eq.s32.totalorder %s14, 0
    %p140 = por %p138, %p139
    %p141 = scmp.ne.s32.totalorder %s127, %s128
    %p142 = scmp.eq.s32.totalorder %s15, 7
    %p143 = por %p141, %p142
    %p145 = scmp.ne.s32.totalorder %s128, %s144
    %p146 = scmp.eq.s32.totalorder %s15, 0
    %p147 = por %p145, %p146
    %p148 = scmp.le.s32.totalorder 1, %s9
    %p149 = scmp.lt.s32.totalorder %s9, 9
    %p150 = pnand %p148, %p149
    %p151 = pneg %p150
    // Predicated region
    $region9: #{cfm_forward.19} parent=5 // pred_check
      _
    $region10: #{cfm_forward.19} parent=5 // pred_check_branch
      %153 = sbr.rel (%p150) target = $region12
    $region11: #{cfm_forward.19} parent=5 // pred_region
      %s154 = ssub.s32 %s9, 1
    $region12: #{cfm_forward.19} parent=5 // pred_fallthru
      _
    %p155 = scmp.lt.s32.totalorder %s9, 8
    // Predicated region
    $region13: #{cfm_forward.19} parent=5 // pred_check
      %p156 = pneg %p155
    $region14: #{cfm_forward.19} parent=5 // pred_check_branch
      %158 = sbr.rel (%p156) target = $region16
    $region15: #{cfm_forward.19} parent=5 // pred_region
      // Predicated region
      $region17: #{cfm_forward.19} parent=15 // pred_check
        %p159 = pneg %p50
      $region18: #{cfm_forward.19} parent=15 // pred_check_branch
        %161 = sbr.rel (%p159) target = $region20
      $region19: #{cfm_forward.19} parent=15 // pred_region
        %s162 = smul.u32 8, %s17
        %p163 = scmp.lt.s32.totalorder %s16, 7
        %s164 = scalar_select %p163, %s16, 7
        %p165 = scmp.lt.s32.totalorder %s162, 7
        %s166 = scalar_select %p165, %s162, 7
        %s167 = smul.addr %s164, 8
        %s168 = sadd.s32 %s166, %s167
        %s169 = smul.addr %s168, 4
        %s170 = scalar_lea.vmem %s0, %s169
        %s171 = smul.u32 8, %s17
      $region20: #{cfm_forward.19} parent=15 // pred_fallthru
        _
      // Predicated region
      $region21: #{cfm_forward.19} parent=15 // pred_check
        %p172 = pneg %p78
      $region22: #{cfm_forward.19} parent=15 // pred_check_branch
        %174 = sbr.rel (%p172) target = $region24
      $region23: #{cfm_forward.19} parent=15 // pred_region
        %s175 = smul.u32 8, %s18
        %p176 = scmp.lt.s32.totalorder %s16, 7
        %s177 = scalar_select %p176, %s16, 7
        %p178 = scmp.lt.s32.totalorder %s175, 7
        %s179 = scalar_select %p178, %s175, 7
        %s180 = smul.addr %s177, 8
        %s181 = sadd.s32 %s179, %s180
        %s182 = smul.addr %s181, 4
        %s183 = scalar_lea.vmem %s1, %s182
        %s184 = smul.u32 8, %s18
      $region24: #{cfm_forward.19} parent=15 // pred_fallthru
        _
      // Predicated region
      $region25: #{cfm_forward.19} parent=15 // pred_check
        %p185 = pneg %p106
      $region26: #{cfm_forward.19} parent=15 // pred_check_branch
        %187 = sbr.rel (%p185) target = $region28
      $region27: #{cfm_forward.19} parent=15 // pred_region
        %s188 = smul.u32 8, %s18
        %p189 = scmp.lt.s32.totalorder %s16, 7
        %s190 = scalar_select %p189, %s16, 7
        %p191 = scmp.lt.s32.totalorder %s188, 7
        %s192 = scalar_select %p191, %s188, 7
        %s193 = smul.addr %s190, 8
        %s194 = sadd.s32 %s192, %s193
        %s195 = smul.addr %s194, 4
        %s196 = scalar_lea.vmem %s2, %s195
        %s197 = smul.u32 8, %s18
      $region28: #{cfm_forward.19} parent=15 // pred_fallthru
        _
    $region16: #{cfm_forward.19} parent=5 // pred_fallthru
      _
    %p198 = scmp.le.s32.totalorder 1, %s9
    %p199 = scmp.lt.s32.totalorder %s9, 9
    %p200 = pnand %p198, %p199
    %p201 = pneg %p200
    // Predicated region
    $region29: #{cfm_forward.19} parent=5 // pred_check
      _
    $region30: #{cfm_forward.19} parent=5 // pred_check_branch
      %203 = sbr.rel (%p200) target = $region32
    $region31: #{cfm_forward.19} parent=5 // pred_region
      %s204 = ssub.s32 %s9, 1
      %s205 = smul.u32 8, %s20
      %p206 = scmp.lt.s32.totalorder %s19, 7
      %s207 = scalar_select %p206, %s19, 7
      %p208 = scmp.lt.s32.totalorder %s205, 7
      %s209 = scalar_select %p208, %s205, 7
      %s210 = smul.addr %s207, 8
      %s211 = sadd.s32 %s209, %s210
      %s212 = smul.addr %s211, 4
      %s213 = scalar_lea.vmem %s0, %s212
      %p214 = pneg %p56
      %p215 = pneg %p53
      %s216 = smul.u32 8, %s21
      %p217 = scmp.lt.s32.totalorder %s19, 7
      %s218 = scalar_select %p217, %s19, 7
      %p219 = scmp.lt.s32.totalorder %s216, 7
      %s220 = scalar_select %p219, %s216, 7
      %s221 = smul.addr %s218, 8
      %s222 = sadd.s32 %s220, %s221
      %s223 = smul.addr %s222, 4
      %s224 = scalar_lea.vmem %s1, %s223
      %p225 = pneg %p84
      %p226 = pneg %p81
      %s227 = smul.u32 8, %s21
      %p228 = scmp.lt.s32.totalorder %s19, 7
      %s229 = scalar_select %p228, %s19, 7
      %p230 = scmp.lt.s32.totalorder %s227, 7
      %s231 = scalar_select %p230, %s227, 7
      %s232 = smul.addr %s229, 8
      %s233 = sadd.s32 %s231, %s232
      %s234 = smul.addr %s233, 4
      %s235 = scalar_lea.vmem %s2, %s234
      %p236 = pneg %p112
      %p237 = pneg %p109
      %p238 = pneg %p140
      %p239 = pneg %p137
      %s240 = smul.u32 8, %s20
      %p241 = scmp.lt.s32.totalorder %s19, 7
      %s242 = scalar_select %p241, %s19, 7
      %p243 = scmp.lt.s32.totalorder %s240, 7
      %s244 = scalar_select %p243, %s240, 7
      %s245 = smul.addr %s242, 8
      %s246 = sadd.s32 %s244, %s245
      %s247 = smul.addr %s246, 4
      %s248 = scalar_lea.vmem %s3, %s247
      %s249 = smul.u32 8, %s20
      %p250 = scmp.lt.s32.totalorder %s19, 7
      %s251 = scalar_select %p250, %s19, 7
      %p252 = scmp.lt.s32.totalorder %s249, 7
      %s253 = scalar_select %p252, %s249, 7
      %s254 = smul.addr %s251, 8
      %s255 = sadd.s32 %s253, %s254
      %s256 = smul.addr %s255, 4
      %s257 = scalar_lea.vmem %s0, %s256
      %s258 = smul.u32 8, %s20
      %s259 = smul.u32 8, %s21
      %p260 = scmp.lt.s32.totalorder %s19, 7
      %s261 = scalar_select %p260, %s19, 7
      %p262 = scmp.lt.s32.totalorder %s259, 7
      %s263 = scalar_select %p262, %s259, 7
      %s264 = smul.addr %s261, 8
      %s265 = sadd.s32 %s263, %s264
      %s266 = smul.addr %s265, 4
      %s267 = scalar_lea.vmem %s1, %s266
      %s268 = smul.u32 8, %s21
      %s269 = smul.u32 8, %s21
      %p270 = scmp.lt.s32.totalorder %s19, 7
      %s271 = scalar_select %p270, %s19, 7
      %p272 = scmp.lt.s32.totalorder %s269, 7
      %s273 = scalar_select %p272, %s269, 7
      %s274 = smul.addr %s271, 8
      %s275 = sadd.s32 %s273, %s274
      %s276 = smul.addr %s275, 4
      %s277 = scalar_lea.vmem %s2, %s276
      %s278 = smul.u32 8, %s21
      %s279 = smul.u32 8, %s20
      %p280 = scmp.lt.s32.totalorder %s19, 7
      %s281 = scalar_select %p280, %s19, 7
      %p282 = scmp.lt.s32.totalorder %s279, 7
      %s283 = scalar_select %p282, %s279, 7
      %s284 = smul.addr %s281, 8
      %s285 = sadd.s32 %s283, %s284
      %s286 = smul.addr %s285, 4
      %s287 = scalar_lea.vmem %s3, %s286
      %s288 = smul.u32 8, %s20
      %p290 = scmp.eq.s32.totalorder %s21, 0
      // Predicated region
      $region33: #{cfm_forward.19} parent=31 // pred_check
        %p291 = pneg %p290
      $region34: #{cfm_forward.19} parent=31 // pred_check_branch
        %293 = sbr.rel (%p291) target = $region36
      $region35: #{cfm_forward.19} parent=31 // pred_region
        %vm294 = vcmask 7168
        %295 = vst.msk [vmem:[#allocation2] sm:$0xff] %vm294, -inf
        %296 = vst.msk [vmem:[#allocation2 + $0x8] sm:$0xff] %vm294, -inf
        %297 = vst.msk [vmem:[#allocation2 + $0x10] sm:$0xff] %vm294, -inf
        %298 = vst.msk [vmem:[#allocation2 + $0x18] sm:$0xff] %vm294, -inf
        %299 = vst.msk [vmem:[#allocation2 + $0x20] sm:$0xff] %vm294, -inf
        %300 = vst.msk [vmem:[#allocation2 + $0x28] sm:$0xff] %vm294, -inf
        %301 = vst.msk [vmem:[#allocation2 + $0x30] sm:$0xff] %vm294, -inf
        %302 = vst.msk [vmem:[#allocation2 + $0x38] sm:$0xff] %vm294, -inf
        %303 = vst.msk [vmem:[#allocation3] sm:$0xff] %vm294, 0.0
        %304 = vst.msk [vmem:[#allocation3 + $0x8] sm:$0xff] %vm294, 0.0
        %305 = vst.msk [vmem:[#allocation3 + $0x10] sm:$0xff] %vm294, 0.0
        %306 = vst.msk [vmem:[#allocation3 + $0x18] sm:$0xff] %vm294, 0.0
        %307 = vst.msk [vmem:[#allocation3 + $0x20] sm:$0xff] %vm294, 0.0
        %308 = vst.msk [vmem:[#allocation3 + $0x28] sm:$0xff] %vm294, 0.0
        %309 = vst.msk [vmem:[#allocation3 + $0x30] sm:$0xff] %vm294, 0.0
        %310 = vst.msk [vmem:[#allocation3 + $0x38] sm:$0xff] %vm294, 0.0
        %vm311 = vcmask 130048
        %312 = vst.msk [vmem:[#allocation4] sm:$0xff] %vm311, 0.0
        %313 = vst.msk [vmem:[#allocation4 + $0x8] sm:$0xff] %vm311, 0.0
        %314 = vst.msk [vmem:[#allocation4 + $0x10] sm:$0xff] %vm311, 0.0
        %315 = vst.msk [vmem:[#allocation4 + $0x18] sm:$0xff] %vm311, 0.0
        %316 = vst.msk [vmem:[#allocation4 + $0x20] sm:$0xff] %vm311, 0.0
        %317 = vst.msk [vmem:[#allocation4 + $0x28] sm:$0xff] %vm311, 0.0
        %318 = vst.msk [vmem:[#allocation4 + $0x30] sm:$0xff] %vm311, 0.0
        %319 = vst.msk [vmem:[#allocation4 + $0x38] sm:$0xff] %vm311, 0.0
      $region36: #{cfm_forward.19} parent=31 // pred_fallthru
        _
      %v320 = vld [vmem:[%s257] sm:$0xf]
      %v321 = vld [vmem:[%s257 + $0x4] sm:$0xf]
      %v322 = vld [vmem:[%s257 + $0x8] sm:$0xf]
      %v323 = vld [vmem:[%s257 + $0xc] sm:$0xf]
      %v324 = vld [vmem:[%s257 + $0x10] sm:$0xf]
      %v325 = vld [vmem:[%s257 + $0x14] sm:$0xf]
      %v326 = vld [vmem:[%s257 + $0x18] sm:$0xf]
      %v327 = vld [vmem:[%s257 + $0x1c] sm:$0xf]
      %v328 = vld [vmem:[%s267] sm:$0xf]
      %v329 = vld [vmem:[%s267 + $0x4] sm:$0xf]
      %v330 = vld [vmem:[%s267 + $0x8] sm:$0xf]
      %v331 = vld [vmem:[%s267 + $0xc] sm:$0xf]
      %v332 = vld [vmem:[%s267 + $0x10] sm:$0xf]
      %v333 = vld [vmem:[%s267 + $0x14] sm:$0xf]
      %v334 = vld [vmem:[%s267 + $0x18] sm:$0xf]
      %v335 = vld [vmem:[%s267 + $0x1c] sm:$0xf]
      %v336 = vld [vmem:[%s277] sm:$0xf]
      %v337 = vld [vmem:[%s277 + $0x4] sm:$0xf]
      %v338 = vld [vmem:[%s277 + $0x8] sm:$0xf]
      %v339 = vld [vmem:[%s277 + $0xc] sm:$0xf]
      %v340 = vld [vmem:[%s277 + $0x10] sm:$0xf]
      %v341 = vld [vmem:[%s277 + $0x14] sm:$0xf]
      %v342 = vld [vmem:[%s277 + $0x18] sm:$0xf]
      %v343 = vld [vmem:[%s277 + $0x1c] sm:$0xf]
      %v352 = vunpack.c.l.b16 %v320
      %v353 = vunpack.c.l.b16 %v321
      %v354 = vunpack.c.l.b16 %v322
      %v355 = vunpack.c.l.b16 %v323
      %v356 = vunpack.c.l.b16 %v324
      %v357 = vunpack.c.l.b16 %v325
      %v358 = vunpack.c.l.b16 %v326
      %v359 = vunpack.c.l.b16 %v327
      %v360 = vpack.c.b16 %v353, %v352
      %v361 = vpack.c.b16 %v355, %v354
      %v362 = vpack.c.b16 %v357, %v356
      %v363 = vpack.c.b16 %v359, %v358
      %v372 = vunpack.c.l.b16 %v328
      %v373 = vunpack.c.l.b16 %v329
      %v374 = vunpack.c.l.b16 %v330
      %v375 = vunpack.c.l.b16 %v331
      %v376 = vunpack.c.l.b16 %v332
      %v377 = vunpack.c.l.b16 %v333
      %v378 = vunpack.c.l.b16 %v334
      %v379 = vunpack.c.l.b16 %v335
      %v380 = vpack.c.b16 %v373, %v372
      %v381 = vpack.c.b16 %v375, %v374
      %v382 = vpack.c.b16 %v377, %v376
      %v383 = vpack.c.b16 %v379, %v378
      %vm384 = vcmask 130048
      %v386 = vsel %vm384, %v360, 0
      %v389 = vsel %vm384, %v361, 0
      %v392 = vsel %vm384, %v362, 0
      %v395 = vsel %vm384, %v363, 0
      %v398 = vsel %vm384, %v380, 0
      %v401 = vsel %vm384, %v381, 0
      %v404 = vsel %vm384, %v382, 0
      %v407 = vsel %vm384, %v383, 0
      %409 = vmatprep.subr.bf16.mxu0 0
      %410 = vmatpush1.bf16.xpose.msra.mxu0 0
      %411 = vmatprep.subr.bf16.mxu0 0
      %412 = vmatpush1.bf16.xpose.msra.mxu0 0
      %413 = vmatprep.subr.bf16.mxu0 0
      %414 = vmatpush1.bf16.xpose.msra.mxu0 0
      %415 = vmatprep.subr.bf16.mxu0 0
      %416 = vmatpush1.bf16.xpose.msra.mxu0 0
      %417 = vmatprep.subr.bf16.mxu0 0
      %418 = vmatpush1.bf16.xpose.msra.mxu0 %v407
      %419 = vmatprep.subr.bf16.mxu0 0
      %420 = vmatpush1.bf16.xpose.msra.mxu0 %v404
      %421 = vmatprep.subr.bf16.mxu0 0
      %422 = vmatpush1.bf16.xpose.msra.mxu0 %v401
      %423 = vmatprep.subr.bf16.mxu0 0
      %424 = vmatpush1.bf16.xpose.msra.mxu0 %v398
      %425 = vmatprep.subr.bf16.mxu0 0
      %426 = vmatpush2.bf16.xpose.msra.mxu0 0
      %427 = vmatprep.subr.bf16.mxu0 0
      %428 = vmatpush2.bf16.xpose.msra.mxu0 0
      %429 = vmatprep.subr.bf16.mxu0 0
      %430 = vmatpush2.bf16.xpose.msra.mxu0 0
      %431 = vmatprep.subr.bf16.mxu0 0
      %432 = vmatpush2.bf16.xpose.msra.mxu0 0
      %433 = vmatprep.subr.bf16.mxu0 0
      %434 = vmatpush2.bf16.xpose.msra.mxu0 0
      %435 = vmatprep.subr.bf16.mxu0 0
      %436 = vmatpush2.bf16.xpose.msra.mxu0 0
      %437 = vmatprep.subr.bf16.mxu0 0
      %438 = vmatpush2.bf16.xpose.msra.mxu0 0
      %439 = vmatprep.subr.bf16.mxu0 0
      %440 = vmatpush2.bf16.xpose.msra.mxu0 0
      %441 = vmatprep.mubr.bf16.mxu0 0
      %442 = vmatmul.mubr.bf16.gmra.mxu0 %v386
      %v443 = vpop.f32.mrf.mxu0
      %v444 = vadd.f32 0.0, %v443
      %v445 = vpop.f32.mrf.mxu0
      %v446 = vpop.f32.mrf.mxu0
      %v447 = vadd.f32 0.0, %v446
      %v448 = vpop.f32.mrf.mxu0
      %449 = vmatprep.mubr.bf16.mxu0 0
      %450 = vmatmul.mubr.bf16.gmra.mxu0 %v389
      %v451 = vpop.f32.mrf.mxu0
      %v452 = vadd.f32 0.0, %v451
      %v453 = vpop.f32.mrf.mxu0
      %v454 = vpop.f32.mrf.mxu0
      %v455 = vadd.f32 0.0, %v454
      %v456 = vpop.f32.mrf.mxu0
      %457 = vmatprep.mubr.bf16.mxu0 0
      %458 = vmatmul.mubr.bf16.gmra.mxu0 %v392
      %v459 = vpop.f32.mrf.mxu0
      %v460 = vadd.f32 0.0, %v459
      %v461 = vpop.f32.mrf.mxu0
      %v462 = vpop.f32.mrf.mxu0
      %v463 = vadd.f32 0.0, %v462
      %v464 = vpop.f32.mrf.mxu0
      %465 = vmatprep.mubr.bf16.mxu0 0
      %466 = vmatmul.mubr.bf16.gmra.mxu0 %v395
      %v467 = vpop.f32.mrf.mxu0
      %v468 = vadd.f32 0.0, %v467
      %v469 = vpop.f32.mrf.mxu0
      %v470 = vpop.f32.mrf.mxu0
      %v471 = vadd.f32 0.0, %v470
      %v472 = vpop.f32.mrf.mxu0
      %473 = vdwg.mxu0
      %v474 = vmul.f32 %v444, 0.25
      %v475 = vmul.f32 %v447, 0.25
      %v476 = vmul.f32 %v452, 0.25
      %v477 = vmul.f32 %v455, 0.25
      %v478 = vmul.f32 %v460, 0.25
      %v479 = vmul.f32 %v463, 0.25
      %v480 = vmul.f32 %v468, 0.25
      %v481 = vmul.f32 %v471, 0.25
      %v482 = vld [vmem:[#allocation2] sm:$0xff]
      %v483 = vld [vmem:[#allocation2 + $0x8] sm:$0xff]
      %v484 = vld [vmem:[#allocation2 + $0x10] sm:$0xff]
      %v485 = vld [vmem:[#allocation2 + $0x18] sm:$0xff]
      %v486 = vld [vmem:[#allocation2 + $0x20] sm:$0xff]
      %v487 = vld [vmem:[#allocation2 + $0x28] sm:$0xff]
      %v488 = vld [vmem:[#allocation2 + $0x30] sm:$0xff]
      %v489 = vld [vmem:[#allocation2 + $0x38] sm:$0xff]
      %vm490 = vcmask 523264
      %v491 = vsel %vm490, %v474, -inf
      %492 = vmax.xlane.f32.xlu0 %v491
      %v493 = vpop.xlane.xlu0 %492
      %v494 = vsel %vm490, %v475, -inf
      %495 = vmax.xlane.f32.xlu0 %v494
      %v496 = vpop.xlane.xlu0 %495
      %v497 = vsel %vm490, %v476, -inf
      %498 = vmax.xlane.f32.xlu0 %v497
      %v499 = vpop.xlane.xlu0 %498
      %v500 = vsel %vm490, %v477, -inf
      %501 = vmax.xlane.f32.xlu0 %v500
      %v502 = vpop.xlane.xlu0 %501
      %v503 = vsel %vm490, %v478, -inf
      %504 = vmax.xlane.f32.xlu0 %v503
      %v505 = vpop.xlane.xlu0 %504
      %v506 = vsel %vm490, %v479, -inf
      %507 = vmax.xlane.f32.xlu0 %v506
      %v508 = vpop.xlane.xlu0 %507
      %v509 = vsel %vm490, %v480, -inf
      %510 = vmax.xlane.f32.xlu0 %v509
      %v511 = vpop.xlane.xlu0 %510
      %v512 = vsel %vm490, %v481, -inf
      %513 = vmax.xlane.f32.xlu0 %v512
      %v514 = vpop.xlane.xlu0 %513
      %v515 = vmax.f32 %v482, %v493
      %v516 = vmax.f32 %v483, %v496
      %v517 = vmax.f32 %v484, %v499
      %v518 = vmax.f32 %v485, %v502
      %v519 = vmax.f32 %v486, %v505
      %v520 = vmax.f32 %v487, %v508
      %v521 = vmax.f32 %v488, %v511
      %v522 = vmax.f32 %v489, %v514
      %v523 = vsub.f32 %v482, %v515
      %v524 = vsub.f32 %v483, %v516
      %v525 = vsub.f32 %v484, %v517
      %v526 = vsub.f32 %v485, %v518
      %v527 = vsub.f32 %v486, %v519
      %v528 = vsub.f32 %v487, %v520
      %v529 = vsub.f32 %v488, %v521
      %v530 = vsub.f32 %v489, %v522
      %v531 = vmul.f32 %v523, 1.442695
      %v532 = vpow.pop %v531
      %v533 = vmul.f32 %v524, 1.442695
      %v534 = vpow.pop %v533
      %v535 = vmul.f32 %v525, 1.442695
      %v536 = vpow.pop %v535
      %v537 = vmul.f32 %v526, 1.442695
      %v538 = vpow.pop %v537
      %v539 = vmul.f32 %v527, 1.442695
      %v540 = vpow.pop %v539
      %v541 = vmul.f32 %v528, 1.442695
      %v542 = vpow.pop %v541
      %v543 = vmul.f32 %v529, 1.442695
      %v544 = vpow.pop %v543
      %v545 = vmul.f32 %v530, 1.442695
      %v546 = vpow.pop %v545
      %548 = vset.pattern.permute.xlu0 0
      %549 = vperm.xlu0 %548, %v515
      %v550 = vpop.permute.xlu0 %549
      %553 = vset.pattern.permute.xlu0 0
      %554 = vperm.xlu0 %553, %v516
      %v555 = vpop.permute.xlu0 %554
      %558 = vset.pattern.permute.xlu0 0
      %559 = vperm.xlu0 %558, %v517
      %v560 = vpop.permute.xlu0 %559
      %563 = vset.pattern.permute.xlu0 0
      %564 = vperm.xlu0 %563, %v518
      %v565 = vpop.permute.xlu0 %564
      %568 = vset.pattern.permute.xlu0 0
      %569 = vperm.xlu0 %568, %v519
      %v570 = vpop.permute.xlu0 %569
      %573 = vset.pattern.permute.xlu0 0
      %574 = vperm.xlu0 %573, %v520
      %v575 = vpop.permute.xlu0 %574
      %578 = vset.pattern.permute.xlu0 0
      %579 = vperm.xlu0 %578, %v521
      %v580 = vpop.permute.xlu0 %579
      %583 = vset.pattern.permute.xlu0 0
      %584 = vperm.xlu0 %583, %v522
      %v585 = vpop.permute.xlu0 %584
      %v587 = vsub.f32 %v474, %v550
      %v588 = vsub.f32 %v475, %v555
      %v589 = vsub.f32 %v476, %v560
      %v590 = vsub.f32 %v477, %v565
      %v591 = vsub.f32 %v478, %v570
      %v592 = vsub.f32 %v479, %v575
      %v593 = vsub.f32 %v480, %v580
      %v594 = vsub.f32 %v481, %v585
      %v595 = vmul.f32 %v587, 1.442695
      %v596 = vpow.pop %v595
      %v597 = vmul.f32 %v588, 1.442695
      %v598 = vpow.pop %v597
      %v599 = vmul.f32 %v589, 1.442695
      %v600 = vpow.pop %v599
      %v601 = vmul.f32 %v590, 1.442695
      %v602 = vpow.pop %v601
      %v603 = vmul.f32 %v591, 1.442695
      %v604 = vpow.pop %v603
      %v605 = vmul.f32 %v592, 1.442695
      %v606 = vpow.pop %v605
      %v607 = vmul.f32 %v593, 1.442695
      %v608 = vpow.pop %v607
      %v609 = vmul.f32 %v594, 1.442695
      %v610 = vpow.pop %v609
      %v611 = vld [vmem:[#allocation3] sm:$0xff]
      %v612 = vld [vmem:[#allocation3 + $0x8] sm:$0xff]
      %v613 = vld [vmem:[#allocation3 + $0x10] sm:$0xff]
      %v614 = vld [vmem:[#allocation3 + $0x18] sm:$0xff]
      %v615 = vld [vmem:[#allocation3 + $0x20] sm:$0xff]
      %v616 = vld [vmem:[#allocation3 + $0x28] sm:$0xff]
      %v617 = vld [vmem:[#allocation3 + $0x30] sm:$0xff]
      %v618 = vld [vmem:[#allocation3 + $0x38] sm:$0xff]
      %v619 = vmul.f32 %v532, %v611
      %v620 = vmul.f32 %v534, %v612
      %v621 = vmul.f32 %v536, %v613
      %v622 = vmul.f32 %v538, %v614
      %v623 = vmul.f32 %v540, %v615
      %v624 = vmul.f32 %v542, %v616
      %v625 = vmul.f32 %v544, %v617
      %v626 = vmul.f32 %v546, %v618
      %v627 = vsel %vm490, %v596, 0.0
      %628 = vadd.xlane.f32.xlu0 %v627
      %v629 = vpop.xlane.xlu0 %628
      %v630 = vsel %vm490, %v598, 0.0
      %631 = vadd.xlane.f32.xlu0 %v630
      %v632 = vpop.xlane.xlu0 %631
      %v633 = vsel %vm490, %v600, 0.0
      %634 = vadd.xlane.f32.xlu0 %v633
      %v635 = vpop.xlane.xlu0 %634
      %v636 = vsel %vm490, %v602, 0.0
      %637 = vadd.xlane.f32.xlu0 %v636
      %v638 = vpop.xlane.xlu0 %637
      %v639 = vsel %vm490, %v604, 0.0
      %640 = vadd.xlane.f32.xlu0 %v639
      %v641 = vpop.xlane.xlu0 %640
      %v642 = vsel %vm490, %v606, 0.0
      %643 = vadd.xlane.f32.xlu0 %v642
      %v644 = vpop.xlane.xlu0 %643
      %v645 = vsel %vm490, %v608, 0.0
      %646 = vadd.xlane.f32.xlu0 %v645
      %v647 = vpop.xlane.xlu0 %646
      %v648 = vsel %vm490, %v610, 0.0
      %649 = vadd.xlane.f32.xlu0 %v648
      %v650 = vpop.xlane.xlu0 %649
      %v651 = vadd.f32 %v619, %v629
      %v652 = vadd.f32 %v620, %v632
      %v653 = vadd.f32 %v621, %v635
      %v654 = vadd.f32 %v622, %v638
      %v655 = vadd.f32 %v623, %v641
      %v656 = vadd.f32 %v624, %v644
      %v657 = vadd.f32 %v625, %v647
      %v658 = vadd.f32 %v626, %v650
      %vm659 = vcmask 7168
      %660 = vst.msk [vmem:[#allocation3] sm:$0xff] %vm659, %v651
      %661 = vst.msk [vmem:[#allocation3 + $0x8] sm:$0xff] %vm659, %v652
      %662 = vst.msk [vmem:[#allocation3 + $0x10] sm:$0xff] %vm659, %v653
      %663 = vst.msk [vmem:[#allocation3 + $0x18] sm:$0xff] %vm659, %v654
      %664 = vst.msk [vmem:[#allocation3 + $0x20] sm:$0xff] %vm659, %v655
      %665 = vst.msk [vmem:[#allocation3 + $0x28] sm:$0xff] %vm659, %v656
      %666 = vst.msk [vmem:[#allocation3 + $0x30] sm:$0xff] %vm659, %v657
      %667 = vst.msk [vmem:[#allocation3 + $0x38] sm:$0xff] %vm659, %v658
      %v668 = vld [vmem:[#allocation4] sm:$0xff]
      %v669 = vld [vmem:[#allocation4 + $0x8] sm:$0xff]
      %v670 = vld [vmem:[#allocation4 + $0x10] sm:$0xff]
      %v671 = vld [vmem:[#allocation4 + $0x18] sm:$0xff]
      %v672 = vld [vmem:[#allocation4 + $0x20] sm:$0xff]
      %v673 = vld [vmem:[#allocation4 + $0x28] sm:$0xff]
      %v674 = vld [vmem:[#allocation4 + $0x30] sm:$0xff]
      %v675 = vld [vmem:[#allocation4 + $0x38] sm:$0xff]
      %677 = vset.pattern.permute.xlu0 0
      %678 = vperm.xlu0 %677, %v532
      %v679 = vpop.permute.xlu0 %678
      %682 = vset.pattern.permute.xlu0 0
      %683 = vperm.xlu0 %682, %v534
      %v684 = vpop.permute.xlu0 %683
      %687 = vset.pattern.permute.xlu0 0
      %688 = vperm.xlu0 %687, %v536
      %v689 = vpop.permute.xlu0 %688
      %692 = vset.pattern.permute.xlu0 0
      %693 = vperm.xlu0 %692, %v538
      %v694 = vpop.permute.xlu0 %693
      %697 = vset.pattern.permute.xlu0 0
      %698 = vperm.xlu0 %697, %v540
      %v699 = vpop.permute.xlu0 %698
      %702 = vset.pattern.permute.xlu0 0
      %703 = vperm.xlu0 %702, %v542
      %v704 = vpop.permute.xlu0 %703
      %707 = vset.pattern.permute.xlu0 0
      %708 = vperm.xlu0 %707, %v544
      %v709 = vpop.permute.xlu0 %708
      %712 = vset.pattern.permute.xlu0 0
      %713 = vperm.xlu0 %712, %v546
      %v714 = vpop.permute.xlu0 %713
      %v716 = vmul.f32 %v679, %v668
      %v717 = vmul.f32 %v684, %v669
      %v718 = vmul.f32 %v689, %v670
      %v719 = vmul.f32 %v694, %v671
      %v720 = vmul.f32 %v699, %v672
      %v721 = vmul.f32 %v704, %v673
      %v722 = vmul.f32 %v709, %v674
      %v723 = vmul.f32 %v714, %v675
      %v724 = vpack.c.bf16 %v598, %v596
      %v725 = vpack.c.bf16 %v602, %v600
      %v726 = vpack.c.bf16 %v606, %v604
      %v727 = vpack.c.bf16 %v610, %v608
      %v736 = vunpack.c.l.b16 %v336
      %v737 = vunpack.c.l.b16 %v337
      %v738 = vunpack.c.l.b16 %v338
      %v739 = vunpack.c.l.b16 %v339
      %v740 = vunpack.c.l.b16 %v340
      %v741 = vunpack.c.l.b16 %v341
      %v742 = vunpack.c.l.b16 %v342
      %v743 = vunpack.c.l.b16 %v343
      %v744 = vpack.c.b16 %v737, %v736
      %v745 = vpack.c.b16 %v739, %v738
      %v746 = vpack.c.b16 %v741, %v740
      %v747 = vpack.c.b16 %v743, %v742
      %v753 = vsel %vm490, %v724, 0
      %v756 = vsel %vm490, %v725, 0
      %v759 = vsel %vm490, %v726, 0
      %v762 = vsel %vm490, %v727, 0
      %764 = vmatprep.subr.bf16.mxu0 0
      %765 = vmatpush1.bf16.msra.mxu0 0
      %766 = vmatprep.subr.bf16.mxu0 0
      %767 = vmatpush1.bf16.msra.mxu0 0
      %768 = vmatprep.subr.bf16.mxu0 0
      %769 = vmatpush1.bf16.msra.mxu0 0
      %770 = vmatprep.subr.bf16.mxu0 0
      %771 = vmatpush1.bf16.msra.mxu0 0
      %772 = vmatprep.subr.bf16.mxu0 0
      %773 = vmatpush1.bf16.msra.mxu0 %v747
      %774 = vmatprep.subr.bf16.mxu0 0
      %775 = vmatpush1.bf16.msra.mxu0 %v746
      %776 = vmatprep.subr.bf16.mxu0 0
      %777 = vmatpush1.bf16.msra.mxu0 %v745
      %778 = vmatprep.subr.bf16.mxu0 0
      %779 = vmatpush1.bf16.msra.mxu0 %v744
      %780 = vmatprep.subr.bf16.mxu0 0
      %781 = vmatpush2.bf16.msra.mxu0 0
      %782 = vmatprep.subr.bf16.mxu0 0
      %783 = vmatpush2.bf16.msra.mxu0 0
      %784 = vmatprep.subr.bf16.mxu0 0
      %785 = vmatpush2.bf16.msra.mxu0 0
      %786 = vmatprep.subr.bf16.mxu0 0
      %787 = vmatpush2.bf16.msra.mxu0 0
      %788 = vmatprep.subr.bf16.mxu0 0
      %789 = vmatpush2.bf16.msra.mxu0 0
      %790 = vmatprep.subr.bf16.mxu0 0
      %791 = vmatpush2.bf16.msra.mxu0 0
      %792 = vmatprep.subr.bf16.mxu0 0
      %793 = vmatpush2.bf16.msra.mxu0 0
      %794 = vmatprep.subr.bf16.mxu0 0
      %795 = vmatpush2.bf16.msra.mxu0 0
      %796 = vmatprep.mubr.bf16.mxu0 0
      %797 = vmatmul.mubr.bf16.gmra.mxu0 %v753
      %v798 = vpop.f32.mrf.mxu0
      %v799 = vadd.f32 0.0, %v798
      %v800 = vpop.f32.mrf.mxu0
      %v801 = vpop.f32.mrf.mxu0
      %v802 = vadd.f32 0.0, %v801
      %v803 = vpop.f32.mrf.mxu0
      %804 = vmatprep.mubr.bf16.mxu0 0
      %805 = vmatmul.mubr.bf16.gmra.mxu0 %v756
      %v806 = vpop.f32.mrf.mxu0
      %v807 = vadd.f32 0.0, %v806
      %v808 = vpop.f32.mrf.mxu0
      %v809 = vpop.f32.mrf.mxu0
      %v810 = vadd.f32 0.0, %v809
      %v811 = vpop.f32.mrf.mxu0
      %812 = vmatprep.mubr.bf16.mxu0 0
      %813 = vmatmul.mubr.bf16.gmra.mxu0 %v759
      %v814 = vpop.f32.mrf.mxu0
      %v815 = vadd.f32 0.0, %v814
      %v816 = vpop.f32.mrf.mxu0
      %v817 = vpop.f32.mrf.mxu0
      %v818 = vadd.f32 0.0, %v817
      %v819 = vpop.f32.mrf.mxu0
      %820 = vmatprep.mubr.bf16.mxu0 0
      %821 = vmatmul.mubr.bf16.gmra.mxu0 %v762
      %v822 = vpop.f32.mrf.mxu0
      %v823 = vadd.f32 0.0, %v822
      %v824 = vpop.f32.mrf.mxu0
      %v825 = vpop.f32.mrf.mxu0
      %v826 = vadd.f32 0.0, %v825
      %v827 = vpop.f32.mrf.mxu0
      %828 = vdwg.mxu0
      %v829 = vadd.f32 %v716, %v799
      %v830 = vadd.f32 %v717, %v802
      %v831 = vadd.f32 %v718, %v807
      %v832 = vadd.f32 %v719, %v810
      %v833 = vadd.f32 %v720, %v815
      %v834 = vadd.f32 %v721, %v818
      %v835 = vadd.f32 %v722, %v823
      %v836 = vadd.f32 %v723, %v826
      %837 = vst.msk [vmem:[#allocation4] sm:$0xff] %vm384, %v829
      %838 = vst.msk [vmem:[#allocation4 + $0x8] sm:$0xff] %vm384, %v830
      %839 = vst.msk [vmem:[#allocation4 + $0x10] sm:$0xff] %vm384, %v831
      %840 = vst.msk [vmem:[#allocation4 + $0x18] sm:$0xff] %vm384, %v832
      %841 = vst.msk [vmem:[#allocation4 + $0x20] sm:$0xff] %vm384, %v833
      %842 = vst.msk [vmem:[#allocation4 + $0x28] sm:$0xff] %vm384, %v834
      %843 = vst.msk [vmem:[#allocation4 + $0x30] sm:$0xff] %vm384, %v835
      %844 = vst.msk [vmem:[#allocation4 + $0x38] sm:$0xff] %vm384, %v836
      %845 = vst.msk [vmem:[#allocation2] sm:$0xff] %vm659, %v515
      %846 = vst.msk [vmem:[#allocation2 + $0x8] sm:$0xff] %vm659, %v516
      %847 = vst.msk [vmem:[#allocation2 + $0x10] sm:$0xff] %vm659, %v517
      %848 = vst.msk [vmem:[#allocation2 + $0x18] sm:$0xff] %vm659, %v518
      %849 = vst.msk [vmem:[#allocation2 + $0x20] sm:$0xff] %vm659, %v519
      %850 = vst.msk [vmem:[#allocation2 + $0x28] sm:$0xff] %vm659, %v520
      %851 = vst.msk [vmem:[#allocation2 + $0x30] sm:$0xff] %vm659, %v521
      %852 = vst.msk [vmem:[#allocation2 + $0x38] sm:$0xff] %vm659, %v522
      // Predicated region
      $region37: #{cfm_forward.19} parent=31 // pred_check
        %p853 = pneg %p290
      $region38: #{cfm_forward.19} parent=31 // pred_check_branch
        %855 = sbr.rel (%p853) target = $region40
      $region39: #{cfm_forward.19} parent=31 // pred_region
        %v856 = vld [vmem:[#allocation4] sm:$0xff]
        %v857 = vld [vmem:[#allocation4 + $0x8] sm:$0xff]
        %v858 = vld [vmem:[#allocation4 + $0x10] sm:$0xff]
        %v859 = vld [vmem:[#allocation4 + $0x18] sm:$0xff]
        %v860 = vld [vmem:[#allocation4 + $0x20] sm:$0xff]
        %v861 = vld [vmem:[#allocation4 + $0x28] sm:$0xff]
        %v862 = vld [vmem:[#allocation4 + $0x30] sm:$0xff]
        %v863 = vld [vmem:[#allocation4 + $0x38] sm:$0xff]
        %v864 = vld [vmem:[#allocation3] sm:$0xff]
        %v865 = vld [vmem:[#allocation3 + $0x8] sm:$0xff]
        %v866 = vld [vmem:[#allocation3 + $0x10] sm:$0xff]
        %v867 = vld [vmem:[#allocation3 + $0x18] sm:$0xff]
        %v868 = vld [vmem:[#allocation3 + $0x20] sm:$0xff]
        %v869 = vld [vmem:[#allocation3 + $0x28] sm:$0xff]
        %v870 = vld [vmem:[#allocation3 + $0x30] sm:$0xff]
        %v871 = vld [vmem:[#allocation3 + $0x38] sm:$0xff]
        %v872 = vrcp.pop %v864
        %v873 = vrcp.pop %v865
        %v874 = vrcp.pop %v866
        %v875 = vrcp.pop %v867
        %v876 = vrcp.pop %v868
        %v877 = vrcp.pop %v869
        %v878 = vrcp.pop %v870
        %v879 = vrcp.pop %v871
        %881 = vset.pattern.permute.xlu0 0
        %882 = vperm.xlu0 %881, %v872
        %v883 = vpop.permute.xlu0 %882
        %886 = vset.pattern.permute.xlu0 0
        %887 = vperm.xlu0 %886, %v873
        %v888 = vpop.permute.xlu0 %887
        %891 = vset.pattern.permute.xlu0 0
        %892 = vperm.xlu0 %891, %v874
        %v893 = vpop.permute.xlu0 %892
        %896 = vset.pattern.permute.xlu0 0
        %897 = vperm.xlu0 %896, %v875
        %v898 = vpop.permute.xlu0 %897
        %901 = vset.pattern.permute.xlu0 0
        %902 = vperm.xlu0 %901, %v876
        %v903 = vpop.permute.xlu0 %902
        %906 = vset.pattern.permute.xlu0 0
        %907 = vperm.xlu0 %906, %v877
        %v908 = vpop.permute.xlu0 %907
        %911 = vset.pattern.permute.xlu0 0
        %912 = vperm.xlu0 %911, %v878
        %v913 = vpop.permute.xlu0 %912
        %916 = vset.pattern.permute.xlu0 0
        %917 = vperm.xlu0 %916, %v879
        %v918 = vpop.permute.xlu0 %917
        %v920 = vmul.f32 %v856, %v883
        %v921 = vmul.f32 %v857, %v888
        %v922 = vmul.f32 %v858, %v893
        %v923 = vmul.f32 %v859, %v898
        %v924 = vmul.f32 %v860, %v903
        %v925 = vmul.f32 %v861, %v908
        %v926 = vmul.f32 %v862, %v913
        %v927 = vmul.f32 %v863, %v918
        %v928 = vpack.c.bf16 %v921, %v920
        %v929 = vpack.c.bf16 %v923, %v922
        %v930 = vpack.c.bf16 %v925, %v924
        %v931 = vpack.c.bf16 %v927, %v926
        %v936 = vunpack.c.l.b16 %v928
        %v937 = vunpack.c.h.b16 %v928
        %v938 = vunpack.c.l.b16 %v929
        %v939 = vunpack.c.h.b16 %v929
        %v940 = vunpack.c.l.b16 %v930
        %v941 = vunpack.c.h.b16 %v930
        %v942 = vunpack.c.l.b16 %v931
        %v943 = vunpack.c.h.b16 %v931
        %v944 = vpack.c.b16 %v936, %v936
        %v945 = vpack.c.b16 %v937, %v937
        %v946 = vpack.c.b16 %v938, %v938
        %v947 = vpack.c.b16 %v939, %v939
        %v948 = vpack.c.b16 %v940, %v940
        %v949 = vpack.c.b16 %v941, %v941
        %v950 = vpack.c.b16 %v942, %v942
        %v951 = vpack.c.b16 %v943, %v943
        %vm960 = vcmask 125952
        %961 = vst.msk [vmem:[%s287] sm:$0xf] %vm960, %v944
        %962 = vst.msk [vmem:[%s287 + $0x4] sm:$0xf] %vm960, %v945
        %963 = vst.msk [vmem:[%s287 + $0x8] sm:$0xf] %vm960, %v946
        %964 = vst.msk [vmem:[%s287 + $0xc] sm:$0xf] %vm960, %v947
        %965 = vst.msk [vmem:[%s287 + $0x10] sm:$0xf] %vm960, %v948
        %966 = vst.msk [vmem:[%s287 + $0x14] sm:$0xf] %vm960, %v949
        %967 = vst.msk [vmem:[%s287 + $0x18] sm:$0xf] %vm960, %v950
        %968 = vst.msk [vmem:[%s287 + $0x1c] sm:$0xf] %vm960, %v951
      $region40: #{cfm_forward.19} parent=31 // pred_fallthru
        _
      %s969 = smul.u32 8, %s20
      %p970 = scmp.lt.s32.totalorder %s19, 7
      %s971 = scalar_select %p970, %s19, 7
      %p972 = scmp.lt.s32.totalorder %s969, 7
      %s973 = scalar_select %p972, %s969, 7
      %s974 = smul.addr %s971, 8
      %s975 = sadd.s32 %s973, %s974
      %s976 = smul.addr %s975, 4
      %s977 = scalar_lea.vmem %s3, %s976
      // Predicated region
      $region41: #{cfm_forward.19} parent=31 // pred_check
        %p978 = pneg %p137
      $region42: #{cfm_forward.19} parent=31 // pred_check_branch
        %980 = sbr.rel (%p978) target = $region44
      $region43: #{cfm_forward.19} parent=31 // pred_region
        %s981 = smul.u32 8, %s20
      $region44: #{cfm_forward.19} parent=31 // pred_fallthru
        _
    $region32: #{cfm_forward.19} parent=5 // pred_fallthru
      _
    %p982 = scmp.le.s32.totalorder 2, %s9
    // Predicated region
    $region45: #{cfm_forward.19} parent=5 // pred_check
      %p983 = pneg %p982
    $region46: #{cfm_forward.19} parent=5 // pred_check_branch
      %985 = sbr.rel (%p983) target = $region48
    $region47: #{cfm_forward.19} parent=5 // pred_region
      %s986 = ssub.s32 %s9, 2
      // Predicated region
      $region49: #{cfm_forward.19} parent=47 // pred_check
        %p987 = pneg %p143
      $region50: #{cfm_forward.19} parent=47 // pred_check_branch
        %989 = sbr.rel (%p987) target = $region52
      $region51: #{cfm_forward.19} parent=47 // pred_region
        %s990 = smul.u32 8, %s23
        %p991 = scmp.lt.s32.totalorder %s22, 7
        %s992 = scalar_select %p991, %s22, 7
        %p993 = scmp.lt.s32.totalorder %s990, 7
        %s994 = scalar_select %p993, %s990, 7
        %s995 = smul.addr %s992, 8
        %s996 = sadd.s32 %s994, %s995
        %s997 = smul.addr %s996, 4
        %s998 = scalar_lea.vmem %s3, %s997
      $region52: #{cfm_forward.19} parent=47 // pred_fallthru
        _
    $region48: #{cfm_forward.19} parent=5 // pred_fallthru
      _
  $region6: #{cfm_forward.19} parent=0 // loop_footer
    %s13 = sadd.s32 1, %s9
  $region7: #{cfm_forward.19} parent=0 // loop_footer_branch
    %8 = sbr.rel target = $region3
  $region8: #{cfm_forward.19} parent=0 // loop_exit
    _

// kernel: cfm_forward.20
$region0: #{cfm_forward.20}
  #allocation0 [shape = 'u32[]', space=smem, size = 0x4, offset = 0x4, fixed_abs, tag = 'smem constant byte address 0x4 - core index']
  #allocation1 [shape = 'u32[144,128]{1,0:T(1,128)}', space=vmem, size = 0x12000, scoped, tag = 'internal scratch']
  %s0 = inlined_call_operand.vmem [shape: bf16[128,64], index: 0, kind: input, shape index: {}]
  %s1 = inlined_call_operand.vmem [shape: bf16[64,64], index: 1, kind: input, shape index: {}]
  %s2 = inlined_call_operand.vmem [shape: f32[1,64], index: 2, kind: input, shape index: {}]
  %s3 = inlined_call_operand.vmem [shape: f32[1,64], index: 3, kind: input, shape index: {}]
  %s4 = inlined_call_operand.vmem [shape: bf16[128,64], index: 4, kind: output, shape index: {}]
  %s5 = sld [smem:[#allocation0]]
  $region26: #{cfm_forward.20} parent=0
    _
  %s7 = ssub.s32 1, %s5
  %s8 = scalar_select 0, %s7, %s5
  // Predicated region
  $region2: #{cfm_forward.20} parent=0 // pred_check
    _
  $region3: #{cfm_forward.20} parent=0 // pred_check_branch
    %10 = sbr.rel (0) target = $region5
  $region4: #{cfm_forward.20} parent=0 // pred_region
    _
  $region5: #{cfm_forward.20} parent=0 // pred_fallthru
    _
  // Predicated region
  $region6: #{cfm_forward.20} parent=0 // pred_check
    _
  $region7: #{cfm_forward.20} parent=0 // pred_check_branch
    %12 = sbr.rel (0) target = $region9
  $region8: #{cfm_forward.20} parent=0 // pred_region
    _
  $region9: #{cfm_forward.20} parent=0 // pred_fallthru
    _
  // Predicated region
  $region10: #{cfm_forward.20} parent=0 // pred_check
    _
  $region11: #{cfm_forward.20} parent=0 // pred_check_branch
    %14 = sbr.rel (0) target = $region13
  $region12: #{cfm_forward.20} parent=0 // pred_region
    _
  $region13: #{cfm_forward.20} parent=0 // pred_fallthru
    _
  // Predicated region
  $region14: #{cfm_forward.20} parent=0 // pred_check
    _
  $region15: #{cfm_forward.20} parent=0 // pred_check_branch
    %16 = sbr.rel (0) target = $region17
  $region16: #{cfm_forward.20} parent=0 // pred_region
    _
  $region17: #{cfm_forward.20} parent=0 // pred_fallthru
    _
  %v18 = vld [vmem:[%s0] sm:$0xf]
  %v19 = vld [vmem:[%s0 + $0x4] sm:$0xf]
  %v20 = vld [vmem:[%s0 + $0x8] sm:$0xf]
  %v21 = vld [vmem:[%s0 + $0xc] sm:$0xf]
  %v22 = vld [vmem:[%s0 + $0x10] sm:$0xf]
  %v23 = vld [vmem:[%s0 + $0x14] sm:$0xf]
  %v24 = vld [vmem:[%s0 + $0x18] sm:$0xf]
  %v25 = vld [vmem:[%s0 + $0x1c] sm:$0xf]
  %v26 = vld [vmem:[%s0 + $0x20] sm:$0xf]
  %v27 = vld [vmem:[%s0 + $0x24] sm:$0xf]
  %v28 = vld [vmem:[%s0 + $0x28] sm:$0xf]
  %v29 = vld [vmem:[%s0 + $0x2c] sm:$0xf]
  %v30 = vld [vmem:[%s0 + $0x30] sm:$0xf]
  %v31 = vld [vmem:[%s0 + $0x34] sm:$0xf]
  %v32 = vld [vmem:[%s0 + $0x38] sm:$0xf]
  %v33 = vld [vmem:[%s0 + $0x3c] sm:$0xf]
  %v34 = vld [vmem:[%s1] sm:$0xf]
  %v35 = vld [vmem:[%s1 + $0x4] sm:$0xf]
  %v36 = vld [vmem:[%s1 + $0x8] sm:$0xf]
  %v37 = vld [vmem:[%s1 + $0xc] sm:$0xf]
  %v38 = vld [vmem:[%s1 + $0x10] sm:$0xf]
  %v39 = vld [vmem:[%s1 + $0x14] sm:$0xf]
  %v40 = vld [vmem:[%s1 + $0x18] sm:$0xf]
  %v41 = vld [vmem:[%s1 + $0x1c] sm:$0xf]
  %v58 = vunpack.c.l.b16 %v18
  %v59 = vunpack.c.l.b16 %v19
  %v60 = vunpack.c.l.b16 %v20
  %v61 = vunpack.c.l.b16 %v21
  %v62 = vunpack.c.l.b16 %v22
  %v63 = vunpack.c.l.b16 %v23
  %v64 = vunpack.c.l.b16 %v24
  %v65 = vunpack.c.l.b16 %v25
  %v66 = vunpack.c.l.b16 %v26
  %v67 = vunpack.c.l.b16 %v27
  %v68 = vunpack.c.l.b16 %v28
  %v69 = vunpack.c.l.b16 %v29
  %v70 = vunpack.c.l.b16 %v30
  %v71 = vunpack.c.l.b16 %v31
  %v72 = vunpack.c.l.b16 %v32
  %v73 = vunpack.c.l.b16 %v33
  %v74 = vpack.c.b16 %v59, %v58
  %v75 = vpack.c.b16 %v61, %v60
  %v76 = vpack.c.b16 %v63, %v62
  %v77 = vpack.c.b16 %v65, %v64
  %v78 = vpack.c.b16 %v67, %v66
  %v79 = vpack.c.b16 %v69, %v68
  %v80 = vpack.c.b16 %v71, %v70
  %v81 = vpack.c.b16 %v73, %v72
  %v90 = vunpack.c.l.b16 %v34
  %v91 = vunpack.c.l.b16 %v35
  %v92 = vunpack.c.l.b16 %v36
  %v93 = vunpack.c.l.b16 %v37
  %v94 = vunpack.c.l.b16 %v38
  %v95 = vunpack.c.l.b16 %v39
  %v96 = vunpack.c.l.b16 %v40
  %v97 = vunpack.c.l.b16 %v41
  %v98 = vpack.c.b16 %v91, %v90
  %v99 = vpack.c.b16 %v93, %v92
  %v100 = vpack.c.b16 %v95, %v94
  %v101 = vpack.c.b16 %v97, %v96
  %vm106 = vcmask 523264
  %v108 = vsel %vm106, %v74, 0
  %v111 = vsel %vm106, %v75, 0
  %v114 = vsel %vm106, %v76, 0
  %v117 = vsel %vm106, %v77, 0
  %v120 = vsel %vm106, %v78, 0
  %v123 = vsel %vm106, %v79, 0
  %v126 = vsel %vm106, %v80, 0
  %v129 = vsel %vm106, %v81, 0
  %131 = vmatprep.subr.bf16.mxu0 0
  %132 = vmatpush1.bf16.msra.mxu0 0
  %133 = vmatprep.subr.bf16.mxu0 0
  %134 = vmatpush1.bf16.msra.mxu0 0
  %135 = vmatprep.subr.bf16.mxu0 0
  %136 = vmatpush1.bf16.msra.mxu0 0
  %137 = vmatprep.subr.bf16.mxu0 0
  %138 = vmatpush1.bf16.msra.mxu0 0
  %139 = vmatprep.subr.bf16.mxu0 0
  %140 = vmatpush1.bf16.msra.mxu0 %v101
  %141 = vmatprep.subr.bf16.mxu0 0
  %142 = vmatpush1.bf16.msra.mxu0 %v100
  %143 = vmatprep.subr.bf16.mxu0 0
  %144 = vmatpush1.bf16.msra.mxu0 %v99
  %145 = vmatprep.subr.bf16.mxu0 0
  %146 = vmatpush1.bf16.msra.mxu0 %v98
  %147 = vmatprep.subr.bf16.mxu0 0
  %148 = vmatpush2.bf16.msra.mxu0 0
  %149 = vmatprep.subr.bf16.mxu0 0
  %150 = vmatpush2.bf16.msra.mxu0 0
  %151 = vmatprep.subr.bf16.mxu0 0
  %152 = vmatpush2.bf16.msra.mxu0 0
  %153 = vmatprep.subr.bf16.mxu0 0
  %154 = vmatpush2.bf16.msra.mxu0 0
  %155 = vmatprep.subr.bf16.mxu0 0
  %156 = vmatpush2.bf16.msra.mxu0 0
  %157 = vmatprep.subr.bf16.mxu0 0
  %158 = vmatpush2.bf16.msra.mxu0 0
  %159 = vmatprep.subr.bf16.mxu0 0
  %160 = vmatpush2.bf16.msra.mxu0 0
  %161 = vmatprep.subr.bf16.mxu0 0
  %162 = vmatpush2.bf16.msra.mxu0 0
  %163 = vmatprep.mubr.bf16.mxu0 0
  %164 = vmatmul.mubr.bf16.gmra.mxu0 %v108
  %v165 = vpop.f32.mrf.mxu0
  %v166 = vadd.f32 0.0, %v165
  %v167 = vpop.f32.mrf.mxu0
  %v168 = vpop.f32.mrf.mxu0
  %v169 = vadd.f32 0.0, %v168
  %v170 = vpop.f32.mrf.mxu0
  %171 = vmatprep.mubr.bf16.mxu0 0
  %172 = vmatmul.mubr.bf16.gmra.mxu0 %v111
  %v173 = vpop.f32.mrf.mxu0
  %v174 = vadd.f32 0.0, %v173
  %v175 = vpop.f32.mrf.mxu0
  %v176 = vpop.f32.mrf.mxu0
  %v177 = vadd.f32 0.0, %v176
  %v178 = vpop.f32.mrf.mxu0
  %179 = vmatprep.mubr.bf16.mxu0 0
  %180 = vmatmul.mubr.bf16.gmra.mxu0 %v114
  %v181 = vpop.f32.mrf.mxu0
  %v182 = vadd.f32 0.0, %v181
  %v183 = vpop.f32.mrf.mxu0
  %v184 = vpop.f32.mrf.mxu0
  %v185 = vadd.f32 0.0, %v184
  %v186 = vpop.f32.mrf.mxu0
  %187 = vmatprep.mubr.bf16.mxu0 0
  %188 = vmatmul.mubr.bf16.gmra.mxu0 %v117
  %v189 = vpop.f32.mrf.mxu0
  %v190 = vadd.f32 0.0, %v189
  %v191 = vpop.f32.mrf.mxu0
  %v192 = vpop.f32.mrf.mxu0
  %v193 = vadd.f32 0.0, %v192
  %v194 = vpop.f32.mrf.mxu0
  %195 = vmatprep.mubr.bf16.mxu0 0
  %196 = vmatmul.mubr.bf16.gmra.mxu0 %v120
  %v197 = vpop.f32.mrf.mxu0
  %v198 = vadd.f32 0.0, %v197
  %v199 = vpop.f32.mrf.mxu0
  %v200 = vpop.f32.mrf.mxu0
  %v201 = vadd.f32 0.0, %v200
  %v202 = vpop.f32.mrf.mxu0
  %203 = vmatprep.mubr.bf16.mxu0 0
  %204 = vmatmul.mubr.bf16.gmra.mxu0 %v123
  %v205 = vpop.f32.mrf.mxu0
  %v206 = vadd.f32 0.0, %v205
  %v207 = vpop.f32.mrf.mxu0
  %v208 = vpop.f32.mrf.mxu0
  %v209 = vadd.f32 0.0, %v208
  %v210 = vpop.f32.mrf.mxu0
  %211 = vmatprep.mubr.bf16.mxu0 0
  %212 = vmatmul.mubr.bf16.gmra.mxu0 %v126
  %v213 = vpop.f32.mrf.mxu0
  %v214 = vadd.f32 0.0, %v213
  %v215 = vpop.f32.mrf.mxu0
  %v216 = vpop.f32.mrf.mxu0
  %v217 = vadd.f32 0.0, %v216
  %v218 = vpop.f32.mrf.mxu0
  %219 = vmatprep.mubr.bf16.mxu0 0
  %220 = vmatmul.mubr.bf16.gmra.mxu0 %v129
  %v221 = vpop.f32.mrf.mxu0
  %v222 = vadd.f32 0.0, %v221
  %v223 = vpop.f32.mrf.mxu0
  %v224 = vpop.f32.mrf.mxu0
  %v225 = vadd.f32 0.0, %v224
  %v226 = vpop.f32.mrf.mxu0
  %227 = vdwg.mxu0
  %v228 = vld [vmem:[%s2] sm:$0x1]
  %v230 = vlaneseq
  %v231 = vshrl.u32 %v230, 7
  %v232 = vsub.s32 0, %v231
  %v233 = vrot.slane %v228, %v232
  %v235 = vmul.f32 %v166, %v233
  %v236 = vmul.f32 %v169, %v233
  %v237 = vmul.f32 %v174, %v233
  %v238 = vmul.f32 %v177, %v233
  %v239 = vmul.f32 %v182, %v233
  %v240 = vmul.f32 %v185, %v233
  %v241 = vmul.f32 %v190, %v233
  %v242 = vmul.f32 %v193, %v233
  %v243 = vmul.f32 %v198, %v233
  %v244 = vmul.f32 %v201, %v233
  %v245 = vmul.f32 %v206, %v233
  %v246 = vmul.f32 %v209, %v233
  %v247 = vmul.f32 %v214, %v233
  %v248 = vmul.f32 %v217, %v233
  %v249 = vmul.f32 %v222, %v233
  %v250 = vmul.f32 %v225, %v233
  %v251 = vld [vmem:[%s3] sm:$0x1]
  %v253 = vlaneseq
  %v254 = vshrl.u32 %v253, 7
  %v255 = vsub.s32 0, %v254
  %v256 = vrot.slane %v251, %v255
  %v258 = vadd.f32 %v235, %v256
  %v259 = vadd.f32 %v236, %v256
  %v260 = vadd.f32 %v237, %v256
  %v261 = vadd.f32 %v238, %v256
  %v262 = vadd.f32 %v239, %v256
  %v263 = vadd.f32 %v240, %v256
  %v264 = vadd.f32 %v241, %v256
  %v265 = vadd.f32 %v242, %v256
  %v266 = vadd.f32 %v243, %v256
  %v267 = vadd.f32 %v244, %v256
  %v268 = vadd.f32 %v245, %v256
  %v269 = vadd.f32 %v246, %v256
  %v270 = vadd.f32 %v247, %v256
  %v271 = vadd.f32 %v248, %v256
  %v272 = vadd.f32 %v249, %v256
  %v273 = vadd.f32 %v250, %v256
  %v274 = vlaneseq
  %v275 = vand.u32 %v274, 127
  %vm276 = vcmp.ge.s32.totalorder %v275, 32
  %v277 = vmax.f32 %v258, 0.0
  %v278 = vmax.f32 %v259, 0.0
  %v279 = vmax.f32 %v260, 0.0
  %v280 = vmax.f32 %v261, 0.0
  %v281 = vmax.f32 %v262, 0.0
  %v282 = vmax.f32 %v263, 0.0
  %v283 = vmax.f32 %v264, 0.0
  %v284 = vmax.f32 %v265, 0.0
  %v285 = vmax.f32 %v266, 0.0
  %v286 = vmax.f32 %v267, 0.0
  %v287 = vmax.f32 %v268, 0.0
  %v288 = vmax.f32 %v269, 0.0
  %v289 = vmax.f32 %v270, 0.0
  %v290 = vmax.f32 %v271, 0.0
  %v291 = vmax.f32 %v272, 0.0
  %v292 = vmax.f32 %v273, 0.0
  %v293 = vsel %vm276, %v277, %v258
  %v294 = vsel %vm276, %v278, %v259
  %v295 = vsel %vm276, %v279, %v260
  %v296 = vsel %vm276, %v280, %v261
  %v297 = vsel %vm276, %v281, %v262
  %v298 = vsel %vm276, %v282, %v263
  %v299 = vsel %vm276, %v283, %v264
  %v300 = vsel %vm276, %v284, %v265
  %v301 = vsel %vm276, %v285, %v266
  %v302 = vsel %vm276, %v286, %v267
  %v303 = vsel %vm276, %v287, %v268
  %v304 = vsel %vm276, %v288, %v269
  %v305 = vsel %vm276, %v289, %v270
  %v306 = vsel %vm276, %v290, %v271
  %v307 = vsel %vm276, %v291, %v272
  %v308 = vsel %vm276, %v292, %v273
  %v309 = vpack.c.bf16 %v294, %v293
  %v310 = vpack.c.bf16 %v296, %v295
  %v311 = vpack.c.bf16 %v298, %v297
  %v312 = vpack.c.bf16 %v300, %v299
  %v313 = vpack.c.bf16 %v302, %v301
  %v314 = vpack.c.bf16 %v304, %v303
  %v315 = vpack.c.bf16 %v306, %v305
  %v316 = vpack.c.bf16 %v308, %v307
  %v325 = vunpack.c.l.b16 %v309
  %v326 = vunpack.c.h.b16 %v309
  %v327 = vunpack.c.l.b16 %v310
  %v328 = vunpack.c.h.b16 %v310
  %v329 = vunpack.c.l.b16 %v311
  %v330 = vunpack.c.h.b16 %v311
  %v331 = vunpack.c.l.b16 %v312
  %v332 = vunpack.c.h.b16 %v312
  %v333 = vunpack.c.l.b16 %v313
  %v334 = vunpack.c.h.b16 %v313
  %v335 = vunpack.c.l.b16 %v314
  %v336 = vunpack.c.h.b16 %v314
  %v337 = vunpack.c.l.b16 %v315
  %v338 = vunpack.c.h.b16 %v315
  %v339 = vunpack.c.l.b16 %v316
  %v340 = vunpack.c.h.b16 %v316
  %v341 = vpack.c.b16 %v325, %v325
  %v342 = vpack.c.b16 %v326, %v326
  %v343 = vpack.c.b16 %v327, %v327
  %v344 = vpack.c.b16 %v328, %v328
  %v345 = vpack.c.b16 %v329, %v329
  %v346 = vpack.c.b16 %v330, %v330
  %v347 = vpack.c.b16 %v331, %v331
  %v348 = vpack.c.b16 %v332, %v332
  %v349 = vpack.c.b16 %v333, %v333
  %v350 = vpack.c.b16 %v334, %v334
  %v351 = vpack.c.b16 %v335, %v335
  %v352 = vpack.c.b16 %v336, %v336
  %v353 = vpack.c.b16 %v337, %v337
  %v354 = vpack.c.b16 %v338, %v338
  %v355 = vpack.c.b16 %v339, %v339
  %v356 = vpack.c.b16 %v340, %v340
  %vm373 = vcmask 519168
  %374 = vst.msk [vmem:[%s4] sm:$0xf] %vm373, %v341
  %375 = vst.msk [vmem:[%s4 + $0x4] sm:$0xf] %vm373, %v342
  %376 = vst.msk [vmem:[%s4 + $0x8] sm:$0xf] %vm373, %v343
  %377 = vst.msk [vmem:[%s4 + $0xc] sm:$0xf] %vm373, %v344
  %378 = vst.msk [vmem:[%s4 + $0x10] sm:$0xf] %vm373, %v345
  %379 = vst.msk [vmem:[%s4 + $0x14] sm:$0xf] %vm373, %v346
  %380 = vst.msk [vmem:[%s4 + $0x18] sm:$0xf] %vm373, %v347
  %381 = vst.msk [vmem:[%s4 + $0x1c] sm:$0xf] %vm373, %v348
  %382 = vst.msk [vmem:[%s4 + $0x20] sm:$0xf] %vm373, %v349
  %383 = vst.msk [vmem:[%s4 + $0x24] sm:$0xf] %vm373, %v350
  %384 = vst.msk [vmem:[%s4 + $0x28] sm:$0xf] %vm373, %v351
  %385 = vst.msk [vmem:[%s4 + $0x2c] sm:$0xf] %vm373, %v352
  %386 = vst.msk [vmem:[%s4 + $0x30] sm:$0xf] %vm373, %v353
  %387 = vst.msk [vmem:[%s4 + $0x34] sm:$0xf] %vm373, %v354
  %388 = vst.msk [vmem:[%s4 + $0x38] sm:$0xf] %vm373, %v355
  %389 = vst.msk [vmem:[%s4 + $0x3c] sm:$0xf] %vm373, %v356
  // Predicated region
  $region18: #{cfm_forward.20} parent=0 // pred_check
    _
  $region19: #{cfm_forward.20} parent=0 // pred_check_branch
    %391 = sbr.rel (0) target = $region21
  $region20: #{cfm_forward.20} parent=0 // pred_region
    _
  $region21: #{cfm_forward.20} parent=0 // pred_fallthru
    _
  // Predicated region
  $region22: #{cfm_forward.20} parent=0 // pred_check
    _
  $region23: #{cfm_forward.20} parent=0 // pred_check_branch
    %393 = sbr.rel (0) target = $region25
  $region24: #{cfm_forward.20} parent=0 // pred_region
    _
  $region25: #{cfm_forward.20} parent=0 // pred_fallthru
    _

// kernel: cfm_forward.23
$region0: #{cfm_forward.23}
  #allocation0 [shape = 'u32[]', space=smem, size = 0x4, offset = 0x4, fixed_abs, tag = 'smem constant byte address 0x4 - core index']
  #allocation1 [shape = 'u32[144,128]{1,0:T(1,128)}', space=vmem, size = 0x12000, scoped, tag = 'internal scratch']
  %s0 = inlined_call_operand.vmem [shape: bf16[128,32], index: 0, kind: input, shape index: {}]
  %s1 = inlined_call_operand.vmem [shape: bf16[128,32], index: 1, kind: input, shape index: {}]
  %s2 = inlined_call_operand.vmem [shape: bf16[32,32], index: 2, kind: input, shape index: {}]
  %s3 = inlined_call_operand.vmem [shape: bf16[32,32], index: 3, kind: input, shape index: {}]
  %s4 = inlined_call_operand.vmem [shape: f32[1,32], index: 4, kind: input, shape index: {}]
  %s5 = inlined_call_operand.vmem [shape: f32[1,32], index: 5, kind: input, shape index: {}]
  %s6 = inlined_call_operand.hbm [shape: f32[128,32], index: 6, kind: output, shape index: {}]
  %s7 = sld [smem:[#allocation0]]
  $region34: #{cfm_forward.23} parent=0
    _
  %s9 = ssub.s32 1, %s7
  %s10 = scalar_select 0, %s9, %s7
  $region1: #{cfm_forward.23} parent=0
    #allocation2 [shape = 'u8[65536]{0}', space=vmem, size = 0x10000, scoped, tag = 'output window, operand 0, single buffered']
    #allocation3 [shape = 's32[1]{0}', space=sflag, size = 0x4, scoped, tag = 'scoped memory for cfm_forward.23']
    %11 = vsyncpa [#allocation3], 0
    // Predicated region
    $region2: #{cfm_forward.23} parent=1 // pred_check
      _
    $region3: #{cfm_forward.23} parent=1 // pred_check_branch
      %13 = sbr.rel (0) target = $region5
    $region4: #{cfm_forward.23} parent=1 // pred_region
      _
    $region5: #{cfm_forward.23} parent=1 // pred_fallthru
      _
    // Predicated region
    $region6: #{cfm_forward.23} parent=1 // pred_check
      _
    $region7: #{cfm_forward.23} parent=1 // pred_check_branch
      %15 = sbr.rel (0) target = $region9
    $region8: #{cfm_forward.23} parent=1 // pred_region
      _
    $region9: #{cfm_forward.23} parent=1 // pred_fallthru
      _
    // Predicated region
    $region10: #{cfm_forward.23} parent=1 // pred_check
      _
    $region11: #{cfm_forward.23} parent=1 // pred_check_branch
      %17 = sbr.rel (0) target = $region13
    $region12: #{cfm_forward.23} parent=1 // pred_region
      _
    $region13: #{cfm_forward.23} parent=1 // pred_fallthru
      _
    // Predicated region
    $region14: #{cfm_forward.23} parent=1 // pred_check
      _
    $region15: #{cfm_forward.23} parent=1 // pred_check_branch
      %19 = sbr.rel (0) target = $region17
    $region16: #{cfm_forward.23} parent=1 // pred_region
      _
    $region17: #{cfm_forward.23} parent=1 // pred_fallthru
      _
    // Predicated region
    $region18: #{cfm_forward.23} parent=1 // pred_check
      _
    $region19: #{cfm_forward.23} parent=1 // pred_check_branch
      %21 = sbr.rel (0) target = $region21
    $region20: #{cfm_forward.23} parent=1 // pred_region
      _
    $region21: #{cfm_forward.23} parent=1 // pred_fallthru
      _
    // Predicated region
    $region22: #{cfm_forward.23} parent=1 // pred_check
      _
    $region23: #{cfm_forward.23} parent=1 // pred_check_branch
      %23 = sbr.rel (0) target = $region25
    $region24: #{cfm_forward.23} parent=1 // pred_region
      _
    $region25: #{cfm_forward.23} parent=1 // pred_fallthru
      _
    %v25 = vld [vmem:[%s0] sm:$0xf]
    %v26 = vld [vmem:[%s0 + $0x4] sm:$0xf]
    %v27 = vld [vmem:[%s0 + $0x8] sm:$0xf]
    %v28 = vld [vmem:[%s0 + $0xc] sm:$0xf]
    %v29 = vld [vmem:[%s0 + $0x10] sm:$0xf]
    %v30 = vld [vmem:[%s0 + $0x14] sm:$0xf]
    %v31 = vld [vmem:[%s0 + $0x18] sm:$0xf]
    %v32 = vld [vmem:[%s0 + $0x1c] sm:$0xf]
    %v33 = vld [vmem:[%s0 + $0x20] sm:$0xf]
    %v34 = vld [vmem:[%s0 + $0x24] sm:$0xf]
    %v35 = vld [vmem:[%s0 + $0x28] sm:$0xf]
    %v36 = vld [vmem:[%s0 + $0x2c] sm:$0xf]
    %v37 = vld [vmem:[%s0 + $0x30] sm:$0xf]
    %v38 = vld [vmem:[%s0 + $0x34] sm:$0xf]
    %v39 = vld [vmem:[%s0 + $0x38] sm:$0xf]
    %v40 = vld [vmem:[%s0 + $0x3c] sm:$0xf]
    %v41 = vld [vmem:[%s2] sm:$0xf]
    %v42 = vld [vmem:[%s2 + $0x4] sm:$0xf]
    %v43 = vld [vmem:[%s2 + $0x8] sm:$0xf]
    %v44 = vld [vmem:[%s2 + $0xc] sm:$0xf]
    %v45 = vld [vmem:[%s1] sm:$0xf]
    %v46 = vld [vmem:[%s1 + $0x4] sm:$0xf]
    %v47 = vld [vmem:[%s1 + $0x8] sm:$0xf]
    %v48 = vld [vmem:[%s1 + $0xc] sm:$0xf]
    %v49 = vld [vmem:[%s1 + $0x10] sm:$0xf]
    %v50 = vld [vmem:[%s1 + $0x14] sm:$0xf]
    %v51 = vld [vmem:[%s1 + $0x18] sm:$0xf]
    %v52 = vld [vmem:[%s1 + $0x1c] sm:$0xf]
    %v53 = vld [vmem:[%s1 + $0x20] sm:$0xf]
    %v54 = vld [vmem:[%s1 + $0x24] sm:$0xf]
    %v55 = vld [vmem:[%s1 + $0x28] sm:$0xf]
    %v56 = vld [vmem:[%s1 + $0x2c] sm:$0xf]
    %v57 = vld [vmem:[%s1 + $0x30] sm:$0xf]
    %v58 = vld [vmem:[%s1 + $0x34] sm:$0xf]
    %v59 = vld [vmem:[%s1 + $0x38] sm:$0xf]
    %v60 = vld [vmem:[%s1 + $0x3c] sm:$0xf]
    %v61 = vld [vmem:[%s3] sm:$0xf]
    %v62 = vld [vmem:[%s3 + $0x4] sm:$0xf]
    %v63 = vld [vmem:[%s3 + $0x8] sm:$0xf]
    %v64 = vld [vmem:[%s3 + $0xc] sm:$0xf]
    %v81 = vunpack.c.l.b16 %v45
    %v82 = vunpack.c.l.b16 %v46
    %v83 = vunpack.c.l.b16 %v47
    %v84 = vunpack.c.l.b16 %v48
    %v85 = vunpack.c.l.b16 %v49
    %v86 = vunpack.c.l.b16 %v50
    %v87 = vunpack.c.l.b16 %v51
    %v88 = vunpack.c.l.b16 %v52
    %v89 = vunpack.c.l.b16 %v53
    %v90 = vunpack.c.l.b16 %v54
    %v91 = vunpack.c.l.b16 %v55
    %v92 = vunpack.c.l.b16 %v56
    %v93 = vunpack.c.l.b16 %v57
    %v94 = vunpack.c.l.b16 %v58
    %v95 = vunpack.c.l.b16 %v59
    %v96 = vunpack.c.l.b16 %v60
    %v97 = vpack.c.b16 %v82, %v81
    %v98 = vpack.c.b16 %v84, %v83
    %v99 = vpack.c.b16 %v86, %v85
    %v100 = vpack.c.b16 %v88, %v87
    %v101 = vpack.c.b16 %v90, %v89
    %v102 = vpack.c.b16 %v92, %v91
    %v103 = vpack.c.b16 %v94, %v93
    %v104 = vpack.c.b16 %v96, %v95
    %v109 = vunpack.c.l.b16 %v61
    %v110 = vunpack.c.l.b16 %v62
    %v111 = vunpack.c.l.b16 %v63
    %v112 = vunpack.c.l.b16 %v64
    %v113 = vpack.c.b16 %v110, %v109
    %v114 = vpack.c.b16 %v112, %v111
    %vm117 = vcmask 261120
    %v119 = vsel %vm117, %v97, 0
    %v122 = vsel %vm117, %v98, 0
    %v125 = vsel %vm117, %v99, 0
    %v128 = vsel %vm117, %v100, 0
    %v131 = vsel %vm117, %v101, 0
    %v134 = vsel %vm117, %v102, 0
    %v137 = vsel %vm117, %v103, 0
    %v140 = vsel %vm117, %v104, 0
    %142 = vmatprep.subr.bf16.mxu0 0
    %143 = vmatpush1.bf16.msra.mxu0 0
    %144 = vmatprep.subr.bf16.mxu0 0
    %145 = vmatpush1.bf16.msra.mxu0 0
    %146 = vmatprep.subr.bf16.mxu0 0
    %147 = vmatpush1.bf16.msra.mxu0 0
    %148 = vmatprep.subr.bf16.mxu0 0
    %149 = vmatpush1.bf16.msra.mxu0 0
    %150 = vmatprep.subr.bf16.mxu0 0
    %151 = vmatpush1.bf16.msra.mxu0 0
    %152 = vmatprep.subr.bf16.mxu0 0
    %153 = vmatpush1.bf16.msra.mxu0 0
    %154 = vmatprep.subr.bf16.mxu0 0
    %155 = vmatpush1.bf16.msra.mxu0 %v114
    %156 = vmatprep.subr.bf16.mxu0 0
    %157 = vmatpush1.bf16.msra.mxu0 %v113
    %158 = vmatprep.subr.bf16.mxu0 0
    %159 = vmatpush2.bf16.msra.mxu0 0
    %160 = vmatprep.subr.bf16.mxu0 0
    %161 = vmatpush2.bf16.msra.mxu0 0
    %162 = vmatprep.subr.bf16.mxu0 0
    %163 = vmatpush2.bf16.msra.mxu0 0
    %164 = vmatprep.subr.bf16.mxu0 0
    %165 = vmatpush2.bf16.msra.mxu0 0
    %166 = vmatprep.subr.bf16.mxu0 0
    %167 = vmatpush2.bf16.msra.mxu0 0
    %168 = vmatprep.subr.bf16.mxu0 0
    %169 = vmatpush2.bf16.msra.mxu0 0
    %170 = vmatprep.subr.bf16.mxu0 0
    %171 = vmatpush2.bf16.msra.mxu0 0
    %172 = vmatprep.subr.bf16.mxu0 0
    %173 = vmatpush2.bf16.msra.mxu0 0
    %174 = vmatprep.mubr.bf16.mxu0 0
    %175 = vmatmul.mubr.bf16.gmra.mxu0 %v119
    %v176 = vpop.f32.mrf.mxu0
    %v177 = vadd.f32 0.0, %v176
    %v178 = vpop.f32.mrf.mxu0
    %v179 = vpop.f32.mrf.mxu0
    %v180 = vadd.f32 0.0, %v179
    %v181 = vpop.f32.mrf.mxu0
    %182 = vmatprep.mubr.bf16.mxu0 0
    %183 = vmatmul.mubr.bf16.gmra.mxu0 %v122
    %v184 = vpop.f32.mrf.mxu0
    %v185 = vadd.f32 0.0, %v184
    %v186 = vpop.f32.mrf.mxu0
    %v187 = vpop.f32.mrf.mxu0
    %v188 = vadd.f32 0.0, %v187
    %v189 = vpop.f32.mrf.mxu0
    %190 = vmatprep.mubr.bf16.mxu0 0
    %191 = vmatmul.mubr.bf16.gmra.mxu0 %v125
    %v192 = vpop.f32.mrf.mxu0
    %v193 = vadd.f32 0.0, %v192
    %v194 = vpop.f32.mrf.mxu0
    %v195 = vpop.f32.mrf.mxu0
    %v196 = vadd.f32 0.0, %v195
    %v197 = vpop.f32.mrf.mxu0
    %198 = vmatprep.mubr.bf16.mxu0 0
    %199 = vmatmul.mubr.bf16.gmra.mxu0 %v128
    %v200 = vpop.f32.mrf.mxu0
    %v201 = vadd.f32 0.0, %v200
    %v202 = vpop.f32.mrf.mxu0
    %v203 = vpop.f32.mrf.mxu0
    %v204 = vadd.f32 0.0, %v203
    %v205 = vpop.f32.mrf.mxu0
    %206 = vmatprep.mubr.bf16.mxu0 0
    %207 = vmatmul.mubr.bf16.gmra.mxu0 %v131
    %v208 = vpop.f32.mrf.mxu0
    %v209 = vadd.f32 0.0, %v208
    %v210 = vpop.f32.mrf.mxu0
    %v211 = vpop.f32.mrf.mxu0
    %v212 = vadd.f32 0.0, %v211
    %v213 = vpop.f32.mrf.mxu0
    %214 = vmatprep.mubr.bf16.mxu0 0
    %215 = vmatmul.mubr.bf16.gmra.mxu0 %v134
    %v216 = vpop.f32.mrf.mxu0
    %v217 = vadd.f32 0.0, %v216
    %v218 = vpop.f32.mrf.mxu0
    %v219 = vpop.f32.mrf.mxu0
    %v220 = vadd.f32 0.0, %v219
    %v221 = vpop.f32.mrf.mxu0
    %222 = vmatprep.mubr.bf16.mxu0 0
    %223 = vmatmul.mubr.bf16.gmra.mxu0 %v137
    %v224 = vpop.f32.mrf.mxu0
    %v225 = vadd.f32 0.0, %v224
    %v226 = vpop.f32.mrf.mxu0
    %v227 = vpop.f32.mrf.mxu0
    %v228 = vadd.f32 0.0, %v227
    %v229 = vpop.f32.mrf.mxu0
    %230 = vmatprep.mubr.bf16.mxu0 0
    %231 = vmatmul.mubr.bf16.gmra.mxu0 %v140
    %v232 = vpop.f32.mrf.mxu0
    %v233 = vadd.f32 0.0, %v232
    %v234 = vpop.f32.mrf.mxu0
    %v235 = vpop.f32.mrf.mxu0
    %v236 = vadd.f32 0.0, %v235
    %v237 = vpop.f32.mrf.mxu0
    %238 = vdwg.mxu0
    %v255 = vunpack.c.l.b16 %v25
    %v256 = vunpack.c.l.b16 %v26
    %v257 = vunpack.c.l.b16 %v27
    %v258 = vunpack.c.l.b16 %v28
    %v259 = vunpack.c.l.b16 %v29
    %v260 = vunpack.c.l.b16 %v30
    %v261 = vunpack.c.l.b16 %v31
    %v262 = vunpack.c.l.b16 %v32
    %v263 = vunpack.c.l.b16 %v33
    %v264 = vunpack.c.l.b16 %v34
    %v265 = vunpack.c.l.b16 %v35
    %v266 = vunpack.c.l.b16 %v36
    %v267 = vunpack.c.l.b16 %v37
    %v268 = vunpack.c.l.b16 %v38
    %v269 = vunpack.c.l.b16 %v39
    %v270 = vunpack.c.l.b16 %v40
    %v271 = vpack.c.b16 %v256, %v255
    %v272 = vpack.c.b16 %v258, %v257
    %v273 = vpack.c.b16 %v260, %v259
    %v274 = vpack.c.b16 %v262, %v261
    %v275 = vpack.c.b16 %v264, %v263
    %v276 = vpack.c.b16 %v266, %v265
    %v277 = vpack.c.b16 %v268, %v267
    %v278 = vpack.c.b16 %v270, %v269
    %v283 = vunpack.c.l.b16 %v41
    %v284 = vunpack.c.l.b16 %v42
    %v285 = vunpack.c.l.b16 %v43
    %v286 = vunpack.c.l.b16 %v44
    %v287 = vpack.c.b16 %v284, %v283
    %v288 = vpack.c.b16 %v286, %v285
    %v292 = vsel %vm117, %v271, 0
    %v295 = vsel %vm117, %v272, 0
    %v298 = vsel %vm117, %v273, 0
    %v301 = vsel %vm117, %v274, 0
    %v304 = vsel %vm117, %v275, 0
    %v307 = vsel %vm117, %v276, 0
    %v310 = vsel %vm117, %v277, 0
    %v313 = vsel %vm117, %v278, 0
    %315 = vmatprep.subr.bf16.mxu0 0
    %316 = vmatpush1.bf16.msra.mxu0 0
    %317 = vmatprep.subr.bf16.mxu0 0
    %318 = vmatpush1.bf16.msra.mxu0 0
    %319 = vmatprep.subr.bf16.mxu0 0
    %320 = vmatpush1.bf16.msra.mxu0 0
    %321 = vmatprep.subr.bf16.mxu0 0
    %322 = vmatpush1.bf16.msra.mxu0 0
    %323 = vmatprep.subr.bf16.mxu0 0
    %324 = vmatpush1.bf16.msra.mxu0 0
    %325 = vmatprep.subr.bf16.mxu0 0
    %326 = vmatpush1.bf16.msra.mxu0 0
    %327 = vmatprep.subr.bf16.mxu0 0
    %328 = vmatpush1.bf16.msra.mxu0 %v288
    %329 = vmatprep.subr.bf16.mxu0 0
    %330 = vmatpush1.bf16.msra.mxu0 %v287
    %331 = vmatprep.subr.bf16.mxu0 0
    %332 = vmatpush2.bf16.msra.mxu0 0
    %333 = vmatprep.subr.bf16.mxu0 0
    %334 = vmatpush2.bf16.msra.mxu0 0
    %335 = vmatprep.subr.bf16.mxu0 0
    %336 = vmatpush2.bf16.msra.mxu0 0
    %337 = vmatprep.subr.bf16.mxu0 0
    %338 = vmatpush2.bf16.msra.mxu0 0
    %339 = vmatprep.subr.bf16.mxu0 0
    %340 = vmatpush2.bf16.msra.mxu0 0
    %341 = vmatprep.subr.bf16.mxu0 0
    %342 = vmatpush2.bf16.msra.mxu0 0
    %343 = vmatprep.subr.bf16.mxu0 0
    %344 = vmatpush2.bf16.msra.mxu0 0
    %345 = vmatprep.subr.bf16.mxu0 0
    %346 = vmatpush2.bf16.msra.mxu0 0
    %347 = vmatprep.mubr.bf16.mxu0 0
    %348 = vmatmul.mubr.bf16.gmra.mxu0 %v292
    %v349 = vpop.f32.mrf.mxu0
    %v350 = vadd.f32 %v177, %v349
    %v351 = vpop.f32.mrf.mxu0
    %v352 = vpop.f32.mrf.mxu0
    %v353 = vadd.f32 %v180, %v352
    %v354 = vpop.f32.mrf.mxu0
    %355 = vmatprep.mubr.bf16.mxu0 0
    %356 = vmatmul.mubr.bf16.gmra.mxu0 %v295
    %v357 = vpop.f32.mrf.mxu0
    %v358 = vadd.f32 %v185, %v357
    %v359 = vpop.f32.mrf.mxu0
    %v360 = vpop.f32.mrf.mxu0
    %v361 = vadd.f32 %v188, %v360
    %v362 = vpop.f32.mrf.mxu0
    %363 = vmatprep.mubr.bf16.mxu0 0
    %364 = vmatmul.mubr.bf16.gmra.mxu0 %v298
    %v365 = vpop.f32.mrf.mxu0
    %v366 = vadd.f32 %v193, %v365
    %v367 = vpop.f32.mrf.mxu0
    %v368 = vpop.f32.mrf.mxu0
    %v369 = vadd.f32 %v196, %v368
    %v370 = vpop.f32.mrf.mxu0
    %371 = vmatprep.mubr.bf16.mxu0 0
    %372 = vmatmul.mubr.bf16.gmra.mxu0 %v301
    %v373 = vpop.f32.mrf.mxu0
    %v374 = vadd.f32 %v201, %v373
    %v375 = vpop.f32.mrf.mxu0
    %v376 = vpop.f32.mrf.mxu0
    %v377 = vadd.f32 %v204, %v376
    %v378 = vpop.f32.mrf.mxu0
    %379 = vmatprep.mubr.bf16.mxu0 0
    %380 = vmatmul.mubr.bf16.gmra.mxu0 %v304
    %v381 = vpop.f32.mrf.mxu0
    %v382 = vadd.f32 %v209, %v381
    %v383 = vpop.f32.mrf.mxu0
    %v384 = vpop.f32.mrf.mxu0
    %v385 = vadd.f32 %v212, %v384
    %v386 = vpop.f32.mrf.mxu0
    %387 = vmatprep.mubr.bf16.mxu0 0
    %388 = vmatmul.mubr.bf16.gmra.mxu0 %v307
    %v389 = vpop.f32.mrf.mxu0
    %v390 = vadd.f32 %v217, %v389
    %v391 = vpop.f32.mrf.mxu0
    %v392 = vpop.f32.mrf.mxu0
    %v393 = vadd.f32 %v220, %v392
    %v394 = vpop.f32.mrf.mxu0
    %395 = vmatprep.mubr.bf16.mxu0 0
    %396 = vmatmul.mubr.bf16.gmra.mxu0 %v310
    %v397 = vpop.f32.mrf.mxu0
    %v398 = vadd.f32 %v225, %v397
    %v399 = vpop.f32.mrf.mxu0
    %v400 = vpop.f32.mrf.mxu0
    %v401 = vadd.f32 %v228, %v400
    %v402 = vpop.f32.mrf.mxu0
    %403 = vmatprep.mubr.bf16.mxu0 0
    %404 = vmatmul.mubr.bf16.gmra.mxu0 %v313
    %v405 = vpop.f32.mrf.mxu0
    %v406 = vadd.f32 %v233, %v405
    %v407 = vpop.f32.mrf.mxu0
    %v408 = vpop.f32.mrf.mxu0
    %v409 = vadd.f32 %v236, %v408
    %v410 = vpop.f32.mrf.mxu0
    %411 = vdwg.mxu0
    %v412 = vld [vmem:[%s4] sm:$0x1]
    %v414 = vlaneseq
    %v415 = vshrl.u32 %v414, 7
    %v416 = vsub.s32 0, %v415
    %v417 = vrot.slane %v412, %v416
    %v419 = vmul.f32 %v350, %v417
    %v420 = vmul.f32 %v353, %v417
    %v421 = vmul.f32 %v358, %v417
    %v422 = vmul.f32 %v361, %v417
    %v423 = vmul.f32 %v366, %v417
    %v424 = vmul.f32 %v369, %v417
    %v425 = vmul.f32 %v374, %v417
    %v426 = vmul.f32 %v377, %v417
    %v427 = vmul.f32 %v382, %v417
    %v428 = vmul.f32 %v385, %v417
    %v429 = vmul.f32 %v390, %v417
    %v430 = vmul.f32 %v393, %v417
    %v431 = vmul.f32 %v398, %v417
    %v432 = vmul.f32 %v401, %v417
    %v433 = vmul.f32 %v406, %v417
    %v434 = vmul.f32 %v409, %v417
    %v435 = vld [vmem:[%s5] sm:$0x1]
    %v437 = vlaneseq
    %v438 = vshrl.u32 %v437, 7
    %v439 = vsub.s32 0, %v438
    %v440 = vrot.slane %v435, %v439
    %v442 = vadd.f32 %v419, %v440
    %v443 = vadd.f32 %v420, %v440
    %v444 = vadd.f32 %v421, %v440
    %v445 = vadd.f32 %v422, %v440
    %v446 = vadd.f32 %v423, %v440
    %v447 = vadd.f32 %v424, %v440
    %v448 = vadd.f32 %v425, %v440
    %v449 = vadd.f32 %v426, %v440
    %v450 = vadd.f32 %v427, %v440
    %v451 = vadd.f32 %v428, %v440
    %v452 = vadd.f32 %v429, %v440
    %v453 = vadd.f32 %v430, %v440
    %v454 = vadd.f32 %v431, %v440
    %v455 = vadd.f32 %v432, %v440
    %v456 = vadd.f32 %v433, %v440
    %v457 = vadd.f32 %v434, %v440
    %v458 = vmax.f32 %v442, 0.0
    %v459 = vmax.f32 %v443, 0.0
    %v460 = vmax.f32 %v444, 0.0
    %v461 = vmax.f32 %v445, 0.0
    %v462 = vmax.f32 %v446, 0.0
    %v463 = vmax.f32 %v447, 0.0
    %v464 = vmax.f32 %v448, 0.0
    %v465 = vmax.f32 %v449, 0.0
    %v466 = vmax.f32 %v450, 0.0
    %v467 = vmax.f32 %v451, 0.0
    %v468 = vmax.f32 %v452, 0.0
    %v469 = vmax.f32 %v453, 0.0
    %v470 = vmax.f32 %v454, 0.0
    %v471 = vmax.f32 %v455, 0.0
    %v472 = vmax.f32 %v456, 0.0
    %v473 = vmax.f32 %v457, 0.0
    %474 = vst.msk [vmem:[#allocation2] sm:$0xff] %vm117, %v458
    %475 = vst.msk [vmem:[#allocation2 + $0x8] sm:$0xff] %vm117, %v459
    %476 = vst.msk [vmem:[#allocation2 + $0x10] sm:$0xff] %vm117, %v460
    %477 = vst.msk [vmem:[#allocation2 + $0x18] sm:$0xff] %vm117, %v461
    %478 = vst.msk [vmem:[#allocation2 + $0x20] sm:$0xff] %vm117, %v462
    %479 = vst.msk [vmem:[#allocation2 + $0x28] sm:$0xff] %vm117, %v463
    %480 = vst.msk [vmem:[#allocation2 + $0x30] sm:$0xff] %vm117, %v464
    %481 = vst.msk [vmem:[#allocation2 + $0x38] sm:$0xff] %vm117, %v465
    %482 = vst.msk [vmem:[#allocation2 + $0x40] sm:$0xff] %vm117, %v466
    %483 = vst.msk [vmem:[#allocation2 + $0x48] sm:$0xff] %vm117, %v467
    %484 = vst.msk [vmem:[#allocation2 + $0x50] sm:$0xff] %vm117, %v468
    %485 = vst.msk [vmem:[#allocation2 + $0x58] sm:$0xff] %vm117, %v469
    %486 = vst.msk [vmem:[#allocation2 + $0x60] sm:$0xff] %vm117, %v470
    %487 = vst.msk [vmem:[#allocation2 + $0x68] sm:$0xff] %vm117, %v471
    %488 = vst.msk [vmem:[#allocation2 + $0x70] sm:$0xff] %vm117, %v472
    %489 = vst.msk [vmem:[#allocation2 + $0x78] sm:$0xff] %vm117, %v473
    // Predicated region
    $region26: #{cfm_forward.23} parent=1 // pred_check
      _
    $region27: #{cfm_forward.23} parent=1 // pred_check_branch
      %491 = sbr.rel (0) target = $region29
    $region28: #{cfm_forward.23} parent=1 // pred_region
      %s493 = ssub.s32 2048, 2048
      %494 = vsyncadd [#allocation3], %s493
      %s495 = sshll.u32 [#allocation2], 4
      %s496 = int_to_ptr.vmem [resolvable:$true] %s495
      %501 = dma.vmem_to_hbm [thread:$0]  %s496, 2048, %s6, [#allocation3], 128, 128, 8
    $region29: #{cfm_forward.23} parent=1 // pred_fallthru
      _
    // Predicated region
    $region30: #{cfm_forward.23} parent=1 // pred_check
      _
    $region31: #{cfm_forward.23} parent=1 // pred_check_branch
      %503 = sbr.rel (0) target = $region33
    $region32: #{cfm_forward.23} parent=1 // pred_region
      %504 = dma.done [#allocation3], 2048
    $region33: #{cfm_forward.23} parent=1 // pred_fallthru
      _
    %505 = vsyncpa [#allocation3], 1

// kernel: cfm_forward.22
$region0: #{cfm_forward.22}
  #allocation0 [shape = 'u32[]', space=smem, size = 0x4, offset = 0x4, fixed_abs, tag = 'smem constant byte address 0x4 - core index']
  #allocation1 [shape = 'u32[144,128]{1,0:T(1,128)}', space=vmem, size = 0x12000, scoped, tag = 'internal scratch']
  #allocation2 [shape = 'f32[64,1]{1,0:T(8,128)}', space=vmem, size = 0x8000, scoped, tag = 'scratch operand']
  #allocation3 [shape = 'f32[64,1]{1,0:T(8,128)}', space=vmem, size = 0x8000, scoped, tag = 'scratch operand']
  #allocation4 [shape = 'f32[64,32]{1,0:T(8,128)}', space=vmem, size = 0x8000, scoped, tag = 'scratch operand']
  %s0 = inlined_call_operand.vmem [shape: bf16[2,64,32], index: 0, kind: input, shape index: {}]
  %s1 = inlined_call_operand.vmem [shape: bf16[2,64,32], index: 1, kind: input, shape index: {}]
  %s2 = inlined_call_operand.vmem [shape: bf16[2,64,32], index: 2, kind: input, shape index: {}]
  %s3 = inlined_call_operand.vmem [shape: bf16[2,64,32], index: 3, kind: output, shape index: {}]
  %s4 = sld [smem:[#allocation0]]
  $region53: #{cfm_forward.22} parent=0
    _
  %s6 = ssub.s32 1, %s4
  %s7 = scalar_select 0, %s6, %s4
  loop: start=0, step=1, limit=4
  $region2: #{cfm_forward.22} parent=0 // loop_pre_header
    _
  $region3: #{cfm_forward.22} parent=0 // loop_header
    %s9 = sphi 0, %s13
    %p10 = scmp.ge.s32.totalorder %s9, 4
    %s16 = sphi 0, %s35
    %s17 = sphi 0, %s31
    %s18 = sphi 0, %s27
    %s19 = sphi 0, %s16
    %s20 = sphi 0, %s17
    %s21 = sphi 0, %s18
    %s22 = sphi 0, %s19
    %s23 = sphi 0, %s20
    %s24 = sphi 0, %s21
    %s40 = sphi 0, %s42
    %s43 = sphi 0, %s40
    %s44 = sphi 0, %s43
    %s60 = sphi 0, %s44
    %s68 = sphi 0, %s70
    %s71 = sphi 0, %s68
    %s72 = sphi 0, %s71
    %s88 = sphi 0, %s72
    %s96 = sphi 0, %s98
    %s99 = sphi 0, %s96
    %s100 = sphi 0, %s99
    %s116 = sphi 0, %s100
    %s124 = sphi 0, %s126
    %s127 = sphi 0, %s124
    %s128 = sphi 0, %s127
    %s144 = sphi 0, %s128
  $region4: #{cfm_forward.22} parent=0 // loop_header_branch
    %12 = sbr.rel (%p10) target = $region8
  $region5: #{cfm_forward.22} parent=0 // loop_body
    %s14 = ssub.s32 %s9, 1
    %s15 = ssub.s32 %s9, 2
    %s25 = sadd.s32 1, %s18
    %p26 = scmp.ge.s32.totalorder %s25, 1
    %s27 = scalar_select %p26, 0, %s25
    %s28 = sadd.s32 1, %s17
    %s29 = scalar_select %p26, %s28, %s17
    %p30 = scmp.ge.s32.totalorder %s29, 1
    %s31 = scalar_select %p30, 0, %s29
    %s32 = sadd.s32 1, %s16
    %s33 = scalar_select %p30, %s32, %s16
    %p34 = scmp.ge.s32.totalorder %s33, 2
    %s35 = scalar_select %p34, 0, %s33
    %s36 = ssub.s32 %s16, %s35
    %s37 = ssub.s32 %s17, %s31
    %s38 = sor.u32 %s36, %s37
    %p39 = scmp.eq.s32.totalorder %s38, 0
    %s41 = sadd.s32 %s40, 1
    %s42 = scalar_select %p39, %s40, %s41
    %p45 = pneg %p39
    %p46 = scmp.eq.s32.totalorder %s9, 1
    %p47 = por %p45, %p46
    %p48 = scmp.ne.s32.totalorder %s40, %s43
    %p49 = scmp.eq.s32.totalorder %s9, 0
    %p50 = por %p48, %p49
    %p51 = scmp.ne.s32.totalorder %s40, %s43
    %p52 = scmp.eq.s32.totalorder %s14, 1
    %p53 = por %p51, %p52
    %p54 = scmp.ne.s32.totalorder %s43, %s44
    %p55 = scmp.eq.s32.totalorder %s14, 0
    %p56 = por %p54, %p55
    %p57 = scmp.ne.s32.totalorder %s43, %s44
    %p58 = scmp.eq.s32.totalorder %s15, 1
    %p59 = por %p57, %p58
    %p61 = scmp.ne.s32.totalorder %s44, %s60
    %p62 = scmp.eq.s32.totalorder %s15, 0
    %p63 = por %p61, %p62
    %s64 = ssub.s32 %s16, %s35
    %s65 = ssub.s32 %s18, %s27
    %s66 = sor.u32 %s64, %s65
    %p67 = scmp.eq.s32.totalorder %s66, 0
    %s69 = sadd.s32 %s68, 1
    %s70 = scalar_select %p67, %s68, %s69
    %p73 = pneg %p67
    %p74 = scmp.eq.s32.totalorder %s9, 1
    %p75 = por %p73, %p74
    %p76 = scmp.ne.s32.totalorder %s68, %s71
    %p77 = scmp.eq.s32.totalorder %s9, 0
    %p78 = por %p76, %p77
    %p79 = scmp.ne.s32.totalorder %s68, %s71
    %p80 = scmp.eq.s32.totalorder %s14, 1
    %p81 = por %p79, %p80
    %p82 = scmp.ne.s32.totalorder %s71, %s72
    %p83 = scmp.eq.s32.totalorder %s14, 0
    %p84 = por %p82, %p83
    %p85 = scmp.ne.s32.totalorder %s71, %s72
    %p86 = scmp.eq.s32.totalorder %s15, 1
    %p87 = por %p85, %p86
    %p89 = scmp.ne.s32.totalorder %s72, %s88
    %p90 = scmp.eq.s32.totalorder %s15, 0
    %p91 = por %p89, %p90
    %s92 = ssub.s32 %s16, %s35
    %s93 = ssub.s32 %s18, %s27
    %s94 = sor.u32 %s92, %s93
    %p95 = scmp.eq.s32.totalorder %s94, 0
    %s97 = sadd.s32 %s96, 1
    %s98 = scalar_select %p95, %s96, %s97
    %p101 = pneg %p95
    %p102 = scmp.eq.s32.totalorder %s9, 1
    %p103 = por %p101, %p102
    %p104 = scmp.ne.s32.totalorder %s96, %s99
    %p105 = scmp.eq.s32.totalorder %s9, 0
    %p106 = por %p104, %p105
    %p107 = scmp.ne.s32.totalorder %s96, %s99
    %p108 = scmp.eq.s32.totalorder %s14, 1
    %p109 = por %p107, %p108
    %p110 = scmp.ne.s32.totalorder %s99, %s100
    %p111 = scmp.eq.s32.totalorder %s14, 0
    %p112 = por %p110, %p111
    %p113 = scmp.ne.s32.totalorder %s99, %s100
    %p114 = scmp.eq.s32.totalorder %s15, 1
    %p115 = por %p113, %p114
    %p117 = scmp.ne.s32.totalorder %s100, %s116
    %p118 = scmp.eq.s32.totalorder %s15, 0
    %p119 = por %p117, %p118
    %s120 = ssub.s32 %s16, %s35
    %s121 = ssub.s32 %s17, %s31
    %s122 = sor.u32 %s120, %s121
    %p123 = scmp.eq.s32.totalorder %s122, 0
    %s125 = sadd.s32 %s124, 1
    %s126 = scalar_select %p123, %s124, %s125
    %p129 = pneg %p123
    %p130 = scmp.eq.s32.totalorder %s9, 1
    %p131 = por %p129, %p130
    %p132 = scmp.ne.s32.totalorder %s124, %s127
    %p133 = scmp.eq.s32.totalorder %s9, 0
    %p134 = por %p132, %p133
    %p135 = scmp.ne.s32.totalorder %s124, %s127
    %p136 = scmp.eq.s32.totalorder %s14, 1
    %p137 = por %p135, %p136
    %p138 = scmp.ne.s32.totalorder %s127, %s128
    %p139 = scmp.eq.s32.totalorder %s14, 0
    %p140 = por %p138, %p139
    %p141 = scmp.ne.s32.totalorder %s127, %s128
    %p142 = scmp.eq.s32.totalorder %s15, 1
    %p143 = por %p141, %p142
    %p145 = scmp.ne.s32.totalorder %s128, %s144
    %p146 = scmp.eq.s32.totalorder %s15, 0
    %p147 = por %p145, %p146
    %p148 = scmp.le.s32.totalorder 1, %s9
    %p149 = scmp.lt.s32.totalorder %s9, 3
    %p150 = pnand %p148, %p149
    %p151 = pneg %p150
    // Predicated region
    $region9: #{cfm_forward.22} parent=5 // pred_check
      _
    $region10: #{cfm_forward.22} parent=5 // pred_check_branch
      %153 = sbr.rel (%p150) target = $region12
    $region11: #{cfm_forward.22} parent=5 // pred_region
      %s154 = ssub.s32 %s9, 1
    $region12: #{cfm_forward.22} parent=5 // pred_fallthru
      _
    %p155 = scmp.lt.s32.totalorder %s9, 2
    // Predicated region
    $region13: #{cfm_forward.22} parent=5 // pred_check
      %p156 = pneg %p155
    $region14: #{cfm_forward.22} parent=5 // pred_check_branch
      %158 = sbr.rel (%p156) target = $region16
    $region15: #{cfm_forward.22} parent=5 // pred_region
      // Predicated region
      $region17: #{cfm_forward.22} parent=15 // pred_check
        %p159 = pneg %p50
      $region18: #{cfm_forward.22} parent=15 // pred_check_branch
        %161 = sbr.rel (%p159) target = $region20
      $region19: #{cfm_forward.22} parent=15 // pred_region
        %s162 = smul.u32 8, %s17
        %p163 = scmp.lt.s32.totalorder %s16, 1
        %s164 = scalar_select %p163, %s16, 1
        %p165 = scmp.lt.s32.totalorder %s162, 7
        %s166 = scalar_select %p165, %s162, 7
        %s167 = smul.addr %s164, 8
        %s168 = sadd.s32 %s166, %s167
        %s169 = smul.addr %s168, 4
        %s170 = scalar_lea.vmem %s0, %s169
        %s171 = smul.u32 8, %s17
      $region20: #{cfm_forward.22} parent=15 // pred_fallthru
        _
      // Predicated region
      $region21: #{cfm_forward.22} parent=15 // pred_check
        %p172 = pneg %p78
      $region22: #{cfm_forward.22} parent=15 // pred_check_branch
        %174 = sbr.rel (%p172) target = $region24
      $region23: #{cfm_forward.22} parent=15 // pred_region
        %s175 = smul.u32 8, %s18
        %p176 = scmp.lt.s32.totalorder %s16, 1
        %s177 = scalar_select %p176, %s16, 1
        %p178 = scmp.lt.s32.totalorder %s175, 7
        %s179 = scalar_select %p178, %s175, 7
        %s180 = smul.addr %s177, 8
        %s181 = sadd.s32 %s179, %s180
        %s182 = smul.addr %s181, 4
        %s183 = scalar_lea.vmem %s1, %s182
        %s184 = smul.u32 8, %s18
      $region24: #{cfm_forward.22} parent=15 // pred_fallthru
        _
      // Predicated region
      $region25: #{cfm_forward.22} parent=15 // pred_check
        %p185 = pneg %p106
      $region26: #{cfm_forward.22} parent=15 // pred_check_branch
        %187 = sbr.rel (%p185) target = $region28
      $region27: #{cfm_forward.22} parent=15 // pred_region
        %s188 = smul.u32 8, %s18
        %p189 = scmp.lt.s32.totalorder %s16, 1
        %s190 = scalar_select %p189, %s16, 1
        %p191 = scmp.lt.s32.totalorder %s188, 7
        %s192 = scalar_select %p191, %s188, 7
        %s193 = smul.addr %s190, 8
        %s194 = sadd.s32 %s192, %s193
        %s195 = smul.addr %s194, 4
        %s196 = scalar_lea.vmem %s2, %s195
        %s197 = smul.u32 8, %s18
      $region28: #{cfm_forward.22} parent=15 // pred_fallthru
        _
    $region16: #{cfm_forward.22} parent=5 // pred_fallthru
      _
    %p198 = scmp.le.s32.totalorder 1, %s9
    %p199 = scmp.lt.s32.totalorder %s9, 3
    %p200 = pnand %p198, %p199
    %p201 = pneg %p200
    // Predicated region
    $region29: #{cfm_forward.22} parent=5 // pred_check
      _
    $region30: #{cfm_forward.22} parent=5 // pred_check_branch
      %203 = sbr.rel (%p200) target = $region32
    $region31: #{cfm_forward.22} parent=5 // pred_region
      %s204 = ssub.s32 %s9, 1
      %s205 = smul.u32 8, %s20
      %p206 = scmp.lt.s32.totalorder %s19, 1
      %s207 = scalar_select %p206, %s19, 1
      %p208 = scmp.lt.s32.totalorder %s205, 7
      %s209 = scalar_select %p208, %s205, 7
      %s210 = smul.addr %s207, 8
      %s211 = sadd.s32 %s209, %s210
      %s212 = smul.addr %s211, 4
      %s213 = scalar_lea.vmem %s0, %s212
      %p214 = pneg %p56
      %p215 = pneg %p53
      %s216 = smul.u32 8, %s21
      %p217 = scmp.lt.s32.totalorder %s19, 1
      %s218 = scalar_select %p217, %s19, 1
      %p219 = scmp.lt.s32.totalorder %s216, 7
      %s220 = scalar_select %p219, %s216, 7
      %s221 = smul.addr %s218, 8
      %s222 = sadd.s32 %s220, %s221
      %s223 = smul.addr %s222, 4
      %s224 = scalar_lea.vmem %s1, %s223
      %p225 = pneg %p84
      %p226 = pneg %p81
      %s227 = smul.u32 8, %s21
      %p228 = scmp.lt.s32.totalorder %s19, 1
      %s229 = scalar_select %p228, %s19, 1
      %p230 = scmp.lt.s32.totalorder %s227, 7
      %s231 = scalar_select %p230, %s227, 7
      %s232 = smul.addr %s229, 8
      %s233 = sadd.s32 %s231, %s232
      %s234 = smul.addr %s233, 4
      %s235 = scalar_lea.vmem %s2, %s234
      %p236 = pneg %p112
      %p237 = pneg %p109
      %p238 = pneg %p140
      %p239 = pneg %p137
      %s240 = smul.u32 8, %s20
      %p241 = scmp.lt.s32.totalorder %s19, 1
      %s242 = scalar_select %p241, %s19, 1
      %p243 = scmp.lt.s32.totalorder %s240, 7
      %s244 = scalar_select %p243, %s240, 7
      %s245 = smul.addr %s242, 8
      %s246 = sadd.s32 %s244, %s245
      %s247 = smul.addr %s246, 4
      %s248 = scalar_lea.vmem %s3, %s247
      %s249 = smul.u32 8, %s20
      %p250 = scmp.lt.s32.totalorder %s19, 1
      %s251 = scalar_select %p250, %s19, 1
      %p252 = scmp.lt.s32.totalorder %s249, 7
      %s253 = scalar_select %p252, %s249, 7
      %s254 = smul.addr %s251, 8
      %s255 = sadd.s32 %s253, %s254
      %s256 = smul.addr %s255, 4
      %s257 = scalar_lea.vmem %s0, %s256
      %s258 = smul.u32 8, %s20
      %s259 = smul.u32 8, %s21
      %p260 = scmp.lt.s32.totalorder %s19, 1
      %s261 = scalar_select %p260, %s19, 1
      %p262 = scmp.lt.s32.totalorder %s259, 7
      %s263 = scalar_select %p262, %s259, 7
      %s264 = smul.addr %s261, 8
      %s265 = sadd.s32 %s263, %s264
      %s266 = smul.addr %s265, 4
      %s267 = scalar_lea.vmem %s1, %s266
      %s268 = smul.u32 8, %s21
      %s269 = smul.u32 8, %s21
      %p270 = scmp.lt.s32.totalorder %s19, 1
      %s271 = scalar_select %p270, %s19, 1
      %p272 = scmp.lt.s32.totalorder %s269, 7
      %s273 = scalar_select %p272, %s269, 7
      %s274 = smul.addr %s271, 8
      %s275 = sadd.s32 %s273, %s274
      %s276 = smul.addr %s275, 4
      %s277 = scalar_lea.vmem %s2, %s276
      %s278 = smul.u32 8, %s21
      %s279 = smul.u32 8, %s20
      %p280 = scmp.lt.s32.totalorder %s19, 1
      %s281 = scalar_select %p280, %s19, 1
      %p282 = scmp.lt.s32.totalorder %s279, 7
      %s283 = scalar_select %p282, %s279, 7
      %s284 = smul.addr %s281, 8
      %s285 = sadd.s32 %s283, %s284
      %s286 = smul.addr %s285, 4
      %s287 = scalar_lea.vmem %s3, %s286
      %s288 = smul.u32 8, %s20
      %p290 = scmp.eq.s32.totalorder %s21, 0
      // Predicated region
      $region33: #{cfm_forward.22} parent=31 // pred_check
        %p291 = pneg %p290
      $region34: #{cfm_forward.22} parent=31 // pred_check_branch
        %293 = sbr.rel (%p291) target = $region36
      $region35: #{cfm_forward.22} parent=31 // pred_region
        %vm294 = vcmask 7168
        %295 = vst.msk [vmem:[#allocation2] sm:$0xff] %vm294, -inf
        %296 = vst.msk [vmem:[#allocation2 + $0x8] sm:$0xff] %vm294, -inf
        %297 = vst.msk [vmem:[#allocation2 + $0x10] sm:$0xff] %vm294, -inf
        %298 = vst.msk [vmem:[#allocation2 + $0x18] sm:$0xff] %vm294, -inf
        %299 = vst.msk [vmem:[#allocation2 + $0x20] sm:$0xff] %vm294, -inf
        %300 = vst.msk [vmem:[#allocation2 + $0x28] sm:$0xff] %vm294, -inf
        %301 = vst.msk [vmem:[#allocation2 + $0x30] sm:$0xff] %vm294, -inf
        %302 = vst.msk [vmem:[#allocation2 + $0x38] sm:$0xff] %vm294, -inf
        %303 = vst.msk [vmem:[#allocation3] sm:$0xff] %vm294, 0.0
        %304 = vst.msk [vmem:[#allocation3 + $0x8] sm:$0xff] %vm294, 0.0
        %305 = vst.msk [vmem:[#allocation3 + $0x10] sm:$0xff] %vm294, 0.0
        %306 = vst.msk [vmem:[#allocation3 + $0x18] sm:$0xff] %vm294, 0.0
        %307 = vst.msk [vmem:[#allocation3 + $0x20] sm:$0xff] %vm294, 0.0
        %308 = vst.msk [vmem:[#allocation3 + $0x28] sm:$0xff] %vm294, 0.0
        %309 = vst.msk [vmem:[#allocation3 + $0x30] sm:$0xff] %vm294, 0.0
        %310 = vst.msk [vmem:[#allocation3 + $0x38] sm:$0xff] %vm294, 0.0
        %vm311 = vcmask 261120
        %312 = vst.msk [vmem:[#allocation4] sm:$0xff] %vm311, 0.0
        %313 = vst.msk [vmem:[#allocation4 + $0x8] sm:$0xff] %vm311, 0.0
        %314 = vst.msk [vmem:[#allocation4 + $0x10] sm:$0xff] %vm311, 0.0
        %315 = vst.msk [vmem:[#allocation4 + $0x18] sm:$0xff] %vm311, 0.0
        %316 = vst.msk [vmem:[#allocation4 + $0x20] sm:$0xff] %vm311, 0.0
        %317 = vst.msk [vmem:[#allocation4 + $0x28] sm:$0xff] %vm311, 0.0
        %318 = vst.msk [vmem:[#allocation4 + $0x30] sm:$0xff] %vm311, 0.0
        %319 = vst.msk [vmem:[#allocation4 + $0x38] sm:$0xff] %vm311, 0.0
      $region36: #{cfm_forward.22} parent=31 // pred_fallthru
        _
      %v320 = vld [vmem:[%s257] sm:$0xf]
      %v321 = vld [vmem:[%s257 + $0x4] sm:$0xf]
      %v322 = vld [vmem:[%s257 + $0x8] sm:$0xf]
      %v323 = vld [vmem:[%s257 + $0xc] sm:$0xf]
      %v324 = vld [vmem:[%s257 + $0x10] sm:$0xf]
      %v325 = vld [vmem:[%s257 + $0x14] sm:$0xf]
      %v326 = vld [vmem:[%s257 + $0x18] sm:$0xf]
      %v327 = vld [vmem:[%s257 + $0x1c] sm:$0xf]
      %v328 = vld [vmem:[%s267] sm:$0xf]
      %v329 = vld [vmem:[%s267 + $0x4] sm:$0xf]
      %v330 = vld [vmem:[%s267 + $0x8] sm:$0xf]
      %v331 = vld [vmem:[%s267 + $0xc] sm:$0xf]
      %v332 = vld [vmem:[%s267 + $0x10] sm:$0xf]
      %v333 = vld [vmem:[%s267 + $0x14] sm:$0xf]
      %v334 = vld [vmem:[%s267 + $0x18] sm:$0xf]
      %v335 = vld [vmem:[%s267 + $0x1c] sm:$0xf]
      %v336 = vld [vmem:[%s277] sm:$0xf]
      %v337 = vld [vmem:[%s277 + $0x4] sm:$0xf]
      %v338 = vld [vmem:[%s277 + $0x8] sm:$0xf]
      %v339 = vld [vmem:[%s277 + $0xc] sm:$0xf]
      %v340 = vld [vmem:[%s277 + $0x10] sm:$0xf]
      %v341 = vld [vmem:[%s277 + $0x14] sm:$0xf]
      %v342 = vld [vmem:[%s277 + $0x18] sm:$0xf]
      %v343 = vld [vmem:[%s277 + $0x1c] sm:$0xf]
      %v352 = vunpack.c.l.b16 %v320
      %v353 = vunpack.c.l.b16 %v321
      %v354 = vunpack.c.l.b16 %v322
      %v355 = vunpack.c.l.b16 %v323
      %v356 = vunpack.c.l.b16 %v324
      %v357 = vunpack.c.l.b16 %v325
      %v358 = vunpack.c.l.b16 %v326
      %v359 = vunpack.c.l.b16 %v327
      %v360 = vpack.c.b16 %v353, %v352
      %v361 = vpack.c.b16 %v355, %v354
      %v362 = vpack.c.b16 %v357, %v356
      %v363 = vpack.c.b16 %v359, %v358
      %v372 = vunpack.c.l.b16 %v328
      %v373 = vunpack.c.l.b16 %v329
      %v374 = vunpack.c.l.b16 %v330
      %v375 = vunpack.c.l.b16 %v331
      %v376 = vunpack.c.l.b16 %v332
      %v377 = vunpack.c.l.b16 %v333
      %v378 = vunpack.c.l.b16 %v334
      %v379 = vunpack.c.l.b16 %v335
      %v380 = vpack.c.b16 %v373, %v372
      %v381 = vpack.c.b16 %v375, %v374
      %v382 = vpack.c.b16 %v377, %v376
      %v383 = vpack.c.b16 %v379, %v378
      %vm384 = vcmask 261120
      %v386 = vsel %vm384, %v360, 0
      %v389 = vsel %vm384, %v361, 0
      %v392 = vsel %vm384, %v362, 0
      %v395 = vsel %vm384, %v363, 0
      %v398 = vsel %vm384, %v380, 0
      %v401 = vsel %vm384, %v381, 0
      %v404 = vsel %vm384, %v382, 0
      %v407 = vsel %vm384, %v383, 0
      %409 = vmatprep.subr.bf16.mxu0 0
      %410 = vmatpush1.bf16.xpose.msra.mxu0 0
      %411 = vmatprep.subr.bf16.mxu0 0
      %412 = vmatpush1.bf16.xpose.msra.mxu0 0
      %413 = vmatprep.subr.bf16.mxu0 0
      %414 = vmatpush1.bf16.xpose.msra.mxu0 0
      %415 = vmatprep.subr.bf16.mxu0 0
      %416 = vmatpush1.bf16.xpose.msra.mxu0 0
      %417 = vmatprep.subr.bf16.mxu0 0
      %418 = vmatpush1.bf16.xpose.msra.mxu0 %v407
      %419 = vmatprep.subr.bf16.mxu0 0
      %420 = vmatpush1.bf16.xpose.msra.mxu0 %v404
      %421 = vmatprep.subr.bf16.mxu0 0
      %422 = vmatpush1.bf16.xpose.msra.mxu0 %v401
      %423 = vmatprep.subr.bf16.mxu0 0
      %424 = vmatpush1.bf16.xpose.msra.mxu0 %v398
      %425 = vmatprep.subr.bf16.mxu0 0
      %426 = vmatpush2.bf16.xpose.msra.mxu0 0
      %427 = vmatprep.subr.bf16.mxu0 0
      %428 = vmatpush2.bf16.xpose.msra.mxu0 0
      %429 = vmatprep.subr.bf16.mxu0 0
      %430 = vmatpush2.bf16.xpose.msra.mxu0 0
      %431 = vmatprep.subr.bf16.mxu0 0
      %432 = vmatpush2.bf16.xpose.msra.mxu0 0
      %433 = vmatprep.subr.bf16.mxu0 0
      %434 = vmatpush2.bf16.xpose.msra.mxu0 0
      %435 = vmatprep.subr.bf16.mxu0 0
      %436 = vmatpush2.bf16.xpose.msra.mxu0 0
      %437 = vmatprep.subr.bf16.mxu0 0
      %438 = vmatpush2.bf16.xpose.msra.mxu0 0
      %439 = vmatprep.subr.bf16.mxu0 0
      %440 = vmatpush2.bf16.xpose.msra.mxu0 0
      %441 = vmatprep.mubr.bf16.mxu0 0
      %442 = vmatmul.mubr.bf16.gmra.mxu0 %v386
      %v443 = vpop.f32.mrf.mxu0
      %v444 = vadd.f32 0.0, %v443
      %v445 = vpop.f32.mrf.mxu0
      %v446 = vpop.f32.mrf.mxu0
      %v447 = vadd.f32 0.0, %v446
      %v448 = vpop.f32.mrf.mxu0
      %449 = vmatprep.mubr.bf16.mxu0 0
      %450 = vmatmul.mubr.bf16.gmra.mxu0 %v389
      %v451 = vpop.f32.mrf.mxu0
      %v452 = vadd.f32 0.0, %v451
      %v453 = vpop.f32.mrf.mxu0
      %v454 = vpop.f32.mrf.mxu0
      %v455 = vadd.f32 0.0, %v454
      %v456 = vpop.f32.mrf.mxu0
      %457 = vmatprep.mubr.bf16.mxu0 0
      %458 = vmatmul.mubr.bf16.gmra.mxu0 %v392
      %v459 = vpop.f32.mrf.mxu0
      %v460 = vadd.f32 0.0, %v459
      %v461 = vpop.f32.mrf.mxu0
      %v462 = vpop.f32.mrf.mxu0
      %v463 = vadd.f32 0.0, %v462
      %v464 = vpop.f32.mrf.mxu0
      %465 = vmatprep.mubr.bf16.mxu0 0
      %466 = vmatmul.mubr.bf16.gmra.mxu0 %v395
      %v467 = vpop.f32.mrf.mxu0
      %v468 = vadd.f32 0.0, %v467
      %v469 = vpop.f32.mrf.mxu0
      %v470 = vpop.f32.mrf.mxu0
      %v471 = vadd.f32 0.0, %v470
      %v472 = vpop.f32.mrf.mxu0
      %473 = vdwg.mxu0
      %v474 = vld [vmem:[#allocation2] sm:$0xff]
      %v475 = vld [vmem:[#allocation2 + $0x8] sm:$0xff]
      %v476 = vld [vmem:[#allocation2 + $0x10] sm:$0xff]
      %v477 = vld [vmem:[#allocation2 + $0x18] sm:$0xff]
      %v478 = vld [vmem:[#allocation2 + $0x20] sm:$0xff]
      %v479 = vld [vmem:[#allocation2 + $0x28] sm:$0xff]
      %v480 = vld [vmem:[#allocation2 + $0x30] sm:$0xff]
      %v481 = vld [vmem:[#allocation2 + $0x38] sm:$0xff]
      %vm482 = vcmask 523264
      %v483 = vsel %vm482, %v444, -inf
      %484 = vmax.xlane.f32.xlu0 %v483
      %v485 = vpop.xlane.xlu0 %484
      %v486 = vsel %vm482, %v447, -inf
      %487 = vmax.xlane.f32.xlu0 %v486
      %v488 = vpop.xlane.xlu0 %487
      %v489 = vsel %vm482, %v452, -inf
      %490 = vmax.xlane.f32.xlu0 %v489
      %v491 = vpop.xlane.xlu0 %490
      %v492 = vsel %vm482, %v455, -inf
      %493 = vmax.xlane.f32.xlu0 %v492
      %v494 = vpop.xlane.xlu0 %493
      %v495 = vsel %vm482, %v460, -inf
      %496 = vmax.xlane.f32.xlu0 %v495
      %v497 = vpop.xlane.xlu0 %496
      %v498 = vsel %vm482, %v463, -inf
      %499 = vmax.xlane.f32.xlu0 %v498
      %v500 = vpop.xlane.xlu0 %499
      %v501 = vsel %vm482, %v468, -inf
      %502 = vmax.xlane.f32.xlu0 %v501
      %v503 = vpop.xlane.xlu0 %502
      %v504 = vsel %vm482, %v471, -inf
      %505 = vmax.xlane.f32.xlu0 %v504
      %v506 = vpop.xlane.xlu0 %505
      %v507 = vmax.f32 %v474, %v485
      %v508 = vmax.f32 %v475, %v488
      %v509 = vmax.f32 %v476, %v491
      %v510 = vmax.f32 %v477, %v494
      %v511 = vmax.f32 %v478, %v497
      %v512 = vmax.f32 %v479, %v500
      %v513 = vmax.f32 %v480, %v503
      %v514 = vmax.f32 %v481, %v506
      %v515 = vsub.f32 %v474, %v507
      %v516 = vsub.f32 %v475, %v508
      %v517 = vsub.f32 %v476, %v509
      %v518 = vsub.f32 %v477, %v510
      %v519 = vsub.f32 %v478, %v511
      %v520 = vsub.f32 %v479, %v512
      %v521 = vsub.f32 %v480, %v513
      %v522 = vsub.f32 %v481, %v514
      %v523 = vmul.f32 %v515, 1.442695
      %v524 = vpow.pop %v523
      %v525 = vmul.f32 %v516, 1.442695
      %v526 = vpow.pop %v525
      %v527 = vmul.f32 %v517, 1.442695
      %v528 = vpow.pop %v527
      %v529 = vmul.f32 %v518, 1.442695
      %v530 = vpow.pop %v529
      %v531 = vmul.f32 %v519, 1.442695
      %v532 = vpow.pop %v531
      %v533 = vmul.f32 %v520, 1.442695
      %v534 = vpow.pop %v533
      %v535 = vmul.f32 %v521, 1.442695
      %v536 = vpow.pop %v535
      %v537 = vmul.f32 %v522, 1.442695
      %v538 = vpow.pop %v537
      %540 = vset.pattern.permute.xlu0 0
      %541 = vperm.xlu0 %540, %v507
      %v542 = vpop.permute.xlu0 %541
      %545 = vset.pattern.permute.xlu0 0
      %546 = vperm.xlu0 %545, %v508
      %v547 = vpop.permute.xlu0 %546
      %550 = vset.pattern.permute.xlu0 0
      %551 = vperm.xlu0 %550, %v509
      %v552 = vpop.permute.xlu0 %551
      %555 = vset.pattern.permute.xlu0 0
      %556 = vperm.xlu0 %555, %v510
      %v557 = vpop.permute.xlu0 %556
      %560 = vset.pattern.permute.xlu0 0
      %561 = vperm.xlu0 %560, %v511
      %v562 = vpop.permute.xlu0 %561
      %565 = vset.pattern.permute.xlu0 0
      %566 = vperm.xlu0 %565, %v512
      %v567 = vpop.permute.xlu0 %566
      %570 = vset.pattern.permute.xlu0 0
      %571 = vperm.xlu0 %570, %v513
      %v572 = vpop.permute.xlu0 %571
      %575 = vset.pattern.permute.xlu0 0
      %576 = vperm.xlu0 %575, %v514
      %v577 = vpop.permute.xlu0 %576
      %v579 = vsub.f32 %v444, %v542
      %v580 = vsub.f32 %v447, %v547
      %v581 = vsub.f32 %v452, %v552
      %v582 = vsub.f32 %v455, %v557
      %v583 = vsub.f32 %v460, %v562
      %v584 = vsub.f32 %v463, %v567
      %v585 = vsub.f32 %v468, %v572
      %v586 = vsub.f32 %v471, %v577
      %v587 = vmul.f32 %v579, 1.442695
      %v588 = vpow.pop %v587
      %v589 = vmul.f32 %v580, 1.442695
      %v590 = vpow.pop %v589
      %v591 = vmul.f32 %v581, 1.442695
      %v592 = vpow.pop %v591
      %v593 = vmul.f32 %v582, 1.442695
      %v594 = vpow.pop %v593
      %v595 = vmul.f32 %v583, 1.442695
      %v596 = vpow.pop %v595
      %v597 = vmul.f32 %v584, 1.442695
      %v598 = vpow.pop %v597
      %v599 = vmul.f32 %v585, 1.442695
      %v600 = vpow.pop %v599
      %v601 = vmul.f32 %v586, 1.442695
      %v602 = vpow.pop %v601
      %v603 = vld [vmem:[#allocation3] sm:$0xff]
      %v604 = vld [vmem:[#allocation3 + $0x8] sm:$0xff]
      %v605 = vld [vmem:[#allocation3 + $0x10] sm:$0xff]
      %v606 = vld [vmem:[#allocation3 + $0x18] sm:$0xff]
      %v607 = vld [vmem:[#allocation3 + $0x20] sm:$0xff]
      %v608 = vld [vmem:[#allocation3 + $0x28] sm:$0xff]
      %v609 = vld [vmem:[#allocation3 + $0x30] sm:$0xff]
      %v610 = vld [vmem:[#allocation3 + $0x38] sm:$0xff]
      %v611 = vmul.f32 %v524, %v603
      %v612 = vmul.f32 %v526, %v604
      %v613 = vmul.f32 %v528, %v605
      %v614 = vmul.f32 %v530, %v606
      %v615 = vmul.f32 %v532, %v607
      %v616 = vmul.f32 %v534, %v608
      %v617 = vmul.f32 %v536, %v609
      %v618 = vmul.f32 %v538, %v610
      %v619 = vsel %vm482, %v588, 0.0
      %620 = vadd.xlane.f32.xlu0 %v619
      %v621 = vpop.xlane.xlu0 %620
      %v622 = vsel %vm482, %v590, 0.0
      %623 = vadd.xlane.f32.xlu0 %v622
      %v624 = vpop.xlane.xlu0 %623
      %v625 = vsel %vm482, %v592, 0.0
      %626 = vadd.xlane.f32.xlu0 %v625
      %v627 = vpop.xlane.xlu0 %626
      %v628 = vsel %vm482, %v594, 0.0
      %629 = vadd.xlane.f32.xlu0 %v628
      %v630 = vpop.xlane.xlu0 %629
      %v631 = vsel %vm482, %v596, 0.0
      %632 = vadd.xlane.f32.xlu0 %v631
      %v633 = vpop.xlane.xlu0 %632
      %v634 = vsel %vm482, %v598, 0.0
      %635 = vadd.xlane.f32.xlu0 %v634
      %v636 = vpop.xlane.xlu0 %635
      %v637 = vsel %vm482, %v600, 0.0
      %638 = vadd.xlane.f32.xlu0 %v637
      %v639 = vpop.xlane.xlu0 %638
      %v640 = vsel %vm482, %v602, 0.0
      %641 = vadd.xlane.f32.xlu0 %v640
      %v642 = vpop.xlane.xlu0 %641
      %v643 = vadd.f32 %v611, %v621
      %v644 = vadd.f32 %v612, %v624
      %v645 = vadd.f32 %v613, %v627
      %v646 = vadd.f32 %v614, %v630
      %v647 = vadd.f32 %v615, %v633
      %v648 = vadd.f32 %v616, %v636
      %v649 = vadd.f32 %v617, %v639
      %v650 = vadd.f32 %v618, %v642
      %vm651 = vcmask 7168
      %652 = vst.msk [vmem:[#allocation3] sm:$0xff] %vm651, %v643
      %653 = vst.msk [vmem:[#allocation3 + $0x8] sm:$0xff] %vm651, %v644
      %654 = vst.msk [vmem:[#allocation3 + $0x10] sm:$0xff] %vm651, %v645
      %655 = vst.msk [vmem:[#allocation3 + $0x18] sm:$0xff] %vm651, %v646
      %656 = vst.msk [vmem:[#allocation3 + $0x20] sm:$0xff] %vm651, %v647
      %657 = vst.msk [vmem:[#allocation3 + $0x28] sm:$0xff] %vm651, %v648
      %658 = vst.msk [vmem:[#allocation3 + $0x30] sm:$0xff] %vm651, %v649
      %659 = vst.msk [vmem:[#allocation3 + $0x38] sm:$0xff] %vm651, %v650
      %v660 = vld [vmem:[#allocation4] sm:$0xff]
      %v661 = vld [vmem:[#allocation4 + $0x8] sm:$0xff]
      %v662 = vld [vmem:[#allocation4 + $0x10] sm:$0xff]
      %v663 = vld [vmem:[#allocation4 + $0x18] sm:$0xff]
      %v664 = vld [vmem:[#allocation4 + $0x20] sm:$0xff]
      %v665 = vld [vmem:[#allocation4 + $0x28] sm:$0xff]
      %v666 = vld [vmem:[#allocation4 + $0x30] sm:$0xff]
      %v667 = vld [vmem:[#allocation4 + $0x38] sm:$0xff]
      %669 = vset.pattern.permute.xlu0 0
      %670 = vperm.xlu0 %669, %v524
      %v671 = vpop.permute.xlu0 %670
      %674 = vset.pattern.permute.xlu0 0
      %675 = vperm.xlu0 %674, %v526
      %v676 = vpop.permute.xlu0 %675
      %679 = vset.pattern.permute.xlu0 0
      %680 = vperm.xlu0 %679, %v528
      %v681 = vpop.permute.xlu0 %680
      %684 = vset.pattern.permute.xlu0 0
      %685 = vperm.xlu0 %684, %v530
      %v686 = vpop.permute.xlu0 %685
      %689 = vset.pattern.permute.xlu0 0
      %690 = vperm.xlu0 %689, %v532
      %v691 = vpop.permute.xlu0 %690
      %694 = vset.pattern.permute.xlu0 0
      %695 = vperm.xlu0 %694, %v534
      %v696 = vpop.permute.xlu0 %695
      %699 = vset.pattern.permute.xlu0 0
      %700 = vperm.xlu0 %699, %v536
      %v701 = vpop.permute.xlu0 %700
      %704 = vset.pattern.permute.xlu0 0
      %705 = vperm.xlu0 %704, %v538
      %v706 = vpop.permute.xlu0 %705
      %v708 = vmul.f32 %v671, %v660
      %v709 = vmul.f32 %v676, %v661
      %v710 = vmul.f32 %v681, %v662
      %v711 = vmul.f32 %v686, %v663
      %v712 = vmul.f32 %v691, %v664
      %v713 = vmul.f32 %v696, %v665
      %v714 = vmul.f32 %v701, %v666
      %v715 = vmul.f32 %v706, %v667
      %v716 = vpack.c.bf16 %v590, %v588
      %v717 = vpack.c.bf16 %v594, %v592
      %v718 = vpack.c.bf16 %v598, %v596
      %v719 = vpack.c.bf16 %v602, %v600
      %v728 = vunpack.c.l.b16 %v336
      %v729 = vunpack.c.l.b16 %v337
      %v730 = vunpack.c.l.b16 %v338
      %v731 = vunpack.c.l.b16 %v339
      %v732 = vunpack.c.l.b16 %v340
      %v733 = vunpack.c.l.b16 %v341
      %v734 = vunpack.c.l.b16 %v342
      %v735 = vunpack.c.l.b16 %v343
      %v736 = vpack.c.b16 %v729, %v728
      %v737 = vpack.c.b16 %v731, %v730
      %v738 = vpack.c.b16 %v733, %v732
      %v739 = vpack.c.b16 %v735, %v734
      %v745 = vsel %vm482, %v716, 0
      %v748 = vsel %vm482, %v717, 0
      %v751 = vsel %vm482, %v718, 0
      %v754 = vsel %vm482, %v719, 0
      %756 = vmatprep.subr.bf16.mxu0 0
      %757 = vmatpush1.bf16.msra.mxu0 0
      %758 = vmatprep.subr.bf16.mxu0 0
      %759 = vmatpush1.bf16.msra.mxu0 0
      %760 = vmatprep.subr.bf16.mxu0 0
      %761 = vmatpush1.bf16.msra.mxu0 0
      %762 = vmatprep.subr.bf16.mxu0 0
      %763 = vmatpush1.bf16.msra.mxu0 0
      %764 = vmatprep.subr.bf16.mxu0 0
      %765 = vmatpush1.bf16.msra.mxu0 %v739
      %766 = vmatprep.subr.bf16.mxu0 0
      %767 = vmatpush1.bf16.msra.mxu0 %v738
      %768 = vmatprep.subr.bf16.mxu0 0
      %769 = vmatpush1.bf16.msra.mxu0 %v737
      %770 = vmatprep.subr.bf16.mxu0 0
      %771 = vmatpush1.bf16.msra.mxu0 %v736
      %772 = vmatprep.subr.bf16.mxu0 0
      %773 = vmatpush2.bf16.msra.mxu0 0
      %774 = vmatprep.subr.bf16.mxu0 0
      %775 = vmatpush2.bf16.msra.mxu0 0
      %776 = vmatprep.subr.bf16.mxu0 0
      %777 = vmatpush2.bf16.msra.mxu0 0
      %778 = vmatprep.subr.bf16.mxu0 0
      %779 = vmatpush2.bf16.msra.mxu0 0
      %780 = vmatprep.subr.bf16.mxu0 0
      %781 = vmatpush2.bf16.msra.mxu0 0
      %782 = vmatprep.subr.bf16.mxu0 0
      %783 = vmatpush2.bf16.msra.mxu0 0
      %784 = vmatprep.subr.bf16.mxu0 0
      %785 = vmatpush2.bf16.msra.mxu0 0
      %786 = vmatprep.subr.bf16.mxu0 0
      %787 = vmatpush2.bf16.msra.mxu0 0
      %788 = vmatprep.mubr.bf16.mxu0 0
      %789 = vmatmul.mubr.bf16.gmra.mxu0 %v745
      %v790 = vpop.f32.mrf.mxu0
      %v791 = vadd.f32 0.0, %v790
      %v792 = vpop.f32.mrf.mxu0
      %v793 = vpop.f32.mrf.mxu0
      %v794 = vadd.f32 0.0, %v793
      %v795 = vpop.f32.mrf.mxu0
      %796 = vmatprep.mubr.bf16.mxu0 0
      %797 = vmatmul.mubr.bf16.gmra.mxu0 %v748
      %v798 = vpop.f32.mrf.mxu0
      %v799 = vadd.f32 0.0, %v798
      %v800 = vpop.f32.mrf.mxu0
      %v801 = vpop.f32.mrf.mxu0
      %v802 = vadd.f32 0.0, %v801
      %v803 = vpop.f32.mrf.mxu0
      %804 = vmatprep.mubr.bf16.mxu0 0
      %805 = vmatmul.mubr.bf16.gmra.mxu0 %v751
      %v806 = vpop.f32.mrf.mxu0
      %v807 = vadd.f32 0.0, %v806
      %v808 = vpop.f32.mrf.mxu0
      %v809 = vpop.f32.mrf.mxu0
      %v810 = vadd.f32 0.0, %v809
      %v811 = vpop.f32.mrf.mxu0
      %812 = vmatprep.mubr.bf16.mxu0 0
      %813 = vmatmul.mubr.bf16.gmra.mxu0 %v754
      %v814 = vpop.f32.mrf.mxu0
      %v815 = vadd.f32 0.0, %v814
      %v816 = vpop.f32.mrf.mxu0
      %v817 = vpop.f32.mrf.mxu0
      %v818 = vadd.f32 0.0, %v817
      %v819 = vpop.f32.mrf.mxu0
      %820 = vdwg.mxu0
      %v821 = vadd.f32 %v708, %v791
      %v822 = vadd.f32 %v709, %v794
      %v823 = vadd.f32 %v710, %v799
      %v824 = vadd.f32 %v711, %v802
      %v825 = vadd.f32 %v712, %v807
      %v826 = vadd.f32 %v713, %v810
      %v827 = vadd.f32 %v714, %v815
      %v828 = vadd.f32 %v715, %v818
      %829 = vst.msk [vmem:[#allocation4] sm:$0xff] %vm384, %v821
      %830 = vst.msk [vmem:[#allocation4 + $0x8] sm:$0xff] %vm384, %v822
      %831 = vst.msk [vmem:[#allocation4 + $0x10] sm:$0xff] %vm384, %v823
      %832 = vst.msk [vmem:[#allocation4 + $0x18] sm:$0xff] %vm384, %v824
      %833 = vst.msk [vmem:[#allocation4 + $0x20] sm:$0xff] %vm384, %v825
      %834 = vst.msk [vmem:[#allocation4 + $0x28] sm:$0xff] %vm384, %v826
      %835 = vst.msk [vmem:[#allocation4 + $0x30] sm:$0xff] %vm384, %v827
      %836 = vst.msk [vmem:[#allocation4 + $0x38] sm:$0xff] %vm384, %v828
      %837 = vst.msk [vmem:[#allocation2] sm:$0xff] %vm651, %v507
      %838 = vst.msk [vmem:[#allocation2 + $0x8] sm:$0xff] %vm651, %v508
      %839 = vst.msk [vmem:[#allocation2 + $0x10] sm:$0xff] %vm651, %v509
      %840 = vst.msk [vmem:[#allocation2 + $0x18] sm:$0xff] %vm651, %v510
      %841 = vst.msk [vmem:[#allocation2 + $0x20] sm:$0xff] %vm651, %v511
      %842 = vst.msk [vmem:[#allocation2 + $0x28] sm:$0xff] %vm651, %v512
      %843 = vst.msk [vmem:[#allocation2 + $0x30] sm:$0xff] %vm651, %v513
      %844 = vst.msk [vmem:[#allocation2 + $0x38] sm:$0xff] %vm651, %v514
      // Predicated region
      $region37: #{cfm_forward.22} parent=31 // pred_check
        %p845 = pneg %p290
      $region38: #{cfm_forward.22} parent=31 // pred_check_branch
        %847 = sbr.rel (%p845) target = $region40
      $region39: #{cfm_forward.22} parent=31 // pred_region
        %v848 = vld [vmem:[#allocation4] sm:$0xff]
        %v849 = vld [vmem:[#allocation4 + $0x8] sm:$0xff]
        %v850 = vld [vmem:[#allocation4 + $0x10] sm:$0xff]
        %v851 = vld [vmem:[#allocation4 + $0x18] sm:$0xff]
        %v852 = vld [vmem:[#allocation4 + $0x20] sm:$0xff]
        %v853 = vld [vmem:[#allocation4 + $0x28] sm:$0xff]
        %v854 = vld [vmem:[#allocation4 + $0x30] sm:$0xff]
        %v855 = vld [vmem:[#allocation4 + $0x38] sm:$0xff]
        %v856 = vld [vmem:[#allocation3] sm:$0xff]
        %v857 = vld [vmem:[#allocation3 + $0x8] sm:$0xff]
        %v858 = vld [vmem:[#allocation3 + $0x10] sm:$0xff]
        %v859 = vld [vmem:[#allocation3 + $0x18] sm:$0xff]
        %v860 = vld [vmem:[#allocation3 + $0x20] sm:$0xff]
        %v861 = vld [vmem:[#allocation3 + $0x28] sm:$0xff]
        %v862 = vld [vmem:[#allocation3 + $0x30] sm:$0xff]
        %v863 = vld [vmem:[#allocation3 + $0x38] sm:$0xff]
        %v864 = vrcp.pop %v856
        %v865 = vrcp.pop %v857
        %v866 = vrcp.pop %v858
        %v867 = vrcp.pop %v859
        %v868 = vrcp.pop %v860
        %v869 = vrcp.pop %v861
        %v870 = vrcp.pop %v862
        %v871 = vrcp.pop %v863
        %873 = vset.pattern.permute.xlu0 0
        %874 = vperm.xlu0 %873, %v864
        %v875 = vpop.permute.xlu0 %874
        %878 = vset.pattern.permute.xlu0 0
        %879 = vperm.xlu0 %878, %v865
        %v880 = vpop.permute.xlu0 %879
        %883 = vset.pattern.permute.xlu0 0
        %884 = vperm.xlu0 %883, %v866
        %v885 = vpop.permute.xlu0 %884
        %888 = vset.pattern.permute.xlu0 0
        %889 = vperm.xlu0 %888, %v867
        %v890 = vpop.permute.xlu0 %889
        %893 = vset.pattern.permute.xlu0 0
        %894 = vperm.xlu0 %893, %v868
        %v895 = vpop.permute.xlu0 %894
        %898 = vset.pattern.permute.xlu0 0
        %899 = vperm.xlu0 %898, %v869
        %v900 = vpop.permute.xlu0 %899
        %903 = vset.pattern.permute.xlu0 0
        %904 = vperm.xlu0 %903, %v870
        %v905 = vpop.permute.xlu0 %904
        %908 = vset.pattern.permute.xlu0 0
        %909 = vperm.xlu0 %908, %v871
        %v910 = vpop.permute.xlu0 %909
        %v912 = vmul.f32 %v848, %v875
        %v913 = vmul.f32 %v849, %v880
        %v914 = vmul.f32 %v850, %v885
        %v915 = vmul.f32 %v851, %v890
        %v916 = vmul.f32 %v852, %v895
        %v917 = vmul.f32 %v853, %v900
        %v918 = vmul.f32 %v854, %v905
        %v919 = vmul.f32 %v855, %v910
        %v920 = vpack.c.bf16 %v913, %v912
        %v921 = vpack.c.bf16 %v915, %v914
        %v922 = vpack.c.bf16 %v917, %v916
        %v923 = vpack.c.bf16 %v919, %v918
        %v928 = vunpack.c.l.b16 %v920
        %v929 = vunpack.c.h.b16 %v920
        %v930 = vunpack.c.l.b16 %v921
        %v931 = vunpack.c.h.b16 %v921
        %v932 = vunpack.c.l.b16 %v922
        %v933 = vunpack.c.h.b16 %v922
        %v934 = vunpack.c.l.b16 %v923
        %v935 = vunpack.c.h.b16 %v923
        %v936 = vpack.c.b16 %v928, %v928
        %v937 = vpack.c.b16 %v929, %v929
        %v938 = vpack.c.b16 %v930, %v930
        %v939 = vpack.c.b16 %v931, %v931
        %v940 = vpack.c.b16 %v932, %v932
        %v941 = vpack.c.b16 %v933, %v933
        %v942 = vpack.c.b16 %v934, %v934
        %v943 = vpack.c.b16 %v935, %v935
        %vm952 = vcmask 257024
        %953 = vst.msk [vmem:[%s287] sm:$0xf] %vm952, %v936
        %954 = vst.msk [vmem:[%s287 + $0x4] sm:$0xf] %vm952, %v937
        %955 = vst.msk [vmem:[%s287 + $0x8] sm:$0xf] %vm952, %v938
        %956 = vst.msk [vmem:[%s287 + $0xc] sm:$0xf] %vm952, %v939
        %957 = vst.msk [vmem:[%s287 + $0x10] sm:$0xf] %vm952, %v940
        %958 = vst.msk [vmem:[%s287 + $0x14] sm:$0xf] %vm952, %v941
        %959 = vst.msk [vmem:[%s287 + $0x18] sm:$0xf] %vm952, %v942
        %960 = vst.msk [vmem:[%s287 + $0x1c] sm:$0xf] %vm952, %v943
      $region40: #{cfm_forward.22} parent=31 // pred_fallthru
        _
      %s961 = smul.u32 8, %s20
      %p962 = scmp.lt.s32.totalorder %s19, 1
      %s963 = scalar_select %p962, %s19, 1
      %p964 = scmp.lt.s32.totalorder %s961, 7
      %s965 = scalar_select %p964, %s961, 7
      %s966 = smul.addr %s963, 8
      %s967 = sadd.s32 %s965, %s966
      %s968 = smul.addr %s967, 4
      %s969 = scalar_lea.vmem %s3, %s968
      // Predicated region
      $region41: #{cfm_forward.22} parent=31 // pred_check
        %p970 = pneg %p137
      $region42: #{cfm_forward.22} parent=31 // pred_check_branch
        %972 = sbr.rel (%p970) target = $region44
      $region43: #{cfm_forward.22} parent=31 // pred_region
        %s973 = smul.u32 8, %s20
      $region44: #{cfm_forward.22} parent=31 // pred_fallthru
        _
    $region32: #{cfm_forward.22} parent=5 // pred_fallthru
      _
    %p974 = scmp.le.s32.totalorder 2, %s9
    // Predicated region
    $region45: #{cfm_forward.22} parent=5 // pred_check
      %p975 = pneg %p974
    $region46: #{cfm_forward.22} parent=5 // pred_check_branch
      %977 = sbr.rel (%p975) target = $region48
    $region47: #{cfm_forward.22} parent=5 // pred_region
      %s978 = ssub.s32 %s9, 2
      // Predicated region
      $region49: #{cfm_forward.22} parent=47 // pred_check
        %p979 = pneg %p143
      $region50: #{cfm_forward.22} parent=47 // pred_check_branch
        %981 = sbr.rel (%p979) target = $region52
      $region51: #{cfm_forward.22} parent=47 // pred_region
        %s982 = smul.u32 8, %s23
        %p983 = scmp.lt.s32.totalorder %s22, 1
        %s984 = scalar_select %p983, %s22, 1
        %p985 = scmp.lt.s32.totalorder %s982, 7
        %s986 = scalar_select %p985, %s982, 7
        %s987 = smul.addr %s984, 8
        %s988 = sadd.s32 %s986, %s987
        %s989 = smul.addr %s988, 4
        %s990 = scalar_lea.vmem %s3, %s989
      $region52: #{cfm_forward.22} parent=47 // pred_fallthru
        _
    $region48: #{cfm_forward.22} parent=5 // pred_fallthru
      _
  $region6: #{cfm_forward.22} parent=0 // loop_footer
    %s13 = sadd.s32 1, %s9
  $region7: #{cfm_forward.22} parent=0 // loop_footer_branch
    %8 = sbr.rel target = $region3
  $region8: #{cfm_forward.22} parent=0 // loop_exit
    _

</llo_original>
